<compile_context>
chip_gen: v6e
topology: v6e:2x2x1
jax: 0.10.0
libtpu: 0.0.40
codegen_flags: <defaults>
</compile_context>

<pallas_src>
import math

import jax
import jax.numpy as jnp
from jax.experimental import pallas as pl
from jax.experimental.pallas import tpu as pltpu


# ----------------------------- parameters -----------------------------------
def init_params(key, m):
    """Parameters mimicking the PyTorch module (torch weight layouts)."""
    ks = jax.random.split(key, 8)

    def conv2d(k, cin, cout, ksz=3):
        bound = 1.0 / math.sqrt(cin * ksz * ksz)
        kw, kb = jax.random.split(k)
        w = jax.random.uniform(kw, (cout, cin, ksz, ksz), jnp.float32, -bound, bound)
        b = jax.random.uniform(kb, (cout,), jnp.float32, -bound, bound)
        return w, b

    def conv1d(k, cin, cout):
        bound = 1.0 / math.sqrt(cin)
        kw, kb = jax.random.split(k)
        w = jax.random.uniform(kw, (cout, cin, 1), jnp.float32, -bound, bound)
        b = jax.random.uniform(kb, (cout,), jnp.float32, -bound, bound)
        return w, b

    def batchnorm(k, c):
        kg, kb, km, kv = jax.random.split(k, 4)
        gamma = 1.0 + 0.1 * jax.random.normal(kg, (c,), jnp.float32)
        beta = 0.1 * jax.random.normal(kb, (c,), jnp.float32)
        mean = 0.1 * jax.random.normal(km, (c,), jnp.float32)
        var = jax.random.uniform(kv, (c,), jnp.float32, 0.5, 1.5)
        return gamma, beta, mean, var

    return {
        "conv1": conv2d(ks[0], 3, m),
        "conv2": conv2d(ks[1], m, m // 2),
        "conv3": conv2d(ks[2], m // 2, m // 4),
        "bn1": batchnorm(ks[3], m),
        "bn2": batchnorm(ks[4], m // 2),
        "bn3": batchnorm(ks[5], m // 4),
        "conv1d_1": conv1d(ks[6], m // 4, 32),
        "conv1d_2": conv1d(ks[7], 32, 2),
    }


def _shift_masks(h, w):
    """(9, 1, h*w) 0/1 masks: validity of each (dy, dx) in {-1,0,1}^2 source."""
    n = h * w
    y = jnp.arange(n) // w
    x = jnp.arange(n) % w
    masks = []
    for t in range(9):
        dy, dx = t // 3 - 1, t % 3 - 1
        valid = (y + dy >= 0) & (y + dy < h) & (x + dx >= 0) & (x + dx < w)
        masks.append(valid)
    return jnp.stack(masks).astype(jnp.float32)[:, None, :]


def _pool_selectors(h, w):
    """(4, h*w, (h/2)*(w/2)) 0/1 gather matrices for the 2x2 max-pool."""
    n = h * w
    h2, w2 = h // 2, w // 2
    m = jnp.arange(h2 * w2)
    base = 2 * (m // w2) * w + 2 * (m % w2)                 # top-left of each window
    l = jnp.arange(n)[:, None]
    sels = []
    for r in range(2):
        for c in range(2):
            src = base + r * w + c
            sels.append((l == src[None, :]).astype(jnp.float32))
    return jnp.stack(sels)                                   # (4, n, n//4)


def prepare_params(params, h, w, eps=1e-5):
    """Fold conv bias + inference-mode BatchNorm; build masks / pool selectors."""
    # TODO(synk): BatchNorm is applied with running statistics (inference mode);
    # train-mode batch statistics would need an extra cross-batch reduction pass.
    out = []
    hk, wk = h, w
    for i in range(3):
        wt, b = params[f"conv{i + 1}"]
        gamma, beta, mean, var = params[f"bn{i + 1}"]
        scale = gamma / jnp.sqrt(var + eps)                  # (Cout,)
        weff = wt * scale[:, None, None, None]               # (Cout, Cin, 3, 3)
        cout, cin = weff.shape[0], weff.shape[1]
        w9 = jnp.transpose(weff, (2, 3, 0, 1)).reshape(9, cout, cin)   # t = ky*3+kx
        beff = ((b - mean) * scale + beta).reshape(cout, 1)
        out += [w9, beff, _shift_masks(hk, wk), _pool_selectors(hk, wk)]
        hk //= 2
        wk //= 2
    w1, b1 = params["conv1d_1"]
    w2, b2 = params["conv1d_2"]
    out += [w1[:, :, 0], b1.reshape(-1, 1), w2[:, :, 0], b2.reshape(-1, 1)]
    return tuple(out)


# ------------------------------ forward --------------------------------------
def encoder_pool_forward(x, prepared):
    """x: (B, 3, H, W) float32.  Returns (B, 2, H//8 * W//8) float32."""
    B, cin0, H, W = x.shape
    assert cin0 == 3 and H % 8 == 0 and W % 8 == 0
    (w9_1, b1e, m1, sel1,
     w9_2, b2e, m2, sel2,
     w9_3, b3e, m3, sel3,
     wc1, bc1, wc2, bc2) = prepared
    C1, C2, C3 = w9_1.shape[1], w9_2.shape[1], w9_3.shape[1]   # m, m//2, m//4
    W1, N1 = W, H * W
    W2, N2 = W // 2, (H // 2) * (W // 2)
    W3, N3 = W // 4, (H // 4) * (W // 4)
    L = (H // 8) * (W // 8)
    f32 = jnp.float32
    PAD = 128                     # lane-aligned offset; >= Wk+1 for every layer

    if x.dtype != f32:
        x = x.astype(f32)
    # Layout plumbing only: flatten spatial so activations are (C, H*W) slabs.
    x_flat = x.reshape(B, 3, N1)

    # ------------- kernel 1: conv stack + 1x1 convs + softmax ---------------
    def fwd_kernel(x_ref,
                   w1_ref, b1_ref, m1_ref, s1_ref,
                   w2_ref, b2_ref, m2_ref, s2_ref,
                   w3_ref, b3_ref, m3_ref, s3_ref,
                   wc1_ref, bc1_ref, wc2_ref, bc2_ref,
                   s_ref, ss_ref,
                   src1, src2, src3):

        def conv_bn_elu_pool(src_ref, w_ref, b_ref, m_ref, sel_ref, wk, n):
            # 3x3 conv (pad=1) as 9 shifted whole-image matmuls, free dim = n.
            acc = None
            for t in range(9):
                dy, dx = t // 3 - 1, t % 3 - 1
                off = PAD + dy * wk + dx
                win = src_ref[:, off:off + n]                 # (Cin, n)
                if dy != 0 or dx != 0:
                    # zero-pad boundary; where() also kills pad-region garbage
                    win = jnp.where(m_ref[t] > 0.5, win, 0.0)
                d = jnp.dot(w_ref[t], win, preferred_element_type=f32)
                acc = d if acc is None else acc + d
            z = acc + b_ref[...]                              # BN+bias folded, added once
            # TODO(synk): jnp.expm1 would be marginally more precise near 0.
            a = jnp.where(z > 0.0, z, jnp.exp(z) - 1.0)       # ELU
            # 2x2 max-pool: 4 whole-image 0/1 selection matmuls + max.
            p0 = jnp.dot(a, sel_ref[0], preferred_element_type=f32)
            p1 = jnp.dot(a, sel_ref[1], preferred_element_type=f32)
            p2 = jnp.dot(a, sel_ref[2], preferred_element_type=f32)
            p3 = jnp.dot(a, sel_ref[3], preferred_element_type=f32)
            return jnp.maximum(jnp.maximum(p0, p1), jnp.maximum(p2, p3))

        # Activation canvases: data lives lane-aligned at [PAD, PAD+n); the pad
        # regions are never zeroed (their contents are masked out by where()).
        src1[:, PAD:PAD + N1] = x_ref[0]                      # (3, N1) aligned store
        a1 = conv_bn_elu_pool(src1, w1_ref, b1_ref, m1_ref, s1_ref, W1, N1)
        src2[:, PAD:PAD + N2] = a1                            # (C1, N2)
        a2 = conv_bn_elu_pool(src2, w2_ref, b2_ref, m2_ref, s2_ref, W2, N2)
        src3[:, PAD:PAD + N3] = a2                            # (C2, N3)
        a3 = conv_bn_elu_pool(src3, w3_ref, b3_ref, m3_ref, s3_ref, W3, N3)

        # 1x1 convs + softmax over the L spatial positions (exact, per image).
        z = jnp.dot(wc1_ref[...], a3, preferred_element_type=f32) + bc1_ref[...]
        z = z - jnp.max(z, axis=1, keepdims=True)
        e = jnp.exp(z)
        p = e / jnp.sum(e, axis=1, keepdims=True)
        s = jnp.dot(wc2_ref[...], p, preferred_element_type=f32) + bc2_ref[...]

        s_ref[0] = s                                          # (2, L)
        ss = jnp.sum(s * s, axis=1, keepdims=True)            # (2, 1)
        ss_ref[0] = jnp.sum(ss, axis=0, keepdims=True)        # per-image sum(s^2)

    consts = (w9_1, b1e, m1, sel1, w9_2, b2e, m2, sel2, w9_3, b3e, m3, sel3,
              wc1, bc1, wc2, bc2)
    in_specs = [pl.BlockSpec((1, 3, N1), lambda i: (i, 0, 0))]
    in_specs += [pl.BlockSpec(c.shape, lambda i, nd=c.ndim: (0,) * nd)
                 for c in consts]                             # VMEM-resident constants

    s_raw, ss_part = pl.pallas_call(
        fwd_kernel,
        out_shape=(jax.ShapeDtypeStruct((B, 2, L), f32),
                   jax.ShapeDtypeStruct((B, 1, 1), f32)),
        grid=(B,),
        in_specs=in_specs,
        out_specs=(pl.BlockSpec((1, 2, L), lambda i: (i, 0, 0)),
                   pl.BlockSpec((1, 1, 1), lambda i: (i, 0, 0))),
        scratch_shapes=[
            pltpu.VMEM((3, PAD + N1 + PAD), f32),    # layer-1 activation canvas
            pltpu.VMEM((C1, PAD + N2 + PAD), f32),   # layer-2 activation canvas
            pltpu.VMEM((C2, PAD + N3 + PAD), f32),   # layer-3 activation canvas
        ],
        compiler_params=pltpu.CompilerParams(
            dimension_semantics=("parallel",),
            vmem_limit_bytes=32 * 1024 * 1024),
    )(x_flat, *consts)

    # -------- kernel 2: global power normalisation, single step, in place ----
    def scale_kernel(s_in_ref, ss_ref, y_ref):
        total = jnp.sum(ss_ref[...])
        inv_norm = jax.lax.rsqrt(total / float(B))
        y_ref[...] = s_in_ref[...] * inv_norm

    y = pl.pallas_call(
        scale_kernel,
        out_shape=jax.ShapeDtypeStruct((B, 2, L), f32),
        input_output_aliases={0: 0},
    )(s_raw, ss_part)
    return y


# ----------------------------- pure-JAX reference ----------------------------
def encoder_pool_reference(x, params, eps=1e-5):
    """Mirror of the PyTorch forward (inference-mode BatchNorm)."""
    hp = jax.lax.Precision.HIGHEST
    s = x.astype(jnp.float32)
    for i in range(3):
        w, b = params[f"conv{i + 1}"]
        gamma, beta, mean, var = params[f"bn{i + 1}"]
        s = jax.lax.conv_general_dilated(
            s, w, window_strides=(1, 1), padding=((1, 1), (1, 1)),
            dimension_numbers=("NCHW", "OIHW", "NCHW"), precision=hp)
        s = s + b[None, :, None, None]
        s = (s - mean[None, :, None, None]) * (
            gamma[None, :, None, None] / jnp.sqrt(var[None, :, None, None] + eps))
        s = s + beta[None, :, None, None]
        s = jnp.where(s > 0.0, s, jnp.exp(s) - 1.0)                # ELU
        s = jax.lax.reduce_window(s, -jnp.inf, jax.lax.max,
                                  (1, 1, 2, 2), (1, 1, 2, 2), "VALID")
    bsz, ch, hh, ww = s.shape
    s = s.reshape(bsz, ch, hh * ww)
    w1, b1 = params["conv1d_1"]
    w2, b2 = params["conv1d_2"]
    s = jnp.einsum("oc,bcl->bol", w1[:, :, 0], s, precision=hp) + b1[None, :, None]
    s = jax.nn.softmax(s, axis=2)
    s = jnp.einsum("oc,bcl->bol", w2[:, :, 0], s, precision=hp) + b2[None, :, None]
    norm = jnp.sqrt(jnp.sum(jnp.linalg.norm(s, axis=1) ** 2) / bsz)
    return s / norm


if __name__ == "__main__":
    B, H, W, M = 2, 16, 16, 32                     # input (2, 3, 16, 16), m = 32

    key = jax.random.PRNGKey(0)
    k_params, k_input = jax.random.split(key)
    params = init_params(k_params, M)
    x = jax.random.normal(k_input, (B, 3, H, W), dtype=jnp.float32)

    prepared = prepare_params(params, H, W)
    y = jax.jit(encoder_pool_forward)(x, prepared)
    y = jax.block_until_ready(y)

    y_ref = encoder_pool_reference(x, params)
    assert y.shape == (B, 2, (H // 8) * (W // 8)), y.shape
    max_err = float(jnp.max(jnp.abs(y - y_ref)))
    assert jnp.allclose(y, y_ref, atol=1e-3, rtol=1e-3), f"max abs err = {max_err}"

    print("KERNEL_OK")
</pallas_src>

<mosaic_0001>
module attributes {stable_mosaic.version = 11 : i64} {
  func.func @scale_kernel(%arg0: memref<2x2x4xf32, #tpu.memory_space<vmem>>, %arg1: memref<2x1x1xf32, #tpu.memory_space<vmem>>, %arg2: memref<2x2x4xf32, #tpu.memory_space<vmem>>) attributes {dimension_semantics = [], scalar_prefetch = 0 : i64, scratch_operands = 0 : i64, tpu.core_type = #tpu.core_type<tc>} {
    %c0 = arith.constant 0 : index
    %c0_0 = arith.constant 0 : index
    %c0_1 = arith.constant 0 : index
    %0 = vector.load %arg1[%c0, %c0_0, %c0_1] : memref<2x1x1xf32, #tpu.memory_space<vmem>>, vector<2x1x1xf32>
    %1 = vector.shape_cast %0 : vector<2x1x1xf32> to vector<1x2x1x1xf32>
    %cst = arith.constant dense<0.000000e+00> : vector<1xf32>
    %2 = vector.multi_reduction <add>, %1, %cst [1, 2, 3] : vector<1x2x1x1xf32> to vector<1xf32>
    %3 = vector.shape_cast %2 : vector<1xf32> to vector<1x1x1x1xf32>
    %4 = vector.extract %3[0, 0, 0, 0] : f32 from vector<1x1x1x1xf32>
    %cst_2 = arith.constant 2.000000e+00 : f32
    %5 = arith.divf %4, %cst_2 : f32
    %6 = math.rsqrt %5 : f32
    %c0_3 = arith.constant 0 : index
    %c0_4 = arith.constant 0 : index
    %c0_5 = arith.constant 0 : index
    %7 = vector.load %arg0[%c0_3, %c0_4, %c0_5] : memref<2x2x4xf32, #tpu.memory_space<vmem>>, vector<2x2x4xf32>
    %8 = vector.broadcast %6 : f32 to vector<2x2x4xf32>
    %9 = arith.mulf %7, %8 : vector<2x2x4xf32>
    %c0_6 = arith.constant 0 : index
    %c0_7 = arith.constant 0 : index
    %c0_8 = arith.constant 0 : index
    %10 = vector.load %arg2[%c0_6, %c0_7, %c0_8] : memref<2x2x4xf32, #tpu.memory_space<vmem>>, vector<2x2x4xf32>
    tpu.vector_store %arg2[%c0_6, %c0_7, %c0_8], %9 {strides = array<i32>} : memref<2x2x4xf32, #tpu.memory_space<vmem>>, vector<2x2x4xf32>,
    return
  }
}

module attributes {stable_mosaic.version = 11 : i64} {
  func.func @fwd_kernel(%arg0: i32, %arg1: memref<1x3x256xf32, #tpu.memory_space<vmem>>, %arg2: memref<9x32x3xf32, #tpu.memory_space<vmem>>, %arg3: memref<32x1xf32, #tpu.memory_space<vmem>>, %arg4: memref<9x1x256xf32, #tpu.memory_space<vmem>>, %arg5: memref<4x256x64xf32, #tpu.memory_space<vmem>>, %arg6: memref<9x16x32xf32, #tpu.memory_space<vmem>>, %arg7: memref<16x1xf32, #tpu.memory_space<vmem>>, %arg8: memref<9x1x64xf32, #tpu.memory_space<vmem>>, %arg9: memref<4x64x16xf32, #tpu.memory_space<vmem>>, %arg10: memref<9x8x16xf32, #tpu.memory_space<vmem>>, %arg11: memref<8x1xf32, #tpu.memory_space<vmem>>, %arg12: memref<9x1x16xf32, #tpu.memory_space<vmem>>, %arg13: memref<4x16x4xf32, #tpu.memory_space<vmem>>, %arg14: memref<32x8xf32, #tpu.memory_space<vmem>>, %arg15: memref<32x1xf32, #tpu.memory_space<vmem>>, %arg16: memref<2x32xf32, #tpu.memory_space<vmem>>, %arg17: memref<2x1xf32, #tpu.memory_space<vmem>>, %arg18: memref<1x2x4xf32, #tpu.memory_space<vmem>>, %arg19: memref<1x1x1xf32, #tpu.memory_space<vmem>>, %arg20: memref<3x512xf32, #tpu.memory_space<vmem>>, %arg21: memref<32x320xf32, #tpu.memory_space<vmem>>, %arg22: memref<16x272xf32, #tpu.memory_space<vmem>>) attributes {dimension_semantics = [#tpu.dimension_semantics<parallel>], iteration_bounds = array<i64: 2>, scalar_prefetch = 0 : i64, scratch_operands = 3 : i64, tpu.core_type = #tpu.core_type<tc>, window_params = [{transform_indices = @transform_0, window_bounds = array<i64: 1, 3, 256>}, {pipeline_mode = #tpu.pipeline_mode<synchronous>, transform_indices = @transform_1, window_bounds = array<i64: 9, 32, 3>}, {pipeline_mode = #tpu.pipeline_mode<synchronous>, transform_indices = @transform_2, window_bounds = array<i64: 32, 1>}, {pipeline_mode = #tpu.pipeline_mode<synchronous>, transform_indices = @transform_3, window_bounds = array<i64: 9, 1, 256>}, {pipeline_mode = #tpu.pipeline_mode<synchronous>, transform_indices = @transform_4, window_bounds = array<i64: 4, 256, 64>}, {pipeline_mode = #tpu.pipeline_mode<synchronous>, transform_indices = @transform_5, window_bounds = array<i64: 9, 16, 32>}, {pipeline_mode = #tpu.pipeline_mode<synchronous>, transform_indices = @transform_6, window_bounds = array<i64: 16, 1>}, {pipeline_mode = #tpu.pipeline_mode<synchronous>, transform_indices = @transform_7, window_bounds = array<i64: 9, 1, 64>}, {pipeline_mode = #tpu.pipeline_mode<synchronous>, transform_indices = @transform_8, window_bounds = array<i64: 4, 64, 16>}, {pipeline_mode = #tpu.pipeline_mode<synchronous>, transform_indices = @transform_9, window_bounds = array<i64: 9, 8, 16>}, {pipeline_mode = #tpu.pipeline_mode<synchronous>, transform_indices = @transform_10, window_bounds = array<i64: 8, 1>}, {pipeline_mode = #tpu.pipeline_mode<synchronous>, transform_indices = @transform_11, window_bounds = array<i64: 9, 1, 16>}, {pipeline_mode = #tpu.pipeline_mode<synchronous>, transform_indices = @transform_12, window_bounds = array<i64: 4, 16, 4>}, {pipeline_mode = #tpu.pipeline_mode<synchronous>, transform_indices = @transform_13, window_bounds = array<i64: 32, 8>}, {pipeline_mode = #tpu.pipeline_mode<synchronous>, transform_indices = @transform_14, window_bounds = array<i64: 32, 1>}, {pipeline_mode = #tpu.pipeline_mode<synchronous>, transform_indices = @transform_15, window_bounds = array<i64: 2, 32>}, {pipeline_mode = #tpu.pipeline_mode<synchronous>, transform_indices = @transform_16, window_bounds = array<i64: 2, 1>}, {transform_indices = @transform_17, window_bounds = array<i64: 1, 2, 4>}, {transform_indices = @transform_18, window_bounds = array<i64: 1, 1, 1>}]} {
    %c0 = arith.constant 0 : index
    %c0_0 = arith.constant 0 : index
    %c0_1 = arith.constant 0 : index
    %0 = vector.load %arg1[%c0, %c0_0, %c0_1] : memref<1x3x256xf32, #tpu.memory_space<vmem>>, vector<1x3x256xf32>
    %1 = vector.shape_cast %0 : vector<1x3x256xf32> to vector<3x256xf32>
    %c0_2 = arith.constant 0 : index
    %c128 = arith.constant 128 : index
    %2 = vector.load %arg20[%c0_2, %c128] : memref<3x512xf32, #tpu.memory_space<vmem>>, vector<3x256xf32>
    tpu.vector_store %arg20[%c0_2, %c128], %1 {strides = array<i32>} : memref<3x512xf32, #tpu.memory_space<vmem>>, vector<3x256xf32>,
    %c0_3 = arith.constant 0 : index
    %c111 = arith.constant 111 : index
    %3 = vector.load %arg20[%c0_3, %c111] : memref<3x512xf32, #tpu.memory_space<vmem>>, vector<3x256xf32>
    %c0_4 = arith.constant 0 : index
    %c0_5 = arith.constant 0 : index
    %c0_6 = arith.constant 0 : index
    %4 = vector.load %arg4[%c0_4, %c0_5, %c0_6] : memref<9x1x256xf32, #tpu.memory_space<vmem>>, vector<1x1x256xf32>
    %5 = vector.shape_cast %4 : vector<1x1x256xf32> to vector<1x256xf32>
    %cst = arith.constant 5.000000e-01 : f32
    %6 = vector.broadcast %cst : f32 to vector<1x256xf32>
    %7 = arith.cmpf ogt, %5, %6 : vector<1x256xf32>
    %cst_7 = arith.constant 0.000000e+00 : f32
    %8 = vector.shape_cast %7 : vector<1x256xi1> to vector<1x256xi1>
    %9 = vector.broadcast %8 : vector<1x256xi1> to vector<3x256xi1>
    %10 = vector.broadcast %cst_7 : f32 to vector<3x256xf32>
    %11 = arith.select %9, %3, %10 : vector<3x256xi1>, vector<3x256xf32>
    %c0_8 = arith.constant 0 : index
    %c0_9 = arith.constant 0 : index
    %c0_10 = arith.constant 0 : index
    %12 = vector.load %arg2[%c0_8, %c0_9, %c0_10] : memref<9x32x3xf32, #tpu.memory_space<vmem>>, vector<1x32x3xf32>
    %13 = vector.shape_cast %12 : vector<1x32x3xf32> to vector<32x3xf32>
    %cst_11 = arith.constant dense<0.000000e+00> : vector<32x256xf32>
    %14 = tpu.matmul %13, %11, %cst_11 {dimension_numbers = #tpu.dot_dimension_numbers<[1], [0], [0], [1], [0, 0, 1, 1], [], []>} : vector<32x3xf32>, vector<3x256xf32>, vector<32x256xf32> -> vector<32x256xf32>
    %c0_12 = arith.constant 0 : index
    %c112 = arith.constant 112 : index
    %15 = vector.load %arg20[%c0_12, %c112] : memref<3x512xf32, #tpu.memory_space<vmem>>, vector<3x256xf32>
    %c1 = arith.constant 1 : index
    %c0_13 = arith.constant 0 : index
    %c0_14 = arith.constant 0 : index
    %16 = vector.load %arg4[%c1, %c0_13, %c0_14] : memref<9x1x256xf32, #tpu.memory_space<vmem>>, vector<1x1x256xf32>
    %17 = vector.shape_cast %16 : vector<1x1x256xf32> to vector<1x256xf32>
    %cst_15 = arith.constant 5.000000e-01 : f32
    %18 = vector.broadcast %cst_15 : f32 to vector<1x256xf32>
    %19 = arith.cmpf ogt, %17, %18 : vector<1x256xf32>
    %cst_16 = arith.constant 0.000000e+00 : f32
    %20 = vector.shape_cast %19 : vector<1x256xi1> to vector<1x256xi1>
    %21 = vector.broadcast %20 : vector<1x256xi1> to vector<3x256xi1>
    %22 = vector.broadcast %cst_16 : f32 to vector<3x256xf32>
    %23 = arith.select %21, %15, %22 : vector<3x256xi1>, vector<3x256xf32>
    %c1_17 = arith.constant 1 : index
    %c0_18 = arith.constant 0 : index
    %c0_19 = arith.constant 0 : index
    %24 = vector.load %arg2[%c1_17, %c0_18, %c0_19] : memref<9x32x3xf32, #tpu.memory_space<vmem>>, vector<1x32x3xf32>
    %25 = vector.shape_cast %24 : vector<1x32x3xf32> to vector<32x3xf32>
    %cst_20 = arith.constant dense<0.000000e+00> : vector<32x256xf32>
    %26 = tpu.matmul %25, %23, %cst_20 {dimension_numbers = #tpu.dot_dimension_numbers<[1], [0], [0], [1], [0, 0, 1, 1], [], []>} : vector<32x3xf32>, vector<3x256xf32>, vector<32x256xf32> -> vector<32x256xf32>
    %27 = arith.addf %14, %26 : vector<32x256xf32>
    %c0_21 = arith.constant 0 : index
    %c113 = arith.constant 113 : index
    %28 = vector.load %arg20[%c0_21, %c113] : memref<3x512xf32, #tpu.memory_space<vmem>>, vector<3x256xf32>
    %c2 = arith.constant 2 : index
    %c0_22 = arith.constant 0 : index
    %c0_23 = arith.constant 0 : index
    %29 = vector.load %arg4[%c2, %c0_22, %c0_23] : memref<9x1x256xf32, #tpu.memory_space<vmem>>, vector<1x1x256xf32>
    %30 = vector.shape_cast %29 : vector<1x1x256xf32> to vector<1x256xf32>
    %cst_24 = arith.constant 5.000000e-01 : f32
    %31 = vector.broadcast %cst_24 : f32 to vector<1x256xf32>
    %32 = arith.cmpf ogt, %30, %31 : vector<1x256xf32>
    %cst_25 = arith.constant 0.000000e+00 : f32
    %33 = vector.shape_cast %32 : vector<1x256xi1> to vector<1x256xi1>
    %34 = vector.broadcast %33 : vector<1x256xi1> to vector<3x256xi1>
    %35 = vector.broadcast %cst_25 : f32 to vector<3x256xf32>
    %36 = arith.select %34, %28, %35 : vector<3x256xi1>, vector<3x256xf32>
    %c2_26 = arith.constant 2 : index
    %c0_27 = arith.constant 0 : index
    %c0_28 = arith.constant 0 : index
    %37 = vector.load %arg2[%c2_26, %c0_27, %c0_28] : memref<9x32x3xf32, #tpu.memory_space<vmem>>, vector<1x32x3xf32>
    %38 = vector.shape_cast %37 : vector<1x32x3xf32> to vector<32x3xf32>
    %cst_29 = arith.constant dense<0.000000e+00> : vector<32x256xf32>
    %39 = tpu.matmul %38, %36, %cst_29 {dimension_numbers = #tpu.dot_dimension_numbers<[1], [0], [0], [1], [0, 0, 1, 1], [], []>} : vector<32x3xf32>, vector<3x256xf32>, vector<32x256xf32> -> vector<32x256xf32>
    %40 = arith.addf %27, %39 : vector<32x256xf32>
    %c0_30 = arith.constant 0 : index
    %c127 = arith.constant 127 : index
    %41 = vector.load %arg20[%c0_30, %c127] : memref<3x512xf32, #tpu.memory_space<vmem>>, vector<3x256xf32>
    %c3 = arith.constant 3 : index
    %c0_31 = arith.constant 0 : index
    %c0_32 = arith.constant 0 : index
    %42 = vector.load %arg4[%c3, %c0_31, %c0_32] : memref<9x1x256xf32, #tpu.memory_space<vmem>>, vector<1x1x256xf32>
    %43 = vector.shape_cast %42 : vector<1x1x256xf32> to vector<1x256xf32>
    %cst_33 = arith.constant 5.000000e-01 : f32
    %44 = vector.broadcast %cst_33 : f32 to vector<1x256xf32>
    %45 = arith.cmpf ogt, %43, %44 : vector<1x256xf32>
    %cst_34 = arith.constant 0.000000e+00 : f32
    %46 = vector.shape_cast %45 : vector<1x256xi1> to vector<1x256xi1>
    %47 = vector.broadcast %46 : vector<1x256xi1> to vector<3x256xi1>
    %48 = vector.broadcast %cst_34 : f32 to vector<3x256xf32>
    %49 = arith.select %47, %41, %48 : vector<3x256xi1>, vector<3x256xf32>
    %c3_35 = arith.constant 3 : index
    %c0_36 = arith.constant 0 : index
    %c0_37 = arith.constant 0 : index
    %50 = vector.load %arg2[%c3_35, %c0_36, %c0_37] : memref<9x32x3xf32, #tpu.memory_space<vmem>>, vector<1x32x3xf32>
    %51 = vector.shape_cast %50 : vector<1x32x3xf32> to vector<32x3xf32>
    %cst_38 = arith.constant dense<0.000000e+00> : vector<32x256xf32>
    %52 = tpu.matmul %51, %49, %cst_38 {dimension_numbers = #tpu.dot_dimension_numbers<[1], [0], [0], [1], [0, 0, 1, 1], [], []>} : vector<32x3xf32>, vector<3x256xf32>, vector<32x256xf32> -> vector<32x256xf32>
    %53 = arith.addf %40, %52 : vector<32x256xf32>
    %c0_39 = arith.constant 0 : index
    %c128_40 = arith.constant 128 : index
    %54 = vector.load %arg20[%c0_39, %c128_40] : memref<3x512xf32, #tpu.memory_space<vmem>>, vector<3x256xf32>
    %c4 = arith.constant 4 : index
    %c0_41 = arith.constant 0 : index
    %c0_42 = arith.constant 0 : index
    %55 = vector.load %arg2[%c4, %c0_41, %c0_42] : memref<9x32x3xf32, #tpu.memory_space<vmem>>, vector<1x32x3xf32>
    %56 = vector.shape_cast %55 : vector<1x32x3xf32> to vector<32x3xf32>
    %cst_43 = arith.constant dense<0.000000e+00> : vector<32x256xf32>
    %57 = tpu.matmul %56, %54, %cst_43 {dimension_numbers = #tpu.dot_dimension_numbers<[1], [0], [0], [1], [0, 0, 1, 1], [], []>} : vector<32x3xf32>, vector<3x256xf32>, vector<32x256xf32> -> vector<32x256xf32>
    %58 = arith.addf %53, %57 : vector<32x256xf32>
    %c0_44 = arith.constant 0 : index
    %c129 = arith.constant 129 : index
    %59 = vector.load %arg20[%c0_44, %c129] : memref<3x512xf32, #tpu.memory_space<vmem>>, vector<3x256xf32>
    %c5 = arith.constant 5 : index
    %c0_45 = arith.constant 0 : index
    %c0_46 = arith.constant 0 : index
    %60 = vector.load %arg4[%c5, %c0_45, %c0_46] : memref<9x1x256xf32, #tpu.memory_space<vmem>>, vector<1x1x256xf32>
    %61 = vector.shape_cast %60 : vector<1x1x256xf32> to vector<1x256xf32>
    %cst_47 = arith.constant 5.000000e-01 : f32
    %62 = vector.broadcast %cst_47 : f32 to vector<1x256xf32>
    %63 = arith.cmpf ogt, %61, %62 : vector<1x256xf32>
    %cst_48 = arith.constant 0.000000e+00 : f32
    %64 = vector.shape_cast %63 : vector<1x256xi1> to vector<1x256xi1>
    %65 = vector.broadcast %64 : vector<1x256xi1> to vector<3x256xi1>
    %66 = vector.broadcast %cst_48 : f32 to vector<3x256xf32>
    %67 = arith.select %65, %59, %66 : vector<3x256xi1>, vector<3x256xf32>
    %c5_49 = arith.constant 5 : index
    %c0_50 = arith.constant 0 : index
    %c0_51 = arith.constant 0 : index
    %68 = vector.load %arg2[%c5_49, %c0_50, %c0_51] : memref<9x32x3xf32, #tpu.memory_space<vmem>>, vector<1x32x3xf32>
    %69 = vector.shape_cast %68 : vector<1x32x3xf32> to vector<32x3xf32>
    %cst_52 = arith.constant dense<0.000000e+00> : vector<32x256xf32>
    %70 = tpu.matmul %69, %67, %cst_52 {dimension_numbers = #tpu.dot_dimension_numbers<[1], [0], [0], [1], [0, 0, 1, 1], [], []>} : vector<32x3xf32>, vector<3x256xf32>, vector<32x256xf32> -> vector<32x256xf32>
    %71 = arith.addf %58, %70 : vector<32x256xf32>
    %c0_53 = arith.constant 0 : index
    %c143 = arith.constant 143 : index
    %72 = vector.load %arg20[%c0_53, %c143] : memref<3x512xf32, #tpu.memory_space<vmem>>, vector<3x256xf32>
    %c6 = arith.constant 6 : index
    %c0_54 = arith.constant 0 : index
    %c0_55 = arith.constant 0 : index
    %73 = vector.load %arg4[%c6, %c0_54, %c0_55] : memref<9x1x256xf32, #tpu.memory_space<vmem>>, vector<1x1x256xf32>
    %74 = vector.shape_cast %73 : vector<1x1x256xf32> to vector<1x256xf32>
    %cst_56 = arith.constant 5.000000e-01 : f32
    %75 = vector.broadcast %cst_56 : f32 to vector<1x256xf32>
    %76 = arith.cmpf ogt, %74, %75 : vector<1x256xf32>
    %cst_57 = arith.constant 0.000000e+00 : f32
    %77 = vector.shape_cast %76 : vector<1x256xi1> to vector<1x256xi1>
    %78 = vector.broadcast %77 : vector<1x256xi1> to vector<3x256xi1>
    %79 = vector.broadcast %cst_57 : f32 to vector<3x256xf32>
    %80 = arith.select %78, %72, %79 : vector<3x256xi1>, vector<3x256xf32>
    %c6_58 = arith.constant 6 : index
    %c0_59 = arith.constant 0 : index
    %c0_60 = arith.constant 0 : index
    %81 = vector.load %arg2[%c6_58, %c0_59, %c0_60] : memref<9x32x3xf32, #tpu.memory_space<vmem>>, vector<1x32x3xf32>
    %82 = vector.shape_cast %81 : vector<1x32x3xf32> to vector<32x3xf32>
    %cst_61 = arith.constant dense<0.000000e+00> : vector<32x256xf32>
    %83 = tpu.matmul %82, %80, %cst_61 {dimension_numbers = #tpu.dot_dimension_numbers<[1], [0], [0], [1], [0, 0, 1, 1], [], []>} : vector<32x3xf32>, vector<3x256xf32>, vector<32x256xf32> -> vector<32x256xf32>
    %84 = arith.addf %71, %83 : vector<32x256xf32>
    %c0_62 = arith.constant 0 : index
    %c144 = arith.constant 144 : index
    %85 = vector.load %arg20[%c0_62, %c144] : memref<3x512xf32, #tpu.memory_space<vmem>>, vector<3x256xf32>
    %c7 = arith.constant 7 : index
    %c0_63 = arith.constant 0 : index
    %c0_64 = arith.constant 0 : index
    %86 = vector.load %arg4[%c7, %c0_63, %c0_64] : memref<9x1x256xf32, #tpu.memory_space<vmem>>, vector<1x1x256xf32>
    %87 = vector.shape_cast %86 : vector<1x1x256xf32> to vector<1x256xf32>
    %cst_65 = arith.constant 5.000000e-01 : f32
    %88 = vector.broadcast %cst_65 : f32 to vector<1x256xf32>
    %89 = arith.cmpf ogt, %87, %88 : vector<1x256xf32>
    %cst_66 = arith.constant 0.000000e+00 : f32
    %90 = vector.shape_cast %89 : vector<1x256xi1> to vector<1x256xi1>
    %91 = vector.broadcast %90 : vector<1x256xi1> to vector<3x256xi1>
    %92 = vector.broadcast %cst_66 : f32 to vector<3x256xf32>
    %93 = arith.select %91, %85, %92 : vector<3x256xi1>, vector<3x256xf32>
    %c7_67 = arith.constant 7 : index
    %c0_68 = arith.constant 0 : index
    %c0_69 = arith.constant 0 : index
    %94 = vector.load %arg2[%c7_67, %c0_68, %c0_69] : memref<9x32x3xf32, #tpu.memory_space<vmem>>, vector<1x32x3xf32>
    %95 = vector.shape_cast %94 : vector<1x32x3xf32> to vector<32x3xf32>
    %cst_70 = arith.constant dense<0.000000e+00> : vector<32x256xf32>
    %96 = tpu.matmul %95, %93, %cst_70 {dimension_numbers = #tpu.dot_dimension_numbers<[1], [0], [0], [1], [0, 0, 1, 1], [], []>} : vector<32x3xf32>, vector<3x256xf32>, vector<32x256xf32> -> vector<32x256xf32>
    %97 = arith.addf %84, %96 : vector<32x256xf32>
    %c0_71 = arith.constant 0 : index
    %c145 = arith.constant 145 : index
    %98 = vector.load %arg20[%c0_71, %c145] : memref<3x512xf32, #tpu.memory_space<vmem>>, vector<3x256xf32>
    %c8 = arith.constant 8 : index
    %c0_72 = arith.constant 0 : index
    %c0_73 = arith.constant 0 : index
    %99 = vector.load %arg4[%c8, %c0_72, %c0_73] : memref<9x1x256xf32, #tpu.memory_space<vmem>>, vector<1x1x256xf32>
    %100 = vector.shape_cast %99 : vector<1x1x256xf32> to vector<1x256xf32>
    %cst_74 = arith.constant 5.000000e-01 : f32
    %101 = vector.broadcast %cst_74 : f32 to vector<1x256xf32>
    %102 = arith.cmpf ogt, %100, %101 : vector<1x256xf32>
    %cst_75 = arith.constant 0.000000e+00 : f32
    %103 = vector.shape_cast %102 : vector<1x256xi1> to vector<1x256xi1>
    %104 = vector.broadcast %103 : vector<1x256xi1> to vector<3x256xi1>
    %105 = vector.broadcast %cst_75 : f32 to vector<3x256xf32>
    %106 = arith.select %104, %98, %105 : vector<3x256xi1>, vector<3x256xf32>
    %c8_76 = arith.constant 8 : index
    %c0_77 = arith.constant 0 : index
    %c0_78 = arith.constant 0 : index
    %107 = vector.load %arg2[%c8_76, %c0_77, %c0_78] : memref<9x32x3xf32, #tpu.memory_space<vmem>>, vector<1x32x3xf32>
    %108 = vector.shape_cast %107 : vector<1x32x3xf32> to vector<32x3xf32>
    %cst_79 = arith.constant dense<0.000000e+00> : vector<32x256xf32>
    %109 = tpu.matmul %108, %106, %cst_79 {dimension_numbers = #tpu.dot_dimension_numbers<[1], [0], [0], [1], [0, 0, 1, 1], [], []>} : vector<32x3xf32>, vector<3x256xf32>, vector<32x256xf32> -> vector<32x256xf32>
    %110 = arith.addf %97, %109 : vector<32x256xf32>
    %c0_80 = arith.constant 0 : index
    %c0_81 = arith.constant 0 : index
    %111 = vector.load %arg3[%c0_80, %c0_81] : memref<32x1xf32, #tpu.memory_space<vmem>>, vector<32x1xf32>
    %112 = vector.broadcast %111 : vector<32x1xf32> to vector<32x256xf32>
    %113 = arith.addf %110, %112 : vector<32x256xf32>
    %cst_82 = arith.constant 0.000000e+00 : f32
    %114 = vector.broadcast %cst_82 : f32 to vector<32x256xf32>
    %115 = arith.cmpf ogt, %113, %114 : vector<32x256xf32>
    %116 = math.exp %113 : vector<32x256xf32>
    %cst_83 = arith.constant 1.000000e+00 : f32
    %117 = vector.broadcast %cst_83 : f32 to vector<32x256xf32>
    %118 = arith.subf %116, %117 : vector<32x256xf32>
    %119 = arith.select %115, %113, %118 : vector<32x256xi1>, vector<32x256xf32>
    %c0_84 = arith.constant 0 : index
    %c0_85 = arith.constant 0 : index
    %c0_86 = arith.constant 0 : index
    %120 = vector.load %arg5[%c0_84, %c0_85, %c0_86] : memref<4x256x64xf32, #tpu.memory_space<vmem>>, vector<1x256x64xf32>
    %121 = vector.shape_cast %120 : vector<1x256x64xf32> to vector<256x64xf32>
    %cst_87 = arith.constant dense<0.000000e+00> : vector<32x64xf32>
    %122 = tpu.matmul %119, %121, %cst_87 {dimension_numbers = #tpu.dot_dimension_numbers<[1], [0], [0], [1], [0, 0, 1, 1], [], []>} : vector<32x256xf32>, vector<256x64xf32>, vector<32x64xf32> -> vector<32x64xf32>
    %c1_88 = arith.constant 1 : index
    %c0_89 = arith.constant 0 : index
    %c0_90 = arith.constant 0 : index
    %123 = vector.load %arg5[%c1_88, %c0_89, %c0_90] : memref<4x256x64xf32, #tpu.memory_space<vmem>>, vector<1x256x64xf32>
    %124 = vector.shape_cast %123 : vector<1x256x64xf32> to vector<256x64xf32>
    %cst_91 = arith.constant dense<0.000000e+00> : vector<32x64xf32>
    %125 = tpu.matmul %119, %124, %cst_91 {dimension_numbers = #tpu.dot_dimension_numbers<[1], [0], [0], [1], [0, 0, 1, 1], [], []>} : vector<32x256xf32>, vector<256x64xf32>, vector<32x64xf32> -> vector<32x64xf32>
    %c2_92 = arith.constant 2 : index
    %c0_93 = arith.constant 0 : index
    %c0_94 = arith.constant 0 : index
    %126 = vector.load %arg5[%c2_92, %c0_93, %c0_94] : memref<4x256x64xf32, #tpu.memory_space<vmem>>, vector<1x256x64xf32>
    %127 = vector.shape_cast %126 : vector<1x256x64xf32> to vector<256x64xf32>
    %cst_95 = arith.constant dense<0.000000e+00> : vector<32x64xf32>
    %128 = tpu.matmul %119, %127, %cst_95 {dimension_numbers = #tpu.dot_dimension_numbers<[1], [0], [0], [1], [0, 0, 1, 1], [], []>} : vector<32x256xf32>, vector<256x64xf32>, vector<32x64xf32> -> vector<32x64xf32>
    %c3_96 = arith.constant 3 : index
    %c0_97 = arith.constant 0 : index
    %c0_98 = arith.constant 0 : index
    %129 = vector.load %arg5[%c3_96, %c0_97, %c0_98] : memref<4x256x64xf32, #tpu.memory_space<vmem>>, vector<1x256x64xf32>
    %130 = vector.shape_cast %129 : vector<1x256x64xf32> to vector<256x64xf32>
    %cst_99 = arith.constant dense<0.000000e+00> : vector<32x64xf32>
    %131 = tpu.matmul %119, %130, %cst_99 {dimension_numbers = #tpu.dot_dimension_numbers<[1], [0], [0], [1], [0, 0, 1, 1], [], []>} : vector<32x256xf32>, vector<256x64xf32>, vector<32x64xf32> -> vector<32x64xf32>
    %132 = arith.maximumf %122, %125 : vector<32x64xf32>
    %133 = arith.maximumf %128, %131 : vector<32x64xf32>
    %134 = arith.maximumf %132, %133 : vector<32x64xf32>
    %c0_100 = arith.constant 0 : index
    %c128_101 = arith.constant 128 : index
    %135 = vector.load %arg21[%c0_100, %c128_101] : memref<32x320xf32, #tpu.memory_space<vmem>>, vector<32x64xf32>
    tpu.vector_store %arg21[%c0_100, %c128_101], %134 {strides = array<i32>} : memref<32x320xf32, #tpu.memory_space<vmem>>, vector<32x64xf32>,
    %c0_102 = arith.constant 0 : index
    %c119 = arith.constant 119 : index
    %136 = vector.load %arg21[%c0_102, %c119] : memref<32x320xf32, #tpu.memory_space<vmem>>, vector<32x64xf32>
    %c0_103 = arith.constant 0 : index
    %c0_104 = arith.constant 0 : index
    %c0_105 = arith.constant 0 : index
    %137 = vector.load %arg8[%c0_103, %c0_104, %c0_105] : memref<9x1x64xf32, #tpu.memory_space<vmem>>, vector<1x1x64xf32>
    %138 = vector.shape_cast %137 : vector<1x1x64xf32> to vector<1x64xf32>
    %cst_106 = arith.constant 5.000000e-01 : f32
    %139 = vector.broadcast %cst_106 : f32 to vector<1x64xf32>
    %140 = arith.cmpf ogt, %138, %139 : vector<1x64xf32>
    %cst_107 = arith.constant 0.000000e+00 : f32
    %141 = vector.shape_cast %140 : vector<1x64xi1> to vector<1x64xi1>
    %142 = vector.broadcast %141 : vector<1x64xi1> to vector<32x64xi1>
    %143 = vector.broadcast %cst_107 : f32 to vector<32x64xf32>
    %144 = arith.select %142, %136, %143 : vector<32x64xi1>, vector<32x64xf32>
    %c0_108 = arith.constant 0 : index
    %c0_109 = arith.constant 0 : index
    %c0_110 = arith.constant 0 : index
    %145 = vector.load %arg6[%c0_108, %c0_109, %c0_110] : memref<9x16x32xf32, #tpu.memory_space<vmem>>, vector<1x16x32xf32>
    %146 = vector.shape_cast %145 : vector<1x16x32xf32> to vector<16x32xf32>
    %cst_111 = arith.constant dense<0.000000e+00> : vector<16x64xf32>
    %147 = tpu.matmul %146, %144, %cst_111 {dimension_numbers = #tpu.dot_dimension_numbers<[1], [0], [0], [1], [0, 0, 1, 1], [], []>} : vector<16x32xf32>, vector<32x64xf32>, vector<16x64xf32> -> vector<16x64xf32>
    %c0_112 = arith.constant 0 : index
    %c120 = arith.constant 120 : index
    %148 = vector.load %arg21[%c0_112, %c120] : memref<32x320xf32, #tpu.memory_space<vmem>>, vector<32x64xf32>
    %c1_113 = arith.constant 1 : index
    %c0_114 = arith.constant 0 : index
    %c0_115 = arith.constant 0 : index
    %149 = vector.load %arg8[%c1_113, %c0_114, %c0_115] : memref<9x1x64xf32, #tpu.memory_space<vmem>>, vector<1x1x64xf32>
    %150 = vector.shape_cast %149 : vector<1x1x64xf32> to vector<1x64xf32>
    %cst_116 = arith.constant 5.000000e-01 : f32
    %151 = vector.broadcast %cst_116 : f32 to vector<1x64xf32>
    %152 = arith.cmpf ogt, %150, %151 : vector<1x64xf32>
    %cst_117 = arith.constant 0.000000e+00 : f32
    %153 = vector.shape_cast %152 : vector<1x64xi1> to vector<1x64xi1>
    %154 = vector.broadcast %153 : vector<1x64xi1> to vector<32x64xi1>
    %155 = vector.broadcast %cst_117 : f32 to vector<32x64xf32>
    %156 = arith.select %154, %148, %155 : vector<32x64xi1>, vector<32x64xf32>
    %c1_118 = arith.constant 1 : index
    %c0_119 = arith.constant 0 : index
    %c0_120 = arith.constant 0 : index
    %157 = vector.load %arg6[%c1_118, %c0_119, %c0_120] : memref<9x16x32xf32, #tpu.memory_space<vmem>>, vector<1x16x32xf32>
    %158 = vector.shape_cast %157 : vector<1x16x32xf32> to vector<16x32xf32>
    %cst_121 = arith.constant dense<0.000000e+00> : vector<16x64xf32>
    %159 = tpu.matmul %158, %156, %cst_121 {dimension_numbers = #tpu.dot_dimension_numbers<[1], [0], [0], [1], [0, 0, 1, 1], [], []>} : vector<16x32xf32>, vector<32x64xf32>, vector<16x64xf32> -> vector<16x64xf32>
    %160 = arith.addf %147, %159 : vector<16x64xf32>
    %c0_122 = arith.constant 0 : index
    %c121 = arith.constant 121 : index
    %161 = vector.load %arg21[%c0_122, %c121] : memref<32x320xf32, #tpu.memory_space<vmem>>, vector<32x64xf32>
    %c2_123 = arith.constant 2 : index
    %c0_124 = arith.constant 0 : index
    %c0_125 = arith.constant 0 : index
    %162 = vector.load %arg8[%c2_123, %c0_124, %c0_125] : memref<9x1x64xf32, #tpu.memory_space<vmem>>, vector<1x1x64xf32>
    %163 = vector.shape_cast %162 : vector<1x1x64xf32> to vector<1x64xf32>
    %cst_126 = arith.constant 5.000000e-01 : f32
    %164 = vector.broadcast %cst_126 : f32 to vector<1x64xf32>
    %165 = arith.cmpf ogt, %163, %164 : vector<1x64xf32>
    %cst_127 = arith.constant 0.000000e+00 : f32
    %166 = vector.shape_cast %165 : vector<1x64xi1> to vector<1x64xi1>
    %167 = vector.broadcast %166 : vector<1x64xi1> to vector<32x64xi1>
    %168 = vector.broadcast %cst_127 : f32 to vector<32x64xf32>
    %169 = arith.select %167, %161, %168 : vector<32x64xi1>, vector<32x64xf32>
    %c2_128 = arith.constant 2 : index
    %c0_129 = arith.constant 0 : index
    %c0_130 = arith.constant 0 : index
    %170 = vector.load %arg6[%c2_128, %c0_129, %c0_130] : memref<9x16x32xf32, #tpu.memory_space<vmem>>, vector<1x16x32xf32>
    %171 = vector.shape_cast %170 : vector<1x16x32xf32> to vector<16x32xf32>
    %cst_131 = arith.constant dense<0.000000e+00> : vector<16x64xf32>
    %172 = tpu.matmul %171, %169, %cst_131 {dimension_numbers = #tpu.dot_dimension_numbers<[1], [0], [0], [1], [0, 0, 1, 1], [], []>} : vector<16x32xf32>, vector<32x64xf32>, vector<16x64xf32> -> vector<16x64xf32>
    %173 = arith.addf %160, %172 : vector<16x64xf32>
    %c0_132 = arith.constant 0 : index
    %c127_133 = arith.constant 127 : index
    %174 = vector.load %arg21[%c0_132, %c127_133] : memref<32x320xf32, #tpu.memory_space<vmem>>, vector<32x64xf32>
    %c3_134 = arith.constant 3 : index
    %c0_135 = arith.constant 0 : index
    %c0_136 = arith.constant 0 : index
    %175 = vector.load %arg8[%c3_134, %c0_135, %c0_136] : memref<9x1x64xf32, #tpu.memory_space<vmem>>, vector<1x1x64xf32>
    %176 = vector.shape_cast %175 : vector<1x1x64xf32> to vector<1x64xf32>
    %cst_137 = arith.constant 5.000000e-01 : f32
    %177 = vector.broadcast %cst_137 : f32 to vector<1x64xf32>
    %178 = arith.cmpf ogt, %176, %177 : vector<1x64xf32>
    %cst_138 = arith.constant 0.000000e+00 : f32
    %179 = vector.shape_cast %178 : vector<1x64xi1> to vector<1x64xi1>
    %180 = vector.broadcast %179 : vector<1x64xi1> to vector<32x64xi1>
    %181 = vector.broadcast %cst_138 : f32 to vector<32x64xf32>
    %182 = arith.select %180, %174, %181 : vector<32x64xi1>, vector<32x64xf32>
    %c3_139 = arith.constant 3 : index
    %c0_140 = arith.constant 0 : index
    %c0_141 = arith.constant 0 : index
    %183 = vector.load %arg6[%c3_139, %c0_140, %c0_141] : memref<9x16x32xf32, #tpu.memory_space<vmem>>, vector<1x16x32xf32>
    %184 = vector.shape_cast %183 : vector<1x16x32xf32> to vector<16x32xf32>
    %cst_142 = arith.constant dense<0.000000e+00> : vector<16x64xf32>
    %185 = tpu.matmul %184, %182, %cst_142 {dimension_numbers = #tpu.dot_dimension_numbers<[1], [0], [0], [1], [0, 0, 1, 1], [], []>} : vector<16x32xf32>, vector<32x64xf32>, vector<16x64xf32> -> vector<16x64xf32>
    %186 = arith.addf %173, %185 : vector<16x64xf32>
    %c0_143 = arith.constant 0 : index
    %c128_144 = arith.constant 128 : index
    %187 = vector.load %arg21[%c0_143, %c128_144] : memref<32x320xf32, #tpu.memory_space<vmem>>, vector<32x64xf32>
    %c4_145 = arith.constant 4 : index
    %c0_146 = arith.constant 0 : index
    %c0_147 = arith.constant 0 : index
    %188 = vector.load %arg6[%c4_145, %c0_146, %c0_147] : memref<9x16x32xf32, #tpu.memory_space<vmem>>, vector<1x16x32xf32>
    %189 = vector.shape_cast %188 : vector<1x16x32xf32> to vector<16x32xf32>
    %cst_148 = arith.constant dense<0.000000e+00> : vector<16x64xf32>
    %190 = tpu.matmul %189, %187, %cst_148 {dimension_numbers = #tpu.dot_dimension_numbers<[1], [0], [0], [1], [0, 0, 1, 1], [], []>} : vector<16x32xf32>, vector<32x64xf32>, vector<16x64xf32> -> vector<16x64xf32>
    %191 = arith.addf %186, %190 : vector<16x64xf32>
    %c0_149 = arith.constant 0 : index
    %c129_150 = arith.constant 129 : index
    %192 = vector.load %arg21[%c0_149, %c129_150] : memref<32x320xf32, #tpu.memory_space<vmem>>, vector<32x64xf32>
    %c5_151 = arith.constant 5 : index
    %c0_152 = arith.constant 0 : index
    %c0_153 = arith.constant 0 : index
    %193 = vector.load %arg8[%c5_151, %c0_152, %c0_153] : memref<9x1x64xf32, #tpu.memory_space<vmem>>, vector<1x1x64xf32>
    %194 = vector.shape_cast %193 : vector<1x1x64xf32> to vector<1x64xf32>
    %cst_154 = arith.constant 5.000000e-01 : f32
    %195 = vector.broadcast %cst_154 : f32 to vector<1x64xf32>
    %196 = arith.cmpf ogt, %194, %195 : vector<1x64xf32>
    %cst_155 = arith.constant 0.000000e+00 : f32
    %197 = vector.shape_cast %196 : vector<1x64xi1> to vector<1x64xi1>
    %198 = vector.broadcast %197 : vector<1x64xi1> to vector<32x64xi1>
    %199 = vector.broadcast %cst_155 : f32 to vector<32x64xf32>
    %200 = arith.select %198, %192, %199 : vector<32x64xi1>, vector<32x64xf32>
    %c5_156 = arith.constant 5 : index
    %c0_157 = arith.constant 0 : index
    %c0_158 = arith.constant 0 : index
    %201 = vector.load %arg6[%c5_156, %c0_157, %c0_158] : memref<9x16x32xf32, #tpu.memory_space<vmem>>, vector<1x16x32xf32>
    %202 = vector.shape_cast %201 : vector<1x16x32xf32> to vector<16x32xf32>
    %cst_159 = arith.constant dense<0.000000e+00> : vector<16x64xf32>
    %203 = tpu.matmul %202, %200, %cst_159 {dimension_numbers = #tpu.dot_dimension_numbers<[1], [0], [0], [1], [0, 0, 1, 1], [], []>} : vector<16x32xf32>, vector<32x64xf32>, vector<16x64xf32> -> vector<16x64xf32>
    %204 = arith.addf %191, %203 : vector<16x64xf32>
    %c0_160 = arith.constant 0 : index
    %c135 = arith.constant 135 : index
    %205 = vector.load %arg21[%c0_160, %c135] : memref<32x320xf32, #tpu.memory_space<vmem>>, vector<32x64xf32>
    %c6_161 = arith.constant 6 : index
    %c0_162 = arith.constant 0 : index
    %c0_163 = arith.constant 0 : index
    %206 = vector.load %arg8[%c6_161, %c0_162, %c0_163] : memref<9x1x64xf32, #tpu.memory_space<vmem>>, vector<1x1x64xf32>
    %207 = vector.shape_cast %206 : vector<1x1x64xf32> to vector<1x64xf32>
    %cst_164 = arith.constant 5.000000e-01 : f32
    %208 = vector.broadcast %cst_164 : f32 to vector<1x64xf32>
    %209 = arith.cmpf ogt, %207, %208 : vector<1x64xf32>
    %cst_165 = arith.constant 0.000000e+00 : f32
    %210 = vector.shape_cast %209 : vector<1x64xi1> to vector<1x64xi1>
    %211 = vector.broadcast %210 : vector<1x64xi1> to vector<32x64xi1>
    %212 = vector.broadcast %cst_165 : f32 to vector<32x64xf32>
    %213 = arith.select %211, %205, %212 : vector<32x64xi1>, vector<32x64xf32>
    %c6_166 = arith.constant 6 : index
    %c0_167 = arith.constant 0 : index
    %c0_168 = arith.constant 0 : index
    %214 = vector.load %arg6[%c6_166, %c0_167, %c0_168] : memref<9x16x32xf32, #tpu.memory_space<vmem>>, vector<1x16x32xf32>
    %215 = vector.shape_cast %214 : vector<1x16x32xf32> to vector<16x32xf32>
    %cst_169 = arith.constant dense<0.000000e+00> : vector<16x64xf32>
    %216 = tpu.matmul %215, %213, %cst_169 {dimension_numbers = #tpu.dot_dimension_numbers<[1], [0], [0], [1], [0, 0, 1, 1], [], []>} : vector<16x32xf32>, vector<32x64xf32>, vector<16x64xf32> -> vector<16x64xf32>
    %217 = arith.addf %204, %216 : vector<16x64xf32>
    %c0_170 = arith.constant 0 : index
    %c136 = arith.constant 136 : index
    %218 = vector.load %arg21[%c0_170, %c136] : memref<32x320xf32, #tpu.memory_space<vmem>>, vector<32x64xf32>
    %c7_171 = arith.constant 7 : index
    %c0_172 = arith.constant 0 : index
    %c0_173 = arith.constant 0 : index
    %219 = vector.load %arg8[%c7_171, %c0_172, %c0_173] : memref<9x1x64xf32, #tpu.memory_space<vmem>>, vector<1x1x64xf32>
    %220 = vector.shape_cast %219 : vector<1x1x64xf32> to vector<1x64xf32>
    %cst_174 = arith.constant 5.000000e-01 : f32
    %221 = vector.broadcast %cst_174 : f32 to vector<1x64xf32>
    %222 = arith.cmpf ogt, %220, %221 : vector<1x64xf32>
    %cst_175 = arith.constant 0.000000e+00 : f32
    %223 = vector.shape_cast %222 : vector<1x64xi1> to vector<1x64xi1>
    %224 = vector.broadcast %223 : vector<1x64xi1> to vector<32x64xi1>
    %225 = vector.broadcast %cst_175 : f32 to vector<32x64xf32>
    %226 = arith.select %224, %218, %225 : vector<32x64xi1>, vector<32x64xf32>
    %c7_176 = arith.constant 7 : index
    %c0_177 = arith.constant 0 : index
    %c0_178 = arith.constant 0 : index
    %227 = vector.load %arg6[%c7_176, %c0_177, %c0_178] : memref<9x16x32xf32, #tpu.memory_space<vmem>>, vector<1x16x32xf32>
    %228 = vector.shape_cast %227 : vector<1x16x32xf32> to vector<16x32xf32>
    %cst_179 = arith.constant dense<0.000000e+00> : vector<16x64xf32>
    %229 = tpu.matmul %228, %226, %cst_179 {dimension_numbers = #tpu.dot_dimension_numbers<[1], [0], [0], [1], [0, 0, 1, 1], [], []>} : vector<16x32xf32>, vector<32x64xf32>, vector<16x64xf32> -> vector<16x64xf32>
    %230 = arith.addf %217, %229 : vector<16x64xf32>
    %c0_180 = arith.constant 0 : index
    %c137 = arith.constant 137 : index
    %231 = vector.load %arg21[%c0_180, %c137] : memref<32x320xf32, #tpu.memory_space<vmem>>, vector<32x64xf32>
    %c8_181 = arith.constant 8 : index
    %c0_182 = arith.constant 0 : index
    %c0_183 = arith.constant 0 : index
    %232 = vector.load %arg8[%c8_181, %c0_182, %c0_183] : memref<9x1x64xf32, #tpu.memory_space<vmem>>, vector<1x1x64xf32>
    %233 = vector.shape_cast %232 : vector<1x1x64xf32> to vector<1x64xf32>
    %cst_184 = arith.constant 5.000000e-01 : f32
    %234 = vector.broadcast %cst_184 : f32 to vector<1x64xf32>
    %235 = arith.cmpf ogt, %233, %234 : vector<1x64xf32>
    %cst_185 = arith.constant 0.000000e+00 : f32
    %236 = vector.shape_cast %235 : vector<1x64xi1> to vector<1x64xi1>
    %237 = vector.broadcast %236 : vector<1x64xi1> to vector<32x64xi1>
    %238 = vector.broadcast %cst_185 : f32 to vector<32x64xf32>
    %239 = arith.select %237, %231, %238 : vector<32x64xi1>, vector<32x64xf32>
    %c8_186 = arith.constant 8 : index
    %c0_187 = arith.constant 0 : index
    %c0_188 = arith.constant 0 : index
    %240 = vector.load %arg6[%c8_186, %c0_187, %c0_188] : memref<9x16x32xf32, #tpu.memory_space<vmem>>, vector<1x16x32xf32>
    %241 = vector.shape_cast %240 : vector<1x16x32xf32> to vector<16x32xf32>
    %cst_189 = arith.constant dense<0.000000e+00> : vector<16x64xf32>
    %242 = tpu.matmul %241, %239, %cst_189 {dimension_numbers = #tpu.dot_dimension_numbers<[1], [0], [0], [1], [0, 0, 1, 1], [], []>} : vector<16x32xf32>, vector<32x64xf32>, vector<16x64xf32> -> vector<16x64xf32>
    %243 = arith.addf %230, %242 : vector<16x64xf32>
    %c0_190 = arith.constant 0 : index
    %c0_191 = arith.constant 0 : index
    %244 = vector.load %arg7[%c0_190, %c0_191] : memref<16x1xf32, #tpu.memory_space<vmem>>, vector<16x1xf32>
    %245 = vector.broadcast %244 : vector<16x1xf32> to vector<16x64xf32>
    %246 = arith.addf %243, %245 : vector<16x64xf32>
    %cst_192 = arith.constant 0.000000e+00 : f32
    %247 = vector.broadcast %cst_192 : f32 to vector<16x64xf32>
    %248 = arith.cmpf ogt, %246, %247 : vector<16x64xf32>
    %249 = math.exp %246 : vector<16x64xf32>
    %cst_193 = arith.constant 1.000000e+00 : f32
    %250 = vector.broadcast %cst_193 : f32 to vector<16x64xf32>
    %251 = arith.subf %249, %250 : vector<16x64xf32>
    %252 = arith.select %248, %246, %251 : vector<16x64xi1>, vector<16x64xf32>
    %c0_194 = arith.constant 0 : index
    %c0_195 = arith.constant 0 : index
    %c0_196 = arith.constant 0 : index
    %253 = vector.load %arg9[%c0_194, %c0_195, %c0_196] : memref<4x64x16xf32, #tpu.memory_space<vmem>>, vector<1x64x16xf32>
    %254 = vector.shape_cast %253 : vector<1x64x16xf32> to vector<64x16xf32>
    %cst_197 = arith.constant dense<0.000000e+00> : vector<16x16xf32>
    %255 = tpu.matmul %252, %254, %cst_197 {dimension_numbers = #tpu.dot_dimension_numbers<[1], [0], [0], [1], [0, 0, 1, 1], [], []>} : vector<16x64xf32>, vector<64x16xf32>, vector<16x16xf32> -> vector<16x16xf32>
    %c1_198 = arith.constant 1 : index
    %c0_199 = arith.constant 0 : index
    %c0_200 = arith.constant 0 : index
    %256 = vector.load %arg9[%c1_198, %c0_199, %c0_200] : memref<4x64x16xf32, #tpu.memory_space<vmem>>, vector<1x64x16xf32>
    %257 = vector.shape_cast %256 : vector<1x64x16xf32> to vector<64x16xf32>
    %cst_201 = arith.constant dense<0.000000e+00> : vector<16x16xf32>
    %258 = tpu.matmul %252, %257, %cst_201 {dimension_numbers = #tpu.dot_dimension_numbers<[1], [0], [0], [1], [0, 0, 1, 1], [], []>} : vector<16x64xf32>, vector<64x16xf32>, vector<16x16xf32> -> vector<16x16xf32>
    %c2_202 = arith.constant 2 : index
    %c0_203 = arith.constant 0 : index
    %c0_204 = arith.constant 0 : index
    %259 = vector.load %arg9[%c2_202, %c0_203, %c0_204] : memref<4x64x16xf32, #tpu.memory_space<vmem>>, vector<1x64x16xf32>
    %260 = vector.shape_cast %259 : vector<1x64x16xf32> to vector<64x16xf32>
    %cst_205 = arith.constant dense<0.000000e+00> : vector<16x16xf32>
    %261 = tpu.matmul %252, %260, %cst_205 {dimension_numbers = #tpu.dot_dimension_numbers<[1], [0], [0], [1], [0, 0, 1, 1], [], []>} : vector<16x64xf32>, vector<64x16xf32>, vector<16x16xf32> -> vector<16x16xf32>
    %c3_206 = arith.constant 3 : index
    %c0_207 = arith.constant 0 : index
    %c0_208 = arith.constant 0 : index
    %262 = vector.load %arg9[%c3_206, %c0_207, %c0_208] : memref<4x64x16xf32, #tpu.memory_space<vmem>>, vector<1x64x16xf32>
    %263 = vector.shape_cast %262 : vector<1x64x16xf32> to vector<64x16xf32>
    %cst_209 = arith.constant dense<0.000000e+00> : vector<16x16xf32>
    %264 = tpu.matmul %252, %263, %cst_209 {dimension_numbers = #tpu.dot_dimension_numbers<[1], [0], [0], [1], [0, 0, 1, 1], [], []>} : vector<16x64xf32>, vector<64x16xf32>, vector<16x16xf32> -> vector<16x16xf32>
    %265 = arith.maximumf %255, %258 : vector<16x16xf32>
    %266 = arith.maximumf %261, %264 : vector<16x16xf32>
    %267 = arith.maximumf %265, %266 : vector<16x16xf32>
    %c0_210 = arith.constant 0 : index
    %c128_211 = arith.constant 128 : index
    %268 = vector.load %arg22[%c0_210, %c128_211] : memref<16x272xf32, #tpu.memory_space<vmem>>, vector<16x16xf32>
    tpu.vector_store %arg22[%c0_210, %c128_211], %267 {strides = array<i32>} : memref<16x272xf32, #tpu.memory_space<vmem>>, vector<16x16xf32>,
    %c0_212 = arith.constant 0 : index
    %c123 = arith.constant 123 : index
    %269 = vector.load %arg22[%c0_212, %c123] : memref<16x272xf32, #tpu.memory_space<vmem>>, vector<16x16xf32>
    %c0_213 = arith.constant 0 : index
    %c0_214 = arith.constant 0 : index
    %c0_215 = arith.constant 0 : index
    %270 = vector.load %arg12[%c0_213, %c0_214, %c0_215] : memref<9x1x16xf32, #tpu.memory_space<vmem>>, vector<1x1x16xf32>
    %271 = vector.shape_cast %270 : vector<1x1x16xf32> to vector<1x16xf32>
    %cst_216 = arith.constant 5.000000e-01 : f32
    %272 = vector.broadcast %cst_216 : f32 to vector<1x16xf32>
    %273 = arith.cmpf ogt, %271, %272 : vector<1x16xf32>
    %cst_217 = arith.constant 0.000000e+00 : f32
    %274 = vector.shape_cast %273 : vector<1x16xi1> to vector<1x16xi1>
    %275 = vector.broadcast %274 : vector<1x16xi1> to vector<16x16xi1>
    %276 = vector.broadcast %cst_217 : f32 to vector<16x16xf32>
    %277 = arith.select %275, %269, %276 : vector<16x16xi1>, vector<16x16xf32>
    %c0_218 = arith.constant 0 : index
    %c0_219 = arith.constant 0 : index
    %c0_220 = arith.constant 0 : index
    %278 = vector.load %arg10[%c0_218, %c0_219, %c0_220] : memref<9x8x16xf32, #tpu.memory_space<vmem>>, vector<1x8x16xf32>
    %279 = vector.shape_cast %278 : vector<1x8x16xf32> to vector<8x16xf32>
    %cst_221 = arith.constant dense<0.000000e+00> : vector<8x16xf32>
    %280 = tpu.matmul %279, %277, %cst_221 {dimension_numbers = #tpu.dot_dimension_numbers<[1], [0], [0], [1], [0, 0, 1, 1], [], []>} : vector<8x16xf32>, vector<16x16xf32>, vector<8x16xf32> -> vector<8x16xf32>
    %c0_222 = arith.constant 0 : index
    %c124 = arith.constant 124 : index
    %281 = vector.load %arg22[%c0_222, %c124] : memref<16x272xf32, #tpu.memory_space<vmem>>, vector<16x16xf32>
    %c1_223 = arith.constant 1 : index
    %c0_224 = arith.constant 0 : index
    %c0_225 = arith.constant 0 : index
    %282 = vector.load %arg12[%c1_223, %c0_224, %c0_225] : memref<9x1x16xf32, #tpu.memory_space<vmem>>, vector<1x1x16xf32>
    %283 = vector.shape_cast %282 : vector<1x1x16xf32> to vector<1x16xf32>
    %cst_226 = arith.constant 5.000000e-01 : f32
    %284 = vector.broadcast %cst_226 : f32 to vector<1x16xf32>
    %285 = arith.cmpf ogt, %283, %284 : vector<1x16xf32>
    %cst_227 = arith.constant 0.000000e+00 : f32
    %286 = vector.shape_cast %285 : vector<1x16xi1> to vector<1x16xi1>
    %287 = vector.broadcast %286 : vector<1x16xi1> to vector<16x16xi1>
    %288 = vector.broadcast %cst_227 : f32 to vector<16x16xf32>
    %289 = arith.select %287, %281, %288 : vector<16x16xi1>, vector<16x16xf32>
    %c1_228 = arith.constant 1 : index
    %c0_229 = arith.constant 0 : index
    %c0_230 = arith.constant 0 : index
    %290 = vector.load %arg10[%c1_228, %c0_229, %c0_230] : memref<9x8x16xf32, #tpu.memory_space<vmem>>, vector<1x8x16xf32>
    %291 = vector.shape_cast %290 : vector<1x8x16xf32> to vector<8x16xf32>
    %cst_231 = arith.constant dense<0.000000e+00> : vector<8x16xf32>
    %292 = tpu.matmul %291, %289, %cst_231 {dimension_numbers = #tpu.dot_dimension_numbers<[1], [0], [0], [1], [0, 0, 1, 1], [], []>} : vector<8x16xf32>, vector<16x16xf32>, vector<8x16xf32> -> vector<8x16xf32>
    %293 = arith.addf %280, %292 : vector<8x16xf32>
    %c0_232 = arith.constant 0 : index
    %c125 = arith.constant 125 : index
    %294 = vector.load %arg22[%c0_232, %c125] : memref<16x272xf32, #tpu.memory_space<vmem>>, vector<16x16xf32>
    %c2_233 = arith.constant 2 : index
    %c0_234 = arith.constant 0 : index
    %c0_235 = arith.constant 0 : index
    %295 = vector.load %arg12[%c2_233, %c0_234, %c0_235] : memref<9x1x16xf32, #tpu.memory_space<vmem>>, vector<1x1x16xf32>
    %296 = vector.shape_cast %295 : vector<1x1x16xf32> to vector<1x16xf32>
    %cst_236 = arith.constant 5.000000e-01 : f32
    %297 = vector.broadcast %cst_236 : f32 to vector<1x16xf32>
    %298 = arith.cmpf ogt, %296, %297 : vector<1x16xf32>
    %cst_237 = arith.constant 0.000000e+00 : f32
    %299 = vector.shape_cast %298 : vector<1x16xi1> to vector<1x16xi1>
    %300 = vector.broadcast %299 : vector<1x16xi1> to vector<16x16xi1>
    %301 = vector.broadcast %cst_237 : f32 to vector<16x16xf32>
    %302 = arith.select %300, %294, %301 : vector<16x16xi1>, vector<16x16xf32>
    %c2_238 = arith.constant 2 : index
    %c0_239 = arith.constant 0 : index
    %c0_240 = arith.constant 0 : index
    %303 = vector.load %arg10[%c2_238, %c0_239, %c0_240] : memref<9x8x16xf32, #tpu.memory_space<vmem>>, vector<1x8x16xf32>
    %304 = vector.shape_cast %303 : vector<1x8x16xf32> to vector<8x16xf32>
    %cst_241 = arith.constant dense<0.000000e+00> : vector<8x16xf32>
    %305 = tpu.matmul %304, %302, %cst_241 {dimension_numbers = #tpu.dot_dimension_numbers<[1], [0], [0], [1], [0, 0, 1, 1], [], []>} : vector<8x16xf32>, vector<16x16xf32>, vector<8x16xf32> -> vector<8x16xf32>
    %306 = arith.addf %293, %305 : vector<8x16xf32>
    %c0_242 = arith.constant 0 : index
    %c127_243 = arith.constant 127 : index
    %307 = vector.load %arg22[%c0_242, %c127_243] : memref<16x272xf32, #tpu.memory_space<vmem>>, vector<16x16xf32>
    %c3_244 = arith.constant 3 : index
    %c0_245 = arith.constant 0 : index
    %c0_246 = arith.constant 0 : index
    %308 = vector.load %arg12[%c3_244, %c0_245, %c0_246] : memref<9x1x16xf32, #tpu.memory_space<vmem>>, vector<1x1x16xf32>
    %309 = vector.shape_cast %308 : vector<1x1x16xf32> to vector<1x16xf32>
    %cst_247 = arith.constant 5.000000e-01 : f32
    %310 = vector.broadcast %cst_247 : f32 to vector<1x16xf32>
    %311 = arith.cmpf ogt, %309, %310 : vector<1x16xf32>
    %cst_248 = arith.constant 0.000000e+00 : f32
    %312 = vector.shape_cast %311 : vector<1x16xi1> to vector<1x16xi1>
    %313 = vector.broadcast %312 : vector<1x16xi1> to vector<16x16xi1>
    %314 = vector.broadcast %cst_248 : f32 to vector<16x16xf32>
    %315 = arith.select %313, %307, %314 : vector<16x16xi1>, vector<16x16xf32>
    %c3_249 = arith.constant 3 : index
    %c0_250 = arith.constant 0 : index
    %c0_251 = arith.constant 0 : index
    %316 = vector.load %arg10[%c3_249, %c0_250, %c0_251] : memref<9x8x16xf32, #tpu.memory_space<vmem>>, vector<1x8x16xf32>
    %317 = vector.shape_cast %316 : vector<1x8x16xf32> to vector<8x16xf32>
    %cst_252 = arith.constant dense<0.000000e+00> : vector<8x16xf32>
    %318 = tpu.matmul %317, %315, %cst_252 {dimension_numbers = #tpu.dot_dimension_numbers<[1], [0], [0], [1], [0, 0, 1, 1], [], []>} : vector<8x16xf32>, vector<16x16xf32>, vector<8x16xf32> -> vector<8x16xf32>
    %319 = arith.addf %306, %318 : vector<8x16xf32>
    %c0_253 = arith.constant 0 : index
    %c128_254 = arith.constant 128 : index
    %320 = vector.load %arg22[%c0_253, %c128_254] : memref<16x272xf32, #tpu.memory_space<vmem>>, vector<16x16xf32>
    %c4_255 = arith.constant 4 : index
    %c0_256 = arith.constant 0 : index
    %c0_257 = arith.constant 0 : index
    %321 = vector.load %arg10[%c4_255, %c0_256, %c0_257] : memref<9x8x16xf32, #tpu.memory_space<vmem>>, vector<1x8x16xf32>
    %322 = vector.shape_cast %321 : vector<1x8x16xf32> to vector<8x16xf32>
    %cst_258 = arith.constant dense<0.000000e+00> : vector<8x16xf32>
    %323 = tpu.matmul %322, %320, %cst_258 {dimension_numbers = #tpu.dot_dimension_numbers<[1], [0], [0], [1], [0, 0, 1, 1], [], []>} : vector<8x16xf32>, vector<16x16xf32>, vector<8x16xf32> -> vector<8x16xf32>
    %324 = arith.addf %319, %323 : vector<8x16xf32>
    %c0_259 = arith.constant 0 : index
    %c129_260 = arith.constant 129 : index
    %325 = vector.load %arg22[%c0_259, %c129_260] : memref<16x272xf32, #tpu.memory_space<vmem>>, vector<16x16xf32>
    %c5_261 = arith.constant 5 : index
    %c0_262 = arith.constant 0 : index
    %c0_263 = arith.constant 0 : index
    %326 = vector.load %arg12[%c5_261, %c0_262, %c0_263] : memref<9x1x16xf32, #tpu.memory_space<vmem>>, vector<1x1x16xf32>
    %327 = vector.shape_cast %326 : vector<1x1x16xf32> to vector<1x16xf32>
    %cst_264 = arith.constant 5.000000e-01 : f32
    %328 = vector.broadcast %cst_264 : f32 to vector<1x16xf32>
    %329 = arith.cmpf ogt, %327, %328 : vector<1x16xf32>
    %cst_265 = arith.constant 0.000000e+00 : f32
    %330 = vector.shape_cast %329 : vector<1x16xi1> to vector<1x16xi1>
    %331 = vector.broadcast %330 : vector<1x16xi1> to vector<16x16xi1>
    %332 = vector.broadcast %cst_265 : f32 to vector<16x16xf32>
    %333 = arith.select %331, %325, %332 : vector<16x16xi1>, vector<16x16xf32>
    %c5_266 = arith.constant 5 : index
    %c0_267 = arith.constant 0 : index
    %c0_268 = arith.constant 0 : index
    %334 = vector.load %arg10[%c5_266, %c0_267, %c0_268] : memref<9x8x16xf32, #tpu.memory_space<vmem>>, vector<1x8x16xf32>
    %335 = vector.shape_cast %334 : vector<1x8x16xf32> to vector<8x16xf32>
    %cst_269 = arith.constant dense<0.000000e+00> : vector<8x16xf32>
    %336 = tpu.matmul %335, %333, %cst_269 {dimension_numbers = #tpu.dot_dimension_numbers<[1], [0], [0], [1], [0, 0, 1, 1], [], []>} : vector<8x16xf32>, vector<16x16xf32>, vector<8x16xf32> -> vector<8x16xf32>
    %337 = arith.addf %324, %336 : vector<8x16xf32>
    %c0_270 = arith.constant 0 : index
    %c131 = arith.constant 131 : index
    %338 = vector.load %arg22[%c0_270, %c131] : memref<16x272xf32, #tpu.memory_space<vmem>>, vector<16x16xf32>
    %c6_271 = arith.constant 6 : index
    %c0_272 = arith.constant 0 : index
    %c0_273 = arith.constant 0 : index
    %339 = vector.load %arg12[%c6_271, %c0_272, %c0_273] : memref<9x1x16xf32, #tpu.memory_space<vmem>>, vector<1x1x16xf32>
    %340 = vector.shape_cast %339 : vector<1x1x16xf32> to vector<1x16xf32>
    %cst_274 = arith.constant 5.000000e-01 : f32
    %341 = vector.broadcast %cst_274 : f32 to vector<1x16xf32>
    %342 = arith.cmpf ogt, %340, %341 : vector<1x16xf32>
    %cst_275 = arith.constant 0.000000e+00 : f32
    %343 = vector.shape_cast %342 : vector<1x16xi1> to vector<1x16xi1>
    %344 = vector.broadcast %343 : vector<1x16xi1> to vector<16x16xi1>
    %345 = vector.broadcast %cst_275 : f32 to vector<16x16xf32>
    %346 = arith.select %344, %338, %345 : vector<16x16xi1>, vector<16x16xf32>
    %c6_276 = arith.constant 6 : index
    %c0_277 = arith.constant 0 : index
    %c0_278 = arith.constant 0 : index
    %347 = vector.load %arg10[%c6_276, %c0_277, %c0_278] : memref<9x8x16xf32, #tpu.memory_space<vmem>>, vector<1x8x16xf32>
    %348 = vector.shape_cast %347 : vector<1x8x16xf32> to vector<8x16xf32>
    %cst_279 = arith.constant dense<0.000000e+00> : vector<8x16xf32>
    %349 = tpu.matmul %348, %346, %cst_279 {dimension_numbers = #tpu.dot_dimension_numbers<[1], [0], [0], [1], [0, 0, 1, 1], [], []>} : vector<8x16xf32>, vector<16x16xf32>, vector<8x16xf32> -> vector<8x16xf32>
    %350 = arith.addf %337, %349 : vector<8x16xf32>
    %c0_280 = arith.constant 0 : index
    %c132 = arith.constant 132 : index
    %351 = vector.load %arg22[%c0_280, %c132] : memref<16x272xf32, #tpu.memory_space<vmem>>, vector<16x16xf32>
    %c7_281 = arith.constant 7 : index
    %c0_282 = arith.constant 0 : index
    %c0_283 = arith.constant 0 : index
    %352 = vector.load %arg12[%c7_281, %c0_282, %c0_283] : memref<9x1x16xf32, #tpu.memory_space<vmem>>, vector<1x1x16xf32>
    %353 = vector.shape_cast %352 : vector<1x1x16xf32> to vector<1x16xf32>
    %cst_284 = arith.constant 5.000000e-01 : f32
    %354 = vector.broadcast %cst_284 : f32 to vector<1x16xf32>
    %355 = arith.cmpf ogt, %353, %354 : vector<1x16xf32>
    %cst_285 = arith.constant 0.000000e+00 : f32
    %356 = vector.shape_cast %355 : vector<1x16xi1> to vector<1x16xi1>
    %357 = vector.broadcast %356 : vector<1x16xi1> to vector<16x16xi1>
    %358 = vector.broadcast %cst_285 : f32 to vector<16x16xf32>
    %359 = arith.select %357, %351, %358 : vector<16x16xi1>, vector<16x16xf32>
    %c7_286 = arith.constant 7 : index
    %c0_287 = arith.constant 0 : index
    %c0_288 = arith.constant 0 : index
    %360 = vector.load %arg10[%c7_286, %c0_287, %c0_288] : memref<9x8x16xf32, #tpu.memory_space<vmem>>, vector<1x8x16xf32>
    %361 = vector.shape_cast %360 : vector<1x8x16xf32> to vector<8x16xf32>
    %cst_289 = arith.constant dense<0.000000e+00> : vector<8x16xf32>
    %362 = tpu.matmul %361, %359, %cst_289 {dimension_numbers = #tpu.dot_dimension_numbers<[1], [0], [0], [1], [0, 0, 1, 1], [], []>} : vector<8x16xf32>, vector<16x16xf32>, vector<8x16xf32> -> vector<8x16xf32>
    %363 = arith.addf %350, %362 : vector<8x16xf32>
    %c0_290 = arith.constant 0 : index
    %c133 = arith.constant 133 : index
    %364 = vector.load %arg22[%c0_290, %c133] : memref<16x272xf32, #tpu.memory_space<vmem>>, vector<16x16xf32>
    %c8_291 = arith.constant 8 : index
    %c0_292 = arith.constant 0 : index
    %c0_293 = arith.constant 0 : index
    %365 = vector.load %arg12[%c8_291, %c0_292, %c0_293] : memref<9x1x16xf32, #tpu.memory_space<vmem>>, vector<1x1x16xf32>
    %366 = vector.shape_cast %365 : vector<1x1x16xf32> to vector<1x16xf32>
    %cst_294 = arith.constant 5.000000e-01 : f32
    %367 = vector.broadcast %cst_294 : f32 to vector<1x16xf32>
    %368 = arith.cmpf ogt, %366, %367 : vector<1x16xf32>
    %cst_295 = arith.constant 0.000000e+00 : f32
    %369 = vector.shape_cast %368 : vector<1x16xi1> to vector<1x16xi1>
    %370 = vector.broadcast %369 : vector<1x16xi1> to vector<16x16xi1>
    %371 = vector.broadcast %cst_295 : f32 to vector<16x16xf32>
    %372 = arith.select %370, %364, %371 : vector<16x16xi1>, vector<16x16xf32>
    %c8_296 = arith.constant 8 : index
    %c0_297 = arith.constant 0 : index
    %c0_298 = arith.constant 0 : index
    %373 = vector.load %arg10[%c8_296, %c0_297, %c0_298] : memref<9x8x16xf32, #tpu.memory_space<vmem>>, vector<1x8x16xf32>
    %374 = vector.shape_cast %373 : vector<1x8x16xf32> to vector<8x16xf32>
    %cst_299 = arith.constant dense<0.000000e+00> : vector<8x16xf32>
    %375 = tpu.matmul %374, %372, %cst_299 {dimension_numbers = #tpu.dot_dimension_numbers<[1], [0], [0], [1], [0, 0, 1, 1], [], []>} : vector<8x16xf32>, vector<16x16xf32>, vector<8x16xf32> -> vector<8x16xf32>
    %376 = arith.addf %363, %375 : vector<8x16xf32>
    %c0_300 = arith.constant 0 : index
    %c0_301 = arith.constant 0 : index
    %377 = vector.load %arg11[%c0_300, %c0_301] : memref<8x1xf32, #tpu.memory_space<vmem>>, vector<8x1xf32>
    %378 = vector.broadcast %377 : vector<8x1xf32> to vector<8x16xf32>
    %379 = arith.addf %376, %378 : vector<8x16xf32>
    %cst_302 = arith.constant 0.000000e+00 : f32
    %380 = vector.broadcast %cst_302 : f32 to vector<8x16xf32>
    %381 = arith.cmpf ogt, %379, %380 : vector<8x16xf32>
    %382 = math.exp %379 : vector<8x16xf32>
    %cst_303 = arith.constant 1.000000e+00 : f32
    %383 = vector.broadcast %cst_303 : f32 to vector<8x16xf32>
    %384 = arith.subf %382, %383 : vector<8x16xf32>
    %385 = arith.select %381, %379, %384 : vector<8x16xi1>, vector<8x16xf32>
    %c0_304 = arith.constant 0 : index
    %c0_305 = arith.constant 0 : index
    %c0_306 = arith.constant 0 : index
    %386 = vector.load %arg13[%c0_304, %c0_305, %c0_306] : memref<4x16x4xf32, #tpu.memory_space<vmem>>, vector<1x16x4xf32>
    %387 = vector.shape_cast %386 : vector<1x16x4xf32> to vector<16x4xf32>
    %cst_307 = arith.constant dense<0.000000e+00> : vector<8x4xf32>
    %388 = tpu.matmul %385, %387, %cst_307 {dimension_numbers = #tpu.dot_dimension_numbers<[1], [0], [0], [1], [0, 0, 1, 1], [], []>} : vector<8x16xf32>, vector<16x4xf32>, vector<8x4xf32> -> vector<8x4xf32>
    %c1_308 = arith.constant 1 : index
    %c0_309 = arith.constant 0 : index
    %c0_310 = arith.constant 0 : index
    %389 = vector.load %arg13[%c1_308, %c0_309, %c0_310] : memref<4x16x4xf32, #tpu.memory_space<vmem>>, vector<1x16x4xf32>
    %390 = vector.shape_cast %389 : vector<1x16x4xf32> to vector<16x4xf32>
    %cst_311 = arith.constant dense<0.000000e+00> : vector<8x4xf32>
    %391 = tpu.matmul %385, %390, %cst_311 {dimension_numbers = #tpu.dot_dimension_numbers<[1], [0], [0], [1], [0, 0, 1, 1], [], []>} : vector<8x16xf32>, vector<16x4xf32>, vector<8x4xf32> -> vector<8x4xf32>
    %c2_312 = arith.constant 2 : index
    %c0_313 = arith.constant 0 : index
    %c0_314 = arith.constant 0 : index
    %392 = vector.load %arg13[%c2_312, %c0_313, %c0_314] : memref<4x16x4xf32, #tpu.memory_space<vmem>>, vector<1x16x4xf32>
    %393 = vector.shape_cast %392 : vector<1x16x4xf32> to vector<16x4xf32>
    %cst_315 = arith.constant dense<0.000000e+00> : vector<8x4xf32>
    %394 = tpu.matmul %385, %393, %cst_315 {dimension_numbers = #tpu.dot_dimension_numbers<[1], [0], [0], [1], [0, 0, 1, 1], [], []>} : vector<8x16xf32>, vector<16x4xf32>, vector<8x4xf32> -> vector<8x4xf32>
    %c3_316 = arith.constant 3 : index
    %c0_317 = arith.constant 0 : index
    %c0_318 = arith.constant 0 : index
    %395 = vector.load %arg13[%c3_316, %c0_317, %c0_318] : memref<4x16x4xf32, #tpu.memory_space<vmem>>, vector<1x16x4xf32>
    %396 = vector.shape_cast %395 : vector<1x16x4xf32> to vector<16x4xf32>
    %cst_319 = arith.constant dense<0.000000e+00> : vector<8x4xf32>
    %397 = tpu.matmul %385, %396, %cst_319 {dimension_numbers = #tpu.dot_dimension_numbers<[1], [0], [0], [1], [0, 0, 1, 1], [], []>} : vector<8x16xf32>, vector<16x4xf32>, vector<8x4xf32> -> vector<8x4xf32>
    %398 = arith.maximumf %388, %391 : vector<8x4xf32>
    %399 = arith.maximumf %394, %397 : vector<8x4xf32>
    %400 = arith.maximumf %398, %399 : vector<8x4xf32>
    %c0_320 = arith.constant 0 : index
    %c0_321 = arith.constant 0 : index
    %401 = vector.load %arg14[%c0_320, %c0_321] : memref<32x8xf32, #tpu.memory_space<vmem>>, vector<32x8xf32>
    %cst_322 = arith.constant dense<0.000000e+00> : vector<32x4xf32>
    %402 = tpu.matmul %401, %400, %cst_322 {dimension_numbers = #tpu.dot_dimension_numbers<[1], [0], [0], [1], [0, 0, 1, 1], [], []>} : vector<32x8xf32>, vector<8x4xf32>, vector<32x4xf32> -> vector<32x4xf32>
    %c0_323 = arith.constant 0 : index
    %c0_324 = arith.constant 0 : index
    %403 = vector.load %arg15[%c0_323, %c0_324] : memref<32x1xf32, #tpu.memory_space<vmem>>, vector<32x1xf32>
    %404 = vector.broadcast %403 : vector<32x1xf32> to vector<32x4xf32>
    %405 = arith.addf %402, %404 : vector<32x4xf32>
    %cst_325 = arith.constant dense<0xFF800000> : vector<32xf32>
    %406 = vector.multi_reduction <maximumf>, %405, %cst_325 [1] : vector<32x4xf32> to vector<32xf32>
    %407 = vector.shape_cast %406 : vector<32xf32> to vector<32x1xf32>
    %408 = vector.broadcast %407 : vector<32x1xf32> to vector<32x4xf32>
    %409 = arith.subf %405, %408 : vector<32x4xf32>
    %410 = math.exp %409 : vector<32x4xf32>
    %cst_326 = arith.constant dense<0.000000e+00> : vector<32xf32>
    %411 = vector.multi_reduction <add>, %410, %cst_326 [1] : vector<32x4xf32> to vector<32xf32>
    %412 = vector.shape_cast %411 : vector<32xf32> to vector<32x1xf32>
    %413 = vector.broadcast %412 : vector<32x1xf32> to vector<32x4xf32>
    %414 = arith.divf %410, %413 : vector<32x4xf32>
    %c0_327 = arith.constant 0 : index
    %c0_328 = arith.constant 0 : index
    %415 = vector.load %arg16[%c0_327, %c0_328] : memref<2x32xf32, #tpu.memory_space<vmem>>, vector<2x32xf32>
    %cst_329 = arith.constant dense<0.000000e+00> : vector<2x4xf32>
    %416 = tpu.matmul %415, %414, %cst_329 {dimension_numbers = #tpu.dot_dimension_numbers<[1], [0], [0], [1], [0, 0, 1, 1], [], []>} : vector<2x32xf32>, vector<32x4xf32>, vector<2x4xf32> -> vector<2x4xf32>
    %c0_330 = arith.constant 0 : index
    %c0_331 = arith.constant 0 : index
    %417 = vector.load %arg17[%c0_330, %c0_331] : memref<2x1xf32, #tpu.memory_space<vmem>>, vector<2x1xf32>
    %418 = vector.broadcast %417 : vector<2x1xf32> to vector<2x4xf32>
    %419 = arith.addf %416, %418 : vector<2x4xf32>
    %c0_332 = arith.constant 0 : index
    %c0_333 = arith.constant 0 : index
    %c0_334 = arith.constant 0 : index
    %420 = vector.load %arg18[%c0_332, %c0_333, %c0_334] : memref<1x2x4xf32, #tpu.memory_space<vmem>>, vector<1x2x4xf32>
    %421 = vector.shape_cast %420 : vector<1x2x4xf32> to vector<2x4xf32>
    %422 = vector.shape_cast %419 : vector<2x4xf32> to vector<1x2x4xf32>
    tpu.vector_store %arg18[%c0_332, %c0_333, %c0_334], %422 {strides = array<i32>} : memref<1x2x4xf32, #tpu.memory_space<vmem>>, vector<1x2x4xf32>,
    %423 = arith.mulf %419, %419 : vector<2x4xf32>
    %cst_335 = arith.constant dense<0.000000e+00> : vector<2xf32>
    %424 = vector.multi_reduction <add>, %423, %cst_335 [1] : vector<2x4xf32> to vector<2xf32>
    %425 = vector.shape_cast %424 : vector<2xf32> to vector<2x1xf32>
    %cst_336 = arith.constant dense<0.000000e+00> : vector<1xf32>
    %426 = vector.multi_reduction <add>, %425, %cst_336 [0] : vector<2x1xf32> to vector<1xf32>
    %427 = vector.shape_cast %426 : vector<1xf32> to vector<1x1xf32>
    %c0_337 = arith.constant 0 : index
    %c0_338 = arith.constant 0 : index
    %c0_339 = arith.constant 0 : index
    %428 = vector.load %arg19[%c0_337, %c0_338, %c0_339] : memref<1x1x1xf32, #tpu.memory_space<vmem>>, vector<1x1x1xf32>
    %429 = vector.shape_cast %428 : vector<1x1x1xf32> to vector<1x1xf32>
    %430 = vector.shape_cast %427 : vector<1x1xf32> to vector<1x1x1xf32>
    tpu.vector_store %arg19[%c0_337, %c0_338, %c0_339], %430 {strides = array<i32>} : memref<1x1x1xf32, #tpu.memory_space<vmem>>, vector<1x1x1xf32>,
    return
  }
  func.func @transform_0(%arg0: i32) -> (i32, i32, i32) {
    %c0_i32 = arith.constant 0 : i32
    %c0_i32_0 = arith.constant 0 : i32
    %c0_i32_1 = arith.constant 0 : i32
    return %arg0, %c0_i32, %c0_i32_0 : i32, i32, i32
  }
  func.func @transform_1(%arg0: i32) -> (i32, i32, i32) {
    %c0_i32 = arith.constant 0 : i32
    %c0_i32_0 = arith.constant 0 : i32
    %c0_i32_1 = arith.constant 0 : i32
    %c0_i32_2 = arith.constant 0 : i32
    return %c0_i32, %c0_i32_0, %c0_i32_1 : i32, i32, i32
  }
  func.func @transform_2(%arg0: i32) -> (i32, i32) {
    %c0_i32 = arith.constant 0 : i32
    %c0_i32_0 = arith.constant 0 : i32
    %c0_i32_1 = arith.constant 0 : i32
    return %c0_i32, %c0_i32_0 : i32, i32
  }
  func.func @transform_3(%arg0: i32) -> (i32, i32, i32) {
    %c0_i32 = arith.constant 0 : i32
    %c0_i32_0 = arith.constant 0 : i32
    %c0_i32_1 = arith.constant 0 : i32
    %c0_i32_2 = arith.constant 0 : i32
    return %c0_i32, %c0_i32_0, %c0_i32_1 : i32, i32, i32
  }
  func.func @transform_4(%arg0: i32) -> (i32, i32, i32) {
    %c0_i32 = arith.constant 0 : i32
    %c0_i32_0 = arith.constant 0 : i32
    %c0_i32_1 = arith.constant 0 : i32
    %c0_i32_2 = arith.constant 0 : i32
    return %c0_i32, %c0_i32_0, %c0_i32_1 : i32, i32, i32
  }
  func.func @transform_5(%arg0: i32) -> (i32, i32, i32) {
    %c0_i32 = arith.constant 0 : i32
    %c0_i32_0 = arith.constant 0 : i32
    %c0_i32_1 = arith.constant 0 : i32
    %c0_i32_2 = arith.constant 0 : i32
    return %c0_i32, %c0_i32_0, %c0_i32_1 : i32, i32, i32
  }
  func.func @transform_6(%arg0: i32) -> (i32, i32) {
    %c0_i32 = arith.constant 0 : i32
    %c0_i32_0 = arith.constant 0 : i32
    %c0_i32_1 = arith.constant 0 : i32
    return %c0_i32, %c0_i32_0 : i32, i32
  }
  func.func @transform_7(%arg0: i32) -> (i32, i32, i32) {
    %c0_i32 = arith.constant 0 : i32
    %c0_i32_0 = arith.constant 0 : i32
    %c0_i32_1 = arith.constant 0 : i32
    %c0_i32_2 = arith.constant 0 : i32
    return %c0_i32, %c0_i32_0, %c0_i32_1 : i32, i32, i32
  }
  func.func @transform_8(%arg0: i32) -> (i32, i32, i32) {
    %c0_i32 = arith.constant 0 : i32
    %c0_i32_0 = arith.constant 0 : i32
    %c0_i32_1 = arith.constant 0 : i32
    %c0_i32_2 = arith.constant 0 : i32
    return %c0_i32, %c0_i32_0, %c0_i32_1 : i32, i32, i32
  }
  func.func @transform_9(%arg0: i32) -> (i32, i32, i32) {
    %c0_i32 = arith.constant 0 : i32
    %c0_i32_0 = arith.constant 0 : i32
    %c0_i32_1 = arith.constant 0 : i32
    %c0_i32_2 = arith.constant 0 : i32
    return %c0_i32, %c0_i32_0, %c0_i32_1 : i32, i32, i32
  }
  func.func @transform_10(%arg0: i32) -> (i32, i32) {
    %c0_i32 = arith.constant 0 : i32
    %c0_i32_0 = arith.constant 0 : i32
    %c0_i32_1 = arith.constant 0 : i32
    return %c0_i32, %c0_i32_0 : i32, i32
  }
  func.func @transform_11(%arg0: i32) -> (i32, i32, i32) {
    %c0_i32 = arith.constant 0 : i32
    %c0_i32_0 = arith.constant 0 : i32
    %c0_i32_1 = arith.constant 0 : i32
    %c0_i32_2 = arith.constant 0 : i32
    return %c0_i32, %c0_i32_0, %c0_i32_1 : i32, i32, i32
  }
  func.func @transform_12(%arg0: i32) -> (i32, i32, i32) {
    %c0_i32 = arith.constant 0 : i32
    %c0_i32_0 = arith.constant 0 : i32
    %c0_i32_1 = arith.constant 0 : i32
    %c0_i32_2 = arith.constant 0 : i32
    return %c0_i32, %c0_i32_0, %c0_i32_1 : i32, i32, i32
  }
  func.func @transform_13(%arg0: i32) -> (i32, i32) {
    %c0_i32 = arith.constant 0 : i32
    %c0_i32_0 = arith.constant 0 : i32
    %c0_i32_1 = arith.constant 0 : i32
    return %c0_i32, %c0_i32_0 : i32, i32
  }
  func.func @transform_14(%arg0: i32) -> (i32, i32) {
    %c0_i32 = arith.constant 0 : i32
    %c0_i32_0 = arith.constant 0 : i32
    %c0_i32_1 = arith.constant 0 : i32
    return %c0_i32, %c0_i32_0 : i32, i32
  }
  func.func @transform_15(%arg0: i32) -> (i32, i32) {
    %c0_i32 = arith.constant 0 : i32
    %c0_i32_0 = arith.constant 0 : i32
    %c0_i32_1 = arith.constant 0 : i32
    return %c0_i32, %c0_i32_0 : i32, i32
  }
  func.func @transform_16(%arg0: i32) -> (i32, i32) {
    %c0_i32 = arith.constant 0 : i32
    %c0_i32_0 = arith.constant 0 : i32
    %c0_i32_1 = arith.constant 0 : i32
    return %c0_i32, %c0_i32_0 : i32, i32
  }
  func.func @transform_17(%arg0: i32) -> (i32, i32, i32) {
    %c0_i32 = arith.constant 0 : i32
    %c0_i32_0 = arith.constant 0 : i32
    %c0_i32_1 = arith.constant 0 : i32
    return %arg0, %c0_i32, %c0_i32_0 : i32, i32, i32
  }
  func.func @transform_18(%arg0: i32) -> (i32, i32, i32) {
    %c0_i32 = arith.constant 0 : i32
    %c0_i32_0 = arith.constant 0 : i32
    %c0_i32_1 = arith.constant 0 : i32
    return %arg0, %c0_i32, %c0_i32_0 : i32, i32, i32
  }
}

</mosaic_0001>

<llo_original>
// kernel: encoder_pool_forward.3
$region0: #{encoder_pool_forward.3}
  #allocation0 [shape = 'u32[]', space=smem, size = 0x4, offset = 0x4, fixed_abs, tag = 'smem constant byte address 0x4 - core index']
  #allocation1 [shape = 'u32[144,128]{1,0:T(1,128)}', space=vmem, size = 0x12000, scoped, tag = 'internal scratch']
  %s0 = inlined_call_operand.hbm [shape: f32[2,2,4], index: 0, kind: input, shape index: {}, may-alias: {0,2}]
  %s1 = inlined_call_operand.vmem [shape: f32[2,1,1], index: 1, kind: input, shape index: {}]
  %s2 = inlined_call_operand.hbm [shape: f32[2,2,4], index: 2, kind: output, shape index: {}, may-alias: {0,2}]
  %s3 = sld [smem:[#allocation0]]
  $region22: #{encoder_pool_forward.3} parent=0
    _
  %s5 = ssub.s32 1, %s3
  %s6 = scalar_select 0, %s5, %s3
  $region1: #{encoder_pool_forward.3} parent=0
    #allocation2 [shape = 'u8[2048]{0}', space=vmem, size = 0x800, scoped, tag = 'input window, operand 0, single buffered']
    #allocation3 [shape = 's32[1]{0}', space=sflag, size = 0x4, scoped, tag = 'scoped memory for encoder_pool_forward.3']
    #allocation4 [shape = 's32[1]{0}', space=sflag, size = 0x4, scoped, tag = 'scoped memory for encoder_pool_forward.3']
    #allocation5 [shape = 'u8[2048]{0}', space=vmem, size = 0x800, scoped, tag = 'output window, operand 0, single buffered']
    %7 = vsyncpa [#allocation3], 0
    %8 = vsyncpa [#allocation4], 0
    // Predicated region
    $region2: #{encoder_pool_forward.3} parent=1 // pred_check
      _
    $region3: #{encoder_pool_forward.3} parent=1 // pred_check_branch
      %10 = sbr.rel (0) target = $region5
    $region4: #{encoder_pool_forward.3} parent=1 // pred_region
      %s12 = ssub.s32 64, 64
      %13 = vsyncadd [#allocation3], %s12
      %s14 = sshll.u32 [#allocation2], 4
      %s15 = int_to_ptr.vmem [resolvable:$true] %s14
      %20 = dma.hbm_to_vmem [thread:$0]  %s0, 64, %s15, [#allocation3], 32, 32, 2
    $region5: #{encoder_pool_forward.3} parent=1 // pred_fallthru
      _
    // Predicated region
    $region6: #{encoder_pool_forward.3} parent=1 // pred_check
      _
    $region7: #{encoder_pool_forward.3} parent=1 // pred_check_branch
      %22 = sbr.rel (0) target = $region9
    $region8: #{encoder_pool_forward.3} parent=1 // pred_region
      _
    $region9: #{encoder_pool_forward.3} parent=1 // pred_fallthru
      _
    // Predicated region
    $region10: #{encoder_pool_forward.3} parent=1 // pred_check
      _
    $region11: #{encoder_pool_forward.3} parent=1 // pred_check_branch
      %24 = sbr.rel (0) target = $region13
    $region12: #{encoder_pool_forward.3} parent=1 // pred_region
      %25 = dma.done [#allocation3], 64
    $region13: #{encoder_pool_forward.3} parent=1 // pred_fallthru
      _
    %v26 = vld [vmem:[%s1] sm:$0x1]
    %v27 = vld [vmem:[%s1 + $0x1] sm:$0x1]
    %vm28 = vcmask 0
    %v29 = vsel %vm28, %v26, 0.0
    %v30 = vsel %vm28, %v27, 0.0
    %v31 = vadd.f32 %v29, %v30
    %32 = vadd.xlane.f32.xlu0 %v31
    %v33 = vpop.xlane.xlu0 %32
    %v34 = vrot.slane %v33, 4
    %v35 = vadd.f32 %v33, %v34
    %v36 = vrot.slane %v35, 2
    %v37 = vadd.f32 %v35, %v36
    %v38 = vrot.slane %v37, 1
    %v39 = vadd.f32 %v37, %v38
    %s40 = vtos %v39
    %v41 = vrcp.pop 2.0
    %s42 = vtos %v41
    %s43 = smul.f32 %s40, %s42
    %v44 = vstv %s43
    %v45 = vrsqrt.pop %v44
    %s46 = vtos %v45
    %v47 = vld [vmem:[#allocation2] sm:$0x3]
    %v48 = vld [vmem:[#allocation2 + $0x2] sm:$0x3]
    %v49 = vstv %s46
    %v50 = vmul.f32 %v47, %v49
    %v51 = vmul.f32 %v48, %v49
    %vm52 = vcmask 25600
    %53 = vst.msk [vmem:[#allocation5] sm:$0x3] %vm52, %v50
    %54 = vst.msk [vmem:[#allocation5 + $0x2] sm:$0x3] %vm52, %v51
    // Predicated region
    $region14: #{encoder_pool_forward.3} parent=1 // pred_check
      _
    $region15: #{encoder_pool_forward.3} parent=1 // pred_check_branch
      %56 = sbr.rel (0) target = $region17
    $region16: #{encoder_pool_forward.3} parent=1 // pred_region
      %s58 = ssub.s32 64, 64
      %59 = vsyncadd [#allocation4], %s58
      %s60 = sshll.u32 [#allocation5], 4
      %s61 = int_to_ptr.vmem [resolvable:$true] %s60
      %66 = dma.vmem_to_hbm [thread:$0]  %s61, 64, %s2, [#allocation4], 32, 32, 2
    $region17: #{encoder_pool_forward.3} parent=1 // pred_fallthru
      _
    // Predicated region
    $region18: #{encoder_pool_forward.3} parent=1 // pred_check
      _
    $region19: #{encoder_pool_forward.3} parent=1 // pred_check_branch
      %68 = sbr.rel (0) target = $region21
    $region20: #{encoder_pool_forward.3} parent=1 // pred_region
      %69 = dma.done [#allocation4], 64
    $region21: #{encoder_pool_forward.3} parent=1 // pred_fallthru
      _
    %70 = vsyncpa [#allocation3], 1
    %71 = vsyncpa [#allocation4], 1

// kernel: encoder_pool_forward.2
$region0: #{encoder_pool_forward.2}
  #allocation0 [shape = 'u32[]', space=smem, size = 0x4, offset = 0x4, fixed_abs, tag = 'smem constant byte address 0x4 - core index']
  #allocation1 [shape = 'u32[144,128]{1,0:T(1,128)}', space=vmem, size = 0x12000, scoped, tag = 'internal scratch']
  #allocation2 [shape = 'f32[3,512]{1,0:T(4,128)}', space=vmem, size = 0x2000, scoped, tag = 'scratch operand']
  #allocation3 [shape = 'f32[32,320]{1,0:T(8,128)}', space=vmem, size = 0xc000, scoped, tag = 'scratch operand']
  #allocation4 [shape = 'f32[16,272]{1,0:T(8,128)}', space=vmem, size = 0x6000, scoped, tag = 'scratch operand']
  %s0 = inlined_call_operand.vmem [shape: f32[2,3,256], index: 0, kind: input, shape index: {}]
  %s1 = inlined_call_operand.vmem [shape: f32[9,32,3], index: 1, kind: input, shape index: {}]
  %s2 = inlined_call_operand.vmem [shape: f32[32,1], index: 2, kind: input, shape index: {}]
  %s3 = inlined_call_operand.vmem [shape: f32[9,1,256], index: 3, kind: input, shape index: {}]
  %s4 = inlined_call_operand.vmem [shape: f32[4,256,64], index: 4, kind: input, shape index: {}]
  %s5 = inlined_call_operand.vmem [shape: f32[9,16,32], index: 5, kind: input, shape index: {}]
  %s6 = inlined_call_operand.vmem [shape: f32[16,1], index: 6, kind: input, shape index: {}]
  %s7 = inlined_call_operand.vmem [shape: f32[9,1,64], index: 7, kind: input, shape index: {}]
  %s8 = inlined_call_operand.vmem [shape: f32[4,64,16], index: 8, kind: input, shape index: {}]
  %s9 = inlined_call_operand.vmem [shape: f32[9,8,16], index: 9, kind: input, shape index: {}]
  %s10 = inlined_call_operand.vmem [shape: f32[8,1], index: 10, kind: input, shape index: {}]
  %s11 = inlined_call_operand.vmem [shape: f32[9,1,16], index: 11, kind: input, shape index: {}]
  %s12 = inlined_call_operand.vmem [shape: f32[4,16,4], index: 12, kind: input, shape index: {}]
  %s13 = inlined_call_operand.vmem [shape: f32[32,8], index: 13, kind: input, shape index: {}]
  %s14 = inlined_call_operand.vmem [shape: f32[32,1], index: 14, kind: input, shape index: {}]
  %s15 = inlined_call_operand.vmem [shape: f32[2,32], index: 15, kind: input, shape index: {}]
  %s16 = inlined_call_operand.vmem [shape: f32[2,1], index: 16, kind: input, shape index: {}]
  %s17 = inlined_call_operand.hbm [shape: f32[2,2,4], index: 17, kind: output, shape index: {0}]
  %s18 = inlined_call_operand.vmem [shape: f32[2,1,1], index: 18, kind: output, shape index: {1}]
  %19 = xla_tuple %s17, %s18
  %s20 = sld [smem:[#allocation0]]
  $region109: #{encoder_pool_forward.2} parent=0
    _
  %s22 = ssub.s32 1, %s20
  %s23 = scalar_select 0, %s22, %s20
  $region1: #{encoder_pool_forward.2} parent=0
    #allocation5 [shape = 'u8[2048]{0}', space=vmem, size = 0x800, scoped, tag = 'output window, operand 0']
    #allocation6 [shape = 's32[2]{0}', space=sflag, size = 0x8, scoped, tag = 'scoped memory for encoder_pool_forward.2']
    %24 = vsyncpa [#allocation6], 0
    %s25 = scalar_lea.sflag [#allocation6], 1
    %26 = vsyncpa %s25, 0
    loop: start=0, step=1, limit=4
    $region2: #{encoder_pool_forward.2} parent=1 // loop_pre_header
      _
    $region3: #{encoder_pool_forward.2} parent=1 // loop_header
      %s28 = sphi 0, %s32
      %p29 = scmp.ge.s32.totalorder %s28, 4
      %s38 = sphi 0, %s40
      %s41 = sphi 0, %s38
      %s42 = sphi 0, %s41
      %s58 = sphi 0, %s42
      %s62 = sphi 0, %s62
      %s64 = sphi 0, %s62
      %s65 = sphi 0, %s64
      %s79 = sphi 0, %s65
      %s83 = sphi 0, %s83
      %s85 = sphi 0, %s83
      %s86 = sphi 0, %s85
      %s100 = sphi 0, %s86
      %s104 = sphi 0, %s104
      %s106 = sphi 0, %s104
      %s107 = sphi 0, %s106
      %s121 = sphi 0, %s107
      %s125 = sphi 0, %s125
      %s127 = sphi 0, %s125
      %s128 = sphi 0, %s127
      %s142 = sphi 0, %s128
      %s146 = sphi 0, %s146
      %s148 = sphi 0, %s146
      %s149 = sphi 0, %s148
      %s163 = sphi 0, %s149
      %s167 = sphi 0, %s167
      %s169 = sphi 0, %s167
      %s170 = sphi 0, %s169
      %s184 = sphi 0, %s170
      %s188 = sphi 0, %s188
      %s190 = sphi 0, %s188
      %s191 = sphi 0, %s190
      %s205 = sphi 0, %s191
      %s209 = sphi 0, %s209
      %s211 = sphi 0, %s209
      %s212 = sphi 0, %s211
      %s226 = sphi 0, %s212
      %s230 = sphi 0, %s230
      %s232 = sphi 0, %s230
      %s233 = sphi 0, %s232
      %s247 = sphi 0, %s233
      %s251 = sphi 0, %s251
      %s253 = sphi 0, %s251
      %s254 = sphi 0, %s253
      %s268 = sphi 0, %s254
      %s272 = sphi 0, %s272
      %s274 = sphi 0, %s272
      %s275 = sphi 0, %s274
      %s289 = sphi 0, %s275
      %s293 = sphi 0, %s293
      %s295 = sphi 0, %s293
      %s296 = sphi 0, %s295
      %s310 = sphi 0, %s296
      %s314 = sphi 0, %s314
      %s316 = sphi 0, %s314
      %s317 = sphi 0, %s316
      %s331 = sphi 0, %s317
      %s335 = sphi 0, %s335
      %s337 = sphi 0, %s335
      %s338 = sphi 0, %s337
      %s352 = sphi 0, %s338
      %s356 = sphi 0, %s356
      %s358 = sphi 0, %s356
      %s359 = sphi 0, %s358
      %s373 = sphi 0, %s359
      %s377 = sphi 0, %s377
      %s379 = sphi 0, %s377
      %s380 = sphi 0, %s379
      %s394 = sphi 0, %s380
      %s400 = sphi 0, %s402
      %s403 = sphi 0, %s400
      %s404 = sphi 0, %s403
      %s420 = sphi 0, %s404
      %s426 = sphi 0, %s428
      %s429 = sphi 0, %s426
      %s430 = sphi 0, %s429
      %s446 = sphi 0, %s430
    $region4: #{encoder_pool_forward.2} parent=1 // loop_header_branch
      %31 = sbr.rel (%p29) target = $region8
    $region5: #{encoder_pool_forward.2} parent=1 // loop_body
      %s33 = ssub.s32 %s28, 1
      %s34 = ssub.s32 %s28, 2
      %s35 = sadd.s32 %s28, 1
      %s36 = ssub.s32 %s28, %s35
      %p37 = scmp.eq.s32.totalorder %s36, 0
      %s39 = sadd.s32 %s38, 1
      %s40 = scalar_select %p37, %s38, %s39
      %p43 = pneg %p37
      %p44 = scmp.eq.s32.totalorder %s28, 1
      %p45 = por %p43, %p44
      %p46 = scmp.ne.s32.totalorder %s38, %s41
      %p47 = scmp.eq.s32.totalorder %s28, 0
      %p48 = por %p46, %p47
      %p49 = scmp.ne.s32.totalorder %s38, %s41
      %p50 = scmp.eq.s32.totalorder %s33, 1
      %p51 = por %p49, %p50
      %p52 = scmp.ne.s32.totalorder %s41, %s42
      %p53 = scmp.eq.s32.totalorder %s33, 0
      %p54 = por %p52, %p53
      %p55 = scmp.ne.s32.totalorder %s41, %s42
      %p56 = scmp.eq.s32.totalorder %s34, 1
      %p57 = por %p55, %p56
      %p59 = scmp.ne.s32.totalorder %s42, %s58
      %p60 = scmp.eq.s32.totalorder %s34, 0
      %p61 = por %p59, %p60
      %s63 = sadd.s32 %s62, 1
      %p66 = scmp.eq.s32.totalorder %s28, 1
      %p67 = scmp.ne.s32.totalorder %s62, %s64
      %p68 = scmp.eq.s32.totalorder %s28, 0
      %p69 = por %p67, %p68
      %p70 = scmp.ne.s32.totalorder %s62, %s64
      %p71 = scmp.eq.s32.totalorder %s33, 1
      %p72 = por %p70, %p71
      %p73 = scmp.ne.s32.totalorder %s64, %s65
      %p74 = scmp.eq.s32.totalorder %s33, 0
      %p75 = por %p73, %p74
      %p76 = scmp.ne.s32.totalorder %s64, %s65
      %p77 = scmp.eq.s32.totalorder %s34, 1
      %p78 = por %p76, %p77
      %p80 = scmp.ne.s32.totalorder %s65, %s79
      %p81 = scmp.eq.s32.totalorder %s34, 0
      %p82 = por %p80, %p81
      %s84 = sadd.s32 %s83, 1
      %p87 = scmp.eq.s32.totalorder %s28, 1
      %p88 = scmp.ne.s32.totalorder %s83, %s85
      %p89 = scmp.eq.s32.totalorder %s28, 0
      %p90 = por %p88, %p89
      %p91 = scmp.ne.s32.totalorder %s83, %s85
      %p92 = scmp.eq.s32.totalorder %s33, 1
      %p93 = por %p91, %p92
      %p94 = scmp.ne.s32.totalorder %s85, %s86
      %p95 = scmp.eq.s32.totalorder %s33, 0
      %p96 = por %p94, %p95
      %p97 = scmp.ne.s32.totalorder %s85, %s86
      %p98 = scmp.eq.s32.totalorder %s34, 1
      %p99 = por %p97, %p98
      %p101 = scmp.ne.s32.totalorder %s86, %s100
      %p102 = scmp.eq.s32.totalorder %s34, 0
      %p103 = por %p101, %p102
      %s105 = sadd.s32 %s104, 1
      %p108 = scmp.eq.s32.totalorder %s28, 1
      %p109 = scmp.ne.s32.totalorder %s104, %s106
      %p110 = scmp.eq.s32.totalorder %s28, 0
      %p111 = por %p109, %p110
      %p112 = scmp.ne.s32.totalorder %s104, %s106
      %p113 = scmp.eq.s32.totalorder %s33, 1
      %p114 = por %p112, %p113
      %p115 = scmp.ne.s32.totalorder %s106, %s107
      %p116 = scmp.eq.s32.totalorder %s33, 0
      %p117 = por %p115, %p116
      %p118 = scmp.ne.s32.totalorder %s106, %s107
      %p119 = scmp.eq.s32.totalorder %s34, 1
      %p120 = por %p118, %p119
      %p122 = scmp.ne.s32.totalorder %s107, %s121
      %p123 = scmp.eq.s32.totalorder %s34, 0
      %p124 = por %p122, %p123
      %s126 = sadd.s32 %s125, 1
      %p129 = scmp.eq.s32.totalorder %s28, 1
      %p130 = scmp.ne.s32.totalorder %s125, %s127
      %p131 = scmp.eq.s32.totalorder %s28, 0
      %p132 = por %p130, %p131
      %p133 = scmp.ne.s32.totalorder %s125, %s127
      %p134 = scmp.eq.s32.totalorder %s33, 1
      %p135 = por %p133, %p134
      %p136 = scmp.ne.s32.totalorder %s127, %s128
      %p137 = scmp.eq.s32.totalorder %s33, 0
      %p138 = por %p136, %p137
      %p139 = scmp.ne.s32.totalorder %s127, %s128
      %p140 = scmp.eq.s32.totalorder %s34, 1
      %p141 = por %p139, %p140
      %p143 = scmp.ne.s32.totalorder %s128, %s142
      %p144 = scmp.eq.s32.totalorder %s34, 0
      %p145 = por %p143, %p144
      %s147 = sadd.s32 %s146, 1
      %p150 = scmp.eq.s32.totalorder %s28, 1
      %p151 = scmp.ne.s32.totalorder %s146, %s148
      %p152 = scmp.eq.s32.totalorder %s28, 0
      %p153 = por %p151, %p152
      %p154 = scmp.ne.s32.totalorder %s146, %s148
      %p155 = scmp.eq.s32.totalorder %s33, 1
      %p156 = por %p154, %p155
      %p157 = scmp.ne.s32.totalorder %s148, %s149
      %p158 = scmp.eq.s32.totalorder %s33, 0
      %p159 = por %p157, %p158
      %p160 = scmp.ne.s32.totalorder %s148, %s149
      %p161 = scmp.eq.s32.totalorder %s34, 1
      %p162 = por %p160, %p161
      %p164 = scmp.ne.s32.totalorder %s149, %s163
      %p165 = scmp.eq.s32.totalorder %s34, 0
      %p166 = por %p164, %p165
      %s168 = sadd.s32 %s167, 1
      %p171 = scmp.eq.s32.totalorder %s28, 1
      %p172 = scmp.ne.s32.totalorder %s167, %s169
      %p173 = scmp.eq.s32.totalorder %s28, 0
      %p174 = por %p172, %p173
      %p175 = scmp.ne.s32.totalorder %s167, %s169
      %p176 = scmp.eq.s32.totalorder %s33, 1
      %p177 = por %p175, %p176
      %p178 = scmp.ne.s32.totalorder %s169, %s170
      %p179 = scmp.eq.s32.totalorder %s33, 0
      %p180 = por %p178, %p179
      %p181 = scmp.ne.s32.totalorder %s169, %s170
      %p182 = scmp.eq.s32.totalorder %s34, 1
      %p183 = por %p181, %p182
      %p185 = scmp.ne.s32.totalorder %s170, %s184
      %p186 = scmp.eq.s32.totalorder %s34, 0
      %p187 = por %p185, %p186
      %s189 = sadd.s32 %s188, 1
      %p192 = scmp.eq.s32.totalorder %s28, 1
      %p193 = scmp.ne.s32.totalorder %s188, %s190
      %p194 = scmp.eq.s32.totalorder %s28, 0
      %p195 = por %p193, %p194
      %p196 = scmp.ne.s32.totalorder %s188, %s190
      %p197 = scmp.eq.s32.totalorder %s33, 1
      %p198 = por %p196, %p197
      %p199 = scmp.ne.s32.totalorder %s190, %s191
      %p200 = scmp.eq.s32.totalorder %s33, 0
      %p201 = por %p199, %p200
      %p202 = scmp.ne.s32.totalorder %s190, %s191
      %p203 = scmp.eq.s32.totalorder %s34, 1
      %p204 = por %p202, %p203
      %p206 = scmp.ne.s32.totalorder %s191, %s205
      %p207 = scmp.eq.s32.totalorder %s34, 0
      %p208 = por %p206, %p207
      %s210 = sadd.s32 %s209, 1
      %p213 = scmp.eq.s32.totalorder %s28, 1
      %p214 = scmp.ne.s32.totalorder %s209, %s211
      %p215 = scmp.eq.s32.totalorder %s28, 0
      %p216 = por %p214, %p215
      %p217 = scmp.ne.s32.totalorder %s209, %s211
      %p218 = scmp.eq.s32.totalorder %s33, 1
      %p219 = por %p217, %p218
      %p220 = scmp.ne.s32.totalorder %s211, %s212
      %p221 = scmp.eq.s32.totalorder %s33, 0
      %p222 = por %p220, %p221
      %p223 = scmp.ne.s32.totalorder %s211, %s212
      %p224 = scmp.eq.s32.totalorder %s34, 1
      %p225 = por %p223, %p224
      %p227 = scmp.ne.s32.totalorder %s212, %s226
      %p228 = scmp.eq.s32.totalorder %s34, 0
      %p229 = por %p227, %p228
      %s231 = sadd.s32 %s230, 1
      %p234 = scmp.eq.s32.totalorder %s28, 1
      %p235 = scmp.ne.s32.totalorder %s230, %s232
      %p236 = scmp.eq.s32.totalorder %s28, 0
      %p237 = por %p235, %p236
      %p238 = scmp.ne.s32.totalorder %s230, %s232
      %p239 = scmp.eq.s32.totalorder %s33, 1
      %p240 = por %p238, %p239
      %p241 = scmp.ne.s32.totalorder %s232, %s233
      %p242 = scmp.eq.s32.totalorder %s33, 0
      %p243 = por %p241, %p242
      %p244 = scmp.ne.s32.totalorder %s232, %s233
      %p245 = scmp.eq.s32.totalorder %s34, 1
      %p246 = por %p244, %p245
      %p248 = scmp.ne.s32.totalorder %s233, %s247
      %p249 = scmp.eq.s32.totalorder %s34, 0
      %p250 = por %p248, %p249
      %s252 = sadd.s32 %s251, 1
      %p255 = scmp.eq.s32.totalorder %s28, 1
      %p256 = scmp.ne.s32.totalorder %s251, %s253
      %p257 = scmp.eq.s32.totalorder %s28, 0
      %p258 = por %p256, %p257
      %p259 = scmp.ne.s32.totalorder %s251, %s253
      %p260 = scmp.eq.s32.totalorder %s33, 1
      %p261 = por %p259, %p260
      %p262 = scmp.ne.s32.totalorder %s253, %s254
      %p263 = scmp.eq.s32.totalorder %s33, 0
      %p264 = por %p262, %p263
      %p265 = scmp.ne.s32.totalorder %s253, %s254
      %p266 = scmp.eq.s32.totalorder %s34, 1
      %p267 = por %p265, %p266
      %p269 = scmp.ne.s32.totalorder %s254, %s268
      %p270 = scmp.eq.s32.totalorder %s34, 0
      %p271 = por %p269, %p270
      %s273 = sadd.s32 %s272, 1
      %p276 = scmp.eq.s32.totalorder %s28, 1
      %p277 = scmp.ne.s32.totalorder %s272, %s274
      %p278 = scmp.eq.s32.totalorder %s28, 0
      %p279 = por %p277, %p278
      %p280 = scmp.ne.s32.totalorder %s272, %s274
      %p281 = scmp.eq.s32.totalorder %s33, 1
      %p282 = por %p280, %p281
      %p283 = scmp.ne.s32.totalorder %s274, %s275
      %p284 = scmp.eq.s32.totalorder %s33, 0
      %p285 = por %p283, %p284
      %p286 = scmp.ne.s32.totalorder %s274, %s275
      %p287 = scmp.eq.s32.totalorder %s34, 1
      %p288 = por %p286, %p287
      %p290 = scmp.ne.s32.totalorder %s275, %s289
      %p291 = scmp.eq.s32.totalorder %s34, 0
      %p292 = por %p290, %p291
      %s294 = sadd.s32 %s293, 1
      %p297 = scmp.eq.s32.totalorder %s28, 1
      %p298 = scmp.ne.s32.totalorder %s293, %s295
      %p299 = scmp.eq.s32.totalorder %s28, 0
      %p300 = por %p298, %p299
      %p301 = scmp.ne.s32.totalorder %s293, %s295
      %p302 = scmp.eq.s32.totalorder %s33, 1
      %p303 = por %p301, %p302
      %p304 = scmp.ne.s32.totalorder %s295, %s296
      %p305 = scmp.eq.s32.totalorder %s33, 0
      %p306 = por %p304, %p305
      %p307 = scmp.ne.s32.totalorder %s295, %s296
      %p308 = scmp.eq.s32.totalorder %s34, 1
      %p309 = por %p307, %p308
      %p311 = scmp.ne.s32.totalorder %s296, %s310
      %p312 = scmp.eq.s32.totalorder %s34, 0
      %p313 = por %p311, %p312
      %s315 = sadd.s32 %s314, 1
      %p318 = scmp.eq.s32.totalorder %s28, 1
      %p319 = scmp.ne.s32.totalorder %s314, %s316
      %p320 = scmp.eq.s32.totalorder %s28, 0
      %p321 = por %p319, %p320
      %p322 = scmp.ne.s32.totalorder %s314, %s316
      %p323 = scmp.eq.s32.totalorder %s33, 1
      %p324 = por %p322, %p323
      %p325 = scmp.ne.s32.totalorder %s316, %s317
      %p326 = scmp.eq.s32.totalorder %s33, 0
      %p327 = por %p325, %p326
      %p328 = scmp.ne.s32.totalorder %s316, %s317
      %p329 = scmp.eq.s32.totalorder %s34, 1
      %p330 = por %p328, %p329
      %p332 = scmp.ne.s32.totalorder %s317, %s331
      %p333 = scmp.eq.s32.totalorder %s34, 0
      %p334 = por %p332, %p333
      %s336 = sadd.s32 %s335, 1
      %p339 = scmp.eq.s32.totalorder %s28, 1
      %p340 = scmp.ne.s32.totalorder %s335, %s337
      %p341 = scmp.eq.s32.totalorder %s28, 0
      %p342 = por %p340, %p341
      %p343 = scmp.ne.s32.totalorder %s335, %s337
      %p344 = scmp.eq.s32.totalorder %s33, 1
      %p345 = por %p343, %p344
      %p346 = scmp.ne.s32.totalorder %s337, %s338
      %p347 = scmp.eq.s32.totalorder %s33, 0
      %p348 = por %p346, %p347
      %p349 = scmp.ne.s32.totalorder %s337, %s338
      %p350 = scmp.eq.s32.totalorder %s34, 1
      %p351 = por %p349, %p350
      %p353 = scmp.ne.s32.totalorder %s338, %s352
      %p354 = scmp.eq.s32.totalorder %s34, 0
      %p355 = por %p353, %p354
      %s357 = sadd.s32 %s356, 1
      %p360 = scmp.eq.s32.totalorder %s28, 1
      %p361 = scmp.ne.s32.totalorder %s356, %s358
      %p362 = scmp.eq.s32.totalorder %s28, 0
      %p363 = por %p361, %p362
      %p364 = scmp.ne.s32.totalorder %s356, %s358
      %p365 = scmp.eq.s32.totalorder %s33, 1
      %p366 = por %p364, %p365
      %p367 = scmp.ne.s32.totalorder %s358, %s359
      %p368 = scmp.eq.s32.totalorder %s33, 0
      %p369 = por %p367, %p368
      %p370 = scmp.ne.s32.totalorder %s358, %s359
      %p371 = scmp.eq.s32.totalorder %s34, 1
      %p372 = por %p370, %p371
      %p374 = scmp.ne.s32.totalorder %s359, %s373
      %p375 = scmp.eq.s32.totalorder %s34, 0
      %p376 = por %p374, %p375
      %s378 = sadd.s32 %s377, 1
      %p381 = scmp.eq.s32.totalorder %s28, 1
      %p382 = scmp.ne.s32.totalorder %s377, %s379
      %p383 = scmp.eq.s32.totalorder %s28, 0
      %p384 = por %p382, %p383
      %p385 = scmp.ne.s32.totalorder %s377, %s379
      %p386 = scmp.eq.s32.totalorder %s33, 1
      %p387 = por %p385, %p386
      %p388 = scmp.ne.s32.totalorder %s379, %s380
      %p389 = scmp.eq.s32.totalorder %s33, 0
      %p390 = por %p388, %p389
      %p391 = scmp.ne.s32.totalorder %s379, %s380
      %p392 = scmp.eq.s32.totalorder %s34, 1
      %p393 = por %p391, %p392
      %p395 = scmp.ne.s32.totalorder %s380, %s394
      %p396 = scmp.eq.s32.totalorder %s34, 0
      %p397 = por %p395, %p396
      %s398 = ssub.s32 %s28, %s35
      %p399 = scmp.eq.s32.totalorder %s398, 0
      %s401 = sadd.s32 %s400, 1
      %s402 = scalar_select %p399, %s400, %s401
      %p405 = pneg %p399
      %p406 = scmp.eq.s32.totalorder %s28, 1
      %p407 = por %p405, %p406
      %p408 = scmp.ne.s32.totalorder %s400, %s403
      %p409 = scmp.eq.s32.totalorder %s28, 0
      %p410 = por %p408, %p409
      %p411 = scmp.ne.s32.totalorder %s400, %s403
      %p412 = scmp.eq.s32.totalorder %s33, 1
      %p413 = por %p411, %p412
      %p414 = scmp.ne.s32.totalorder %s403, %s404
      %p415 = scmp.eq.s32.totalorder %s33, 0
      %p416 = por %p414, %p415
      %p417 = scmp.ne.s32.totalorder %s403, %s404
      %p418 = scmp.eq.s32.totalorder %s34, 1
      %p419 = por %p417, %p418
      %p421 = scmp.ne.s32.totalorder %s404, %s420
      %p422 = scmp.eq.s32.totalorder %s34, 0
      %p423 = por %p421, %p422
      %s424 = ssub.s32 %s28, %s35
      %p425 = scmp.eq.s32.totalorder %s424, 0
      %s427 = sadd.s32 %s426, 1
      %s428 = scalar_select %p425, %s426, %s427
      %p431 = pneg %p425
      %p432 = scmp.eq.s32.totalorder %s28, 1
      %p433 = por %p431, %p432
      %p434 = scmp.ne.s32.totalorder %s426, %s429
      %p435 = scmp.eq.s32.totalorder %s28, 0
      %p436 = por %p434, %p435
      %p437 = scmp.ne.s32.totalorder %s426, %s429
      %p438 = scmp.eq.s32.totalorder %s33, 1
      %p439 = por %p437, %p438
      %p440 = scmp.ne.s32.totalorder %s429, %s430
      %p441 = scmp.eq.s32.totalorder %s33, 0
      %p442 = por %p440, %p441
      %p443 = scmp.ne.s32.totalorder %s429, %s430
      %p444 = scmp.eq.s32.totalorder %s34, 1
      %p445 = por %p443, %p444
      %p447 = scmp.ne.s32.totalorder %s430, %s446
      %p448 = scmp.eq.s32.totalorder %s34, 0
      %p449 = por %p447, %p448
      %p450 = scmp.le.s32.totalorder 1, %s28
      %p451 = scmp.lt.s32.totalorder %s28, 3
      %p452 = pnand %p450, %p451
      %p453 = pneg %p452
      // Predicated region
      $region9: #{encoder_pool_forward.2} parent=5 // pred_check
        _
      $region10: #{encoder_pool_forward.2} parent=5 // pred_check_branch
        %455 = sbr.rel (%p452) target = $region12
      $region11: #{encoder_pool_forward.2} parent=5 // pred_region
        %s456 = ssub.s32 %s28, 1
        // Predicated region
        $region13: #{encoder_pool_forward.2} parent=11 // pred_check
          %p457 = pneg %p75
        $region14: #{encoder_pool_forward.2} parent=11 // pred_check_branch
          %459 = sbr.rel (%p457) target = $region16
        $region15: #{encoder_pool_forward.2} parent=11 // pred_region
          _
        $region16: #{encoder_pool_forward.2} parent=11 // pred_fallthru
          _
        // Predicated region
        $region17: #{encoder_pool_forward.2} parent=11 // pred_check
          %p460 = pneg %p96
        $region18: #{encoder_pool_forward.2} parent=11 // pred_check_branch
          %462 = sbr.rel (%p460) target = $region20
        $region19: #{encoder_pool_forward.2} parent=11 // pred_region
          _
        $region20: #{encoder_pool_forward.2} parent=11 // pred_fallthru
          _
        // Predicated region
        $region21: #{encoder_pool_forward.2} parent=11 // pred_check
          %p463 = pneg %p117
        $region22: #{encoder_pool_forward.2} parent=11 // pred_check_branch
          %465 = sbr.rel (%p463) target = $region24
        $region23: #{encoder_pool_forward.2} parent=11 // pred_region
          _
        $region24: #{encoder_pool_forward.2} parent=11 // pred_fallthru
          _
        // Predicated region
        $region25: #{encoder_pool_forward.2} parent=11 // pred_check
          %p466 = pneg %p138
        $region26: #{encoder_pool_forward.2} parent=11 // pred_check_branch
          %468 = sbr.rel (%p466) target = $region28
        $region27: #{encoder_pool_forward.2} parent=11 // pred_region
          _
        $region28: #{encoder_pool_forward.2} parent=11 // pred_fallthru
          _
        // Predicated region
        $region29: #{encoder_pool_forward.2} parent=11 // pred_check
          %p469 = pneg %p159
        $region30: #{encoder_pool_forward.2} parent=11 // pred_check_branch
          %471 = sbr.rel (%p469) target = $region32
        $region31: #{encoder_pool_forward.2} parent=11 // pred_region
          _
        $region32: #{encoder_pool_forward.2} parent=11 // pred_fallthru
          _
        // Predicated region
        $region33: #{encoder_pool_forward.2} parent=11 // pred_check
          %p472 = pneg %p180
        $region34: #{encoder_pool_forward.2} parent=11 // pred_check_branch
          %474 = sbr.rel (%p472) target = $region36
        $region35: #{encoder_pool_forward.2} parent=11 // pred_region
          _
        $region36: #{encoder_pool_forward.2} parent=11 // pred_fallthru
          _
        // Predicated region
        $region37: #{encoder_pool_forward.2} parent=11 // pred_check
          %p475 = pneg %p201
        $region38: #{encoder_pool_forward.2} parent=11 // pred_check_branch
          %477 = sbr.rel (%p475) target = $region40
        $region39: #{encoder_pool_forward.2} parent=11 // pred_region
          _
        $region40: #{encoder_pool_forward.2} parent=11 // pred_fallthru
          _
        // Predicated region
        $region41: #{encoder_pool_forward.2} parent=11 // pred_check
          %p478 = pneg %p222
        $region42: #{encoder_pool_forward.2} parent=11 // pred_check_branch
          %480 = sbr.rel (%p478) target = $region44
        $region43: #{encoder_pool_forward.2} parent=11 // pred_region
          _
        $region44: #{encoder_pool_forward.2} parent=11 // pred_fallthru
          _
        // Predicated region
        $region45: #{encoder_pool_forward.2} parent=11 // pred_check
          %p481 = pneg %p243
        $region46: #{encoder_pool_forward.2} parent=11 // pred_check_branch
          %483 = sbr.rel (%p481) target = $region48
        $region47: #{encoder_pool_forward.2} parent=11 // pred_region
          _
        $region48: #{encoder_pool_forward.2} parent=11 // pred_fallthru
          _
        // Predicated region
        $region49: #{encoder_pool_forward.2} parent=11 // pred_check
          %p484 = pneg %p264
        $region50: #{encoder_pool_forward.2} parent=11 // pred_check_branch
          %486 = sbr.rel (%p484) target = $region52
        $region51: #{encoder_pool_forward.2} parent=11 // pred_region
          _
        $region52: #{encoder_pool_forward.2} parent=11 // pred_fallthru
          _
        // Predicated region
        $region53: #{encoder_pool_forward.2} parent=11 // pred_check
          %p487 = pneg %p285
        $region54: #{encoder_pool_forward.2} parent=11 // pred_check_branch
          %489 = sbr.rel (%p487) target = $region56
        $region55: #{encoder_pool_forward.2} parent=11 // pred_region
          _
        $region56: #{encoder_pool_forward.2} parent=11 // pred_fallthru
          _
        // Predicated region
        $region57: #{encoder_pool_forward.2} parent=11 // pred_check
          %p490 = pneg %p306
        $region58: #{encoder_pool_forward.2} parent=11 // pred_check_branch
          %492 = sbr.rel (%p490) target = $region60
        $region59: #{encoder_pool_forward.2} parent=11 // pred_region
          _
        $region60: #{encoder_pool_forward.2} parent=11 // pred_fallthru
          _
        // Predicated region
        $region61: #{encoder_pool_forward.2} parent=11 // pred_check
          %p493 = pneg %p327
        $region62: #{encoder_pool_forward.2} parent=11 // pred_check_branch
          %495 = sbr.rel (%p493) target = $region64
        $region63: #{encoder_pool_forward.2} parent=11 // pred_region
          _
        $region64: #{encoder_pool_forward.2} parent=11 // pred_fallthru
          _
        // Predicated region
        $region65: #{encoder_pool_forward.2} parent=11 // pred_check
          %p496 = pneg %p348
        $region66: #{encoder_pool_forward.2} parent=11 // pred_check_branch
          %498 = sbr.rel (%p496) target = $region68
        $region67: #{encoder_pool_forward.2} parent=11 // pred_region
          _
        $region68: #{encoder_pool_forward.2} parent=11 // pred_fallthru
          _
        // Predicated region
        $region69: #{encoder_pool_forward.2} parent=11 // pred_check
          %p499 = pneg %p369
        $region70: #{encoder_pool_forward.2} parent=11 // pred_check_branch
          %501 = sbr.rel (%p499) target = $region72
        $region71: #{encoder_pool_forward.2} parent=11 // pred_region
          _
        $region72: #{encoder_pool_forward.2} parent=11 // pred_fallthru
          _
        // Predicated region
        $region73: #{encoder_pool_forward.2} parent=11 // pred_check
          %p502 = pneg %p390
        $region74: #{encoder_pool_forward.2} parent=11 // pred_check_branch
          %504 = sbr.rel (%p502) target = $region76
        $region75: #{encoder_pool_forward.2} parent=11 // pred_region
          _
        $region76: #{encoder_pool_forward.2} parent=11 // pred_fallthru
          _
      $region12: #{encoder_pool_forward.2} parent=5 // pred_fallthru
        _
      %p505 = scmp.lt.s32.totalorder %s28, 2
      // Predicated region
      $region77: #{encoder_pool_forward.2} parent=5 // pred_check
        %p506 = pneg %p505
      $region78: #{encoder_pool_forward.2} parent=5 // pred_check_branch
        %508 = sbr.rel (%p506) target = $region80
      $region79: #{encoder_pool_forward.2} parent=5 // pred_region
        // Predicated region
        $region81: #{encoder_pool_forward.2} parent=79 // pred_check
          %p509 = pneg %p48
        $region82: #{encoder_pool_forward.2} parent=79 // pred_check_branch
          %511 = sbr.rel (%p509) target = $region84
        $region83: #{encoder_pool_forward.2} parent=79 // pred_region
          %p512 = scmp.lt.s32.totalorder %s28, 1
          %s513 = scalar_select %p512, %s28, 1
          %s514 = smul.addr %s513, 2
          %s515 = smul.addr %s514, 4
          %s516 = scalar_lea.vmem %s0, %s515
        $region84: #{encoder_pool_forward.2} parent=79 // pred_fallthru
          _
      $region80: #{encoder_pool_forward.2} parent=5 // pred_fallthru
        _
      %p517 = scmp.le.s32.totalorder 1, %s28
      %p518 = scmp.lt.s32.totalorder %s28, 3
      %p519 = pnand %p517, %p518
      %p520 = pneg %p519
      // Predicated region
      $region85: #{encoder_pool_forward.2} parent=5 // pred_check
        _
      $region86: #{encoder_pool_forward.2} parent=5 // pred_check_branch
        %522 = sbr.rel (%p519) target = $region88
      $region87: #{encoder_pool_forward.2} parent=5 // pred_region
        %s523 = ssub.s32 %s28, 1
        %p524 = scmp.lt.s32.totalorder %s33, 1
        %s525 = scalar_select %p524, %s33, 1
        %s526 = smul.addr %s525, 2
        %s527 = smul.addr %s526, 4
        %s528 = scalar_lea.vmem %s0, %s527
        %p529 = pneg %p54
        %p530 = pneg %p51
        %p531 = pneg %p75
        %p532 = pneg %p72
        %p533 = pneg %p96
        %p534 = pneg %p93
        %p535 = pneg %p117
        %p536 = pneg %p114
        %p537 = pneg %p138
        %p538 = pneg %p135
        %p539 = pneg %p159
        %p540 = pneg %p156
        %p541 = pneg %p180
        %p542 = pneg %p177
        %p543 = pneg %p201
        %p544 = pneg %p198
        %p545 = pneg %p222
        %p546 = pneg %p219
        %p547 = pneg %p243
        %p548 = pneg %p240
        %p549 = pneg %p264
        %p550 = pneg %p261
        %p551 = pneg %p285
        %p552 = pneg %p282
        %p553 = pneg %p306
        %p554 = pneg %p303
        %p555 = pneg %p327
        %p556 = pneg %p324
        %p557 = pneg %p348
        %p558 = pneg %p345
        %p559 = pneg %p369
        %p560 = pneg %p366
        %p561 = pneg %p390
        %p562 = pneg %p387
        %p563 = pneg %p416
        %p564 = pneg %p413
        %s565 = sand.u32 %s403, 1
        %s566 = scalar_lea.sflag [#allocation6], %s565
        %s567 = sand.u32 %s403, 1
        %s568 = smul.addr %s567, 2
        %s569 = scalar_lea.vmem [#allocation5], %s568
        %p570 = pneg %p442
        %p571 = pneg %p439
        %p572 = scmp.lt.s32.totalorder %s33, 1
        %s573 = scalar_select %p572, %s33, 1
        %s574 = scalar_lea.vmem %s18, %s573
        %p575 = scmp.lt.s32.totalorder %s33, 1
        %s576 = scalar_select %p575, %s33, 1
        %s577 = smul.addr %s576, 2
        %s578 = smul.addr %s577, 4
        %s579 = scalar_lea.vmem %s0, %s578
        %p580 = scmp.lt.s32.totalorder %s33, 1
        %s581 = scalar_select %p580, %s33, 1
        %s582 = scalar_lea.vmem %s18, %s581
        %v583 = vld [vmem:[%s579] sm:$0x77]
        %584 = vst [vmem:[#allocation2 + $0x4] sm:$0x77] %v583
        %v585 = vld [vmem:[#allocation2] sm:$0x77]
        %v586 = vld [vmem:[#allocation2 + $0x8] sm:$0x7]
        %v587 = vld [vmem:[%s3] sm:$0x3]
        %vm588 = vcmp.gt.f32.partialorder %v587, 0.5
        %v589 = vsel %vm588, 1, 0
        %v590 = vlaneseq
        %v591 = vshrl.u32 %v590, 7
        %v592 = vsub.s32 0, %v591
        %v593 = vrot.slane %v589, %v592
        %v594 = vlaneseq
        %v595 = vshrl.u32 %v594, 7
        %v596 = vsub.s32 1, %v595
        %v597 = vrot.slane %v589, %v596
        %vm598 = vcmp.eq.s32.totalorder %v593, 1
        %vm599 = vcmp.eq.s32.totalorder %v597, 1
        %v602 = vcombine.high %v585, %v585
        %603 = vrot.lane.b32.xlu0 %v585, 17
        %v604 = vpop.permute.xlu0 %603
        %605 = vrot.lane.b32.xlu0 %v602, 17
        %v606 = vpop.permute.xlu0 %605
        %607 = vrot.lane.b32.xlu0 %v586, 17
        %v608 = vpop.permute.xlu0 %607
        %vm609 = vcmask 138240
        %v610 = vsel %vm609, %v604, %v606
        %v611 = vsel %vm609, %v606, %v608
        %v614 = vsel %vm598, %v610, 0.0
        %v615 = vsel %vm599, %v611, 0.0
        %v616 = vld [vmem:[%s1] sm:$0xff]
        %v617 = vld [vmem:[%s1 + $0x8] sm:$0xff]
        %v618 = vld [vmem:[%s1 + $0x10] sm:$0xff]
        %v619 = vld [vmem:[%s1 + $0x18] sm:$0xff]
        %s620 = scalar_lea.vmem %s3, 2
        %v621 = vld [vmem:[%s620] sm:$0x3]
        %vm622 = vcmp.gt.f32.partialorder %v621, 0.5
        %v623 = vsel %vm622, 1, 0
        %v624 = vlaneseq
        %v625 = vshrl.u32 %v624, 7
        %v626 = vsub.s32 0, %v625
        %v627 = vrot.slane %v623, %v626
        %v628 = vlaneseq
        %v629 = vshrl.u32 %v628, 7
        %v630 = vsub.s32 1, %v629
        %v631 = vrot.slane %v623, %v630
        %vm632 = vcmp.eq.s32.totalorder %v627, 1
        %vm633 = vcmp.eq.s32.totalorder %v631, 1
        %634 = vrot.lane.b32.xlu0 %v585, 16
        %v635 = vpop.permute.xlu0 %634
        %636 = vrot.lane.b32.xlu0 %v602, 16
        %v637 = vpop.permute.xlu0 %636
        %638 = vrot.lane.b32.xlu0 %v586, 16
        %v639 = vpop.permute.xlu0 %638
        %vm640 = vcmask 130048
        %v641 = vsel %vm640, %v635, %v637
        %v642 = vsel %vm640, %v637, %v639
        %v645 = vsel %vm632, %v641, 0.0
        %v646 = vsel %vm633, %v642, 0.0
        %s647 = scalar_lea.vmem %s1, 32
        %v648 = vld [vmem:[%s647] sm:$0xff]
        %v649 = vld [vmem:[%s647 + $0x8] sm:$0xff]
        %v650 = vld [vmem:[%s647 + $0x10] sm:$0xff]
        %v651 = vld [vmem:[%s647 + $0x18] sm:$0xff]
        %vm652 = vcmask 23552
        %v654 = vsel %vm652, %v648, 0
        %v657 = vsel %vm652, %v649, 0
        %v660 = vsel %vm652, %v650, 0
        %v663 = vsel %vm652, %v651, 0
        %vm665 = vcmask 1042432
        %v667 = vsel %vm665, %v645, 0
        %v670 = vsel %vm665, %v646, 0
        %672 = vmatprep.subr.mxu0 0.0
        %673 = vmatpush1.msra.mxu0 0.0
        %674 = vmatprep.subr.mxu0 0.0
        %675 = vmatpush1.msra.mxu0 0.0
        %676 = vmatprep.subr.mxu0 0.0
        %677 = vmatpush1.msra.mxu0 0.0
        %678 = vmatprep.subr.mxu0 0.0
        %679 = vmatpush1.msra.mxu0 0.0
        %680 = vmatprep.subr.mxu0 0.0
        %681 = vmatpush1.msra.mxu0 0.0
        %682 = vmatprep.subr.mxu0 0.0
        %683 = vmatpush1.msra.mxu0 0.0
        %684 = vmatprep.subr.mxu0 0.0
        %685 = vmatpush1.msra.mxu0 0.0
        %686 = vmatprep.subr.mxu0 0.0
        %687 = vmatpush1.msra.mxu0 0.0
        %688 = vmatprep.subr.mxu0 0.0
        %689 = vmatpush1.msra.mxu0 0.0
        %690 = vmatprep.subr.mxu0 0.0
        %691 = vmatpush1.msra.mxu0 0.0
        %692 = vmatprep.subr.mxu0 0.0
        %693 = vmatpush1.msra.mxu0 0.0
        %694 = vmatprep.subr.mxu0 0.0
        %695 = vmatpush1.msra.mxu0 0.0
        %696 = vmatprep.subr.mxu0 0.0
        %697 = vmatpush1.msra.mxu0 0.0
        %698 = vmatprep.subr.mxu0 0.0
        %699 = vmatpush1.msra.mxu0 0.0
        %700 = vmatprep.subr.mxu0 0.0
        %701 = vmatpush1.msra.mxu0 0.0
        %702 = vmatprep.subr.mxu0 %v670
        %703 = vmatpush1.msra.mxu0 %v667
        %704 = vmatprep.subr.mxu0 0.0
        %705 = vmatpush2.msra.mxu0 0.0
        %706 = vmatprep.subr.mxu0 0.0
        %707 = vmatpush2.msra.mxu0 0.0
        %708 = vmatprep.subr.mxu0 0.0
        %709 = vmatpush2.msra.mxu0 0.0
        %710 = vmatprep.subr.mxu0 0.0
        %711 = vmatpush2.msra.mxu0 0.0
        %712 = vmatprep.subr.mxu0 0.0
        %713 = vmatpush2.msra.mxu0 0.0
        %714 = vmatprep.subr.mxu0 0.0
        %715 = vmatpush2.msra.mxu0 0.0
        %716 = vmatprep.subr.mxu0 0.0
        %717 = vmatpush2.msra.mxu0 0.0
        %718 = vmatprep.subr.mxu0 0.0
        %719 = vmatpush2.msra.mxu0 0.0
        %720 = vmatprep.subr.mxu0 0.0
        %721 = vmatpush2.msra.mxu0 0.0
        %722 = vmatprep.subr.mxu0 0.0
        %723 = vmatpush2.msra.mxu0 0.0
        %724 = vmatprep.subr.mxu0 0.0
        %725 = vmatpush2.msra.mxu0 0.0
        %726 = vmatprep.subr.mxu0 0.0
        %727 = vmatpush2.msra.mxu0 0.0
        %728 = vmatprep.subr.mxu0 0.0
        %729 = vmatpush2.msra.mxu0 0.0
        %730 = vmatprep.subr.mxu0 0.0
        %731 = vmatpush2.msra.mxu0 0.0
        %732 = vmatprep.subr.mxu0 0.0
        %733 = vmatpush2.msra.mxu0 0.0
        %734 = vmatprep.subr.mxu0 0.0
        %735 = vmatpush2.msra.mxu0 0.0
        %736 = vmatprep.mubr.f32.mxu0 0.0
        %737 = vmatmul.mubr.f32.gmra.mxu0 %v654
        %v738 = vpop.f32.mrf.mxu0
        %v739 = vadd.f32 0.0, %v738
        %v740 = vpop.f32.mrf.mxu0
        %v741 = vadd.f32 0.0, %v740
        %742 = vmatprep.mubr.f32.mxu0 0.0
        %743 = vmatmul.mubr.f32.gmra.mxu0 %v657
        %v744 = vpop.f32.mrf.mxu0
        %v745 = vadd.f32 0.0, %v744
        %v746 = vpop.f32.mrf.mxu0
        %v747 = vadd.f32 0.0, %v746
        %748 = vmatprep.mubr.f32.mxu0 0.0
        %749 = vmatmul.mubr.f32.gmra.mxu0 %v660
        %v750 = vpop.f32.mrf.mxu0
        %v751 = vadd.f32 0.0, %v750
        %v752 = vpop.f32.mrf.mxu0
        %v753 = vadd.f32 0.0, %v752
        %754 = vmatprep.mubr.f32.mxu0 0.0
        %755 = vmatmul.mubr.f32.gmra.mxu0 %v663
        %v756 = vpop.f32.mrf.mxu0
        %v757 = vadd.f32 0.0, %v756
        %v758 = vpop.f32.mrf.mxu0
        %v759 = vadd.f32 0.0, %v758
        %760 = vdwg.mxu0
        %v762 = vsel %vm652, %v616, 0
        %v765 = vsel %vm652, %v617, 0
        %v768 = vsel %vm652, %v618, 0
        %v771 = vsel %vm652, %v619, 0
        %v774 = vsel %vm665, %v614, 0
        %v777 = vsel %vm665, %v615, 0
        %779 = vmatprep.subr.mxu0 0.0
        %780 = vmatpush1.msra.mxu0 0.0
        %781 = vmatprep.subr.mxu0 0.0
        %782 = vmatpush1.msra.mxu0 0.0
        %783 = vmatprep.subr.mxu0 0.0
        %784 = vmatpush1.msra.mxu0 0.0
        %785 = vmatprep.subr.mxu0 0.0
        %786 = vmatpush1.msra.mxu0 0.0
        %787 = vmatprep.subr.mxu0 0.0
        %788 = vmatpush1.msra.mxu0 0.0
        %789 = vmatprep.subr.mxu0 0.0
        %790 = vmatpush1.msra.mxu0 0.0
        %791 = vmatprep.subr.mxu0 0.0
        %792 = vmatpush1.msra.mxu0 0.0
        %793 = vmatprep.subr.mxu0 0.0
        %794 = vmatpush1.msra.mxu0 0.0
        %795 = vmatprep.subr.mxu0 0.0
        %796 = vmatpush1.msra.mxu0 0.0
        %797 = vmatprep.subr.mxu0 0.0
        %798 = vmatpush1.msra.mxu0 0.0
        %799 = vmatprep.subr.mxu0 0.0
        %800 = vmatpush1.msra.mxu0 0.0
        %801 = vmatprep.subr.mxu0 0.0
        %802 = vmatpush1.msra.mxu0 0.0
        %803 = vmatprep.subr.mxu0 0.0
        %804 = vmatpush1.msra.mxu0 0.0
        %805 = vmatprep.subr.mxu0 0.0
        %806 = vmatpush1.msra.mxu0 0.0
        %807 = vmatprep.subr.mxu0 0.0
        %808 = vmatpush1.msra.mxu0 0.0
        %809 = vmatprep.subr.mxu0 %v777
        %810 = vmatpush1.msra.mxu0 %v774
        %811 = vmatprep.subr.mxu0 0.0
        %812 = vmatpush2.msra.mxu0 0.0
        %813 = vmatprep.subr.mxu0 0.0
        %814 = vmatpush2.msra.mxu0 0.0
        %815 = vmatprep.subr.mxu0 0.0
        %816 = vmatpush2.msra.mxu0 0.0
        %817 = vmatprep.subr.mxu0 0.0
        %818 = vmatpush2.msra.mxu0 0.0
        %819 = vmatprep.subr.mxu0 0.0
        %820 = vmatpush2.msra.mxu0 0.0
        %821 = vmatprep.subr.mxu0 0.0
        %822 = vmatpush2.msra.mxu0 0.0
        %823 = vmatprep.subr.mxu0 0.0
        %824 = vmatpush2.msra.mxu0 0.0
        %825 = vmatprep.subr.mxu0 0.0
        %826 = vmatpush2.msra.mxu0 0.0
        %827 = vmatprep.subr.mxu0 0.0
        %828 = vmatpush2.msra.mxu0 0.0
        %829 = vmatprep.subr.mxu0 0.0
        %830 = vmatpush2.msra.mxu0 0.0
        %831 = vmatprep.subr.mxu0 0.0
        %832 = vmatpush2.msra.mxu0 0.0
        %833 = vmatprep.subr.mxu0 0.0
        %834 = vmatpush2.msra.mxu0 0.0
        %835 = vmatprep.subr.mxu0 0.0
        %836 = vmatpush2.msra.mxu0 0.0
        %837 = vmatprep.subr.mxu0 0.0
        %838 = vmatpush2.msra.mxu0 0.0
        %839 = vmatprep.subr.mxu0 0.0
        %840 = vmatpush2.msra.mxu0 0.0
        %841 = vmatprep.subr.mxu0 0.0
        %842 = vmatpush2.msra.mxu0 0.0
        %843 = vmatprep.mubr.f32.mxu0 0.0
        %844 = vmatmul.mubr.f32.gmra.mxu0 %v762
        %v845 = vpop.f32.mrf.mxu0
        %v846 = vadd.f32 %v739, %v845
        %v847 = vpop.f32.mrf.mxu0
        %v848 = vadd.f32 %v741, %v847
        %849 = vmatprep.mubr.f32.mxu0 0.0
        %850 = vmatmul.mubr.f32.gmra.mxu0 %v765
        %v851 = vpop.f32.mrf.mxu0
        %v852 = vadd.f32 %v745, %v851
        %v853 = vpop.f32.mrf.mxu0
        %v854 = vadd.f32 %v747, %v853
        %855 = vmatprep.mubr.f32.mxu0 0.0
        %856 = vmatmul.mubr.f32.gmra.mxu0 %v768
        %v857 = vpop.f32.mrf.mxu0
        %v858 = vadd.f32 %v751, %v857
        %v859 = vpop.f32.mrf.mxu0
        %v860 = vadd.f32 %v753, %v859
        %861 = vmatprep.mubr.f32.mxu0 0.0
        %862 = vmatmul.mubr.f32.gmra.mxu0 %v771
        %v863 = vpop.f32.mrf.mxu0
        %v864 = vadd.f32 %v757, %v863
        %v865 = vpop.f32.mrf.mxu0
        %v866 = vadd.f32 %v759, %v865
        %867 = vdwg.mxu0
        %v868 = vld [vmem:[#allocation2] sm:$0x77]
        %v869 = vld [vmem:[#allocation2 + $0x8] sm:$0x7]
        %s870 = scalar_lea.vmem %s3, 4
        %v871 = vld [vmem:[%s870] sm:$0x3]
        %vm872 = vcmp.gt.f32.partialorder %v871, 0.5
        %v873 = vsel %vm872, 1, 0
        %v874 = vlaneseq
        %v875 = vshrl.u32 %v874, 7
        %v876 = vsub.s32 0, %v875
        %v877 = vrot.slane %v873, %v876
        %v878 = vlaneseq
        %v879 = vshrl.u32 %v878, 7
        %v880 = vsub.s32 1, %v879
        %v881 = vrot.slane %v873, %v880
        %vm882 = vcmp.eq.s32.totalorder %v877, 1
        %vm883 = vcmp.eq.s32.totalorder %v881, 1
        %v886 = vcombine.high %v868, %v868
        %887 = vrot.lane.b32.xlu0 %v868, 15
        %v888 = vpop.permute.xlu0 %887
        %889 = vrot.lane.b32.xlu0 %v886, 15
        %v890 = vpop.permute.xlu0 %889
        %891 = vrot.lane.b32.xlu0 %v869, 15
        %v892 = vpop.permute.xlu0 %891
        %vm893 = vcmask 121856
        %v894 = vsel %vm893, %v888, %v890
        %v895 = vsel %vm893, %v890, %v892
        %v898 = vsel %vm882, %v894, 0.0
        %v899 = vsel %vm883, %v895, 0.0
        %s900 = scalar_lea.vmem %s1, 64
        %v901 = vld [vmem:[%s900] sm:$0xff]
        %v902 = vld [vmem:[%s900 + $0x8] sm:$0xff]
        %v903 = vld [vmem:[%s900 + $0x10] sm:$0xff]
        %v904 = vld [vmem:[%s900 + $0x18] sm:$0xff]
        %v906 = vsel %vm652, %v901, 0
        %v909 = vsel %vm652, %v902, 0
        %v912 = vsel %vm652, %v903, 0
        %v915 = vsel %vm652, %v904, 0
        %v918 = vsel %vm665, %v898, 0
        %v921 = vsel %vm665, %v899, 0
        %923 = vmatprep.subr.mxu0 0.0
        %924 = vmatpush1.msra.mxu0 0.0
        %925 = vmatprep.subr.mxu0 0.0
        %926 = vmatpush1.msra.mxu0 0.0
        %927 = vmatprep.subr.mxu0 0.0
        %928 = vmatpush1.msra.mxu0 0.0
        %929 = vmatprep.subr.mxu0 0.0
        %930 = vmatpush1.msra.mxu0 0.0
        %931 = vmatprep.subr.mxu0 0.0
        %932 = vmatpush1.msra.mxu0 0.0
        %933 = vmatprep.subr.mxu0 0.0
        %934 = vmatpush1.msra.mxu0 0.0
        %935 = vmatprep.subr.mxu0 0.0
        %936 = vmatpush1.msra.mxu0 0.0
        %937 = vmatprep.subr.mxu0 0.0
        %938 = vmatpush1.msra.mxu0 0.0
        %939 = vmatprep.subr.mxu0 0.0
        %940 = vmatpush1.msra.mxu0 0.0
        %941 = vmatprep.subr.mxu0 0.0
        %942 = vmatpush1.msra.mxu0 0.0
        %943 = vmatprep.subr.mxu0 0.0
        %944 = vmatpush1.msra.mxu0 0.0
        %945 = vmatprep.subr.mxu0 0.0
        %946 = vmatpush1.msra.mxu0 0.0
        %947 = vmatprep.subr.mxu0 0.0
        %948 = vmatpush1.msra.mxu0 0.0
        %949 = vmatprep.subr.mxu0 0.0
        %950 = vmatpush1.msra.mxu0 0.0
        %951 = vmatprep.subr.mxu0 0.0
        %952 = vmatpush1.msra.mxu0 0.0
        %953 = vmatprep.subr.mxu0 %v921
        %954 = vmatpush1.msra.mxu0 %v918
        %955 = vmatprep.subr.mxu0 0.0
        %956 = vmatpush2.msra.mxu0 0.0
        %957 = vmatprep.subr.mxu0 0.0
        %958 = vmatpush2.msra.mxu0 0.0
        %959 = vmatprep.subr.mxu0 0.0
        %960 = vmatpush2.msra.mxu0 0.0
        %961 = vmatprep.subr.mxu0 0.0
        %962 = vmatpush2.msra.mxu0 0.0
        %963 = vmatprep.subr.mxu0 0.0
        %964 = vmatpush2.msra.mxu0 0.0
        %965 = vmatprep.subr.mxu0 0.0
        %966 = vmatpush2.msra.mxu0 0.0
        %967 = vmatprep.subr.mxu0 0.0
        %968 = vmatpush2.msra.mxu0 0.0
        %969 = vmatprep.subr.mxu0 0.0
        %970 = vmatpush2.msra.mxu0 0.0
        %971 = vmatprep.subr.mxu0 0.0
        %972 = vmatpush2.msra.mxu0 0.0
        %973 = vmatprep.subr.mxu0 0.0
        %974 = vmatpush2.msra.mxu0 0.0
        %975 = vmatprep.subr.mxu0 0.0
        %976 = vmatpush2.msra.mxu0 0.0
        %977 = vmatprep.subr.mxu0 0.0
        %978 = vmatpush2.msra.mxu0 0.0
        %979 = vmatprep.subr.mxu0 0.0
        %980 = vmatpush2.msra.mxu0 0.0
        %981 = vmatprep.subr.mxu0 0.0
        %982 = vmatpush2.msra.mxu0 0.0
        %983 = vmatprep.subr.mxu0 0.0
        %984 = vmatpush2.msra.mxu0 0.0
        %985 = vmatprep.subr.mxu0 0.0
        %986 = vmatpush2.msra.mxu0 0.0
        %987 = vmatprep.mubr.f32.mxu0 0.0
        %988 = vmatmul.mubr.f32.gmra.mxu0 %v906
        %v989 = vpop.f32.mrf.mxu0
        %v990 = vadd.f32 0.0, %v989
        %v991 = vpop.f32.mrf.mxu0
        %v992 = vadd.f32 0.0, %v991
        %993 = vmatprep.mubr.f32.mxu0 0.0
        %994 = vmatmul.mubr.f32.gmra.mxu0 %v909
        %v995 = vpop.f32.mrf.mxu0
        %v996 = vadd.f32 0.0, %v995
        %v997 = vpop.f32.mrf.mxu0
        %v998 = vadd.f32 0.0, %v997
        %999 = vmatprep.mubr.f32.mxu0 0.0
        %1000 = vmatmul.mubr.f32.gmra.mxu0 %v912
        %v1001 = vpop.f32.mrf.mxu0
        %v1002 = vadd.f32 0.0, %v1001
        %v1003 = vpop.f32.mrf.mxu0
        %v1004 = vadd.f32 0.0, %v1003
        %1005 = vmatprep.mubr.f32.mxu0 0.0
        %1006 = vmatmul.mubr.f32.gmra.mxu0 %v915
        %v1007 = vpop.f32.mrf.mxu0
        %v1008 = vadd.f32 0.0, %v1007
        %v1009 = vpop.f32.mrf.mxu0
        %v1010 = vadd.f32 0.0, %v1009
        %1011 = vdwg.mxu0
        %v1012 = vadd.f32 %v846, %v990
        %v1013 = vadd.f32 %v848, %v992
        %v1014 = vadd.f32 %v852, %v996
        %v1015 = vadd.f32 %v854, %v998
        %v1016 = vadd.f32 %v858, %v1002
        %v1017 = vadd.f32 %v860, %v1004
        %v1018 = vadd.f32 %v864, %v1008
        %v1019 = vadd.f32 %v866, %v1010
        %v1020 = vld [vmem:[#allocation2] sm:$0x77]
        %v1021 = vld [vmem:[#allocation2 + $0x8] sm:$0x7]
        %s1022 = scalar_lea.vmem %s3, 6
        %v1023 = vld [vmem:[%s1022] sm:$0x3]
        %vm1024 = vcmp.gt.f32.partialorder %v1023, 0.5
        %v1025 = vsel %vm1024, 1, 0
        %v1026 = vlaneseq
        %v1027 = vshrl.u32 %v1026, 7
        %v1028 = vsub.s32 0, %v1027
        %v1029 = vrot.slane %v1025, %v1028
        %v1030 = vlaneseq
        %v1031 = vshrl.u32 %v1030, 7
        %v1032 = vsub.s32 1, %v1031
        %v1033 = vrot.slane %v1025, %v1032
        %vm1034 = vcmp.eq.s32.totalorder %v1029, 1
        %vm1035 = vcmp.eq.s32.totalorder %v1033, 1
        %v1038 = vcombine.high %v1020, %v1020
        %1039 = vrot.lane.b32.xlu0 %v1020, 1
        %v1040 = vpop.permute.xlu0 %1039
        %1041 = vrot.lane.b32.xlu0 %v1038, 1
        %v1042 = vpop.permute.xlu0 %1041
        %1043 = vrot.lane.b32.xlu0 %v1021, 1
        %v1044 = vpop.permute.xlu0 %1043
        %vm1045 = vcmask 7168
        %v1046 = vsel %vm1045, %v1040, %v1042
        %v1047 = vsel %vm1045, %v1042, %v1044
        %v1050 = vsel %vm1034, %v1046, 0.0
        %v1051 = vsel %vm1035, %v1047, 0.0
        %s1052 = scalar_lea.vmem %s1, 96
        %v1053 = vld [vmem:[%s1052] sm:$0xff]
        %v1054 = vld [vmem:[%s1052 + $0x8] sm:$0xff]
        %v1055 = vld [vmem:[%s1052 + $0x10] sm:$0xff]
        %v1056 = vld [vmem:[%s1052 + $0x18] sm:$0xff]
        %v1058 = vsel %vm652, %v1053, 0
        %v1061 = vsel %vm652, %v1054, 0
        %v1064 = vsel %vm652, %v1055, 0
        %v1067 = vsel %vm652, %v1056, 0
        %v1070 = vsel %vm665, %v1050, 0
        %v1073 = vsel %vm665, %v1051, 0
        %1075 = vmatprep.subr.mxu0 0.0
        %1076 = vmatpush1.msra.mxu0 0.0
        %1077 = vmatprep.subr.mxu0 0.0
        %1078 = vmatpush1.msra.mxu0 0.0
        %1079 = vmatprep.subr.mxu0 0.0
        %1080 = vmatpush1.msra.mxu0 0.0
        %1081 = vmatprep.subr.mxu0 0.0
        %1082 = vmatpush1.msra.mxu0 0.0
        %1083 = vmatprep.subr.mxu0 0.0
        %1084 = vmatpush1.msra.mxu0 0.0
        %1085 = vmatprep.subr.mxu0 0.0
        %1086 = vmatpush1.msra.mxu0 0.0
        %1087 = vmatprep.subr.mxu0 0.0
        %1088 = vmatpush1.msra.mxu0 0.0
        %1089 = vmatprep.subr.mxu0 0.0
        %1090 = vmatpush1.msra.mxu0 0.0
        %1091 = vmatprep.subr.mxu0 0.0
        %1092 = vmatpush1.msra.mxu0 0.0
        %1093 = vmatprep.subr.mxu0 0.0
        %1094 = vmatpush1.msra.mxu0 0.0
        %1095 = vmatprep.subr.mxu0 0.0
        %1096 = vmatpush1.msra.mxu0 0.0
        %1097 = vmatprep.subr.mxu0 0.0
        %1098 = vmatpush1.msra.mxu0 0.0
        %1099 = vmatprep.subr.mxu0 0.0
        %1100 = vmatpush1.msra.mxu0 0.0
        %1101 = vmatprep.subr.mxu0 0.0
        %1102 = vmatpush1.msra.mxu0 0.0
        %1103 = vmatprep.subr.mxu0 0.0
        %1104 = vmatpush1.msra.mxu0 0.0
        %1105 = vmatprep.subr.mxu0 %v1073
        %1106 = vmatpush1.msra.mxu0 %v1070
        %1107 = vmatprep.subr.mxu0 0.0
        %1108 = vmatpush2.msra.mxu0 0.0
        %1109 = vmatprep.subr.mxu0 0.0
        %1110 = vmatpush2.msra.mxu0 0.0
        %1111 = vmatprep.subr.mxu0 0.0
        %1112 = vmatpush2.msra.mxu0 0.0
        %1113 = vmatprep.subr.mxu0 0.0
        %1114 = vmatpush2.msra.mxu0 0.0
        %1115 = vmatprep.subr.mxu0 0.0
        %1116 = vmatpush2.msra.mxu0 0.0
        %1117 = vmatprep.subr.mxu0 0.0
        %1118 = vmatpush2.msra.mxu0 0.0
        %1119 = vmatprep.subr.mxu0 0.0
        %1120 = vmatpush2.msra.mxu0 0.0
        %1121 = vmatprep.subr.mxu0 0.0
        %1122 = vmatpush2.msra.mxu0 0.0
        %1123 = vmatprep.subr.mxu0 0.0
        %1124 = vmatpush2.msra.mxu0 0.0
        %1125 = vmatprep.subr.mxu0 0.0
        %1126 = vmatpush2.msra.mxu0 0.0
        %1127 = vmatprep.subr.mxu0 0.0
        %1128 = vmatpush2.msra.mxu0 0.0
        %1129 = vmatprep.subr.mxu0 0.0
        %1130 = vmatpush2.msra.mxu0 0.0
        %1131 = vmatprep.subr.mxu0 0.0
        %1132 = vmatpush2.msra.mxu0 0.0
        %1133 = vmatprep.subr.mxu0 0.0
        %1134 = vmatpush2.msra.mxu0 0.0
        %1135 = vmatprep.subr.mxu0 0.0
        %1136 = vmatpush2.msra.mxu0 0.0
        %1137 = vmatprep.subr.mxu0 0.0
        %1138 = vmatpush2.msra.mxu0 0.0
        %1139 = vmatprep.mubr.f32.mxu0 0.0
        %1140 = vmatmul.mubr.f32.gmra.mxu0 %v1058
        %v1141 = vpop.f32.mrf.mxu0
        %v1142 = vadd.f32 0.0, %v1141
        %v1143 = vpop.f32.mrf.mxu0
        %v1144 = vadd.f32 0.0, %v1143
        %1145 = vmatprep.mubr.f32.mxu0 0.0
        %1146 = vmatmul.mubr.f32.gmra.mxu0 %v1061
        %v1147 = vpop.f32.mrf.mxu0
        %v1148 = vadd.f32 0.0, %v1147
        %v1149 = vpop.f32.mrf.mxu0
        %v1150 = vadd.f32 0.0, %v1149
        %1151 = vmatprep.mubr.f32.mxu0 0.0
        %1152 = vmatmul.mubr.f32.gmra.mxu0 %v1064
        %v1153 = vpop.f32.mrf.mxu0
        %v1154 = vadd.f32 0.0, %v1153
        %v1155 = vpop.f32.mrf.mxu0
        %v1156 = vadd.f32 0.0, %v1155
        %1157 = vmatprep.mubr.f32.mxu0 0.0
        %1158 = vmatmul.mubr.f32.gmra.mxu0 %v1067
        %v1159 = vpop.f32.mrf.mxu0
        %v1160 = vadd.f32 0.0, %v1159
        %v1161 = vpop.f32.mrf.mxu0
        %v1162 = vadd.f32 0.0, %v1161
        %1163 = vdwg.mxu0
        %v1164 = vadd.f32 %v1012, %v1142
        %v1165 = vadd.f32 %v1013, %v1144
        %v1166 = vadd.f32 %v1014, %v1148
        %v1167 = vadd.f32 %v1015, %v1150
        %v1168 = vadd.f32 %v1016, %v1154
        %v1169 = vadd.f32 %v1017, %v1156
        %v1170 = vadd.f32 %v1018, %v1160
        %v1171 = vadd.f32 %v1019, %v1162
        %v1172 = vld [vmem:[#allocation2 + $0x4] sm:$0x77]
        %s1173 = scalar_lea.vmem %s1, 128
        %v1174 = vld [vmem:[%s1173] sm:$0xff]
        %v1175 = vld [vmem:[%s1173 + $0x8] sm:$0xff]
        %v1176 = vld [vmem:[%s1173 + $0x10] sm:$0xff]
        %v1177 = vld [vmem:[%s1173 + $0x18] sm:$0xff]
        %v1179 = vcombine.high %v1172, %v1172
        %v1181 = vsel %vm652, %v1174, 0
        %v1184 = vsel %vm652, %v1175, 0
        %v1187 = vsel %vm652, %v1176, 0
        %v1190 = vsel %vm652, %v1177, 0
        %v1192 = vsel %vm665, %v1172, 0
        %v1194 = vsel %vm665, %v1179, 0
        %1196 = vmatprep.subr.mxu0 0.0
        %1197 = vmatpush1.msra.mxu0 0.0
        %1198 = vmatprep.subr.mxu0 0.0
        %1199 = vmatpush1.msra.mxu0 0.0
        %1200 = vmatprep.subr.mxu0 0.0
        %1201 = vmatpush1.msra.mxu0 0.0
        %1202 = vmatprep.subr.mxu0 0.0
        %1203 = vmatpush1.msra.mxu0 0.0
        %1204 = vmatprep.subr.mxu0 0.0
        %1205 = vmatpush1.msra.mxu0 0.0
        %1206 = vmatprep.subr.mxu0 0.0
        %1207 = vmatpush1.msra.mxu0 0.0
        %1208 = vmatprep.subr.mxu0 0.0
        %1209 = vmatpush1.msra.mxu0 0.0
        %1210 = vmatprep.subr.mxu0 0.0
        %1211 = vmatpush1.msra.mxu0 0.0
        %1212 = vmatprep.subr.mxu0 0.0
        %1213 = vmatpush1.msra.mxu0 0.0
        %1214 = vmatprep.subr.mxu0 0.0
        %1215 = vmatpush1.msra.mxu0 0.0
        %1216 = vmatprep.subr.mxu0 0.0
        %1217 = vmatpush1.msra.mxu0 0.0
        %1218 = vmatprep.subr.mxu0 0.0
        %1219 = vmatpush1.msra.mxu0 0.0
        %1220 = vmatprep.subr.mxu0 0.0
        %1221 = vmatpush1.msra.mxu0 0.0
        %1222 = vmatprep.subr.mxu0 0.0
        %1223 = vmatpush1.msra.mxu0 0.0
        %1224 = vmatprep.subr.mxu0 0.0
        %1225 = vmatpush1.msra.mxu0 0.0
        %1226 = vmatprep.subr.mxu0 %v1194
        %1227 = vmatpush1.msra.mxu0 %v1192
        %1228 = vmatprep.subr.mxu0 0.0
        %1229 = vmatpush2.msra.mxu0 0.0
        %1230 = vmatprep.subr.mxu0 0.0
        %1231 = vmatpush2.msra.mxu0 0.0
        %1232 = vmatprep.subr.mxu0 0.0
        %1233 = vmatpush2.msra.mxu0 0.0
        %1234 = vmatprep.subr.mxu0 0.0
        %1235 = vmatpush2.msra.mxu0 0.0
        %1236 = vmatprep.subr.mxu0 0.0
        %1237 = vmatpush2.msra.mxu0 0.0
        %1238 = vmatprep.subr.mxu0 0.0
        %1239 = vmatpush2.msra.mxu0 0.0
        %1240 = vmatprep.subr.mxu0 0.0
        %1241 = vmatpush2.msra.mxu0 0.0
        %1242 = vmatprep.subr.mxu0 0.0
        %1243 = vmatpush2.msra.mxu0 0.0
        %1244 = vmatprep.subr.mxu0 0.0
        %1245 = vmatpush2.msra.mxu0 0.0
        %1246 = vmatprep.subr.mxu0 0.0
        %1247 = vmatpush2.msra.mxu0 0.0
        %1248 = vmatprep.subr.mxu0 0.0
        %1249 = vmatpush2.msra.mxu0 0.0
        %1250 = vmatprep.subr.mxu0 0.0
        %1251 = vmatpush2.msra.mxu0 0.0
        %1252 = vmatprep.subr.mxu0 0.0
        %1253 = vmatpush2.msra.mxu0 0.0
        %1254 = vmatprep.subr.mxu0 0.0
        %1255 = vmatpush2.msra.mxu0 0.0
        %1256 = vmatprep.subr.mxu0 0.0
        %1257 = vmatpush2.msra.mxu0 0.0
        %1258 = vmatprep.subr.mxu0 0.0
        %1259 = vmatpush2.msra.mxu0 0.0
        %1260 = vmatprep.mubr.f32.mxu0 0.0
        %1261 = vmatmul.mubr.f32.gmra.mxu0 %v1181
        %v1262 = vpop.f32.mrf.mxu0
        %v1263 = vadd.f32 0.0, %v1262
        %v1264 = vpop.f32.mrf.mxu0
        %v1265 = vadd.f32 0.0, %v1264
        %1266 = vmatprep.mubr.f32.mxu0 0.0
        %1267 = vmatmul.mubr.f32.gmra.mxu0 %v1184
        %v1268 = vpop.f32.mrf.mxu0
        %v1269 = vadd.f32 0.0, %v1268
        %v1270 = vpop.f32.mrf.mxu0
        %v1271 = vadd.f32 0.0, %v1270
        %1272 = vmatprep.mubr.f32.mxu0 0.0
        %1273 = vmatmul.mubr.f32.gmra.mxu0 %v1187
        %v1274 = vpop.f32.mrf.mxu0
        %v1275 = vadd.f32 0.0, %v1274
        %v1276 = vpop.f32.mrf.mxu0
        %v1277 = vadd.f32 0.0, %v1276
        %1278 = vmatprep.mubr.f32.mxu0 0.0
        %1279 = vmatmul.mubr.f32.gmra.mxu0 %v1190
        %v1280 = vpop.f32.mrf.mxu0
        %v1281 = vadd.f32 0.0, %v1280
        %v1282 = vpop.f32.mrf.mxu0
        %v1283 = vadd.f32 0.0, %v1282
        %1284 = vdwg.mxu0
        %v1285 = vadd.f32 %v1164, %v1263
        %v1286 = vadd.f32 %v1165, %v1265
        %v1287 = vadd.f32 %v1166, %v1269
        %v1288 = vadd.f32 %v1167, %v1271
        %v1289 = vadd.f32 %v1168, %v1275
        %v1290 = vadd.f32 %v1169, %v1277
        %v1291 = vadd.f32 %v1170, %v1281
        %v1292 = vadd.f32 %v1171, %v1283
        %v1293 = vld [vmem:[#allocation2 + $0x4] sm:$0x77]
        %v1294 = vld [vmem:[#allocation2 + $0xc] sm:$0x7]
        %s1295 = scalar_lea.vmem %s3, 10
        %v1296 = vld [vmem:[%s1295] sm:$0x3]
        %vm1297 = vcmp.gt.f32.partialorder %v1296, 0.5
        %v1298 = vsel %vm1297, 1, 0
        %v1299 = vlaneseq
        %v1300 = vshrl.u32 %v1299, 7
        %v1301 = vsub.s32 0, %v1300
        %v1302 = vrot.slane %v1298, %v1301
        %v1303 = vlaneseq
        %v1304 = vshrl.u32 %v1303, 7
        %v1305 = vsub.s32 1, %v1304
        %v1306 = vrot.slane %v1298, %v1305
        %vm1307 = vcmp.eq.s32.totalorder %v1302, 1
        %vm1308 = vcmp.eq.s32.totalorder %v1306, 1
        %v1311 = vcombine.high %v1293, %v1293
        %1312 = vrot.lane.b32.xlu0 %v1293, 127
        %v1313 = vpop.permute.xlu0 %1312
        %1314 = vrot.lane.b32.xlu0 %v1311, 127
        %v1315 = vpop.permute.xlu0 %1314
        %1316 = vrot.lane.b32.xlu0 %v1294, 127
        %v1317 = vpop.permute.xlu0 %1316
        %vm1318 = vcmask 1039360
        %v1319 = vsel %vm1318, %v1313, %v1315
        %v1320 = vsel %vm1318, %v1315, %v1317
        %v1323 = vsel %vm1307, %v1319, 0.0
        %v1324 = vsel %vm1308, %v1320, 0.0
        %s1325 = scalar_lea.vmem %s1, 160
        %v1326 = vld [vmem:[%s1325] sm:$0xff]
        %v1327 = vld [vmem:[%s1325 + $0x8] sm:$0xff]
        %v1328 = vld [vmem:[%s1325 + $0x10] sm:$0xff]
        %v1329 = vld [vmem:[%s1325 + $0x18] sm:$0xff]
        %v1331 = vsel %vm652, %v1326, 0
        %v1334 = vsel %vm652, %v1327, 0
        %v1337 = vsel %vm652, %v1328, 0
        %v1340 = vsel %vm652, %v1329, 0
        %v1343 = vsel %vm665, %v1323, 0
        %v1346 = vsel %vm665, %v1324, 0
        %1348 = vmatprep.subr.mxu0 0.0
        %1349 = vmatpush1.msra.mxu0 0.0
        %1350 = vmatprep.subr.mxu0 0.0
        %1351 = vmatpush1.msra.mxu0 0.0
        %1352 = vmatprep.subr.mxu0 0.0
        %1353 = vmatpush1.msra.mxu0 0.0
        %1354 = vmatprep.subr.mxu0 0.0
        %1355 = vmatpush1.msra.mxu0 0.0
        %1356 = vmatprep.subr.mxu0 0.0
        %1357 = vmatpush1.msra.mxu0 0.0
        %1358 = vmatprep.subr.mxu0 0.0
        %1359 = vmatpush1.msra.mxu0 0.0
        %1360 = vmatprep.subr.mxu0 0.0
        %1361 = vmatpush1.msra.mxu0 0.0
        %1362 = vmatprep.subr.mxu0 0.0
        %1363 = vmatpush1.msra.mxu0 0.0
        %1364 = vmatprep.subr.mxu0 0.0
        %1365 = vmatpush1.msra.mxu0 0.0
        %1366 = vmatprep.subr.mxu0 0.0
        %1367 = vmatpush1.msra.mxu0 0.0
        %1368 = vmatprep.subr.mxu0 0.0
        %1369 = vmatpush1.msra.mxu0 0.0
        %1370 = vmatprep.subr.mxu0 0.0
        %1371 = vmatpush1.msra.mxu0 0.0
        %1372 = vmatprep.subr.mxu0 0.0
        %1373 = vmatpush1.msra.mxu0 0.0
        %1374 = vmatprep.subr.mxu0 0.0
        %1375 = vmatpush1.msra.mxu0 0.0
        %1376 = vmatprep.subr.mxu0 0.0
        %1377 = vmatpush1.msra.mxu0 0.0
        %1378 = vmatprep.subr.mxu0 %v1346
        %1379 = vmatpush1.msra.mxu0 %v1343
        %1380 = vmatprep.subr.mxu0 0.0
        %1381 = vmatpush2.msra.mxu0 0.0
        %1382 = vmatprep.subr.mxu0 0.0
        %1383 = vmatpush2.msra.mxu0 0.0
        %1384 = vmatprep.subr.mxu0 0.0
        %1385 = vmatpush2.msra.mxu0 0.0
        %1386 = vmatprep.subr.mxu0 0.0
        %1387 = vmatpush2.msra.mxu0 0.0
        %1388 = vmatprep.subr.mxu0 0.0
        %1389 = vmatpush2.msra.mxu0 0.0
        %1390 = vmatprep.subr.mxu0 0.0
        %1391 = vmatpush2.msra.mxu0 0.0
        %1392 = vmatprep.subr.mxu0 0.0
        %1393 = vmatpush2.msra.mxu0 0.0
        %1394 = vmatprep.subr.mxu0 0.0
        %1395 = vmatpush2.msra.mxu0 0.0
        %1396 = vmatprep.subr.mxu0 0.0
        %1397 = vmatpush2.msra.mxu0 0.0
        %1398 = vmatprep.subr.mxu0 0.0
        %1399 = vmatpush2.msra.mxu0 0.0
        %1400 = vmatprep.subr.mxu0 0.0
        %1401 = vmatpush2.msra.mxu0 0.0
        %1402 = vmatprep.subr.mxu0 0.0
        %1403 = vmatpush2.msra.mxu0 0.0
        %1404 = vmatprep.subr.mxu0 0.0
        %1405 = vmatpush2.msra.mxu0 0.0
        %1406 = vmatprep.subr.mxu0 0.0
        %1407 = vmatpush2.msra.mxu0 0.0
        %1408 = vmatprep.subr.mxu0 0.0
        %1409 = vmatpush2.msra.mxu0 0.0
        %1410 = vmatprep.subr.mxu0 0.0
        %1411 = vmatpush2.msra.mxu0 0.0
        %1412 = vmatprep.mubr.f32.mxu0 0.0
        %1413 = vmatmul.mubr.f32.gmra.mxu0 %v1331
        %v1414 = vpop.f32.mrf.mxu0
        %v1415 = vadd.f32 0.0, %v1414
        %v1416 = vpop.f32.mrf.mxu0
        %v1417 = vadd.f32 0.0, %v1416
        %1418 = vmatprep.mubr.f32.mxu0 0.0
        %1419 = vmatmul.mubr.f32.gmra.mxu0 %v1334
        %v1420 = vpop.f32.mrf.mxu0
        %v1421 = vadd.f32 0.0, %v1420
        %v1422 = vpop.f32.mrf.mxu0
        %v1423 = vadd.f32 0.0, %v1422
        %1424 = vmatprep.mubr.f32.mxu0 0.0
        %1425 = vmatmul.mubr.f32.gmra.mxu0 %v1337
        %v1426 = vpop.f32.mrf.mxu0
        %v1427 = vadd.f32 0.0, %v1426
        %v1428 = vpop.f32.mrf.mxu0
        %v1429 = vadd.f32 0.0, %v1428
        %1430 = vmatprep.mubr.f32.mxu0 0.0
        %1431 = vmatmul.mubr.f32.gmra.mxu0 %v1340
        %v1432 = vpop.f32.mrf.mxu0
        %v1433 = vadd.f32 0.0, %v1432
        %v1434 = vpop.f32.mrf.mxu0
        %v1435 = vadd.f32 0.0, %v1434
        %1436 = vdwg.mxu0
        %v1437 = vadd.f32 %v1285, %v1415
        %v1438 = vadd.f32 %v1286, %v1417
        %v1439 = vadd.f32 %v1287, %v1421
        %v1440 = vadd.f32 %v1288, %v1423
        %v1441 = vadd.f32 %v1289, %v1427
        %v1442 = vadd.f32 %v1290, %v1429
        %v1443 = vadd.f32 %v1291, %v1433
        %v1444 = vadd.f32 %v1292, %v1435
        %v1445 = vld [vmem:[#allocation2 + $0x4] sm:$0x77]
        %v1446 = vld [vmem:[#allocation2 + $0xc] sm:$0x7]
        %s1447 = scalar_lea.vmem %s3, 12
        %v1448 = vld [vmem:[%s1447] sm:$0x3]
        %vm1449 = vcmp.gt.f32.partialorder %v1448, 0.5
        %v1450 = vsel %vm1449, 1, 0
        %v1451 = vlaneseq
        %v1452 = vshrl.u32 %v1451, 7
        %v1453 = vsub.s32 0, %v1452
        %v1454 = vrot.slane %v1450, %v1453
        %v1455 = vlaneseq
        %v1456 = vshrl.u32 %v1455, 7
        %v1457 = vsub.s32 1, %v1456
        %v1458 = vrot.slane %v1450, %v1457
        %vm1459 = vcmp.eq.s32.totalorder %v1454, 1
        %vm1460 = vcmp.eq.s32.totalorder %v1458, 1
        %v1463 = vcombine.high %v1445, %v1445
        %1464 = vrot.lane.b32.xlu0 %v1445, 113
        %v1465 = vpop.permute.xlu0 %1464
        %1466 = vrot.lane.b32.xlu0 %v1463, 113
        %v1467 = vpop.permute.xlu0 %1466
        %1468 = vrot.lane.b32.xlu0 %v1446, 113
        %v1469 = vpop.permute.xlu0 %1468
        %vm1470 = vcmask 924672
        %v1471 = vsel %vm1470, %v1465, %v1467
        %v1472 = vsel %vm1470, %v1467, %v1469
        %v1475 = vsel %vm1459, %v1471, 0.0
        %v1476 = vsel %vm1460, %v1472, 0.0
        %s1477 = scalar_lea.vmem %s1, 192
        %v1478 = vld [vmem:[%s1477] sm:$0xff]
        %v1479 = vld [vmem:[%s1477 + $0x8] sm:$0xff]
        %v1480 = vld [vmem:[%s1477 + $0x10] sm:$0xff]
        %v1481 = vld [vmem:[%s1477 + $0x18] sm:$0xff]
        %v1483 = vsel %vm652, %v1478, 0
        %v1486 = vsel %vm652, %v1479, 0
        %v1489 = vsel %vm652, %v1480, 0
        %v1492 = vsel %vm652, %v1481, 0
        %v1495 = vsel %vm665, %v1475, 0
        %v1498 = vsel %vm665, %v1476, 0
        %1500 = vmatprep.subr.mxu0 0.0
        %1501 = vmatpush1.msra.mxu0 0.0
        %1502 = vmatprep.subr.mxu0 0.0
        %1503 = vmatpush1.msra.mxu0 0.0
        %1504 = vmatprep.subr.mxu0 0.0
        %1505 = vmatpush1.msra.mxu0 0.0
        %1506 = vmatprep.subr.mxu0 0.0
        %1507 = vmatpush1.msra.mxu0 0.0
        %1508 = vmatprep.subr.mxu0 0.0
        %1509 = vmatpush1.msra.mxu0 0.0
        %1510 = vmatprep.subr.mxu0 0.0
        %1511 = vmatpush1.msra.mxu0 0.0
        %1512 = vmatprep.subr.mxu0 0.0
        %1513 = vmatpush1.msra.mxu0 0.0
        %1514 = vmatprep.subr.mxu0 0.0
        %1515 = vmatpush1.msra.mxu0 0.0
        %1516 = vmatprep.subr.mxu0 0.0
        %1517 = vmatpush1.msra.mxu0 0.0
        %1518 = vmatprep.subr.mxu0 0.0
        %1519 = vmatpush1.msra.mxu0 0.0
        %1520 = vmatprep.subr.mxu0 0.0
        %1521 = vmatpush1.msra.mxu0 0.0
        %1522 = vmatprep.subr.mxu0 0.0
        %1523 = vmatpush1.msra.mxu0 0.0
        %1524 = vmatprep.subr.mxu0 0.0
        %1525 = vmatpush1.msra.mxu0 0.0
        %1526 = vmatprep.subr.mxu0 0.0
        %1527 = vmatpush1.msra.mxu0 0.0
        %1528 = vmatprep.subr.mxu0 0.0
        %1529 = vmatpush1.msra.mxu0 0.0
        %1530 = vmatprep.subr.mxu0 %v1498
        %1531 = vmatpush1.msra.mxu0 %v1495
        %1532 = vmatprep.subr.mxu0 0.0
        %1533 = vmatpush2.msra.mxu0 0.0
        %1534 = vmatprep.subr.mxu0 0.0
        %1535 = vmatpush2.msra.mxu0 0.0
        %1536 = vmatprep.subr.mxu0 0.0
        %1537 = vmatpush2.msra.mxu0 0.0
        %1538 = vmatprep.subr.mxu0 0.0
        %1539 = vmatpush2.msra.mxu0 0.0
        %1540 = vmatprep.subr.mxu0 0.0
        %1541 = vmatpush2.msra.mxu0 0.0
        %1542 = vmatprep.subr.mxu0 0.0
        %1543 = vmatpush2.msra.mxu0 0.0
        %1544 = vmatprep.subr.mxu0 0.0
        %1545 = vmatpush2.msra.mxu0 0.0
        %1546 = vmatprep.subr.mxu0 0.0
        %1547 = vmatpush2.msra.mxu0 0.0
        %1548 = vmatprep.subr.mxu0 0.0
        %1549 = vmatpush2.msra.mxu0 0.0
        %1550 = vmatprep.subr.mxu0 0.0
        %1551 = vmatpush2.msra.mxu0 0.0
        %1552 = vmatprep.subr.mxu0 0.0
        %1553 = vmatpush2.msra.mxu0 0.0
        %1554 = vmatprep.subr.mxu0 0.0
        %1555 = vmatpush2.msra.mxu0 0.0
        %1556 = vmatprep.subr.mxu0 0.0
        %1557 = vmatpush2.msra.mxu0 0.0
        %1558 = vmatprep.subr.mxu0 0.0
        %1559 = vmatpush2.msra.mxu0 0.0
        %1560 = vmatprep.subr.mxu0 0.0
        %1561 = vmatpush2.msra.mxu0 0.0
        %1562 = vmatprep.subr.mxu0 0.0
        %1563 = vmatpush2.msra.mxu0 0.0
        %1564 = vmatprep.mubr.f32.mxu0 0.0
        %1565 = vmatmul.mubr.f32.gmra.mxu0 %v1483
        %v1566 = vpop.f32.mrf.mxu0
        %v1567 = vadd.f32 0.0, %v1566
        %v1568 = vpop.f32.mrf.mxu0
        %v1569 = vadd.f32 0.0, %v1568
        %1570 = vmatprep.mubr.f32.mxu0 0.0
        %1571 = vmatmul.mubr.f32.gmra.mxu0 %v1486
        %v1572 = vpop.f32.mrf.mxu0
        %v1573 = vadd.f32 0.0, %v1572
        %v1574 = vpop.f32.mrf.mxu0
        %v1575 = vadd.f32 0.0, %v1574
        %1576 = vmatprep.mubr.f32.mxu0 0.0
        %1577 = vmatmul.mubr.f32.gmra.mxu0 %v1489
        %v1578 = vpop.f32.mrf.mxu0
        %v1579 = vadd.f32 0.0, %v1578
        %v1580 = vpop.f32.mrf.mxu0
        %v1581 = vadd.f32 0.0, %v1580
        %1582 = vmatprep.mubr.f32.mxu0 0.0
        %1583 = vmatmul.mubr.f32.gmra.mxu0 %v1492
        %v1584 = vpop.f32.mrf.mxu0
        %v1585 = vadd.f32 0.0, %v1584
        %v1586 = vpop.f32.mrf.mxu0
        %v1587 = vadd.f32 0.0, %v1586
        %1588 = vdwg.mxu0
        %v1589 = vadd.f32 %v1437, %v1567
        %v1590 = vadd.f32 %v1438, %v1569
        %v1591 = vadd.f32 %v1439, %v1573
        %v1592 = vadd.f32 %v1440, %v1575
        %v1593 = vadd.f32 %v1441, %v1579
        %v1594 = vadd.f32 %v1442, %v1581
        %v1595 = vadd.f32 %v1443, %v1585
        %v1596 = vadd.f32 %v1444, %v1587
        %v1597 = vld [vmem:[#allocation2 + $0x4] sm:$0x77]
        %v1598 = vld [vmem:[#allocation2 + $0xc] sm:$0x7]
        %s1599 = scalar_lea.vmem %s3, 14
        %v1600 = vld [vmem:[%s1599] sm:$0x3]
        %vm1601 = vcmp.gt.f32.partialorder %v1600, 0.5
        %v1602 = vsel %vm1601, 1, 0
        %v1603 = vlaneseq
        %v1604 = vshrl.u32 %v1603, 7
        %v1605 = vsub.s32 0, %v1604
        %v1606 = vrot.slane %v1602, %v1605
        %v1607 = vlaneseq
        %v1608 = vshrl.u32 %v1607, 7
        %v1609 = vsub.s32 1, %v1608
        %v1610 = vrot.slane %v1602, %v1609
        %vm1611 = vcmp.eq.s32.totalorder %v1606, 1
        %vm1612 = vcmp.eq.s32.totalorder %v1610, 1
        %v1615 = vcombine.high %v1597, %v1597
        %1616 = vrot.lane.b32.xlu0 %v1597, 112
        %v1617 = vpop.permute.xlu0 %1616
        %1618 = vrot.lane.b32.xlu0 %v1615, 112
        %v1619 = vpop.permute.xlu0 %1618
        %1620 = vrot.lane.b32.xlu0 %v1598, 112
        %v1621 = vpop.permute.xlu0 %1620
        %vm1622 = vcmask 916480
        %v1623 = vsel %vm1622, %v1617, %v1619
        %v1624 = vsel %vm1622, %v1619, %v1621
        %v1627 = vsel %vm1611, %v1623, 0.0
        %v1628 = vsel %vm1612, %v1624, 0.0
        %s1629 = scalar_lea.vmem %s1, 224
        %v1630 = vld [vmem:[%s1629] sm:$0xff]
        %v1631 = vld [vmem:[%s1629 + $0x8] sm:$0xff]
        %v1632 = vld [vmem:[%s1629 + $0x10] sm:$0xff]
        %v1633 = vld [vmem:[%s1629 + $0x18] sm:$0xff]
        %v1635 = vsel %vm652, %v1630, 0
        %v1638 = vsel %vm652, %v1631, 0
        %v1641 = vsel %vm652, %v1632, 0
        %v1644 = vsel %vm652, %v1633, 0
        %v1647 = vsel %vm665, %v1627, 0
        %v1650 = vsel %vm665, %v1628, 0
        %1652 = vmatprep.subr.mxu0 0.0
        %1653 = vmatpush1.msra.mxu0 0.0
        %1654 = vmatprep.subr.mxu0 0.0
        %1655 = vmatpush1.msra.mxu0 0.0
        %1656 = vmatprep.subr.mxu0 0.0
        %1657 = vmatpush1.msra.mxu0 0.0
        %1658 = vmatprep.subr.mxu0 0.0
        %1659 = vmatpush1.msra.mxu0 0.0
        %1660 = vmatprep.subr.mxu0 0.0
        %1661 = vmatpush1.msra.mxu0 0.0
        %1662 = vmatprep.subr.mxu0 0.0
        %1663 = vmatpush1.msra.mxu0 0.0
        %1664 = vmatprep.subr.mxu0 0.0
        %1665 = vmatpush1.msra.mxu0 0.0
        %1666 = vmatprep.subr.mxu0 0.0
        %1667 = vmatpush1.msra.mxu0 0.0
        %1668 = vmatprep.subr.mxu0 0.0
        %1669 = vmatpush1.msra.mxu0 0.0
        %1670 = vmatprep.subr.mxu0 0.0
        %1671 = vmatpush1.msra.mxu0 0.0
        %1672 = vmatprep.subr.mxu0 0.0
        %1673 = vmatpush1.msra.mxu0 0.0
        %1674 = vmatprep.subr.mxu0 0.0
        %1675 = vmatpush1.msra.mxu0 0.0
        %1676 = vmatprep.subr.mxu0 0.0
        %1677 = vmatpush1.msra.mxu0 0.0
        %1678 = vmatprep.subr.mxu0 0.0
        %1679 = vmatpush1.msra.mxu0 0.0
        %1680 = vmatprep.subr.mxu0 0.0
        %1681 = vmatpush1.msra.mxu0 0.0
        %1682 = vmatprep.subr.mxu0 %v1650
        %1683 = vmatpush1.msra.mxu0 %v1647
        %1684 = vmatprep.subr.mxu0 0.0
        %1685 = vmatpush2.msra.mxu0 0.0
        %1686 = vmatprep.subr.mxu0 0.0
        %1687 = vmatpush2.msra.mxu0 0.0
        %1688 = vmatprep.subr.mxu0 0.0
        %1689 = vmatpush2.msra.mxu0 0.0
        %1690 = vmatprep.subr.mxu0 0.0
        %1691 = vmatpush2.msra.mxu0 0.0
        %1692 = vmatprep.subr.mxu0 0.0
        %1693 = vmatpush2.msra.mxu0 0.0
        %1694 = vmatprep.subr.mxu0 0.0
        %1695 = vmatpush2.msra.mxu0 0.0
        %1696 = vmatprep.subr.mxu0 0.0
        %1697 = vmatpush2.msra.mxu0 0.0
        %1698 = vmatprep.subr.mxu0 0.0
        %1699 = vmatpush2.msra.mxu0 0.0
        %1700 = vmatprep.subr.mxu0 0.0
        %1701 = vmatpush2.msra.mxu0 0.0
        %1702 = vmatprep.subr.mxu0 0.0
        %1703 = vmatpush2.msra.mxu0 0.0
        %1704 = vmatprep.subr.mxu0 0.0
        %1705 = vmatpush2.msra.mxu0 0.0
        %1706 = vmatprep.subr.mxu0 0.0
        %1707 = vmatpush2.msra.mxu0 0.0
        %1708 = vmatprep.subr.mxu0 0.0
        %1709 = vmatpush2.msra.mxu0 0.0
        %1710 = vmatprep.subr.mxu0 0.0
        %1711 = vmatpush2.msra.mxu0 0.0
        %1712 = vmatprep.subr.mxu0 0.0
        %1713 = vmatpush2.msra.mxu0 0.0
        %1714 = vmatprep.subr.mxu0 0.0
        %1715 = vmatpush2.msra.mxu0 0.0
        %1716 = vmatprep.mubr.f32.mxu0 0.0
        %1717 = vmatmul.mubr.f32.gmra.mxu0 %v1635
        %v1718 = vpop.f32.mrf.mxu0
        %v1719 = vadd.f32 0.0, %v1718
        %v1720 = vpop.f32.mrf.mxu0
        %v1721 = vadd.f32 0.0, %v1720
        %1722 = vmatprep.mubr.f32.mxu0 0.0
        %1723 = vmatmul.mubr.f32.gmra.mxu0 %v1638
        %v1724 = vpop.f32.mrf.mxu0
        %v1725 = vadd.f32 0.0, %v1724
        %v1726 = vpop.f32.mrf.mxu0
        %v1727 = vadd.f32 0.0, %v1726
        %1728 = vmatprep.mubr.f32.mxu0 0.0
        %1729 = vmatmul.mubr.f32.gmra.mxu0 %v1641
        %v1730 = vpop.f32.mrf.mxu0
        %v1731 = vadd.f32 0.0, %v1730
        %v1732 = vpop.f32.mrf.mxu0
        %v1733 = vadd.f32 0.0, %v1732
        %1734 = vmatprep.mubr.f32.mxu0 0.0
        %1735 = vmatmul.mubr.f32.gmra.mxu0 %v1644
        %v1736 = vpop.f32.mrf.mxu0
        %v1737 = vadd.f32 0.0, %v1736
        %v1738 = vpop.f32.mrf.mxu0
        %v1739 = vadd.f32 0.0, %v1738
        %1740 = vdwg.mxu0
        %v1741 = vadd.f32 %v1589, %v1719
        %v1742 = vadd.f32 %v1590, %v1721
        %v1743 = vadd.f32 %v1591, %v1725
        %v1744 = vadd.f32 %v1592, %v1727
        %v1745 = vadd.f32 %v1593, %v1731
        %v1746 = vadd.f32 %v1594, %v1733
        %v1747 = vadd.f32 %v1595, %v1737
        %v1748 = vadd.f32 %v1596, %v1739
        %v1749 = vld [vmem:[#allocation2 + $0x4] sm:$0x77]
        %v1750 = vld [vmem:[#allocation2 + $0xc] sm:$0x7]
        %s1751 = scalar_lea.vmem %s3, 16
        %v1752 = vld [vmem:[%s1751] sm:$0x3]
        %vm1753 = vcmp.gt.f32.partialorder %v1752, 0.5
        %v1754 = vsel %vm1753, 1, 0
        %v1755 = vlaneseq
        %v1756 = vshrl.u32 %v1755, 7
        %v1757 = vsub.s32 0, %v1756
        %v1758 = vrot.slane %v1754, %v1757
        %v1759 = vlaneseq
        %v1760 = vshrl.u32 %v1759, 7
        %v1761 = vsub.s32 1, %v1760
        %v1762 = vrot.slane %v1754, %v1761
        %vm1763 = vcmp.eq.s32.totalorder %v1758, 1
        %vm1764 = vcmp.eq.s32.totalorder %v1762, 1
        %v1767 = vcombine.high %v1749, %v1749
        %1768 = vrot.lane.b32.xlu0 %v1749, 111
        %v1769 = vpop.permute.xlu0 %1768
        %1770 = vrot.lane.b32.xlu0 %v1767, 111
        %v1771 = vpop.permute.xlu0 %1770
        %1772 = vrot.lane.b32.xlu0 %v1750, 111
        %v1773 = vpop.permute.xlu0 %1772
        %vm1774 = vcmask 908288
        %v1775 = vsel %vm1774, %v1769, %v1771
        %v1776 = vsel %vm1774, %v1771, %v1773
        %v1779 = vsel %vm1763, %v1775, 0.0
        %v1780 = vsel %vm1764, %v1776, 0.0
        %s1781 = scalar_lea.vmem %s1, 256
        %v1782 = vld [vmem:[%s1781] sm:$0xff]
        %v1783 = vld [vmem:[%s1781 + $0x8] sm:$0xff]
        %v1784 = vld [vmem:[%s1781 + $0x10] sm:$0xff]
        %v1785 = vld [vmem:[%s1781 + $0x18] sm:$0xff]
        %v1787 = vsel %vm652, %v1782, 0
        %v1790 = vsel %vm652, %v1783, 0
        %v1793 = vsel %vm652, %v1784, 0
        %v1796 = vsel %vm652, %v1785, 0
        %v1799 = vsel %vm665, %v1779, 0
        %v1802 = vsel %vm665, %v1780, 0
        %1804 = vmatprep.subr.mxu0 0.0
        %1805 = vmatpush1.msra.mxu0 0.0
        %1806 = vmatprep.subr.mxu0 0.0
        %1807 = vmatpush1.msra.mxu0 0.0
        %1808 = vmatprep.subr.mxu0 0.0
        %1809 = vmatpush1.msra.mxu0 0.0
        %1810 = vmatprep.subr.mxu0 0.0
        %1811 = vmatpush1.msra.mxu0 0.0
        %1812 = vmatprep.subr.mxu0 0.0
        %1813 = vmatpush1.msra.mxu0 0.0
        %1814 = vmatprep.subr.mxu0 0.0
        %1815 = vmatpush1.msra.mxu0 0.0
        %1816 = vmatprep.subr.mxu0 0.0
        %1817 = vmatpush1.msra.mxu0 0.0
        %1818 = vmatprep.subr.mxu0 0.0
        %1819 = vmatpush1.msra.mxu0 0.0
        %1820 = vmatprep.subr.mxu0 0.0
        %1821 = vmatpush1.msra.mxu0 0.0
        %1822 = vmatprep.subr.mxu0 0.0
        %1823 = vmatpush1.msra.mxu0 0.0
        %1824 = vmatprep.subr.mxu0 0.0
        %1825 = vmatpush1.msra.mxu0 0.0
        %1826 = vmatprep.subr.mxu0 0.0
        %1827 = vmatpush1.msra.mxu0 0.0
        %1828 = vmatprep.subr.mxu0 0.0
        %1829 = vmatpush1.msra.mxu0 0.0
        %1830 = vmatprep.subr.mxu0 0.0
        %1831 = vmatpush1.msra.mxu0 0.0
        %1832 = vmatprep.subr.mxu0 0.0
        %1833 = vmatpush1.msra.mxu0 0.0
        %1834 = vmatprep.subr.mxu0 %v1802
        %1835 = vmatpush1.msra.mxu0 %v1799
        %1836 = vmatprep.subr.mxu0 0.0
        %1837 = vmatpush2.msra.mxu0 0.0
        %1838 = vmatprep.subr.mxu0 0.0
        %1839 = vmatpush2.msra.mxu0 0.0
        %1840 = vmatprep.subr.mxu0 0.0
        %1841 = vmatpush2.msra.mxu0 0.0
        %1842 = vmatprep.subr.mxu0 0.0
        %1843 = vmatpush2.msra.mxu0 0.0
        %1844 = vmatprep.subr.mxu0 0.0
        %1845 = vmatpush2.msra.mxu0 0.0
        %1846 = vmatprep.subr.mxu0 0.0
        %1847 = vmatpush2.msra.mxu0 0.0
        %1848 = vmatprep.subr.mxu0 0.0
        %1849 = vmatpush2.msra.mxu0 0.0
        %1850 = vmatprep.subr.mxu0 0.0
        %1851 = vmatpush2.msra.mxu0 0.0
        %1852 = vmatprep.subr.mxu0 0.0
        %1853 = vmatpush2.msra.mxu0 0.0
        %1854 = vmatprep.subr.mxu0 0.0
        %1855 = vmatpush2.msra.mxu0 0.0
        %1856 = vmatprep.subr.mxu0 0.0
        %1857 = vmatpush2.msra.mxu0 0.0
        %1858 = vmatprep.subr.mxu0 0.0
        %1859 = vmatpush2.msra.mxu0 0.0
        %1860 = vmatprep.subr.mxu0 0.0
        %1861 = vmatpush2.msra.mxu0 0.0
        %1862 = vmatprep.subr.mxu0 0.0
        %1863 = vmatpush2.msra.mxu0 0.0
        %1864 = vmatprep.subr.mxu0 0.0
        %1865 = vmatpush2.msra.mxu0 0.0
        %1866 = vmatprep.subr.mxu0 0.0
        %1867 = vmatpush2.msra.mxu0 0.0
        %1868 = vmatprep.mubr.f32.mxu0 0.0
        %1869 = vmatmul.mubr.f32.gmra.mxu0 %v1787
        %v1870 = vpop.f32.mrf.mxu0
        %v1871 = vadd.f32 0.0, %v1870
        %v1872 = vpop.f32.mrf.mxu0
        %v1873 = vadd.f32 0.0, %v1872
        %1874 = vmatprep.mubr.f32.mxu0 0.0
        %1875 = vmatmul.mubr.f32.gmra.mxu0 %v1790
        %v1876 = vpop.f32.mrf.mxu0
        %v1877 = vadd.f32 0.0, %v1876
        %v1878 = vpop.f32.mrf.mxu0
        %v1879 = vadd.f32 0.0, %v1878
        %1880 = vmatprep.mubr.f32.mxu0 0.0
        %1881 = vmatmul.mubr.f32.gmra.mxu0 %v1793
        %v1882 = vpop.f32.mrf.mxu0
        %v1883 = vadd.f32 0.0, %v1882
        %v1884 = vpop.f32.mrf.mxu0
        %v1885 = vadd.f32 0.0, %v1884
        %1886 = vmatprep.mubr.f32.mxu0 0.0
        %1887 = vmatmul.mubr.f32.gmra.mxu0 %v1796
        %v1888 = vpop.f32.mrf.mxu0
        %v1889 = vadd.f32 0.0, %v1888
        %v1890 = vpop.f32.mrf.mxu0
        %v1891 = vadd.f32 0.0, %v1890
        %1892 = vdwg.mxu0
        %v1893 = vadd.f32 %v1741, %v1871
        %v1894 = vadd.f32 %v1742, %v1873
        %v1895 = vadd.f32 %v1743, %v1877
        %v1896 = vadd.f32 %v1744, %v1879
        %v1897 = vadd.f32 %v1745, %v1883
        %v1898 = vadd.f32 %v1746, %v1885
        %v1899 = vadd.f32 %v1747, %v1889
        %v1900 = vadd.f32 %v1748, %v1891
        %v1901 = vld [vmem:[%s2] sm:$0xff]
        %v1902 = vld [vmem:[%s2 + $0x8] sm:$0xff]
        %v1903 = vld [vmem:[%s2 + $0x10] sm:$0xff]
        %v1904 = vld [vmem:[%s2 + $0x18] sm:$0xff]
        %1906 = vset.pattern.permute.xlu0 0
        %1907 = vperm.xlu0 %1906, %v1901
        %v1908 = vpop.permute.xlu0 %1907
        %1911 = vset.pattern.permute.xlu0 0
        %1912 = vperm.xlu0 %1911, %v1902
        %v1913 = vpop.permute.xlu0 %1912
        %1916 = vset.pattern.permute.xlu0 0
        %1917 = vperm.xlu0 %1916, %v1903
        %v1918 = vpop.permute.xlu0 %1917
        %1921 = vset.pattern.permute.xlu0 0
        %1922 = vperm.xlu0 %1921, %v1904
        %v1923 = vpop.permute.xlu0 %1922
        %v1925 = vadd.f32 %v1893, %v1908
        %v1926 = vadd.f32 %v1894, %v1908
        %v1927 = vadd.f32 %v1895, %v1913
        %v1928 = vadd.f32 %v1896, %v1913
        %v1929 = vadd.f32 %v1897, %v1918
        %v1930 = vadd.f32 %v1898, %v1918
        %v1931 = vadd.f32 %v1899, %v1923
        %v1932 = vadd.f32 %v1900, %v1923
        %vm1933 = vcmp.gt.f32.partialorder %v1925, 0.0
        %vm1934 = vcmp.gt.f32.partialorder %v1926, 0.0
        %vm1935 = vcmp.gt.f32.partialorder %v1927, 0.0
        %vm1936 = vcmp.gt.f32.partialorder %v1928, 0.0
        %vm1937 = vcmp.gt.f32.partialorder %v1929, 0.0
        %vm1938 = vcmp.gt.f32.partialorder %v1930, 0.0
        %vm1939 = vcmp.gt.f32.partialorder %v1931, 0.0
        %vm1940 = vcmp.gt.f32.partialorder %v1932, 0.0
        %v1941 = vmul.f32 %v1925, 1.442695
        %v1942 = vpow.pop %v1941
        %v1943 = vmul.f32 %v1926, 1.442695
        %v1944 = vpow.pop %v1943
        %v1945 = vmul.f32 %v1927, 1.442695
        %v1946 = vpow.pop %v1945
        %v1947 = vmul.f32 %v1928, 1.442695
        %v1948 = vpow.pop %v1947
        %v1949 = vmul.f32 %v1929, 1.442695
        %v1950 = vpow.pop %v1949
        %v1951 = vmul.f32 %v1930, 1.442695
        %v1952 = vpow.pop %v1951
        %v1953 = vmul.f32 %v1931, 1.442695
        %v1954 = vpow.pop %v1953
        %v1955 = vmul.f32 %v1932, 1.442695
        %v1956 = vpow.pop %v1955
        %v1957 = vsub.f32 %v1942, 1.0
        %v1958 = vsub.f32 %v1944, 1.0
        %v1959 = vsub.f32 %v1946, 1.0
        %v1960 = vsub.f32 %v1948, 1.0
        %v1961 = vsub.f32 %v1950, 1.0
        %v1962 = vsub.f32 %v1952, 1.0
        %v1963 = vsub.f32 %v1954, 1.0
        %v1964 = vsub.f32 %v1956, 1.0
        %v1965 = vsel %vm1933, %v1925, %v1957
        %v1966 = vsel %vm1934, %v1926, %v1958
        %v1967 = vsel %vm1935, %v1927, %v1959
        %v1968 = vsel %vm1936, %v1928, %v1960
        %v1969 = vsel %vm1937, %v1929, %v1961
        %v1970 = vsel %vm1938, %v1930, %v1962
        %v1971 = vsel %vm1939, %v1931, %v1963
        %v1972 = vsel %vm1940, %v1932, %v1964
        %v1973 = vld [vmem:[%s4] sm:$0xff]
        %v1974 = vld [vmem:[%s4 + $0x8] sm:$0xff]
        %v1975 = vld [vmem:[%s4 + $0x10] sm:$0xff]
        %v1976 = vld [vmem:[%s4 + $0x18] sm:$0xff]
        %v1977 = vld [vmem:[%s4 + $0x20] sm:$0xff]
        %v1978 = vld [vmem:[%s4 + $0x28] sm:$0xff]
        %v1979 = vld [vmem:[%s4 + $0x30] sm:$0xff]
        %v1980 = vld [vmem:[%s4 + $0x38] sm:$0xff]
        %v1981 = vld [vmem:[%s4 + $0x40] sm:$0xff]
        %v1982 = vld [vmem:[%s4 + $0x48] sm:$0xff]
        %v1983 = vld [vmem:[%s4 + $0x50] sm:$0xff]
        %v1984 = vld [vmem:[%s4 + $0x58] sm:$0xff]
        %v1985 = vld [vmem:[%s4 + $0x60] sm:$0xff]
        %v1986 = vld [vmem:[%s4 + $0x68] sm:$0xff]
        %v1987 = vld [vmem:[%s4 + $0x70] sm:$0xff]
        %v1988 = vld [vmem:[%s4 + $0x78] sm:$0xff]
        %v1989 = vld [vmem:[%s4 + $0x80] sm:$0xff]
        %v1990 = vld [vmem:[%s4 + $0x88] sm:$0xff]
        %v1991 = vld [vmem:[%s4 + $0x90] sm:$0xff]
        %v1992 = vld [vmem:[%s4 + $0x98] sm:$0xff]
        %v1993 = vld [vmem:[%s4 + $0xa0] sm:$0xff]
        %v1994 = vld [vmem:[%s4 + $0xa8] sm:$0xff]
        %v1995 = vld [vmem:[%s4 + $0xb0] sm:$0xff]
        %v1996 = vld [vmem:[%s4 + $0xb8] sm:$0xff]
        %v1997 = vld [vmem:[%s4 + $0xc0] sm:$0xff]
        %v1998 = vld [vmem:[%s4 + $0xc8] sm:$0xff]
        %v1999 = vld [vmem:[%s4 + $0xd0] sm:$0xff]
        %v2000 = vld [vmem:[%s4 + $0xd8] sm:$0xff]
        %v2001 = vld [vmem:[%s4 + $0xe0] sm:$0xff]
        %v2002 = vld [vmem:[%s4 + $0xe8] sm:$0xff]
        %v2003 = vld [vmem:[%s4 + $0xf0] sm:$0xff]
        %v2004 = vld [vmem:[%s4 + $0xf8] sm:$0xff]
        %2005 = vmatprep.subr.mxu0 0.0
        %2006 = vmatpush1.msra.mxu0 %v1988
        %2007 = vmatprep.subr.mxu0 0.0
        %2008 = vmatpush1.msra.mxu0 %v1987
        %2009 = vmatprep.subr.mxu0 0.0
        %2010 = vmatpush1.msra.mxu0 %v1986
        %2011 = vmatprep.subr.mxu0 0.0
        %2012 = vmatpush1.msra.mxu0 %v1985
        %2013 = vmatprep.subr.mxu0 0.0
        %2014 = vmatpush1.msra.mxu0 %v1984
        %2015 = vmatprep.subr.mxu0 0.0
        %2016 = vmatpush1.msra.mxu0 %v1983
        %2017 = vmatprep.subr.mxu0 0.0
        %2018 = vmatpush1.msra.mxu0 %v1982
        %2019 = vmatprep.subr.mxu0 0.0
        %2020 = vmatpush1.msra.mxu0 %v1981
        %2021 = vmatprep.subr.mxu0 0.0
        %2022 = vmatpush1.msra.mxu0 %v1980
        %2023 = vmatprep.subr.mxu0 0.0
        %2024 = vmatpush1.msra.mxu0 %v1979
        %2025 = vmatprep.subr.mxu0 0.0
        %2026 = vmatpush1.msra.mxu0 %v1978
        %2027 = vmatprep.subr.mxu0 0.0
        %2028 = vmatpush1.msra.mxu0 %v1977
        %2029 = vmatprep.subr.mxu0 0.0
        %2030 = vmatpush1.msra.mxu0 %v1976
        %2031 = vmatprep.subr.mxu0 0.0
        %2032 = vmatpush1.msra.mxu0 %v1975
        %2033 = vmatprep.subr.mxu0 0.0
        %2034 = vmatpush1.msra.mxu0 %v1974
        %2035 = vmatprep.subr.mxu0 0.0
        %2036 = vmatpush1.msra.mxu0 %v1973
        %2037 = vmatprep.subr.mxu0 0.0
        %2038 = vmatpush2.msra.mxu0 %v2004
        %2039 = vmatprep.subr.mxu0 0.0
        %2040 = vmatpush2.msra.mxu0 %v2003
        %2041 = vmatprep.subr.mxu0 0.0
        %2042 = vmatpush2.msra.mxu0 %v2002
        %2043 = vmatprep.subr.mxu0 0.0
        %2044 = vmatpush2.msra.mxu0 %v2001
        %2045 = vmatprep.subr.mxu0 0.0
        %2046 = vmatpush2.msra.mxu0 %v2000
        %2047 = vmatprep.subr.mxu0 0.0
        %2048 = vmatpush2.msra.mxu0 %v1999
        %2049 = vmatprep.subr.mxu0 0.0
        %2050 = vmatpush2.msra.mxu0 %v1998
        %2051 = vmatprep.subr.mxu0 0.0
        %2052 = vmatpush2.msra.mxu0 %v1997
        %2053 = vmatprep.subr.mxu0 0.0
        %2054 = vmatpush2.msra.mxu0 %v1996
        %2055 = vmatprep.subr.mxu0 0.0
        %2056 = vmatpush2.msra.mxu0 %v1995
        %2057 = vmatprep.subr.mxu0 0.0
        %2058 = vmatpush2.msra.mxu0 %v1994
        %2059 = vmatprep.subr.mxu0 0.0
        %2060 = vmatpush2.msra.mxu0 %v1993
        %2061 = vmatprep.subr.mxu0 0.0
        %2062 = vmatpush2.msra.mxu0 %v1992
        %2063 = vmatprep.subr.mxu0 0.0
        %2064 = vmatpush2.msra.mxu0 %v1991
        %2065 = vmatprep.subr.mxu0 0.0
        %2066 = vmatpush2.msra.mxu0 %v1990
        %2067 = vmatprep.subr.mxu0 0.0
        %2068 = vmatpush2.msra.mxu0 %v1989
        %2069 = vmatprep.mubr.f32.mxu0 %v1966
        %2070 = vmatmul.mubr.f32.gmra.mxu0 %v1965
        %v2071 = vpop.f32.mrf.mxu0
        %v2072 = vadd.f32 0.0, %v2071
        %v2073 = vpop.f32.mrf.mxu0
        %2074 = vmatprep.mubr.f32.mxu0 %v1968
        %2075 = vmatmul.mubr.f32.gmra.mxu0 %v1967
        %v2076 = vpop.f32.mrf.mxu0
        %v2077 = vadd.f32 0.0, %v2076
        %v2078 = vpop.f32.mrf.mxu0
        %2079 = vmatprep.mubr.f32.mxu0 %v1970
        %2080 = vmatmul.mubr.f32.gmra.mxu0 %v1969
        %v2081 = vpop.f32.mrf.mxu0
        %v2082 = vadd.f32 0.0, %v2081
        %v2083 = vpop.f32.mrf.mxu0
        %2084 = vmatprep.mubr.f32.mxu0 %v1972
        %2085 = vmatmul.mubr.f32.gmra.mxu0 %v1971
        %v2086 = vpop.f32.mrf.mxu0
        %v2087 = vadd.f32 0.0, %v2086
        %v2088 = vpop.f32.mrf.mxu0
        %2089 = vdwg.mxu0
        %s2090 = scalar_lea.vmem %s4, 256
        %v2091 = vld [vmem:[%s2090] sm:$0xff]
        %v2092 = vld [vmem:[%s2090 + $0x8] sm:$0xff]
        %v2093 = vld [vmem:[%s2090 + $0x10] sm:$0xff]
        %v2094 = vld [vmem:[%s2090 + $0x18] sm:$0xff]
        %v2095 = vld [vmem:[%s2090 + $0x20] sm:$0xff]
        %v2096 = vld [vmem:[%s2090 + $0x28] sm:$0xff]
        %v2097 = vld [vmem:[%s2090 + $0x30] sm:$0xff]
        %v2098 = vld [vmem:[%s2090 + $0x38] sm:$0xff]
        %v2099 = vld [vmem:[%s2090 + $0x40] sm:$0xff]
        %v2100 = vld [vmem:[%s2090 + $0x48] sm:$0xff]
        %v2101 = vld [vmem:[%s2090 + $0x50] sm:$0xff]
        %v2102 = vld [vmem:[%s2090 + $0x58] sm:$0xff]
        %v2103 = vld [vmem:[%s2090 + $0x60] sm:$0xff]
        %v2104 = vld [vmem:[%s2090 + $0x68] sm:$0xff]
        %v2105 = vld [vmem:[%s2090 + $0x70] sm:$0xff]
        %v2106 = vld [vmem:[%s2090 + $0x78] sm:$0xff]
        %v2107 = vld [vmem:[%s2090 + $0x80] sm:$0xff]
        %v2108 = vld [vmem:[%s2090 + $0x88] sm:$0xff]
        %v2109 = vld [vmem:[%s2090 + $0x90] sm:$0xff]
        %v2110 = vld [vmem:[%s2090 + $0x98] sm:$0xff]
        %v2111 = vld [vmem:[%s2090 + $0xa0] sm:$0xff]
        %v2112 = vld [vmem:[%s2090 + $0xa8] sm:$0xff]
        %v2113 = vld [vmem:[%s2090 + $0xb0] sm:$0xff]
        %v2114 = vld [vmem:[%s2090 + $0xb8] sm:$0xff]
        %v2115 = vld [vmem:[%s2090 + $0xc0] sm:$0xff]
        %v2116 = vld [vmem:[%s2090 + $0xc8] sm:$0xff]
        %v2117 = vld [vmem:[%s2090 + $0xd0] sm:$0xff]
        %v2118 = vld [vmem:[%s2090 + $0xd8] sm:$0xff]
        %v2119 = vld [vmem:[%s2090 + $0xe0] sm:$0xff]
        %v2120 = vld [vmem:[%s2090 + $0xe8] sm:$0xff]
        %v2121 = vld [vmem:[%s2090 + $0xf0] sm:$0xff]
        %v2122 = vld [vmem:[%s2090 + $0xf8] sm:$0xff]
        %2123 = vmatprep.subr.mxu0 0.0
        %2124 = vmatpush1.msra.mxu0 %v2106
        %2125 = vmatprep.subr.mxu0 0.0
        %2126 = vmatpush1.msra.mxu0 %v2105
        %2127 = vmatprep.subr.mxu0 0.0
        %2128 = vmatpush1.msra.mxu0 %v2104
        %2129 = vmatprep.subr.mxu0 0.0
        %2130 = vmatpush1.msra.mxu0 %v2103
        %2131 = vmatprep.subr.mxu0 0.0
        %2132 = vmatpush1.msra.mxu0 %v2102
        %2133 = vmatprep.subr.mxu0 0.0
        %2134 = vmatpush1.msra.mxu0 %v2101
        %2135 = vmatprep.subr.mxu0 0.0
        %2136 = vmatpush1.msra.mxu0 %v2100
        %2137 = vmatprep.subr.mxu0 0.0
        %2138 = vmatpush1.msra.mxu0 %v2099
        %2139 = vmatprep.subr.mxu0 0.0
        %2140 = vmatpush1.msra.mxu0 %v2098
        %2141 = vmatprep.subr.mxu0 0.0
        %2142 = vmatpush1.msra.mxu0 %v2097
        %2143 = vmatprep.subr.mxu0 0.0
        %2144 = vmatpush1.msra.mxu0 %v2096
        %2145 = vmatprep.subr.mxu0 0.0
        %2146 = vmatpush1.msra.mxu0 %v2095
        %2147 = vmatprep.subr.mxu0 0.0
        %2148 = vmatpush1.msra.mxu0 %v2094
        %2149 = vmatprep.subr.mxu0 0.0
        %2150 = vmatpush1.msra.mxu0 %v2093
        %2151 = vmatprep.subr.mxu0 0.0
        %2152 = vmatpush1.msra.mxu0 %v2092
        %2153 = vmatprep.subr.mxu0 0.0
        %2154 = vmatpush1.msra.mxu0 %v2091
        %2155 = vmatprep.subr.mxu0 0.0
        %2156 = vmatpush2.msra.mxu0 %v2122
        %2157 = vmatprep.subr.mxu0 0.0
        %2158 = vmatpush2.msra.mxu0 %v2121
        %2159 = vmatprep.subr.mxu0 0.0
        %2160 = vmatpush2.msra.mxu0 %v2120
        %2161 = vmatprep.subr.mxu0 0.0
        %2162 = vmatpush2.msra.mxu0 %v2119
        %2163 = vmatprep.subr.mxu0 0.0
        %2164 = vmatpush2.msra.mxu0 %v2118
        %2165 = vmatprep.subr.mxu0 0.0
        %2166 = vmatpush2.msra.mxu0 %v2117
        %2167 = vmatprep.subr.mxu0 0.0
        %2168 = vmatpush2.msra.mxu0 %v2116
        %2169 = vmatprep.subr.mxu0 0.0
        %2170 = vmatpush2.msra.mxu0 %v2115
        %2171 = vmatprep.subr.mxu0 0.0
        %2172 = vmatpush2.msra.mxu0 %v2114
        %2173 = vmatprep.subr.mxu0 0.0
        %2174 = vmatpush2.msra.mxu0 %v2113
        %2175 = vmatprep.subr.mxu0 0.0
        %2176 = vmatpush2.msra.mxu0 %v2112
        %2177 = vmatprep.subr.mxu0 0.0
        %2178 = vmatpush2.msra.mxu0 %v2111
        %2179 = vmatprep.subr.mxu0 0.0
        %2180 = vmatpush2.msra.mxu0 %v2110
        %2181 = vmatprep.subr.mxu0 0.0
        %2182 = vmatpush2.msra.mxu0 %v2109
        %2183 = vmatprep.subr.mxu0 0.0
        %2184 = vmatpush2.msra.mxu0 %v2108
        %2185 = vmatprep.subr.mxu0 0.0
        %2186 = vmatpush2.msra.mxu0 %v2107
        %2187 = vmatprep.mubr.f32.mxu0 %v1966
        %2188 = vmatmul.mubr.f32.gmra.mxu0 %v1965
        %v2189 = vpop.f32.mrf.mxu0
        %v2190 = vadd.f32 0.0, %v2189
        %v2191 = vpop.f32.mrf.mxu0
        %2192 = vmatprep.mubr.f32.mxu0 %v1968
        %2193 = vmatmul.mubr.f32.gmra.mxu0 %v1967
        %v2194 = vpop.f32.mrf.mxu0
        %v2195 = vadd.f32 0.0, %v2194
        %v2196 = vpop.f32.mrf.mxu0
        %2197 = vmatprep.mubr.f32.mxu0 %v1970
        %2198 = vmatmul.mubr.f32.gmra.mxu0 %v1969
        %v2199 = vpop.f32.mrf.mxu0
        %v2200 = vadd.f32 0.0, %v2199
        %v2201 = vpop.f32.mrf.mxu0
        %2202 = vmatprep.mubr.f32.mxu0 %v1972
        %2203 = vmatmul.mubr.f32.gmra.mxu0 %v1971
        %v2204 = vpop.f32.mrf.mxu0
        %v2205 = vadd.f32 0.0, %v2204
        %v2206 = vpop.f32.mrf.mxu0
        %2207 = vdwg.mxu0
        %s2208 = scalar_lea.vmem %s4, 512
        %v2209 = vld [vmem:[%s2208] sm:$0xff]
        %v2210 = vld [vmem:[%s2208 + $0x8] sm:$0xff]
        %v2211 = vld [vmem:[%s2208 + $0x10] sm:$0xff]
        %v2212 = vld [vmem:[%s2208 + $0x18] sm:$0xff]
        %v2213 = vld [vmem:[%s2208 + $0x20] sm:$0xff]
        %v2214 = vld [vmem:[%s2208 + $0x28] sm:$0xff]
        %v2215 = vld [vmem:[%s2208 + $0x30] sm:$0xff]
        %v2216 = vld [vmem:[%s2208 + $0x38] sm:$0xff]
        %v2217 = vld [vmem:[%s2208 + $0x40] sm:$0xff]
        %v2218 = vld [vmem:[%s2208 + $0x48] sm:$0xff]
        %v2219 = vld [vmem:[%s2208 + $0x50] sm:$0xff]
        %v2220 = vld [vmem:[%s2208 + $0x58] sm:$0xff]
        %v2221 = vld [vmem:[%s2208 + $0x60] sm:$0xff]
        %v2222 = vld [vmem:[%s2208 + $0x68] sm:$0xff]
        %v2223 = vld [vmem:[%s2208 + $0x70] sm:$0xff]
        %v2224 = vld [vmem:[%s2208 + $0x78] sm:$0xff]
        %v2225 = vld [vmem:[%s2208 + $0x80] sm:$0xff]
        %v2226 = vld [vmem:[%s2208 + $0x88] sm:$0xff]
        %v2227 = vld [vmem:[%s2208 + $0x90] sm:$0xff]
        %v2228 = vld [vmem:[%s2208 + $0x98] sm:$0xff]
        %v2229 = vld [vmem:[%s2208 + $0xa0] sm:$0xff]
        %v2230 = vld [vmem:[%s2208 + $0xa8] sm:$0xff]
        %v2231 = vld [vmem:[%s2208 + $0xb0] sm:$0xff]
        %v2232 = vld [vmem:[%s2208 + $0xb8] sm:$0xff]
        %v2233 = vld [vmem:[%s2208 + $0xc0] sm:$0xff]
        %v2234 = vld [vmem:[%s2208 + $0xc8] sm:$0xff]
        %v2235 = vld [vmem:[%s2208 + $0xd0] sm:$0xff]
        %v2236 = vld [vmem:[%s2208 + $0xd8] sm:$0xff]
        %v2237 = vld [vmem:[%s2208 + $0xe0] sm:$0xff]
        %v2238 = vld [vmem:[%s2208 + $0xe8] sm:$0xff]
        %v2239 = vld [vmem:[%s2208 + $0xf0] sm:$0xff]
        %v2240 = vld [vmem:[%s2208 + $0xf8] sm:$0xff]
        %2241 = vmatprep.subr.mxu0 0.0
        %2242 = vmatpush1.msra.mxu0 %v2224
        %2243 = vmatprep.subr.mxu0 0.0
        %2244 = vmatpush1.msra.mxu0 %v2223
        %2245 = vmatprep.subr.mxu0 0.0
        %2246 = vmatpush1.msra.mxu0 %v2222
        %2247 = vmatprep.subr.mxu0 0.0
        %2248 = vmatpush1.msra.mxu0 %v2221
        %2249 = vmatprep.subr.mxu0 0.0
        %2250 = vmatpush1.msra.mxu0 %v2220
        %2251 = vmatprep.subr.mxu0 0.0
        %2252 = vmatpush1.msra.mxu0 %v2219
        %2253 = vmatprep.subr.mxu0 0.0
        %2254 = vmatpush1.msra.mxu0 %v2218
        %2255 = vmatprep.subr.mxu0 0.0
        %2256 = vmatpush1.msra.mxu0 %v2217
        %2257 = vmatprep.subr.mxu0 0.0
        %2258 = vmatpush1.msra.mxu0 %v2216
        %2259 = vmatprep.subr.mxu0 0.0
        %2260 = vmatpush1.msra.mxu0 %v2215
        %2261 = vmatprep.subr.mxu0 0.0
        %2262 = vmatpush1.msra.mxu0 %v2214
        %2263 = vmatprep.subr.mxu0 0.0
        %2264 = vmatpush1.msra.mxu0 %v2213
        %2265 = vmatprep.subr.mxu0 0.0
        %2266 = vmatpush1.msra.mxu0 %v2212
        %2267 = vmatprep.subr.mxu0 0.0
        %2268 = vmatpush1.msra.mxu0 %v2211
        %2269 = vmatprep.subr.mxu0 0.0
        %2270 = vmatpush1.msra.mxu0 %v2210
        %2271 = vmatprep.subr.mxu0 0.0
        %2272 = vmatpush1.msra.mxu0 %v2209
        %2273 = vmatprep.subr.mxu0 0.0
        %2274 = vmatpush2.msra.mxu0 %v2240
        %2275 = vmatprep.subr.mxu0 0.0
        %2276 = vmatpush2.msra.mxu0 %v2239
        %2277 = vmatprep.subr.mxu0 0.0
        %2278 = vmatpush2.msra.mxu0 %v2238
        %2279 = vmatprep.subr.mxu0 0.0
        %2280 = vmatpush2.msra.mxu0 %v2237
        %2281 = vmatprep.subr.mxu0 0.0
        %2282 = vmatpush2.msra.mxu0 %v2236
        %2283 = vmatprep.subr.mxu0 0.0
        %2284 = vmatpush2.msra.mxu0 %v2235
        %2285 = vmatprep.subr.mxu0 0.0
        %2286 = vmatpush2.msra.mxu0 %v2234
        %2287 = vmatprep.subr.mxu0 0.0
        %2288 = vmatpush2.msra.mxu0 %v2233
        %2289 = vmatprep.subr.mxu0 0.0
        %2290 = vmatpush2.msra.mxu0 %v2232
        %2291 = vmatprep.subr.mxu0 0.0
        %2292 = vmatpush2.msra.mxu0 %v2231
        %2293 = vmatprep.subr.mxu0 0.0
        %2294 = vmatpush2.msra.mxu0 %v2230
        %2295 = vmatprep.subr.mxu0 0.0
        %2296 = vmatpush2.msra.mxu0 %v2229
        %2297 = vmatprep.subr.mxu0 0.0
        %2298 = vmatpush2.msra.mxu0 %v2228
        %2299 = vmatprep.subr.mxu0 0.0
        %2300 = vmatpush2.msra.mxu0 %v2227
        %2301 = vmatprep.subr.mxu0 0.0
        %2302 = vmatpush2.msra.mxu0 %v2226
        %2303 = vmatprep.subr.mxu0 0.0
        %2304 = vmatpush2.msra.mxu0 %v2225
        %2305 = vmatprep.mubr.f32.mxu0 %v1966
        %2306 = vmatmul.mubr.f32.gmra.mxu0 %v1965
        %v2307 = vpop.f32.mrf.mxu0
        %v2308 = vadd.f32 0.0, %v2307
        %v2309 = vpop.f32.mrf.mxu0
        %2310 = vmatprep.mubr.f32.mxu0 %v1968
        %2311 = vmatmul.mubr.f32.gmra.mxu0 %v1967
        %v2312 = vpop.f32.mrf.mxu0
        %v2313 = vadd.f32 0.0, %v2312
        %v2314 = vpop.f32.mrf.mxu0
        %2315 = vmatprep.mubr.f32.mxu0 %v1970
        %2316 = vmatmul.mubr.f32.gmra.mxu0 %v1969
        %v2317 = vpop.f32.mrf.mxu0
        %v2318 = vadd.f32 0.0, %v2317
        %v2319 = vpop.f32.mrf.mxu0
        %2320 = vmatprep.mubr.f32.mxu0 %v1972
        %2321 = vmatmul.mubr.f32.gmra.mxu0 %v1971
        %v2322 = vpop.f32.mrf.mxu0
        %v2323 = vadd.f32 0.0, %v2322
        %v2324 = vpop.f32.mrf.mxu0
        %2325 = vdwg.mxu0
        %s2326 = scalar_lea.vmem %s4, 768
        %v2327 = vld [vmem:[%s2326] sm:$0xff]
        %v2328 = vld [vmem:[%s2326 + $0x8] sm:$0xff]
        %v2329 = vld [vmem:[%s2326 + $0x10] sm:$0xff]
        %v2330 = vld [vmem:[%s2326 + $0x18] sm:$0xff]
        %v2331 = vld [vmem:[%s2326 + $0x20] sm:$0xff]
        %v2332 = vld [vmem:[%s2326 + $0x28] sm:$0xff]
        %v2333 = vld [vmem:[%s2326 + $0x30] sm:$0xff]
        %v2334 = vld [vmem:[%s2326 + $0x38] sm:$0xff]
        %v2335 = vld [vmem:[%s2326 + $0x40] sm:$0xff]
        %v2336 = vld [vmem:[%s2326 + $0x48] sm:$0xff]
        %v2337 = vld [vmem:[%s2326 + $0x50] sm:$0xff]
        %v2338 = vld [vmem:[%s2326 + $0x58] sm:$0xff]
        %v2339 = vld [vmem:[%s2326 + $0x60] sm:$0xff]
        %v2340 = vld [vmem:[%s2326 + $0x68] sm:$0xff]
        %v2341 = vld [vmem:[%s2326 + $0x70] sm:$0xff]
        %v2342 = vld [vmem:[%s2326 + $0x78] sm:$0xff]
        %v2343 = vld [vmem:[%s2326 + $0x80] sm:$0xff]
        %v2344 = vld [vmem:[%s2326 + $0x88] sm:$0xff]
        %v2345 = vld [vmem:[%s2326 + $0x90] sm:$0xff]
        %v2346 = vld [vmem:[%s2326 + $0x98] sm:$0xff]
        %v2347 = vld [vmem:[%s2326 + $0xa0] sm:$0xff]
        %v2348 = vld [vmem:[%s2326 + $0xa8] sm:$0xff]
        %v2349 = vld [vmem:[%s2326 + $0xb0] sm:$0xff]
        %v2350 = vld [vmem:[%s2326 + $0xb8] sm:$0xff]
        %v2351 = vld [vmem:[%s2326 + $0xc0] sm:$0xff]
        %v2352 = vld [vmem:[%s2326 + $0xc8] sm:$0xff]
        %v2353 = vld [vmem:[%s2326 + $0xd0] sm:$0xff]
        %v2354 = vld [vmem:[%s2326 + $0xd8] sm:$0xff]
        %v2355 = vld [vmem:[%s2326 + $0xe0] sm:$0xff]
        %v2356 = vld [vmem:[%s2326 + $0xe8] sm:$0xff]
        %v2357 = vld [vmem:[%s2326 + $0xf0] sm:$0xff]
        %v2358 = vld [vmem:[%s2326 + $0xf8] sm:$0xff]
        %2359 = vmatprep.subr.mxu0 0.0
        %2360 = vmatpush1.msra.mxu0 %v2342
        %2361 = vmatprep.subr.mxu0 0.0
        %2362 = vmatpush1.msra.mxu0 %v2341
        %2363 = vmatprep.subr.mxu0 0.0
        %2364 = vmatpush1.msra.mxu0 %v2340
        %2365 = vmatprep.subr.mxu0 0.0
        %2366 = vmatpush1.msra.mxu0 %v2339
        %2367 = vmatprep.subr.mxu0 0.0
        %2368 = vmatpush1.msra.mxu0 %v2338
        %2369 = vmatprep.subr.mxu0 0.0
        %2370 = vmatpush1.msra.mxu0 %v2337
        %2371 = vmatprep.subr.mxu0 0.0
        %2372 = vmatpush1.msra.mxu0 %v2336
        %2373 = vmatprep.subr.mxu0 0.0
        %2374 = vmatpush1.msra.mxu0 %v2335
        %2375 = vmatprep.subr.mxu0 0.0
        %2376 = vmatpush1.msra.mxu0 %v2334
        %2377 = vmatprep.subr.mxu0 0.0
        %2378 = vmatpush1.msra.mxu0 %v2333
        %2379 = vmatprep.subr.mxu0 0.0
        %2380 = vmatpush1.msra.mxu0 %v2332
        %2381 = vmatprep.subr.mxu0 0.0
        %2382 = vmatpush1.msra.mxu0 %v2331
        %2383 = vmatprep.subr.mxu0 0.0
        %2384 = vmatpush1.msra.mxu0 %v2330
        %2385 = vmatprep.subr.mxu0 0.0
        %2386 = vmatpush1.msra.mxu0 %v2329
        %2387 = vmatprep.subr.mxu0 0.0
        %2388 = vmatpush1.msra.mxu0 %v2328
        %2389 = vmatprep.subr.mxu0 0.0
        %2390 = vmatpush1.msra.mxu0 %v2327
        %2391 = vmatprep.subr.mxu0 0.0
        %2392 = vmatpush2.msra.mxu0 %v2358
        %2393 = vmatprep.subr.mxu0 0.0
        %2394 = vmatpush2.msra.mxu0 %v2357
        %2395 = vmatprep.subr.mxu0 0.0
        %2396 = vmatpush2.msra.mxu0 %v2356
        %2397 = vmatprep.subr.mxu0 0.0
        %2398 = vmatpush2.msra.mxu0 %v2355
        %2399 = vmatprep.subr.mxu0 0.0
        %2400 = vmatpush2.msra.mxu0 %v2354
        %2401 = vmatprep.subr.mxu0 0.0
        %2402 = vmatpush2.msra.mxu0 %v2353
        %2403 = vmatprep.subr.mxu0 0.0
        %2404 = vmatpush2.msra.mxu0 %v2352
        %2405 = vmatprep.subr.mxu0 0.0
        %2406 = vmatpush2.msra.mxu0 %v2351
        %2407 = vmatprep.subr.mxu0 0.0
        %2408 = vmatpush2.msra.mxu0 %v2350
        %2409 = vmatprep.subr.mxu0 0.0
        %2410 = vmatpush2.msra.mxu0 %v2349
        %2411 = vmatprep.subr.mxu0 0.0
        %2412 = vmatpush2.msra.mxu0 %v2348
        %2413 = vmatprep.subr.mxu0 0.0
        %2414 = vmatpush2.msra.mxu0 %v2347
        %2415 = vmatprep.subr.mxu0 0.0
        %2416 = vmatpush2.msra.mxu0 %v2346
        %2417 = vmatprep.subr.mxu0 0.0
        %2418 = vmatpush2.msra.mxu0 %v2345
        %2419 = vmatprep.subr.mxu0 0.0
        %2420 = vmatpush2.msra.mxu0 %v2344
        %2421 = vmatprep.subr.mxu0 0.0
        %2422 = vmatpush2.msra.mxu0 %v2343
        %2423 = vmatprep.mubr.f32.mxu0 %v1966
        %2424 = vmatmul.mubr.f32.gmra.mxu0 %v1965
        %v2425 = vpop.f32.mrf.mxu0
        %v2426 = vadd.f32 0.0, %v2425
        %v2427 = vpop.f32.mrf.mxu0
        %2428 = vmatprep.mubr.f32.mxu0 %v1968
        %2429 = vmatmul.mubr.f32.gmra.mxu0 %v1967
        %v2430 = vpop.f32.mrf.mxu0
        %v2431 = vadd.f32 0.0, %v2430
        %v2432 = vpop.f32.mrf.mxu0
        %2433 = vmatprep.mubr.f32.mxu0 %v1970
        %2434 = vmatmul.mubr.f32.gmra.mxu0 %v1969
        %v2435 = vpop.f32.mrf.mxu0
        %v2436 = vadd.f32 0.0, %v2435
        %v2437 = vpop.f32.mrf.mxu0
        %2438 = vmatprep.mubr.f32.mxu0 %v1972
        %2439 = vmatmul.mubr.f32.gmra.mxu0 %v1971
        %v2440 = vpop.f32.mrf.mxu0
        %v2441 = vadd.f32 0.0, %v2440
        %v2442 = vpop.f32.mrf.mxu0
        %2443 = vdwg.mxu0
        %v2444 = vmax.f32 %v2072, %v2190
        %v2445 = vmax.f32 %v2077, %v2195
        %v2446 = vmax.f32 %v2082, %v2200
        %v2447 = vmax.f32 %v2087, %v2205
        %v2448 = vmax.f32 %v2308, %v2426
        %v2449 = vmax.f32 %v2313, %v2431
        %v2450 = vmax.f32 %v2318, %v2436
        %v2451 = vmax.f32 %v2323, %v2441
        %v2452 = vmax.f32 %v2444, %v2448
        %v2453 = vmax.f32 %v2445, %v2449
        %v2454 = vmax.f32 %v2446, %v2450
        %v2455 = vmax.f32 %v2447, %v2451
        %vm2456 = vcmask 523264
        %2457 = vst.msk [vmem:[#allocation3 + $0x8] sm:$0xff] %vm2456, %v2452
        %2458 = vst.msk [vmem:[#allocation3 + $0x20] sm:$0xff] %vm2456, %v2453
        %2459 = vst.msk [vmem:[#allocation3 + $0x38] sm:$0xff] %vm2456, %v2454
        %2460 = vst.msk [vmem:[#allocation3 + $0x50] sm:$0xff] %vm2456, %v2455
        %v2461 = vld [vmem:[#allocation3] sm:$0xff]
        %v2462 = vld [vmem:[#allocation3 + $0x8] sm:$0xff]
        %v2463 = vld [vmem:[#allocation3 + $0x18] sm:$0xff]
        %v2464 = vld [vmem:[#allocation3 + $0x20] sm:$0xff]
        %v2465 = vld [vmem:[#allocation3 + $0x30] sm:$0xff]
        %v2466 = vld [vmem:[#allocation3 + $0x38] sm:$0xff]
        %v2467 = vld [vmem:[#allocation3 + $0x48] sm:$0xff]
        %v2468 = vld [vmem:[#allocation3 + $0x50] sm:$0xff]
        %v2469 = vld [vmem:[%s7] sm:$0x1]
        %vm2470 = vcmp.gt.f32.partialorder %v2469, 0.5
        %v2471 = vsel %vm2470, 1, 0
        %v2472 = vlaneseq
        %v2473 = vshrl.u32 %v2472, 7
        %v2474 = vsub.s32 0, %v2473
        %v2475 = vrot.slane %v2471, %v2474
        %vm2476 = vcmp.eq.s32.totalorder %v2475, 1
        %2485 = vrot.lane.b32.xlu0 %v2461, 9
        %v2486 = vpop.permute.xlu0 %2485
        %2487 = vrot.lane.b32.xlu0 %v2462, 9
        %v2488 = vpop.permute.xlu0 %2487
        %2489 = vrot.lane.b32.xlu0 %v2463, 9
        %v2490 = vpop.permute.xlu0 %2489
        %2491 = vrot.lane.b32.xlu0 %v2464, 9
        %v2492 = vpop.permute.xlu0 %2491
        %2493 = vrot.lane.b32.xlu0 %v2465, 9
        %v2494 = vpop.permute.xlu0 %2493
        %2495 = vrot.lane.b32.xlu0 %v2466, 9
        %v2496 = vpop.permute.xlu0 %2495
        %2497 = vrot.lane.b32.xlu0 %v2467, 9
        %v2498 = vpop.permute.xlu0 %2497
        %2499 = vrot.lane.b32.xlu0 %v2468, 9
        %v2500 = vpop.permute.xlu0 %2499
        %vm2501 = vcmask 72704
        %v2502 = vsel %vm2501, %v2486, %v2488
        %v2503 = vsel %vm2501, %v2490, %v2492
        %v2504 = vsel %vm2501, %v2494, %v2496
        %v2505 = vsel %vm2501, %v2498, %v2500
        %v2510 = vsel %vm2476, %v2502, 0.0
        %v2511 = vsel %vm2476, %v2503, 0.0
        %v2512 = vsel %vm2476, %v2504, 0.0
        %v2513 = vsel %vm2476, %v2505, 0.0
        %v2514 = vld [vmem:[%s5] sm:$0xff]
        %v2515 = vld [vmem:[%s5 + $0x8] sm:$0xff]
        %s2516 = scalar_lea.vmem %s7, 1
        %v2517 = vld [vmem:[%s2516] sm:$0x1]
        %vm2518 = vcmp.gt.f32.partialorder %v2517, 0.5
        %v2519 = vsel %vm2518, 1, 0
        %v2520 = vlaneseq
        %v2521 = vshrl.u32 %v2520, 7
        %v2522 = vsub.s32 0, %v2521
        %v2523 = vrot.slane %v2519, %v2522
        %vm2524 = vcmp.eq.s32.totalorder %v2523, 1
        %2525 = vrot.lane.b32.xlu0 %v2461, 8
        %v2526 = vpop.permute.xlu0 %2525
        %2527 = vrot.lane.b32.xlu0 %v2462, 8
        %v2528 = vpop.permute.xlu0 %2527
        %2529 = vrot.lane.b32.xlu0 %v2463, 8
        %v2530 = vpop.permute.xlu0 %2529
        %2531 = vrot.lane.b32.xlu0 %v2464, 8
        %v2532 = vpop.permute.xlu0 %2531
        %2533 = vrot.lane.b32.xlu0 %v2465, 8
        %v2534 = vpop.permute.xlu0 %2533
        %2535 = vrot.lane.b32.xlu0 %v2466, 8
        %v2536 = vpop.permute.xlu0 %2535
        %2537 = vrot.lane.b32.xlu0 %v2467, 8
        %v2538 = vpop.permute.xlu0 %2537
        %2539 = vrot.lane.b32.xlu0 %v2468, 8
        %v2540 = vpop.permute.xlu0 %2539
        %vm2541 = vcmask 64512
        %v2542 = vsel %vm2541, %v2526, %v2528
        %v2543 = vsel %vm2541, %v2530, %v2532
        %v2544 = vsel %vm2541, %v2534, %v2536
        %v2545 = vsel %vm2541, %v2538, %v2540
        %v2550 = vsel %vm2524, %v2542, 0.0
        %v2551 = vsel %vm2524, %v2543, 0.0
        %v2552 = vsel %vm2524, %v2544, 0.0
        %v2553 = vsel %vm2524, %v2545, 0.0
        %s2554 = scalar_lea.vmem %s5, 16
        %v2555 = vld [vmem:[%s2554] sm:$0xff]
        %v2556 = vld [vmem:[%s2554 + $0x8] sm:$0xff]
        %vm2557 = vcmask 261120
        %v2559 = vsel %vm2557, %v2555, 0
        %v2562 = vsel %vm2557, %v2556, 0
        %2564 = vmatprep.subr.mxu0 0.0
        %2565 = vmatpush1.msra.mxu0 0.0
        %2566 = vmatprep.subr.mxu0 0.0
        %2567 = vmatpush1.msra.mxu0 0.0
        %2568 = vmatprep.subr.mxu0 0.0
        %2569 = vmatpush1.msra.mxu0 0.0
        %2570 = vmatprep.subr.mxu0 0.0
        %2571 = vmatpush1.msra.mxu0 0.0
        %2572 = vmatprep.subr.mxu0 0.0
        %2573 = vmatpush1.msra.mxu0 0.0
        %2574 = vmatprep.subr.mxu0 0.0
        %2575 = vmatpush1.msra.mxu0 0.0
        %2576 = vmatprep.subr.mxu0 0.0
        %2577 = vmatpush1.msra.mxu0 0.0
        %2578 = vmatprep.subr.mxu0 0.0
        %2579 = vmatpush1.msra.mxu0 0.0
        %2580 = vmatprep.subr.mxu0 0.0
        %2581 = vmatpush1.msra.mxu0 0.0
        %2582 = vmatprep.subr.mxu0 0.0
        %2583 = vmatpush1.msra.mxu0 0.0
        %2584 = vmatprep.subr.mxu0 0.0
        %2585 = vmatpush1.msra.mxu0 0.0
        %2586 = vmatprep.subr.mxu0 0.0
        %2587 = vmatpush1.msra.mxu0 0.0
        %2588 = vmatprep.subr.mxu0 0.0
        %2589 = vmatpush1.msra.mxu0 %v2553
        %2590 = vmatprep.subr.mxu0 0.0
        %2591 = vmatpush1.msra.mxu0 %v2552
        %2592 = vmatprep.subr.mxu0 0.0
        %2593 = vmatpush1.msra.mxu0 %v2551
        %2594 = vmatprep.subr.mxu0 0.0
        %2595 = vmatpush1.msra.mxu0 %v2550
        %2596 = vmatprep.subr.mxu0 0.0
        %2597 = vmatpush2.msra.mxu0 0.0
        %2598 = vmatprep.subr.mxu0 0.0
        %2599 = vmatpush2.msra.mxu0 0.0
        %2600 = vmatprep.subr.mxu0 0.0
        %2601 = vmatpush2.msra.mxu0 0.0
        %2602 = vmatprep.subr.mxu0 0.0
        %2603 = vmatpush2.msra.mxu0 0.0
        %2604 = vmatprep.subr.mxu0 0.0
        %2605 = vmatpush2.msra.mxu0 0.0
        %2606 = vmatprep.subr.mxu0 0.0
        %2607 = vmatpush2.msra.mxu0 0.0
        %2608 = vmatprep.subr.mxu0 0.0
        %2609 = vmatpush2.msra.mxu0 0.0
        %2610 = vmatprep.subr.mxu0 0.0
        %2611 = vmatpush2.msra.mxu0 0.0
        %2612 = vmatprep.subr.mxu0 0.0
        %2613 = vmatpush2.msra.mxu0 0.0
        %2614 = vmatprep.subr.mxu0 0.0
        %2615 = vmatpush2.msra.mxu0 0.0
        %2616 = vmatprep.subr.mxu0 0.0
        %2617 = vmatpush2.msra.mxu0 0.0
        %2618 = vmatprep.subr.mxu0 0.0
        %2619 = vmatpush2.msra.mxu0 0.0
        %2620 = vmatprep.subr.mxu0 0.0
        %2621 = vmatpush2.msra.mxu0 0.0
        %2622 = vmatprep.subr.mxu0 0.0
        %2623 = vmatpush2.msra.mxu0 0.0
        %2624 = vmatprep.subr.mxu0 0.0
        %2625 = vmatpush2.msra.mxu0 0.0
        %2626 = vmatprep.subr.mxu0 0.0
        %2627 = vmatpush2.msra.mxu0 0.0
        %2628 = vmatprep.mubr.f32.mxu0 0.0
        %2629 = vmatmul.mubr.f32.gmra.mxu0 %v2559
        %v2630 = vpop.f32.mrf.mxu0
        %v2631 = vadd.f32 0.0, %v2630
        %v2632 = vpop.f32.mrf.mxu0
        %2633 = vmatprep.mubr.f32.mxu0 0.0
        %2634 = vmatmul.mubr.f32.gmra.mxu0 %v2562
        %v2635 = vpop.f32.mrf.mxu0
        %v2636 = vadd.f32 0.0, %v2635
        %v2637 = vpop.f32.mrf.mxu0
        %2638 = vdwg.mxu0
        %v2640 = vsel %vm2557, %v2514, 0
        %v2643 = vsel %vm2557, %v2515, 0
        %2645 = vmatprep.subr.mxu0 0.0
        %2646 = vmatpush1.msra.mxu0 0.0
        %2647 = vmatprep.subr.mxu0 0.0
        %2648 = vmatpush1.msra.mxu0 0.0
        %2649 = vmatprep.subr.mxu0 0.0
        %2650 = vmatpush1.msra.mxu0 0.0
        %2651 = vmatprep.subr.mxu0 0.0
        %2652 = vmatpush1.msra.mxu0 0.0
        %2653 = vmatprep.subr.mxu0 0.0
        %2654 = vmatpush1.msra.mxu0 0.0
        %2655 = vmatprep.subr.mxu0 0.0
        %2656 = vmatpush1.msra.mxu0 0.0
        %2657 = vmatprep.subr.mxu0 0.0
        %2658 = vmatpush1.msra.mxu0 0.0
        %2659 = vmatprep.subr.mxu0 0.0
        %2660 = vmatpush1.msra.mxu0 0.0
        %2661 = vmatprep.subr.mxu0 0.0
        %2662 = vmatpush1.msra.mxu0 0.0
        %2663 = vmatprep.subr.mxu0 0.0
        %2664 = vmatpush1.msra.mxu0 0.0
        %2665 = vmatprep.subr.mxu0 0.0
        %2666 = vmatpush1.msra.mxu0 0.0
        %2667 = vmatprep.subr.mxu0 0.0
        %2668 = vmatpush1.msra.mxu0 0.0
        %2669 = vmatprep.subr.mxu0 0.0
        %2670 = vmatpush1.msra.mxu0 %v2513
        %2671 = vmatprep.subr.mxu0 0.0
        %2672 = vmatpush1.msra.mxu0 %v2512
        %2673 = vmatprep.subr.mxu0 0.0
        %2674 = vmatpush1.msra.mxu0 %v2511
        %2675 = vmatprep.subr.mxu0 0.0
        %2676 = vmatpush1.msra.mxu0 %v2510
        %2677 = vmatprep.subr.mxu0 0.0
        %2678 = vmatpush2.msra.mxu0 0.0
        %2679 = vmatprep.subr.mxu0 0.0
        %2680 = vmatpush2.msra.mxu0 0.0
        %2681 = vmatprep.subr.mxu0 0.0
        %2682 = vmatpush2.msra.mxu0 0.0
        %2683 = vmatprep.subr.mxu0 0.0
        %2684 = vmatpush2.msra.mxu0 0.0
        %2685 = vmatprep.subr.mxu0 0.0
        %2686 = vmatpush2.msra.mxu0 0.0
        %2687 = vmatprep.subr.mxu0 0.0
        %2688 = vmatpush2.msra.mxu0 0.0
        %2689 = vmatprep.subr.mxu0 0.0
        %2690 = vmatpush2.msra.mxu0 0.0
        %2691 = vmatprep.subr.mxu0 0.0
        %2692 = vmatpush2.msra.mxu0 0.0
        %2693 = vmatprep.subr.mxu0 0.0
        %2694 = vmatpush2.msra.mxu0 0.0
        %2695 = vmatprep.subr.mxu0 0.0
        %2696 = vmatpush2.msra.mxu0 0.0
        %2697 = vmatprep.subr.mxu0 0.0
        %2698 = vmatpush2.msra.mxu0 0.0
        %2699 = vmatprep.subr.mxu0 0.0
        %2700 = vmatpush2.msra.mxu0 0.0
        %2701 = vmatprep.subr.mxu0 0.0
        %2702 = vmatpush2.msra.mxu0 0.0
        %2703 = vmatprep.subr.mxu0 0.0
        %2704 = vmatpush2.msra.mxu0 0.0
        %2705 = vmatprep.subr.mxu0 0.0
        %2706 = vmatpush2.msra.mxu0 0.0
        %2707 = vmatprep.subr.mxu0 0.0
        %2708 = vmatpush2.msra.mxu0 0.0
        %2709 = vmatprep.mubr.f32.mxu0 0.0
        %2710 = vmatmul.mubr.f32.gmra.mxu0 %v2640
        %v2711 = vpop.f32.mrf.mxu0
        %v2712 = vadd.f32 %v2631, %v2711
        %v2713 = vpop.f32.mrf.mxu0
        %2714 = vmatprep.mubr.f32.mxu0 0.0
        %2715 = vmatmul.mubr.f32.gmra.mxu0 %v2643
        %v2716 = vpop.f32.mrf.mxu0
        %v2717 = vadd.f32 %v2636, %v2716
        %v2718 = vpop.f32.mrf.mxu0
        %2719 = vdwg.mxu0
        %s2720 = scalar_lea.vmem %s7, 2
        %v2721 = vld [vmem:[%s2720] sm:$0x1]
        %vm2722 = vcmp.gt.f32.partialorder %v2721, 0.5
        %v2723 = vsel %vm2722, 1, 0
        %v2724 = vlaneseq
        %v2725 = vshrl.u32 %v2724, 7
        %v2726 = vsub.s32 0, %v2725
        %v2727 = vrot.slane %v2723, %v2726
        %vm2728 = vcmp.eq.s32.totalorder %v2727, 1
        %2729 = vrot.lane.b32.xlu0 %v2461, 7
        %v2730 = vpop.permute.xlu0 %2729
        %2731 = vrot.lane.b32.xlu0 %v2462, 7
        %v2732 = vpop.permute.xlu0 %2731
        %2733 = vrot.lane.b32.xlu0 %v2463, 7
        %v2734 = vpop.permute.xlu0 %2733
        %2735 = vrot.lane.b32.xlu0 %v2464, 7
        %v2736 = vpop.permute.xlu0 %2735
        %2737 = vrot.lane.b32.xlu0 %v2465, 7
        %v2738 = vpop.permute.xlu0 %2737
        %2739 = vrot.lane.b32.xlu0 %v2466, 7
        %v2740 = vpop.permute.xlu0 %2739
        %2741 = vrot.lane.b32.xlu0 %v2467, 7
        %v2742 = vpop.permute.xlu0 %2741
        %2743 = vrot.lane.b32.xlu0 %v2468, 7
        %v2744 = vpop.permute.xlu0 %2743
        %vm2745 = vcmask 56320
        %v2746 = vsel %vm2745, %v2730, %v2732
        %v2747 = vsel %vm2745, %v2734, %v2736
        %v2748 = vsel %vm2745, %v2738, %v2740
        %v2749 = vsel %vm2745, %v2742, %v2744
        %v2754 = vsel %vm2728, %v2746, 0.0
        %v2755 = vsel %vm2728, %v2747, 0.0
        %v2756 = vsel %vm2728, %v2748, 0.0
        %v2757 = vsel %vm2728, %v2749, 0.0
        %s2758 = scalar_lea.vmem %s5, 32
        %v2759 = vld [vmem:[%s2758] sm:$0xff]
        %v2760 = vld [vmem:[%s2758 + $0x8] sm:$0xff]
        %v2762 = vsel %vm2557, %v2759, 0
        %v2765 = vsel %vm2557, %v2760, 0
        %2767 = vmatprep.subr.mxu0 0.0
        %2768 = vmatpush1.msra.mxu0 0.0
        %2769 = vmatprep.subr.mxu0 0.0
        %2770 = vmatpush1.msra.mxu0 0.0
        %2771 = vmatprep.subr.mxu0 0.0
        %2772 = vmatpush1.msra.mxu0 0.0
        %2773 = vmatprep.subr.mxu0 0.0
        %2774 = vmatpush1.msra.mxu0 0.0
        %2775 = vmatprep.subr.mxu0 0.0
        %2776 = vmatpush1.msra.mxu0 0.0
        %2777 = vmatprep.subr.mxu0 0.0
        %2778 = vmatpush1.msra.mxu0 0.0
        %2779 = vmatprep.subr.mxu0 0.0
        %2780 = vmatpush1.msra.mxu0 0.0
        %2781 = vmatprep.subr.mxu0 0.0
        %2782 = vmatpush1.msra.mxu0 0.0
        %2783 = vmatprep.subr.mxu0 0.0
        %2784 = vmatpush1.msra.mxu0 0.0
        %2785 = vmatprep.subr.mxu0 0.0
        %2786 = vmatpush1.msra.mxu0 0.0
        %2787 = vmatprep.subr.mxu0 0.0
        %2788 = vmatpush1.msra.mxu0 0.0
        %2789 = vmatprep.subr.mxu0 0.0
        %2790 = vmatpush1.msra.mxu0 0.0
        %2791 = vmatprep.subr.mxu0 0.0
        %2792 = vmatpush1.msra.mxu0 %v2757
        %2793 = vmatprep.subr.mxu0 0.0
        %2794 = vmatpush1.msra.mxu0 %v2756
        %2795 = vmatprep.subr.mxu0 0.0
        %2796 = vmatpush1.msra.mxu0 %v2755
        %2797 = vmatprep.subr.mxu0 0.0
        %2798 = vmatpush1.msra.mxu0 %v2754
        %2799 = vmatprep.subr.mxu0 0.0
        %2800 = vmatpush2.msra.mxu0 0.0
        %2801 = vmatprep.subr.mxu0 0.0
        %2802 = vmatpush2.msra.mxu0 0.0
        %2803 = vmatprep.subr.mxu0 0.0
        %2804 = vmatpush2.msra.mxu0 0.0
        %2805 = vmatprep.subr.mxu0 0.0
        %2806 = vmatpush2.msra.mxu0 0.0
        %2807 = vmatprep.subr.mxu0 0.0
        %2808 = vmatpush2.msra.mxu0 0.0
        %2809 = vmatprep.subr.mxu0 0.0
        %2810 = vmatpush2.msra.mxu0 0.0
        %2811 = vmatprep.subr.mxu0 0.0
        %2812 = vmatpush2.msra.mxu0 0.0
        %2813 = vmatprep.subr.mxu0 0.0
        %2814 = vmatpush2.msra.mxu0 0.0
        %2815 = vmatprep.subr.mxu0 0.0
        %2816 = vmatpush2.msra.mxu0 0.0
        %2817 = vmatprep.subr.mxu0 0.0
        %2818 = vmatpush2.msra.mxu0 0.0
        %2819 = vmatprep.subr.mxu0 0.0
        %2820 = vmatpush2.msra.mxu0 0.0
        %2821 = vmatprep.subr.mxu0 0.0
        %2822 = vmatpush2.msra.mxu0 0.0
        %2823 = vmatprep.subr.mxu0 0.0
        %2824 = vmatpush2.msra.mxu0 0.0
        %2825 = vmatprep.subr.mxu0 0.0
        %2826 = vmatpush2.msra.mxu0 0.0
        %2827 = vmatprep.subr.mxu0 0.0
        %2828 = vmatpush2.msra.mxu0 0.0
        %2829 = vmatprep.subr.mxu0 0.0
        %2830 = vmatpush2.msra.mxu0 0.0
        %2831 = vmatprep.mubr.f32.mxu0 0.0
        %2832 = vmatmul.mubr.f32.gmra.mxu0 %v2762
        %v2833 = vpop.f32.mrf.mxu0
        %v2834 = vadd.f32 0.0, %v2833
        %v2835 = vpop.f32.mrf.mxu0
        %2836 = vmatprep.mubr.f32.mxu0 0.0
        %2837 = vmatmul.mubr.f32.gmra.mxu0 %v2765
        %v2838 = vpop.f32.mrf.mxu0
        %v2839 = vadd.f32 0.0, %v2838
        %v2840 = vpop.f32.mrf.mxu0
        %2841 = vdwg.mxu0
        %v2842 = vadd.f32 %v2712, %v2834
        %v2843 = vadd.f32 %v2717, %v2839
        %s2844 = scalar_lea.vmem %s7, 3
        %v2845 = vld [vmem:[%s2844] sm:$0x1]
        %vm2846 = vcmp.gt.f32.partialorder %v2845, 0.5
        %v2847 = vsel %vm2846, 1, 0
        %v2848 = vlaneseq
        %v2849 = vshrl.u32 %v2848, 7
        %v2850 = vsub.s32 0, %v2849
        %v2851 = vrot.slane %v2847, %v2850
        %vm2852 = vcmp.eq.s32.totalorder %v2851, 1
        %2853 = vrot.lane.b32.xlu0 %v2461, 1
        %v2854 = vpop.permute.xlu0 %2853
        %2855 = vrot.lane.b32.xlu0 %v2462, 1
        %v2856 = vpop.permute.xlu0 %2855
        %2857 = vrot.lane.b32.xlu0 %v2463, 1
        %v2858 = vpop.permute.xlu0 %2857
        %2859 = vrot.lane.b32.xlu0 %v2464, 1
        %v2860 = vpop.permute.xlu0 %2859
        %2861 = vrot.lane.b32.xlu0 %v2465, 1
        %v2862 = vpop.permute.xlu0 %2861
        %2863 = vrot.lane.b32.xlu0 %v2466, 1
        %v2864 = vpop.permute.xlu0 %2863
        %2865 = vrot.lane.b32.xlu0 %v2467, 1
        %v2866 = vpop.permute.xlu0 %2865
        %2867 = vrot.lane.b32.xlu0 %v2468, 1
        %v2868 = vpop.permute.xlu0 %2867
        %v2869 = vsel %vm1045, %v2854, %v2856
        %v2870 = vsel %vm1045, %v2858, %v2860
        %v2871 = vsel %vm1045, %v2862, %v2864
        %v2872 = vsel %vm1045, %v2866, %v2868
        %v2877 = vsel %vm2852, %v2869, 0.0
        %v2878 = vsel %vm2852, %v2870, 0.0
        %v2879 = vsel %vm2852, %v2871, 0.0
        %v2880 = vsel %vm2852, %v2872, 0.0
        %s2881 = scalar_lea.vmem %s5, 48
        %v2882 = vld [vmem:[%s2881] sm:$0xff]
        %v2883 = vld [vmem:[%s2881 + $0x8] sm:$0xff]
        %v2885 = vsel %vm2557, %v2882, 0
        %v2888 = vsel %vm2557, %v2883, 0
        %2890 = vmatprep.subr.mxu0 0.0
        %2891 = vmatpush1.msra.mxu0 0.0
        %2892 = vmatprep.subr.mxu0 0.0
        %2893 = vmatpush1.msra.mxu0 0.0
        %2894 = vmatprep.subr.mxu0 0.0
        %2895 = vmatpush1.msra.mxu0 0.0
        %2896 = vmatprep.subr.mxu0 0.0
        %2897 = vmatpush1.msra.mxu0 0.0
        %2898 = vmatprep.subr.mxu0 0.0
        %2899 = vmatpush1.msra.mxu0 0.0
        %2900 = vmatprep.subr.mxu0 0.0
        %2901 = vmatpush1.msra.mxu0 0.0
        %2902 = vmatprep.subr.mxu0 0.0
        %2903 = vmatpush1.msra.mxu0 0.0
        %2904 = vmatprep.subr.mxu0 0.0
        %2905 = vmatpush1.msra.mxu0 0.0
        %2906 = vmatprep.subr.mxu0 0.0
        %2907 = vmatpush1.msra.mxu0 0.0
        %2908 = vmatprep.subr.mxu0 0.0
        %2909 = vmatpush1.msra.mxu0 0.0
        %2910 = vmatprep.subr.mxu0 0.0
        %2911 = vmatpush1.msra.mxu0 0.0
        %2912 = vmatprep.subr.mxu0 0.0
        %2913 = vmatpush1.msra.mxu0 0.0
        %2914 = vmatprep.subr.mxu0 0.0
        %2915 = vmatpush1.msra.mxu0 %v2880
        %2916 = vmatprep.subr.mxu0 0.0
        %2917 = vmatpush1.msra.mxu0 %v2879
        %2918 = vmatprep.subr.mxu0 0.0
        %2919 = vmatpush1.msra.mxu0 %v2878
        %2920 = vmatprep.subr.mxu0 0.0
        %2921 = vmatpush1.msra.mxu0 %v2877
        %2922 = vmatprep.subr.mxu0 0.0
        %2923 = vmatpush2.msra.mxu0 0.0
        %2924 = vmatprep.subr.mxu0 0.0
        %2925 = vmatpush2.msra.mxu0 0.0
        %2926 = vmatprep.subr.mxu0 0.0
        %2927 = vmatpush2.msra.mxu0 0.0
        %2928 = vmatprep.subr.mxu0 0.0
        %2929 = vmatpush2.msra.mxu0 0.0
        %2930 = vmatprep.subr.mxu0 0.0
        %2931 = vmatpush2.msra.mxu0 0.0
        %2932 = vmatprep.subr.mxu0 0.0
        %2933 = vmatpush2.msra.mxu0 0.0
        %2934 = vmatprep.subr.mxu0 0.0
        %2935 = vmatpush2.msra.mxu0 0.0
        %2936 = vmatprep.subr.mxu0 0.0
        %2937 = vmatpush2.msra.mxu0 0.0
        %2938 = vmatprep.subr.mxu0 0.0
        %2939 = vmatpush2.msra.mxu0 0.0
        %2940 = vmatprep.subr.mxu0 0.0
        %2941 = vmatpush2.msra.mxu0 0.0
        %2942 = vmatprep.subr.mxu0 0.0
        %2943 = vmatpush2.msra.mxu0 0.0
        %2944 = vmatprep.subr.mxu0 0.0
        %2945 = vmatpush2.msra.mxu0 0.0
        %2946 = vmatprep.subr.mxu0 0.0
        %2947 = vmatpush2.msra.mxu0 0.0
        %2948 = vmatprep.subr.mxu0 0.0
        %2949 = vmatpush2.msra.mxu0 0.0
        %2950 = vmatprep.subr.mxu0 0.0
        %2951 = vmatpush2.msra.mxu0 0.0
        %2952 = vmatprep.subr.mxu0 0.0
        %2953 = vmatpush2.msra.mxu0 0.0
        %2954 = vmatprep.mubr.f32.mxu0 0.0
        %2955 = vmatmul.mubr.f32.gmra.mxu0 %v2885
        %v2956 = vpop.f32.mrf.mxu0
        %v2957 = vadd.f32 0.0, %v2956
        %v2958 = vpop.f32.mrf.mxu0
        %2959 = vmatprep.mubr.f32.mxu0 0.0
        %2960 = vmatmul.mubr.f32.gmra.mxu0 %v2888
        %v2961 = vpop.f32.mrf.mxu0
        %v2962 = vadd.f32 0.0, %v2961
        %v2963 = vpop.f32.mrf.mxu0
        %2964 = vdwg.mxu0
        %v2965 = vadd.f32 %v2842, %v2957
        %v2966 = vadd.f32 %v2843, %v2962
        %s2967 = scalar_lea.vmem %s5, 64
        %v2968 = vld [vmem:[%s2967] sm:$0xff]
        %v2969 = vld [vmem:[%s2967 + $0x8] sm:$0xff]
        %v2971 = vsel %vm2557, %v2968, 0
        %v2974 = vsel %vm2557, %v2969, 0
        %2976 = vmatprep.subr.mxu0 0.0
        %2977 = vmatpush1.msra.mxu0 0.0
        %2978 = vmatprep.subr.mxu0 0.0
        %2979 = vmatpush1.msra.mxu0 0.0
        %2980 = vmatprep.subr.mxu0 0.0
        %2981 = vmatpush1.msra.mxu0 0.0
        %2982 = vmatprep.subr.mxu0 0.0
        %2983 = vmatpush1.msra.mxu0 0.0
        %2984 = vmatprep.subr.mxu0 0.0
        %2985 = vmatpush1.msra.mxu0 0.0
        %2986 = vmatprep.subr.mxu0 0.0
        %2987 = vmatpush1.msra.mxu0 0.0
        %2988 = vmatprep.subr.mxu0 0.0
        %2989 = vmatpush1.msra.mxu0 0.0
        %2990 = vmatprep.subr.mxu0 0.0
        %2991 = vmatpush1.msra.mxu0 0.0
        %2992 = vmatprep.subr.mxu0 0.0
        %2993 = vmatpush1.msra.mxu0 0.0
        %2994 = vmatprep.subr.mxu0 0.0
        %2995 = vmatpush1.msra.mxu0 0.0
        %2996 = vmatprep.subr.mxu0 0.0
        %2997 = vmatpush1.msra.mxu0 0.0
        %2998 = vmatprep.subr.mxu0 0.0
        %2999 = vmatpush1.msra.mxu0 0.0
        %3000 = vmatprep.subr.mxu0 0.0
        %3001 = vmatpush1.msra.mxu0 %v2468
        %3002 = vmatprep.subr.mxu0 0.0
        %3003 = vmatpush1.msra.mxu0 %v2466
        %3004 = vmatprep.subr.mxu0 0.0
        %3005 = vmatpush1.msra.mxu0 %v2464
        %3006 = vmatprep.subr.mxu0 0.0
        %3007 = vmatpush1.msra.mxu0 %v2462
        %3008 = vmatprep.subr.mxu0 0.0
        %3009 = vmatpush2.msra.mxu0 0.0
        %3010 = vmatprep.subr.mxu0 0.0
        %3011 = vmatpush2.msra.mxu0 0.0
        %3012 = vmatprep.subr.mxu0 0.0
        %3013 = vmatpush2.msra.mxu0 0.0
        %3014 = vmatprep.subr.mxu0 0.0
        %3015 = vmatpush2.msra.mxu0 0.0
        %3016 = vmatprep.subr.mxu0 0.0
        %3017 = vmatpush2.msra.mxu0 0.0
        %3018 = vmatprep.subr.mxu0 0.0
        %3019 = vmatpush2.msra.mxu0 0.0
        %3020 = vmatprep.subr.mxu0 0.0
        %3021 = vmatpush2.msra.mxu0 0.0
        %3022 = vmatprep.subr.mxu0 0.0
        %3023 = vmatpush2.msra.mxu0 0.0
        %3024 = vmatprep.subr.mxu0 0.0
        %3025 = vmatpush2.msra.mxu0 0.0
        %3026 = vmatprep.subr.mxu0 0.0
        %3027 = vmatpush2.msra.mxu0 0.0
        %3028 = vmatprep.subr.mxu0 0.0
        %3029 = vmatpush2.msra.mxu0 0.0
        %3030 = vmatprep.subr.mxu0 0.0
        %3031 = vmatpush2.msra.mxu0 0.0
        %3032 = vmatprep.subr.mxu0 0.0
        %3033 = vmatpush2.msra.mxu0 0.0
        %3034 = vmatprep.subr.mxu0 0.0
        %3035 = vmatpush2.msra.mxu0 0.0
        %3036 = vmatprep.subr.mxu0 0.0
        %3037 = vmatpush2.msra.mxu0 0.0
        %3038 = vmatprep.subr.mxu0 0.0
        %3039 = vmatpush2.msra.mxu0 0.0
        %3040 = vmatprep.mubr.f32.mxu0 0.0
        %3041 = vmatmul.mubr.f32.gmra.mxu0 %v2971
        %v3042 = vpop.f32.mrf.mxu0
        %v3043 = vadd.f32 0.0, %v3042
        %v3044 = vpop.f32.mrf.mxu0
        %3045 = vmatprep.mubr.f32.mxu0 0.0
        %3046 = vmatmul.mubr.f32.gmra.mxu0 %v2974
        %v3047 = vpop.f32.mrf.mxu0
        %v3048 = vadd.f32 0.0, %v3047
        %v3049 = vpop.f32.mrf.mxu0
        %3050 = vdwg.mxu0
        %v3051 = vadd.f32 %v2965, %v3043
        %v3052 = vadd.f32 %v2966, %v3048
        %s3053 = scalar_lea.vmem %s7, 5
        %v3054 = vld [vmem:[%s3053] sm:$0x1]
        %vm3055 = vcmp.gt.f32.partialorder %v3054, 0.5
        %v3056 = vsel %vm3055, 1, 0
        %v3057 = vlaneseq
        %v3058 = vshrl.u32 %v3057, 7
        %v3059 = vsub.s32 0, %v3058
        %v3060 = vrot.slane %v3056, %v3059
        %vm3061 = vcmp.eq.s32.totalorder %v3060, 1
        %3062 = vrot.lane.b32.xlu0 %v2462, 127
        %v3063 = vpop.permute.xlu0 %3062
        %3064 = vrot.lane.b32.xlu0 %v2464, 127
        %v3065 = vpop.permute.xlu0 %3064
        %3066 = vrot.lane.b32.xlu0 %v2466, 127
        %v3067 = vpop.permute.xlu0 %3066
        %3068 = vrot.lane.b32.xlu0 %v2468, 127
        %v3069 = vpop.permute.xlu0 %3068
        %v3074 = vsel %vm3061, %v3063, 0.0
        %v3075 = vsel %vm3061, %v3065, 0.0
        %v3076 = vsel %vm3061, %v3067, 0.0
        %v3077 = vsel %vm3061, %v3069, 0.0
        %s3078 = scalar_lea.vmem %s5, 80
        %v3079 = vld [vmem:[%s3078] sm:$0xff]
        %v3080 = vld [vmem:[%s3078 + $0x8] sm:$0xff]
        %v3082 = vsel %vm2557, %v3079, 0
        %v3085 = vsel %vm2557, %v3080, 0
        %3087 = vmatprep.subr.mxu0 0.0
        %3088 = vmatpush1.msra.mxu0 0.0
        %3089 = vmatprep.subr.mxu0 0.0
        %3090 = vmatpush1.msra.mxu0 0.0
        %3091 = vmatprep.subr.mxu0 0.0
        %3092 = vmatpush1.msra.mxu0 0.0
        %3093 = vmatprep.subr.mxu0 0.0
        %3094 = vmatpush1.msra.mxu0 0.0
        %3095 = vmatprep.subr.mxu0 0.0
        %3096 = vmatpush1.msra.mxu0 0.0
        %3097 = vmatprep.subr.mxu0 0.0
        %3098 = vmatpush1.msra.mxu0 0.0
        %3099 = vmatprep.subr.mxu0 0.0
        %3100 = vmatpush1.msra.mxu0 0.0
        %3101 = vmatprep.subr.mxu0 0.0
        %3102 = vmatpush1.msra.mxu0 0.0
        %3103 = vmatprep.subr.mxu0 0.0
        %3104 = vmatpush1.msra.mxu0 0.0
        %3105 = vmatprep.subr.mxu0 0.0
        %3106 = vmatpush1.msra.mxu0 0.0
        %3107 = vmatprep.subr.mxu0 0.0
        %3108 = vmatpush1.msra.mxu0 0.0
        %3109 = vmatprep.subr.mxu0 0.0
        %3110 = vmatpush1.msra.mxu0 0.0
        %3111 = vmatprep.subr.mxu0 0.0
        %3112 = vmatpush1.msra.mxu0 %v3077
        %3113 = vmatprep.subr.mxu0 0.0
        %3114 = vmatpush1.msra.mxu0 %v3076
        %3115 = vmatprep.subr.mxu0 0.0
        %3116 = vmatpush1.msra.mxu0 %v3075
        %3117 = vmatprep.subr.mxu0 0.0
        %3118 = vmatpush1.msra.mxu0 %v3074
        %3119 = vmatprep.subr.mxu0 0.0
        %3120 = vmatpush2.msra.mxu0 0.0
        %3121 = vmatprep.subr.mxu0 0.0
        %3122 = vmatpush2.msra.mxu0 0.0
        %3123 = vmatprep.subr.mxu0 0.0
        %3124 = vmatpush2.msra.mxu0 0.0
        %3125 = vmatprep.subr.mxu0 0.0
        %3126 = vmatpush2.msra.mxu0 0.0
        %3127 = vmatprep.subr.mxu0 0.0
        %3128 = vmatpush2.msra.mxu0 0.0
        %3129 = vmatprep.subr.mxu0 0.0
        %3130 = vmatpush2.msra.mxu0 0.0
        %3131 = vmatprep.subr.mxu0 0.0
        %3132 = vmatpush2.msra.mxu0 0.0
        %3133 = vmatprep.subr.mxu0 0.0
        %3134 = vmatpush2.msra.mxu0 0.0
        %3135 = vmatprep.subr.mxu0 0.0
        %3136 = vmatpush2.msra.mxu0 0.0
        %3137 = vmatprep.subr.mxu0 0.0
        %3138 = vmatpush2.msra.mxu0 0.0
        %3139 = vmatprep.subr.mxu0 0.0
        %3140 = vmatpush2.msra.mxu0 0.0
        %3141 = vmatprep.subr.mxu0 0.0
        %3142 = vmatpush2.msra.mxu0 0.0
        %3143 = vmatprep.subr.mxu0 0.0
        %3144 = vmatpush2.msra.mxu0 0.0
        %3145 = vmatprep.subr.mxu0 0.0
        %3146 = vmatpush2.msra.mxu0 0.0
        %3147 = vmatprep.subr.mxu0 0.0
        %3148 = vmatpush2.msra.mxu0 0.0
        %3149 = vmatprep.subr.mxu0 0.0
        %3150 = vmatpush2.msra.mxu0 0.0
        %3151 = vmatprep.mubr.f32.mxu0 0.0
        %3152 = vmatmul.mubr.f32.gmra.mxu0 %v3082
        %v3153 = vpop.f32.mrf.mxu0
        %v3154 = vadd.f32 0.0, %v3153
        %v3155 = vpop.f32.mrf.mxu0
        %3156 = vmatprep.mubr.f32.mxu0 0.0
        %3157 = vmatmul.mubr.f32.gmra.mxu0 %v3085
        %v3158 = vpop.f32.mrf.mxu0
        %v3159 = vadd.f32 0.0, %v3158
        %v3160 = vpop.f32.mrf.mxu0
        %3161 = vdwg.mxu0
        %v3162 = vadd.f32 %v3051, %v3154
        %v3163 = vadd.f32 %v3052, %v3159
        %s3164 = scalar_lea.vmem %s7, 6
        %v3165 = vld [vmem:[%s3164] sm:$0x1]
        %vm3166 = vcmp.gt.f32.partialorder %v3165, 0.5
        %v3167 = vsel %vm3166, 1, 0
        %v3168 = vlaneseq
        %v3169 = vshrl.u32 %v3168, 7
        %v3170 = vsub.s32 0, %v3169
        %v3171 = vrot.slane %v3167, %v3170
        %vm3172 = vcmp.eq.s32.totalorder %v3171, 1
        %3173 = vrot.lane.b32.xlu0 %v2462, 121
        %v3174 = vpop.permute.xlu0 %3173
        %3175 = vrot.lane.b32.xlu0 %v2464, 121
        %v3176 = vpop.permute.xlu0 %3175
        %3177 = vrot.lane.b32.xlu0 %v2466, 121
        %v3178 = vpop.permute.xlu0 %3177
        %3179 = vrot.lane.b32.xlu0 %v2468, 121
        %v3180 = vpop.permute.xlu0 %3179
        %v3185 = vsel %vm3172, %v3174, 0.0
        %v3186 = vsel %vm3172, %v3176, 0.0
        %v3187 = vsel %vm3172, %v3178, 0.0
        %v3188 = vsel %vm3172, %v3180, 0.0
        %s3189 = scalar_lea.vmem %s5, 96
        %v3190 = vld [vmem:[%s3189] sm:$0xff]
        %v3191 = vld [vmem:[%s3189 + $0x8] sm:$0xff]
        %v3193 = vsel %vm2557, %v3190, 0
        %v3196 = vsel %vm2557, %v3191, 0
        %3198 = vmatprep.subr.mxu0 0.0
        %3199 = vmatpush1.msra.mxu0 0.0
        %3200 = vmatprep.subr.mxu0 0.0
        %3201 = vmatpush1.msra.mxu0 0.0
        %3202 = vmatprep.subr.mxu0 0.0
        %3203 = vmatpush1.msra.mxu0 0.0
        %3204 = vmatprep.subr.mxu0 0.0
        %3205 = vmatpush1.msra.mxu0 0.0
        %3206 = vmatprep.subr.mxu0 0.0
        %3207 = vmatpush1.msra.mxu0 0.0
        %3208 = vmatprep.subr.mxu0 0.0
        %3209 = vmatpush1.msra.mxu0 0.0
        %3210 = vmatprep.subr.mxu0 0.0
        %3211 = vmatpush1.msra.mxu0 0.0
        %3212 = vmatprep.subr.mxu0 0.0
        %3213 = vmatpush1.msra.mxu0 0.0
        %3214 = vmatprep.subr.mxu0 0.0
        %3215 = vmatpush1.msra.mxu0 0.0
        %3216 = vmatprep.subr.mxu0 0.0
        %3217 = vmatpush1.msra.mxu0 0.0
        %3218 = vmatprep.subr.mxu0 0.0
        %3219 = vmatpush1.msra.mxu0 0.0
        %3220 = vmatprep.subr.mxu0 0.0
        %3221 = vmatpush1.msra.mxu0 0.0
        %3222 = vmatprep.subr.mxu0 0.0
        %3223 = vmatpush1.msra.mxu0 %v3188
        %3224 = vmatprep.subr.mxu0 0.0
        %3225 = vmatpush1.msra.mxu0 %v3187
        %3226 = vmatprep.subr.mxu0 0.0
        %3227 = vmatpush1.msra.mxu0 %v3186
        %3228 = vmatprep.subr.mxu0 0.0
        %3229 = vmatpush1.msra.mxu0 %v3185
        %3230 = vmatprep.subr.mxu0 0.0
        %3231 = vmatpush2.msra.mxu0 0.0
        %3232 = vmatprep.subr.mxu0 0.0
        %3233 = vmatpush2.msra.mxu0 0.0
        %3234 = vmatprep.subr.mxu0 0.0
        %3235 = vmatpush2.msra.mxu0 0.0
        %3236 = vmatprep.subr.mxu0 0.0
        %3237 = vmatpush2.msra.mxu0 0.0
        %3238 = vmatprep.subr.mxu0 0.0
        %3239 = vmatpush2.msra.mxu0 0.0
        %3240 = vmatprep.subr.mxu0 0.0
        %3241 = vmatpush2.msra.mxu0 0.0
        %3242 = vmatprep.subr.mxu0 0.0
        %3243 = vmatpush2.msra.mxu0 0.0
        %3244 = vmatprep.subr.mxu0 0.0
        %3245 = vmatpush2.msra.mxu0 0.0
        %3246 = vmatprep.subr.mxu0 0.0
        %3247 = vmatpush2.msra.mxu0 0.0
        %3248 = vmatprep.subr.mxu0 0.0
        %3249 = vmatpush2.msra.mxu0 0.0
        %3250 = vmatprep.subr.mxu0 0.0
        %3251 = vmatpush2.msra.mxu0 0.0
        %3252 = vmatprep.subr.mxu0 0.0
        %3253 = vmatpush2.msra.mxu0 0.0
        %3254 = vmatprep.subr.mxu0 0.0
        %3255 = vmatpush2.msra.mxu0 0.0
        %3256 = vmatprep.subr.mxu0 0.0
        %3257 = vmatpush2.msra.mxu0 0.0
        %3258 = vmatprep.subr.mxu0 0.0
        %3259 = vmatpush2.msra.mxu0 0.0
        %3260 = vmatprep.subr.mxu0 0.0
        %3261 = vmatpush2.msra.mxu0 0.0
        %3262 = vmatprep.mubr.f32.mxu0 0.0
        %3263 = vmatmul.mubr.f32.gmra.mxu0 %v3193
        %v3264 = vpop.f32.mrf.mxu0
        %v3265 = vadd.f32 0.0, %v3264
        %v3266 = vpop.f32.mrf.mxu0
        %3267 = vmatprep.mubr.f32.mxu0 0.0
        %3268 = vmatmul.mubr.f32.gmra.mxu0 %v3196
        %v3269 = vpop.f32.mrf.mxu0
        %v3270 = vadd.f32 0.0, %v3269
        %v3271 = vpop.f32.mrf.mxu0
        %3272 = vdwg.mxu0
        %v3273 = vadd.f32 %v3162, %v3265
        %v3274 = vadd.f32 %v3163, %v3270
        %s3275 = scalar_lea.vmem %s7, 7
        %v3276 = vld [vmem:[%s3275] sm:$0x1]
        %vm3277 = vcmp.gt.f32.partialorder %v3276, 0.5
        %v3278 = vsel %vm3277, 1, 0
        %v3279 = vlaneseq
        %v3280 = vshrl.u32 %v3279, 7
        %v3281 = vsub.s32 0, %v3280
        %v3282 = vrot.slane %v3278, %v3281
        %vm3283 = vcmp.eq.s32.totalorder %v3282, 1
        %3284 = vrot.lane.b32.xlu0 %v2462, 120
        %v3285 = vpop.permute.xlu0 %3284
        %3286 = vrot.lane.b32.xlu0 %v2464, 120
        %v3287 = vpop.permute.xlu0 %3286
        %3288 = vrot.lane.b32.xlu0 %v2466, 120
        %v3289 = vpop.permute.xlu0 %3288
        %3290 = vrot.lane.b32.xlu0 %v2468, 120
        %v3291 = vpop.permute.xlu0 %3290
        %v3296 = vsel %vm3283, %v3285, 0.0
        %v3297 = vsel %vm3283, %v3287, 0.0
        %v3298 = vsel %vm3283, %v3289, 0.0
        %v3299 = vsel %vm3283, %v3291, 0.0
        %s3300 = scalar_lea.vmem %s5, 112
        %v3301 = vld [vmem:[%s3300] sm:$0xff]
        %v3302 = vld [vmem:[%s3300 + $0x8] sm:$0xff]
        %v3304 = vsel %vm2557, %v3301, 0
        %v3307 = vsel %vm2557, %v3302, 0
        %3309 = vmatprep.subr.mxu0 0.0
        %3310 = vmatpush1.msra.mxu0 0.0
        %3311 = vmatprep.subr.mxu0 0.0
        %3312 = vmatpush1.msra.mxu0 0.0
        %3313 = vmatprep.subr.mxu0 0.0
        %3314 = vmatpush1.msra.mxu0 0.0
        %3315 = vmatprep.subr.mxu0 0.0
        %3316 = vmatpush1.msra.mxu0 0.0
        %3317 = vmatprep.subr.mxu0 0.0
        %3318 = vmatpush1.msra.mxu0 0.0
        %3319 = vmatprep.subr.mxu0 0.0
        %3320 = vmatpush1.msra.mxu0 0.0
        %3321 = vmatprep.subr.mxu0 0.0
        %3322 = vmatpush1.msra.mxu0 0.0
        %3323 = vmatprep.subr.mxu0 0.0
        %3324 = vmatpush1.msra.mxu0 0.0
        %3325 = vmatprep.subr.mxu0 0.0
        %3326 = vmatpush1.msra.mxu0 0.0
        %3327 = vmatprep.subr.mxu0 0.0
        %3328 = vmatpush1.msra.mxu0 0.0
        %3329 = vmatprep.subr.mxu0 0.0
        %3330 = vmatpush1.msra.mxu0 0.0
        %3331 = vmatprep.subr.mxu0 0.0
        %3332 = vmatpush1.msra.mxu0 0.0
        %3333 = vmatprep.subr.mxu0 0.0
        %3334 = vmatpush1.msra.mxu0 %v3299
        %3335 = vmatprep.subr.mxu0 0.0
        %3336 = vmatpush1.msra.mxu0 %v3298
        %3337 = vmatprep.subr.mxu0 0.0
        %3338 = vmatpush1.msra.mxu0 %v3297
        %3339 = vmatprep.subr.mxu0 0.0
        %3340 = vmatpush1.msra.mxu0 %v3296
        %3341 = vmatprep.subr.mxu0 0.0
        %3342 = vmatpush2.msra.mxu0 0.0
        %3343 = vmatprep.subr.mxu0 0.0
        %3344 = vmatpush2.msra.mxu0 0.0
        %3345 = vmatprep.subr.mxu0 0.0
        %3346 = vmatpush2.msra.mxu0 0.0
        %3347 = vmatprep.subr.mxu0 0.0
        %3348 = vmatpush2.msra.mxu0 0.0
        %3349 = vmatprep.subr.mxu0 0.0
        %3350 = vmatpush2.msra.mxu0 0.0
        %3351 = vmatprep.subr.mxu0 0.0
        %3352 = vmatpush2.msra.mxu0 0.0
        %3353 = vmatprep.subr.mxu0 0.0
        %3354 = vmatpush2.msra.mxu0 0.0
        %3355 = vmatprep.subr.mxu0 0.0
        %3356 = vmatpush2.msra.mxu0 0.0
        %3357 = vmatprep.subr.mxu0 0.0
        %3358 = vmatpush2.msra.mxu0 0.0
        %3359 = vmatprep.subr.mxu0 0.0
        %3360 = vmatpush2.msra.mxu0 0.0
        %3361 = vmatprep.subr.mxu0 0.0
        %3362 = vmatpush2.msra.mxu0 0.0
        %3363 = vmatprep.subr.mxu0 0.0
        %3364 = vmatpush2.msra.mxu0 0.0
        %3365 = vmatprep.subr.mxu0 0.0
        %3366 = vmatpush2.msra.mxu0 0.0
        %3367 = vmatprep.subr.mxu0 0.0
        %3368 = vmatpush2.msra.mxu0 0.0
        %3369 = vmatprep.subr.mxu0 0.0
        %3370 = vmatpush2.msra.mxu0 0.0
        %3371 = vmatprep.subr.mxu0 0.0
        %3372 = vmatpush2.msra.mxu0 0.0
        %3373 = vmatprep.mubr.f32.mxu0 0.0
        %3374 = vmatmul.mubr.f32.gmra.mxu0 %v3304
        %v3375 = vpop.f32.mrf.mxu0
        %v3376 = vadd.f32 0.0, %v3375
        %v3377 = vpop.f32.mrf.mxu0
        %3378 = vmatprep.mubr.f32.mxu0 0.0
        %3379 = vmatmul.mubr.f32.gmra.mxu0 %v3307
        %v3380 = vpop.f32.mrf.mxu0
        %v3381 = vadd.f32 0.0, %v3380
        %v3382 = vpop.f32.mrf.mxu0
        %3383 = vdwg.mxu0
        %v3384 = vadd.f32 %v3273, %v3376
        %v3385 = vadd.f32 %v3274, %v3381
        %s3386 = scalar_lea.vmem %s7, 8
        %v3387 = vld [vmem:[%s3386] sm:$0x1]
        %vm3388 = vcmp.gt.f32.partialorder %v3387, 0.5
        %v3389 = vsel %vm3388, 1, 0
        %v3390 = vlaneseq
        %v3391 = vshrl.u32 %v3390, 7
        %v3392 = vsub.s32 0, %v3391
        %v3393 = vrot.slane %v3389, %v3392
        %vm3394 = vcmp.eq.s32.totalorder %v3393, 1
        %3395 = vrot.lane.b32.xlu0 %v2462, 119
        %v3396 = vpop.permute.xlu0 %3395
        %3397 = vrot.lane.b32.xlu0 %v2464, 119
        %v3398 = vpop.permute.xlu0 %3397
        %3399 = vrot.lane.b32.xlu0 %v2466, 119
        %v3400 = vpop.permute.xlu0 %3399
        %3401 = vrot.lane.b32.xlu0 %v2468, 119
        %v3402 = vpop.permute.xlu0 %3401
        %v3407 = vsel %vm3394, %v3396, 0.0
        %v3408 = vsel %vm3394, %v3398, 0.0
        %v3409 = vsel %vm3394, %v3400, 0.0
        %v3410 = vsel %vm3394, %v3402, 0.0
        %s3411 = scalar_lea.vmem %s5, 128
        %v3412 = vld [vmem:[%s3411] sm:$0xff]
        %v3413 = vld [vmem:[%s3411 + $0x8] sm:$0xff]
        %v3415 = vsel %vm2557, %v3412, 0
        %v3418 = vsel %vm2557, %v3413, 0
        %3420 = vmatprep.subr.mxu0 0.0
        %3421 = vmatpush1.msra.mxu0 0.0
        %3422 = vmatprep.subr.mxu0 0.0
        %3423 = vmatpush1.msra.mxu0 0.0
        %3424 = vmatprep.subr.mxu0 0.0
        %3425 = vmatpush1.msra.mxu0 0.0
        %3426 = vmatprep.subr.mxu0 0.0
        %3427 = vmatpush1.msra.mxu0 0.0
        %3428 = vmatprep.subr.mxu0 0.0
        %3429 = vmatpush1.msra.mxu0 0.0
        %3430 = vmatprep.subr.mxu0 0.0
        %3431 = vmatpush1.msra.mxu0 0.0
        %3432 = vmatprep.subr.mxu0 0.0
        %3433 = vmatpush1.msra.mxu0 0.0
        %3434 = vmatprep.subr.mxu0 0.0
        %3435 = vmatpush1.msra.mxu0 0.0
        %3436 = vmatprep.subr.mxu0 0.0
        %3437 = vmatpush1.msra.mxu0 0.0
        %3438 = vmatprep.subr.mxu0 0.0
        %3439 = vmatpush1.msra.mxu0 0.0
        %3440 = vmatprep.subr.mxu0 0.0
        %3441 = vmatpush1.msra.mxu0 0.0
        %3442 = vmatprep.subr.mxu0 0.0
        %3443 = vmatpush1.msra.mxu0 0.0
        %3444 = vmatprep.subr.mxu0 0.0
        %3445 = vmatpush1.msra.mxu0 %v3410
        %3446 = vmatprep.subr.mxu0 0.0
        %3447 = vmatpush1.msra.mxu0 %v3409
        %3448 = vmatprep.subr.mxu0 0.0
        %3449 = vmatpush1.msra.mxu0 %v3408
        %3450 = vmatprep.subr.mxu0 0.0
        %3451 = vmatpush1.msra.mxu0 %v3407
        %3452 = vmatprep.subr.mxu0 0.0
        %3453 = vmatpush2.msra.mxu0 0.0
        %3454 = vmatprep.subr.mxu0 0.0
        %3455 = vmatpush2.msra.mxu0 0.0
        %3456 = vmatprep.subr.mxu0 0.0
        %3457 = vmatpush2.msra.mxu0 0.0
        %3458 = vmatprep.subr.mxu0 0.0
        %3459 = vmatpush2.msra.mxu0 0.0
        %3460 = vmatprep.subr.mxu0 0.0
        %3461 = vmatpush2.msra.mxu0 0.0
        %3462 = vmatprep.subr.mxu0 0.0
        %3463 = vmatpush2.msra.mxu0 0.0
        %3464 = vmatprep.subr.mxu0 0.0
        %3465 = vmatpush2.msra.mxu0 0.0
        %3466 = vmatprep.subr.mxu0 0.0
        %3467 = vmatpush2.msra.mxu0 0.0
        %3468 = vmatprep.subr.mxu0 0.0
        %3469 = vmatpush2.msra.mxu0 0.0
        %3470 = vmatprep.subr.mxu0 0.0
        %3471 = vmatpush2.msra.mxu0 0.0
        %3472 = vmatprep.subr.mxu0 0.0
        %3473 = vmatpush2.msra.mxu0 0.0
        %3474 = vmatprep.subr.mxu0 0.0
        %3475 = vmatpush2.msra.mxu0 0.0
        %3476 = vmatprep.subr.mxu0 0.0
        %3477 = vmatpush2.msra.mxu0 0.0
        %3478 = vmatprep.subr.mxu0 0.0
        %3479 = vmatpush2.msra.mxu0 0.0
        %3480 = vmatprep.subr.mxu0 0.0
        %3481 = vmatpush2.msra.mxu0 0.0
        %3482 = vmatprep.subr.mxu0 0.0
        %3483 = vmatpush2.msra.mxu0 0.0
        %3484 = vmatprep.mubr.f32.mxu0 0.0
        %3485 = vmatmul.mubr.f32.gmra.mxu0 %v3415
        %v3486 = vpop.f32.mrf.mxu0
        %v3487 = vadd.f32 0.0, %v3486
        %v3488 = vpop.f32.mrf.mxu0
        %3489 = vmatprep.mubr.f32.mxu0 0.0
        %3490 = vmatmul.mubr.f32.gmra.mxu0 %v3418
        %v3491 = vpop.f32.mrf.mxu0
        %v3492 = vadd.f32 0.0, %v3491
        %v3493 = vpop.f32.mrf.mxu0
        %3494 = vdwg.mxu0
        %v3495 = vadd.f32 %v3384, %v3487
        %v3496 = vadd.f32 %v3385, %v3492
        %v3497 = vld [vmem:[%s6] sm:$0xff]
        %v3498 = vld [vmem:[%s6 + $0x8] sm:$0xff]
        %3500 = vset.pattern.permute.xlu0 0
        %3501 = vperm.xlu0 %3500, %v3497
        %v3502 = vpop.permute.xlu0 %3501
        %3505 = vset.pattern.permute.xlu0 0
        %3506 = vperm.xlu0 %3505, %v3498
        %v3507 = vpop.permute.xlu0 %3506
        %v3509 = vadd.f32 %v3495, %v3502
        %v3510 = vadd.f32 %v3496, %v3507
        %vm3511 = vcmp.gt.f32.partialorder %v3509, 0.0
        %vm3512 = vcmp.gt.f32.partialorder %v3510, 0.0
        %v3513 = vmul.f32 %v3509, 1.442695
        %v3514 = vpow.pop %v3513
        %v3515 = vmul.f32 %v3510, 1.442695
        %v3516 = vpow.pop %v3515
        %v3517 = vsub.f32 %v3514, 1.0
        %v3518 = vsub.f32 %v3516, 1.0
        %v3519 = vsel %vm3511, %v3509, %v3517
        %v3520 = vsel %vm3512, %v3510, %v3518
        %v3521 = vld [vmem:[%s8] sm:$0xff]
        %v3522 = vld [vmem:[%s8 + $0x8] sm:$0xff]
        %v3523 = vld [vmem:[%s8 + $0x10] sm:$0xff]
        %v3524 = vld [vmem:[%s8 + $0x18] sm:$0xff]
        %v3525 = vld [vmem:[%s8 + $0x20] sm:$0xff]
        %v3526 = vld [vmem:[%s8 + $0x28] sm:$0xff]
        %v3527 = vld [vmem:[%s8 + $0x30] sm:$0xff]
        %v3528 = vld [vmem:[%s8 + $0x38] sm:$0xff]
        %v3530 = vsel %vm2456, %v3519, 0
        %v3533 = vsel %vm2456, %v3520, 0
        %3535 = vmatprep.subr.mxu0 0.0
        %3536 = vmatpush1.msra.mxu0 0.0
        %3537 = vmatprep.subr.mxu0 0.0
        %3538 = vmatpush1.msra.mxu0 0.0
        %3539 = vmatprep.subr.mxu0 0.0
        %3540 = vmatpush1.msra.mxu0 0.0
        %3541 = vmatprep.subr.mxu0 0.0
        %3542 = vmatpush1.msra.mxu0 0.0
        %3543 = vmatprep.subr.mxu0 0.0
        %3544 = vmatpush1.msra.mxu0 0.0
        %3545 = vmatprep.subr.mxu0 0.0
        %3546 = vmatpush1.msra.mxu0 0.0
        %3547 = vmatprep.subr.mxu0 0.0
        %3548 = vmatpush1.msra.mxu0 0.0
        %3549 = vmatprep.subr.mxu0 0.0
        %3550 = vmatpush1.msra.mxu0 0.0
        %3551 = vmatprep.subr.mxu0 0.0
        %3552 = vmatpush1.msra.mxu0 %v3528
        %3553 = vmatprep.subr.mxu0 0.0
        %3554 = vmatpush1.msra.mxu0 %v3527
        %3555 = vmatprep.subr.mxu0 0.0
        %3556 = vmatpush1.msra.mxu0 %v3526
        %3557 = vmatprep.subr.mxu0 0.0
        %3558 = vmatpush1.msra.mxu0 %v3525
        %3559 = vmatprep.subr.mxu0 0.0
        %3560 = vmatpush1.msra.mxu0 %v3524
        %3561 = vmatprep.subr.mxu0 0.0
        %3562 = vmatpush1.msra.mxu0 %v3523
        %3563 = vmatprep.subr.mxu0 0.0
        %3564 = vmatpush1.msra.mxu0 %v3522
        %3565 = vmatprep.subr.mxu0 0.0
        %3566 = vmatpush1.msra.mxu0 %v3521
        %3567 = vmatprep.subr.mxu0 0.0
        %3568 = vmatpush2.msra.mxu0 0.0
        %3569 = vmatprep.subr.mxu0 0.0
        %3570 = vmatpush2.msra.mxu0 0.0
        %3571 = vmatprep.subr.mxu0 0.0
        %3572 = vmatpush2.msra.mxu0 0.0
        %3573 = vmatprep.subr.mxu0 0.0
        %3574 = vmatpush2.msra.mxu0 0.0
        %3575 = vmatprep.subr.mxu0 0.0
        %3576 = vmatpush2.msra.mxu0 0.0
        %3577 = vmatprep.subr.mxu0 0.0
        %3578 = vmatpush2.msra.mxu0 0.0
        %3579 = vmatprep.subr.mxu0 0.0
        %3580 = vmatpush2.msra.mxu0 0.0
        %3581 = vmatprep.subr.mxu0 0.0
        %3582 = vmatpush2.msra.mxu0 0.0
        %3583 = vmatprep.subr.mxu0 0.0
        %3584 = vmatpush2.msra.mxu0 0.0
        %3585 = vmatprep.subr.mxu0 0.0
        %3586 = vmatpush2.msra.mxu0 0.0
        %3587 = vmatprep.subr.mxu0 0.0
        %3588 = vmatpush2.msra.mxu0 0.0
        %3589 = vmatprep.subr.mxu0 0.0
        %3590 = vmatpush2.msra.mxu0 0.0
        %3591 = vmatprep.subr.mxu0 0.0
        %3592 = vmatpush2.msra.mxu0 0.0
        %3593 = vmatprep.subr.mxu0 0.0
        %3594 = vmatpush2.msra.mxu0 0.0
        %3595 = vmatprep.subr.mxu0 0.0
        %3596 = vmatpush2.msra.mxu0 0.0
        %3597 = vmatprep.subr.mxu0 0.0
        %3598 = vmatpush2.msra.mxu0 0.0
        %3599 = vmatprep.mubr.f32.mxu0 0.0
        %3600 = vmatmul.mubr.f32.gmra.mxu0 %v3530
        %v3601 = vpop.f32.mrf.mxu0
        %v3602 = vadd.f32 0.0, %v3601
        %v3603 = vpop.f32.mrf.mxu0
        %3604 = vmatprep.mubr.f32.mxu0 0.0
        %3605 = vmatmul.mubr.f32.gmra.mxu0 %v3533
        %v3606 = vpop.f32.mrf.mxu0
        %v3607 = vadd.f32 0.0, %v3606
        %v3608 = vpop.f32.mrf.mxu0
        %3609 = vdwg.mxu0
        %s3610 = scalar_lea.vmem %s8, 64
        %v3611 = vld [vmem:[%s3610] sm:$0xff]
        %v3612 = vld [vmem:[%s3610 + $0x8] sm:$0xff]
        %v3613 = vld [vmem:[%s3610 + $0x10] sm:$0xff]
        %v3614 = vld [vmem:[%s3610 + $0x18] sm:$0xff]
        %v3615 = vld [vmem:[%s3610 + $0x20] sm:$0xff]
        %v3616 = vld [vmem:[%s3610 + $0x28] sm:$0xff]
        %v3617 = vld [vmem:[%s3610 + $0x30] sm:$0xff]
        %v3618 = vld [vmem:[%s3610 + $0x38] sm:$0xff]
        %3619 = vmatprep.subr.mxu0 0.0
        %3620 = vmatpush1.msra.mxu0 0.0
        %3621 = vmatprep.subr.mxu0 0.0
        %3622 = vmatpush1.msra.mxu0 0.0
        %3623 = vmatprep.subr.mxu0 0.0
        %3624 = vmatpush1.msra.mxu0 0.0
        %3625 = vmatprep.subr.mxu0 0.0
        %3626 = vmatpush1.msra.mxu0 0.0
        %3627 = vmatprep.subr.mxu0 0.0
        %3628 = vmatpush1.msra.mxu0 0.0
        %3629 = vmatprep.subr.mxu0 0.0
        %3630 = vmatpush1.msra.mxu0 0.0
        %3631 = vmatprep.subr.mxu0 0.0
        %3632 = vmatpush1.msra.mxu0 0.0
        %3633 = vmatprep.subr.mxu0 0.0
        %3634 = vmatpush1.msra.mxu0 0.0
        %3635 = vmatprep.subr.mxu0 0.0
        %3636 = vmatpush1.msra.mxu0 %v3618
        %3637 = vmatprep.subr.mxu0 0.0
        %3638 = vmatpush1.msra.mxu0 %v3617
        %3639 = vmatprep.subr.mxu0 0.0
        %3640 = vmatpush1.msra.mxu0 %v3616
        %3641 = vmatprep.subr.mxu0 0.0
        %3642 = vmatpush1.msra.mxu0 %v3615
        %3643 = vmatprep.subr.mxu0 0.0
        %3644 = vmatpush1.msra.mxu0 %v3614
        %3645 = vmatprep.subr.mxu0 0.0
        %3646 = vmatpush1.msra.mxu0 %v3613
        %3647 = vmatprep.subr.mxu0 0.0
        %3648 = vmatpush1.msra.mxu0 %v3612
        %3649 = vmatprep.subr.mxu0 0.0
        %3650 = vmatpush1.msra.mxu0 %v3611
        %3651 = vmatprep.subr.mxu0 0.0
        %3652 = vmatpush2.msra.mxu0 0.0
        %3653 = vmatprep.subr.mxu0 0.0
        %3654 = vmatpush2.msra.mxu0 0.0
        %3655 = vmatprep.subr.mxu0 0.0
        %3656 = vmatpush2.msra.mxu0 0.0
        %3657 = vmatprep.subr.mxu0 0.0
        %3658 = vmatpush2.msra.mxu0 0.0
        %3659 = vmatprep.subr.mxu0 0.0
        %3660 = vmatpush2.msra.mxu0 0.0
        %3661 = vmatprep.subr.mxu0 0.0
        %3662 = vmatpush2.msra.mxu0 0.0
        %3663 = vmatprep.subr.mxu0 0.0
        %3664 = vmatpush2.msra.mxu0 0.0
        %3665 = vmatprep.subr.mxu0 0.0
        %3666 = vmatpush2.msra.mxu0 0.0
        %3667 = vmatprep.subr.mxu0 0.0
        %3668 = vmatpush2.msra.mxu0 0.0
        %3669 = vmatprep.subr.mxu0 0.0
        %3670 = vmatpush2.msra.mxu0 0.0
        %3671 = vmatprep.subr.mxu0 0.0
        %3672 = vmatpush2.msra.mxu0 0.0
        %3673 = vmatprep.subr.mxu0 0.0
        %3674 = vmatpush2.msra.mxu0 0.0
        %3675 = vmatprep.subr.mxu0 0.0
        %3676 = vmatpush2.msra.mxu0 0.0
        %3677 = vmatprep.subr.mxu0 0.0
        %3678 = vmatpush2.msra.mxu0 0.0
        %3679 = vmatprep.subr.mxu0 0.0
        %3680 = vmatpush2.msra.mxu0 0.0
        %3681 = vmatprep.subr.mxu0 0.0
        %3682 = vmatpush2.msra.mxu0 0.0
        %3683 = vmatprep.mubr.f32.mxu0 0.0
        %3684 = vmatmul.mubr.f32.gmra.mxu0 %v3530
        %v3685 = vpop.f32.mrf.mxu0
        %v3686 = vadd.f32 0.0, %v3685
        %v3687 = vpop.f32.mrf.mxu0
        %3688 = vmatprep.mubr.f32.mxu0 0.0
        %3689 = vmatmul.mubr.f32.gmra.mxu0 %v3533
        %v3690 = vpop.f32.mrf.mxu0
        %v3691 = vadd.f32 0.0, %v3690
        %v3692 = vpop.f32.mrf.mxu0
        %3693 = vdwg.mxu0
        %s3694 = scalar_lea.vmem %s8, 128
        %v3695 = vld [vmem:[%s3694] sm:$0xff]
        %v3696 = vld [vmem:[%s3694 + $0x8] sm:$0xff]
        %v3697 = vld [vmem:[%s3694 + $0x10] sm:$0xff]
        %v3698 = vld [vmem:[%s3694 + $0x18] sm:$0xff]
        %v3699 = vld [vmem:[%s3694 + $0x20] sm:$0xff]
        %v3700 = vld [vmem:[%s3694 + $0x28] sm:$0xff]
        %v3701 = vld [vmem:[%s3694 + $0x30] sm:$0xff]
        %v3702 = vld [vmem:[%s3694 + $0x38] sm:$0xff]
        %3703 = vmatprep.subr.mxu0 0.0
        %3704 = vmatpush1.msra.mxu0 0.0
        %3705 = vmatprep.subr.mxu0 0.0
        %3706 = vmatpush1.msra.mxu0 0.0
        %3707 = vmatprep.subr.mxu0 0.0
        %3708 = vmatpush1.msra.mxu0 0.0
        %3709 = vmatprep.subr.mxu0 0.0
        %3710 = vmatpush1.msra.mxu0 0.0
        %3711 = vmatprep.subr.mxu0 0.0
        %3712 = vmatpush1.msra.mxu0 0.0
        %3713 = vmatprep.subr.mxu0 0.0
        %3714 = vmatpush1.msra.mxu0 0.0
        %3715 = vmatprep.subr.mxu0 0.0
        %3716 = vmatpush1.msra.mxu0 0.0
        %3717 = vmatprep.subr.mxu0 0.0
        %3718 = vmatpush1.msra.mxu0 0.0
        %3719 = vmatprep.subr.mxu0 0.0
        %3720 = vmatpush1.msra.mxu0 %v3702
        %3721 = vmatprep.subr.mxu0 0.0
        %3722 = vmatpush1.msra.mxu0 %v3701
        %3723 = vmatprep.subr.mxu0 0.0
        %3724 = vmatpush1.msra.mxu0 %v3700
        %3725 = vmatprep.subr.mxu0 0.0
        %3726 = vmatpush1.msra.mxu0 %v3699
        %3727 = vmatprep.subr.mxu0 0.0
        %3728 = vmatpush1.msra.mxu0 %v3698
        %3729 = vmatprep.subr.mxu0 0.0
        %3730 = vmatpush1.msra.mxu0 %v3697
        %3731 = vmatprep.subr.mxu0 0.0
        %3732 = vmatpush1.msra.mxu0 %v3696
        %3733 = vmatprep.subr.mxu0 0.0
        %3734 = vmatpush1.msra.mxu0 %v3695
        %3735 = vmatprep.subr.mxu0 0.0
        %3736 = vmatpush2.msra.mxu0 0.0
        %3737 = vmatprep.subr.mxu0 0.0
        %3738 = vmatpush2.msra.mxu0 0.0
        %3739 = vmatprep.subr.mxu0 0.0
        %3740 = vmatpush2.msra.mxu0 0.0
        %3741 = vmatprep.subr.mxu0 0.0
        %3742 = vmatpush2.msra.mxu0 0.0
        %3743 = vmatprep.subr.mxu0 0.0
        %3744 = vmatpush2.msra.mxu0 0.0
        %3745 = vmatprep.subr.mxu0 0.0
        %3746 = vmatpush2.msra.mxu0 0.0
        %3747 = vmatprep.subr.mxu0 0.0
        %3748 = vmatpush2.msra.mxu0 0.0
        %3749 = vmatprep.subr.mxu0 0.0
        %3750 = vmatpush2.msra.mxu0 0.0
        %3751 = vmatprep.subr.mxu0 0.0
        %3752 = vmatpush2.msra.mxu0 0.0
        %3753 = vmatprep.subr.mxu0 0.0
        %3754 = vmatpush2.msra.mxu0 0.0
        %3755 = vmatprep.subr.mxu0 0.0
        %3756 = vmatpush2.msra.mxu0 0.0
        %3757 = vmatprep.subr.mxu0 0.0
        %3758 = vmatpush2.msra.mxu0 0.0
        %3759 = vmatprep.subr.mxu0 0.0
        %3760 = vmatpush2.msra.mxu0 0.0
        %3761 = vmatprep.subr.mxu0 0.0
        %3762 = vmatpush2.msra.mxu0 0.0
        %3763 = vmatprep.subr.mxu0 0.0
        %3764 = vmatpush2.msra.mxu0 0.0
        %3765 = vmatprep.subr.mxu0 0.0
        %3766 = vmatpush2.msra.mxu0 0.0
        %3767 = vmatprep.mubr.f32.mxu0 0.0
        %3768 = vmatmul.mubr.f32.gmra.mxu0 %v3530
        %v3769 = vpop.f32.mrf.mxu0
        %v3770 = vadd.f32 0.0, %v3769
        %v3771 = vpop.f32.mrf.mxu0
        %3772 = vmatprep.mubr.f32.mxu0 0.0
        %3773 = vmatmul.mubr.f32.gmra.mxu0 %v3533
        %v3774 = vpop.f32.mrf.mxu0
        %v3775 = vadd.f32 0.0, %v3774
        %v3776 = vpop.f32.mrf.mxu0
        %3777 = vdwg.mxu0
        %s3778 = scalar_lea.vmem %s8, 192
        %v3779 = vld [vmem:[%s3778] sm:$0xff]
        %v3780 = vld [vmem:[%s3778 + $0x8] sm:$0xff]
        %v3781 = vld [vmem:[%s3778 + $0x10] sm:$0xff]
        %v3782 = vld [vmem:[%s3778 + $0x18] sm:$0xff]
        %v3783 = vld [vmem:[%s3778 + $0x20] sm:$0xff]
        %v3784 = vld [vmem:[%s3778 + $0x28] sm:$0xff]
        %v3785 = vld [vmem:[%s3778 + $0x30] sm:$0xff]
        %v3786 = vld [vmem:[%s3778 + $0x38] sm:$0xff]
        %3787 = vmatprep.subr.mxu0 0.0
        %3788 = vmatpush1.msra.mxu0 0.0
        %3789 = vmatprep.subr.mxu0 0.0
        %3790 = vmatpush1.msra.mxu0 0.0
        %3791 = vmatprep.subr.mxu0 0.0
        %3792 = vmatpush1.msra.mxu0 0.0
        %3793 = vmatprep.subr.mxu0 0.0
        %3794 = vmatpush1.msra.mxu0 0.0
        %3795 = vmatprep.subr.mxu0 0.0
        %3796 = vmatpush1.msra.mxu0 0.0
        %3797 = vmatprep.subr.mxu0 0.0
        %3798 = vmatpush1.msra.mxu0 0.0
        %3799 = vmatprep.subr.mxu0 0.0
        %3800 = vmatpush1.msra.mxu0 0.0
        %3801 = vmatprep.subr.mxu0 0.0
        %3802 = vmatpush1.msra.mxu0 0.0
        %3803 = vmatprep.subr.mxu0 0.0
        %3804 = vmatpush1.msra.mxu0 %v3786
        %3805 = vmatprep.subr.mxu0 0.0
        %3806 = vmatpush1.msra.mxu0 %v3785
        %3807 = vmatprep.subr.mxu0 0.0
        %3808 = vmatpush1.msra.mxu0 %v3784
        %3809 = vmatprep.subr.mxu0 0.0
        %3810 = vmatpush1.msra.mxu0 %v3783
        %3811 = vmatprep.subr.mxu0 0.0
        %3812 = vmatpush1.msra.mxu0 %v3782
        %3813 = vmatprep.subr.mxu0 0.0
        %3814 = vmatpush1.msra.mxu0 %v3781
        %3815 = vmatprep.subr.mxu0 0.0
        %3816 = vmatpush1.msra.mxu0 %v3780
        %3817 = vmatprep.subr.mxu0 0.0
        %3818 = vmatpush1.msra.mxu0 %v3779
        %3819 = vmatprep.subr.mxu0 0.0
        %3820 = vmatpush2.msra.mxu0 0.0
        %3821 = vmatprep.subr.mxu0 0.0
        %3822 = vmatpush2.msra.mxu0 0.0
        %3823 = vmatprep.subr.mxu0 0.0
        %3824 = vmatpush2.msra.mxu0 0.0
        %3825 = vmatprep.subr.mxu0 0.0
        %3826 = vmatpush2.msra.mxu0 0.0
        %3827 = vmatprep.subr.mxu0 0.0
        %3828 = vmatpush2.msra.mxu0 0.0
        %3829 = vmatprep.subr.mxu0 0.0
        %3830 = vmatpush2.msra.mxu0 0.0
        %3831 = vmatprep.subr.mxu0 0.0
        %3832 = vmatpush2.msra.mxu0 0.0
        %3833 = vmatprep.subr.mxu0 0.0
        %3834 = vmatpush2.msra.mxu0 0.0
        %3835 = vmatprep.subr.mxu0 0.0
        %3836 = vmatpush2.msra.mxu0 0.0
        %3837 = vmatprep.subr.mxu0 0.0
        %3838 = vmatpush2.msra.mxu0 0.0
        %3839 = vmatprep.subr.mxu0 0.0
        %3840 = vmatpush2.msra.mxu0 0.0
        %3841 = vmatprep.subr.mxu0 0.0
        %3842 = vmatpush2.msra.mxu0 0.0
        %3843 = vmatprep.subr.mxu0 0.0
        %3844 = vmatpush2.msra.mxu0 0.0
        %3845 = vmatprep.subr.mxu0 0.0
        %3846 = vmatpush2.msra.mxu0 0.0
        %3847 = vmatprep.subr.mxu0 0.0
        %3848 = vmatpush2.msra.mxu0 0.0
        %3849 = vmatprep.subr.mxu0 0.0
        %3850 = vmatpush2.msra.mxu0 0.0
        %3851 = vmatprep.mubr.f32.mxu0 0.0
        %3852 = vmatmul.mubr.f32.gmra.mxu0 %v3530
        %v3853 = vpop.f32.mrf.mxu0
        %v3854 = vadd.f32 0.0, %v3853
        %v3855 = vpop.f32.mrf.mxu0
        %3856 = vmatprep.mubr.f32.mxu0 0.0
        %3857 = vmatmul.mubr.f32.gmra.mxu0 %v3533
        %v3858 = vpop.f32.mrf.mxu0
        %v3859 = vadd.f32 0.0, %v3858
        %v3860 = vpop.f32.mrf.mxu0
        %3861 = vdwg.mxu0
        %v3862 = vmax.f32 %v3602, %v3686
        %v3863 = vmax.f32 %v3607, %v3691
        %v3864 = vmax.f32 %v3770, %v3854
        %v3865 = vmax.f32 %v3775, %v3859
        %v3866 = vmax.f32 %v3862, %v3864
        %v3867 = vmax.f32 %v3863, %v3865
        %3868 = vst.msk [vmem:[#allocation4 + $0x8] sm:$0xff] %vm640, %v3866
        %3869 = vst.msk [vmem:[#allocation4 + $0x20] sm:$0xff] %vm640, %v3867
        %v3870 = vld [vmem:[#allocation4] sm:$0xff]
        %v3871 = vld [vmem:[#allocation4 + $0x8] sm:$0xff]
        %v3872 = vld [vmem:[#allocation4 + $0x18] sm:$0xff]
        %v3873 = vld [vmem:[#allocation4 + $0x20] sm:$0xff]
        %v3874 = vld [vmem:[%s11] sm:$0x1]
        %vm3875 = vcmp.gt.f32.partialorder %v3874, 0.5
        %v3876 = vsel %vm3875, 1, 0
        %v3877 = vlaneseq
        %v3878 = vshrl.u32 %v3877, 7
        %v3879 = vsub.s32 0, %v3878
        %v3880 = vrot.slane %v3876, %v3879
        %vm3881 = vcmp.eq.s32.totalorder %v3880, 1
        %3886 = vrot.lane.b32.xlu0 %v3870, 5
        %v3887 = vpop.permute.xlu0 %3886
        %3888 = vrot.lane.b32.xlu0 %v3871, 5
        %v3889 = vpop.permute.xlu0 %3888
        %3890 = vrot.lane.b32.xlu0 %v3872, 5
        %v3891 = vpop.permute.xlu0 %3890
        %3892 = vrot.lane.b32.xlu0 %v3873, 5
        %v3893 = vpop.permute.xlu0 %3892
        %vm3894 = vcmask 39936
        %v3895 = vsel %vm3894, %v3887, %v3889
        %v3896 = vsel %vm3894, %v3891, %v3893
        %v3899 = vsel %vm3881, %v3895, 0.0
        %v3900 = vsel %vm3881, %v3896, 0.0
        %v3901 = vld [vmem:[%s9] sm:$0xff]
        %s3902 = scalar_lea.vmem %s11, 1
        %v3903 = vld [vmem:[%s3902] sm:$0x1]
        %vm3904 = vcmp.gt.f32.partialorder %v3903, 0.5
        %v3905 = vsel %vm3904, 1, 0
        %v3906 = vlaneseq
        %v3907 = vshrl.u32 %v3906, 7
        %v3908 = vsub.s32 0, %v3907
        %v3909 = vrot.slane %v3905, %v3908
        %vm3910 = vcmp.eq.s32.totalorder %v3909, 1
        %3911 = vrot.lane.b32.xlu0 %v3870, 4
        %v3912 = vpop.permute.xlu0 %3911
        %3913 = vrot.lane.b32.xlu0 %v3871, 4
        %v3914 = vpop.permute.xlu0 %3913
        %3915 = vrot.lane.b32.xlu0 %v3872, 4
        %v3916 = vpop.permute.xlu0 %3915
        %3917 = vrot.lane.b32.xlu0 %v3873, 4
        %v3918 = vpop.permute.xlu0 %3917
        %vm3919 = vcmask 31744
        %v3920 = vsel %vm3919, %v3912, %v3914
        %v3921 = vsel %vm3919, %v3916, %v3918
        %v3924 = vsel %vm3910, %v3920, 0.0
        %v3925 = vsel %vm3910, %v3921, 0.0
        %s3926 = scalar_lea.vmem %s9, 8
        %v3927 = vld [vmem:[%s3926] sm:$0xff]
        %v3929 = vsel %vm640, %v3927, 0
        %3931 = vmatprep.subr.mxu0 0.0
        %3932 = vmatpush1.msra.mxu0 0.0
        %3933 = vmatprep.subr.mxu0 0.0
        %3934 = vmatpush1.msra.mxu0 0.0
        %3935 = vmatprep.subr.mxu0 0.0
        %3936 = vmatpush1.msra.mxu0 0.0
        %3937 = vmatprep.subr.mxu0 0.0
        %3938 = vmatpush1.msra.mxu0 0.0
        %3939 = vmatprep.subr.mxu0 0.0
        %3940 = vmatpush1.msra.mxu0 0.0
        %3941 = vmatprep.subr.mxu0 0.0
        %3942 = vmatpush1.msra.mxu0 0.0
        %3943 = vmatprep.subr.mxu0 0.0
        %3944 = vmatpush1.msra.mxu0 0.0
        %3945 = vmatprep.subr.mxu0 0.0
        %3946 = vmatpush1.msra.mxu0 0.0
        %3947 = vmatprep.subr.mxu0 0.0
        %3948 = vmatpush1.msra.mxu0 0.0
        %3949 = vmatprep.subr.mxu0 0.0
        %3950 = vmatpush1.msra.mxu0 0.0
        %3951 = vmatprep.subr.mxu0 0.0
        %3952 = vmatpush1.msra.mxu0 0.0
        %3953 = vmatprep.subr.mxu0 0.0
        %3954 = vmatpush1.msra.mxu0 0.0
        %3955 = vmatprep.subr.mxu0 0.0
        %3956 = vmatpush1.msra.mxu0 0.0
        %3957 = vmatprep.subr.mxu0 0.0
        %3958 = vmatpush1.msra.mxu0 0.0
        %3959 = vmatprep.subr.mxu0 0.0
        %3960 = vmatpush1.msra.mxu0 %v3925
        %3961 = vmatprep.subr.mxu0 0.0
        %3962 = vmatpush1.msra.mxu0 %v3924
        %3963 = vmatprep.subr.mxu0 0.0
        %3964 = vmatpush2.msra.mxu0 0.0
        %3965 = vmatprep.subr.mxu0 0.0
        %3966 = vmatpush2.msra.mxu0 0.0
        %3967 = vmatprep.subr.mxu0 0.0
        %3968 = vmatpush2.msra.mxu0 0.0
        %3969 = vmatprep.subr.mxu0 0.0
        %3970 = vmatpush2.msra.mxu0 0.0
        %3971 = vmatprep.subr.mxu0 0.0
        %3972 = vmatpush2.msra.mxu0 0.0
        %3973 = vmatprep.subr.mxu0 0.0
        %3974 = vmatpush2.msra.mxu0 0.0
        %3975 = vmatprep.subr.mxu0 0.0
        %3976 = vmatpush2.msra.mxu0 0.0
        %3977 = vmatprep.subr.mxu0 0.0
        %3978 = vmatpush2.msra.mxu0 0.0
        %3979 = vmatprep.subr.mxu0 0.0
        %3980 = vmatpush2.msra.mxu0 0.0
        %3981 = vmatprep.subr.mxu0 0.0
        %3982 = vmatpush2.msra.mxu0 0.0
        %3983 = vmatprep.subr.mxu0 0.0
        %3984 = vmatpush2.msra.mxu0 0.0
        %3985 = vmatprep.subr.mxu0 0.0
        %3986 = vmatpush2.msra.mxu0 0.0
        %3987 = vmatprep.subr.mxu0 0.0
        %3988 = vmatpush2.msra.mxu0 0.0
        %3989 = vmatprep.subr.mxu0 0.0
        %3990 = vmatpush2.msra.mxu0 0.0
        %3991 = vmatprep.subr.mxu0 0.0
        %3992 = vmatpush2.msra.mxu0 0.0
        %3993 = vmatprep.subr.mxu0 0.0
        %3994 = vmatpush2.msra.mxu0 0.0
        %3995 = vmatprep.mubr.f32.mxu0 0.0
        %3996 = vmatmul.mubr.f32.gmra.mxu0 %v3929
        %v3997 = vpop.f32.mrf.mxu0
        %v3998 = vadd.f32 0.0, %v3997
        %v3999 = vpop.f32.mrf.mxu0
        %4000 = vdwg.mxu0
        %v4002 = vsel %vm640, %v3901, 0
        %4004 = vmatprep.subr.mxu0 0.0
        %4005 = vmatpush1.msra.mxu0 0.0
        %4006 = vmatprep.subr.mxu0 0.0
        %4007 = vmatpush1.msra.mxu0 0.0
        %4008 = vmatprep.subr.mxu0 0.0
        %4009 = vmatpush1.msra.mxu0 0.0
        %4010 = vmatprep.subr.mxu0 0.0
        %4011 = vmatpush1.msra.mxu0 0.0
        %4012 = vmatprep.subr.mxu0 0.0
        %4013 = vmatpush1.msra.mxu0 0.0
        %4014 = vmatprep.subr.mxu0 0.0
        %4015 = vmatpush1.msra.mxu0 0.0
        %4016 = vmatprep.subr.mxu0 0.0
        %4017 = vmatpush1.msra.mxu0 0.0
        %4018 = vmatprep.subr.mxu0 0.0
        %4019 = vmatpush1.msra.mxu0 0.0
        %4020 = vmatprep.subr.mxu0 0.0
        %4021 = vmatpush1.msra.mxu0 0.0
        %4022 = vmatprep.subr.mxu0 0.0
        %4023 = vmatpush1.msra.mxu0 0.0
        %4024 = vmatprep.subr.mxu0 0.0
        %4025 = vmatpush1.msra.mxu0 0.0
        %4026 = vmatprep.subr.mxu0 0.0
        %4027 = vmatpush1.msra.mxu0 0.0
        %4028 = vmatprep.subr.mxu0 0.0
        %4029 = vmatpush1.msra.mxu0 0.0
        %4030 = vmatprep.subr.mxu0 0.0
        %4031 = vmatpush1.msra.mxu0 0.0
        %4032 = vmatprep.subr.mxu0 0.0
        %4033 = vmatpush1.msra.mxu0 %v3900
        %4034 = vmatprep.subr.mxu0 0.0
        %4035 = vmatpush1.msra.mxu0 %v3899
        %4036 = vmatprep.subr.mxu0 0.0
        %4037 = vmatpush2.msra.mxu0 0.0
        %4038 = vmatprep.subr.mxu0 0.0
        %4039 = vmatpush2.msra.mxu0 0.0
        %4040 = vmatprep.subr.mxu0 0.0
        %4041 = vmatpush2.msra.mxu0 0.0
        %4042 = vmatprep.subr.mxu0 0.0
        %4043 = vmatpush2.msra.mxu0 0.0
        %4044 = vmatprep.subr.mxu0 0.0
        %4045 = vmatpush2.msra.mxu0 0.0
        %4046 = vmatprep.subr.mxu0 0.0
        %4047 = vmatpush2.msra.mxu0 0.0
        %4048 = vmatprep.subr.mxu0 0.0
        %4049 = vmatpush2.msra.mxu0 0.0
        %4050 = vmatprep.subr.mxu0 0.0
        %4051 = vmatpush2.msra.mxu0 0.0
        %4052 = vmatprep.subr.mxu0 0.0
        %4053 = vmatpush2.msra.mxu0 0.0
        %4054 = vmatprep.subr.mxu0 0.0
        %4055 = vmatpush2.msra.mxu0 0.0
        %4056 = vmatprep.subr.mxu0 0.0
        %4057 = vmatpush2.msra.mxu0 0.0
        %4058 = vmatprep.subr.mxu0 0.0
        %4059 = vmatpush2.msra.mxu0 0.0
        %4060 = vmatprep.subr.mxu0 0.0
        %4061 = vmatpush2.msra.mxu0 0.0
        %4062 = vmatprep.subr.mxu0 0.0
        %4063 = vmatpush2.msra.mxu0 0.0
        %4064 = vmatprep.subr.mxu0 0.0
        %4065 = vmatpush2.msra.mxu0 0.0
        %4066 = vmatprep.subr.mxu0 0.0
        %4067 = vmatpush2.msra.mxu0 0.0
        %4068 = vmatprep.mubr.f32.mxu0 0.0
        %4069 = vmatmul.mubr.f32.gmra.mxu0 %v4002
        %v4070 = vpop.f32.mrf.mxu0
        %v4071 = vadd.f32 %v3998, %v4070
        %v4072 = vpop.f32.mrf.mxu0
        %4073 = vdwg.mxu0
        %s4074 = scalar_lea.vmem %s11, 2
        %v4075 = vld [vmem:[%s4074] sm:$0x1]
        %vm4076 = vcmp.gt.f32.partialorder %v4075, 0.5
        %v4077 = vsel %vm4076, 1, 0
        %v4078 = vlaneseq
        %v4079 = vshrl.u32 %v4078, 7
        %v4080 = vsub.s32 0, %v4079
        %v4081 = vrot.slane %v4077, %v4080
        %vm4082 = vcmp.eq.s32.totalorder %v4081, 1
        %4083 = vrot.lane.b32.xlu0 %v3870, 3
        %v4084 = vpop.permute.xlu0 %4083
        %4085 = vrot.lane.b32.xlu0 %v3871, 3
        %v4086 = vpop.permute.xlu0 %4085
        %4087 = vrot.lane.b32.xlu0 %v3872, 3
        %v4088 = vpop.permute.xlu0 %4087
        %4089 = vrot.lane.b32.xlu0 %v3873, 3
        %v4090 = vpop.permute.xlu0 %4089
        %v4091 = vsel %vm652, %v4084, %v4086
        %v4092 = vsel %vm652, %v4088, %v4090
        %v4095 = vsel %vm4082, %v4091, 0.0
        %v4096 = vsel %vm4082, %v4092, 0.0
        %s4097 = scalar_lea.vmem %s9, 16
        %v4098 = vld [vmem:[%s4097] sm:$0xff]
        %v4100 = vsel %vm640, %v4098, 0
        %4102 = vmatprep.subr.mxu0 0.0
        %4103 = vmatpush1.msra.mxu0 0.0
        %4104 = vmatprep.subr.mxu0 0.0
        %4105 = vmatpush1.msra.mxu0 0.0
        %4106 = vmatprep.subr.mxu0 0.0
        %4107 = vmatpush1.msra.mxu0 0.0
        %4108 = vmatprep.subr.mxu0 0.0
        %4109 = vmatpush1.msra.mxu0 0.0
        %4110 = vmatprep.subr.mxu0 0.0
        %4111 = vmatpush1.msra.mxu0 0.0
        %4112 = vmatprep.subr.mxu0 0.0
        %4113 = vmatpush1.msra.mxu0 0.0
        %4114 = vmatprep.subr.mxu0 0.0
        %4115 = vmatpush1.msra.mxu0 0.0
        %4116 = vmatprep.subr.mxu0 0.0
        %4117 = vmatpush1.msra.mxu0 0.0
        %4118 = vmatprep.subr.mxu0 0.0
        %4119 = vmatpush1.msra.mxu0 0.0
        %4120 = vmatprep.subr.mxu0 0.0
        %4121 = vmatpush1.msra.mxu0 0.0
        %4122 = vmatprep.subr.mxu0 0.0
        %4123 = vmatpush1.msra.mxu0 0.0
        %4124 = vmatprep.subr.mxu0 0.0
        %4125 = vmatpush1.msra.mxu0 0.0
        %4126 = vmatprep.subr.mxu0 0.0
        %4127 = vmatpush1.msra.mxu0 0.0
        %4128 = vmatprep.subr.mxu0 0.0
        %4129 = vmatpush1.msra.mxu0 0.0
        %4130 = vmatprep.subr.mxu0 0.0
        %4131 = vmatpush1.msra.mxu0 %v4096
        %4132 = vmatprep.subr.mxu0 0.0
        %4133 = vmatpush1.msra.mxu0 %v4095
        %4134 = vmatprep.subr.mxu0 0.0
        %4135 = vmatpush2.msra.mxu0 0.0
        %4136 = vmatprep.subr.mxu0 0.0
        %4137 = vmatpush2.msra.mxu0 0.0
        %4138 = vmatprep.subr.mxu0 0.0
        %4139 = vmatpush2.msra.mxu0 0.0
        %4140 = vmatprep.subr.mxu0 0.0
        %4141 = vmatpush2.msra.mxu0 0.0
        %4142 = vmatprep.subr.mxu0 0.0
        %4143 = vmatpush2.msra.mxu0 0.0
        %4144 = vmatprep.subr.mxu0 0.0
        %4145 = vmatpush2.msra.mxu0 0.0
        %4146 = vmatprep.subr.mxu0 0.0
        %4147 = vmatpush2.msra.mxu0 0.0
        %4148 = vmatprep.subr.mxu0 0.0
        %4149 = vmatpush2.msra.mxu0 0.0
        %4150 = vmatprep.subr.mxu0 0.0
        %4151 = vmatpush2.msra.mxu0 0.0
        %4152 = vmatprep.subr.mxu0 0.0
        %4153 = vmatpush2.msra.mxu0 0.0
        %4154 = vmatprep.subr.mxu0 0.0
        %4155 = vmatpush2.msra.mxu0 0.0
        %4156 = vmatprep.subr.mxu0 0.0
        %4157 = vmatpush2.msra.mxu0 0.0
        %4158 = vmatprep.subr.mxu0 0.0
        %4159 = vmatpush2.msra.mxu0 0.0
        %4160 = vmatprep.subr.mxu0 0.0
        %4161 = vmatpush2.msra.mxu0 0.0
        %4162 = vmatprep.subr.mxu0 0.0
        %4163 = vmatpush2.msra.mxu0 0.0
        %4164 = vmatprep.subr.mxu0 0.0
        %4165 = vmatpush2.msra.mxu0 0.0
        %4166 = vmatprep.mubr.f32.mxu0 0.0
        %4167 = vmatmul.mubr.f32.gmra.mxu0 %v4100
        %v4168 = vpop.f32.mrf.mxu0
        %v4169 = vadd.f32 0.0, %v4168
        %v4170 = vpop.f32.mrf.mxu0
        %4171 = vdwg.mxu0
        %v4172 = vadd.f32 %v4071, %v4169
        %s4173 = scalar_lea.vmem %s11, 3
        %v4174 = vld [vmem:[%s4173] sm:$0x1]
        %vm4175 = vcmp.gt.f32.partialorder %v4174, 0.5
        %v4176 = vsel %vm4175, 1, 0
        %v4177 = vlaneseq
        %v4178 = vshrl.u32 %v4177, 7
        %v4179 = vsub.s32 0, %v4178
        %v4180 = vrot.slane %v4176, %v4179
        %vm4181 = vcmp.eq.s32.totalorder %v4180, 1
        %4182 = vrot.lane.b32.xlu0 %v3870, 1
        %v4183 = vpop.permute.xlu0 %4182
        %4184 = vrot.lane.b32.xlu0 %v3871, 1
        %v4185 = vpop.permute.xlu0 %4184
        %4186 = vrot.lane.b32.xlu0 %v3872, 1
        %v4187 = vpop.permute.xlu0 %4186
        %4188 = vrot.lane.b32.xlu0 %v3873, 1
        %v4189 = vpop.permute.xlu0 %4188
        %v4190 = vsel %vm1045, %v4183, %v4185
        %v4191 = vsel %vm1045, %v4187, %v4189
        %v4194 = vsel %vm4181, %v4190, 0.0
        %v4195 = vsel %vm4181, %v4191, 0.0
        %s4196 = scalar_lea.vmem %s9, 24
        %v4197 = vld [vmem:[%s4196] sm:$0xff]
        %v4199 = vsel %vm640, %v4197, 0
        %4201 = vmatprep.subr.mxu0 0.0
        %4202 = vmatpush1.msra.mxu0 0.0
        %4203 = vmatprep.subr.mxu0 0.0
        %4204 = vmatpush1.msra.mxu0 0.0
        %4205 = vmatprep.subr.mxu0 0.0
        %4206 = vmatpush1.msra.mxu0 0.0
        %4207 = vmatprep.subr.mxu0 0.0
        %4208 = vmatpush1.msra.mxu0 0.0
        %4209 = vmatprep.subr.mxu0 0.0
        %4210 = vmatpush1.msra.mxu0 0.0
        %4211 = vmatprep.subr.mxu0 0.0
        %4212 = vmatpush1.msra.mxu0 0.0
        %4213 = vmatprep.subr.mxu0 0.0
        %4214 = vmatpush1.msra.mxu0 0.0
        %4215 = vmatprep.subr.mxu0 0.0
        %4216 = vmatpush1.msra.mxu0 0.0
        %4217 = vmatprep.subr.mxu0 0.0
        %4218 = vmatpush1.msra.mxu0 0.0
        %4219 = vmatprep.subr.mxu0 0.0
        %4220 = vmatpush1.msra.mxu0 0.0
        %4221 = vmatprep.subr.mxu0 0.0
        %4222 = vmatpush1.msra.mxu0 0.0
        %4223 = vmatprep.subr.mxu0 0.0
        %4224 = vmatpush1.msra.mxu0 0.0
        %4225 = vmatprep.subr.mxu0 0.0
        %4226 = vmatpush1.msra.mxu0 0.0
        %4227 = vmatprep.subr.mxu0 0.0
        %4228 = vmatpush1.msra.mxu0 0.0
        %4229 = vmatprep.subr.mxu0 0.0
        %4230 = vmatpush1.msra.mxu0 %v4195
        %4231 = vmatprep.subr.mxu0 0.0
        %4232 = vmatpush1.msra.mxu0 %v4194
        %4233 = vmatprep.subr.mxu0 0.0
        %4234 = vmatpush2.msra.mxu0 0.0
        %4235 = vmatprep.subr.mxu0 0.0
        %4236 = vmatpush2.msra.mxu0 0.0
        %4237 = vmatprep.subr.mxu0 0.0
        %4238 = vmatpush2.msra.mxu0 0.0
        %4239 = vmatprep.subr.mxu0 0.0
        %4240 = vmatpush2.msra.mxu0 0.0
        %4241 = vmatprep.subr.mxu0 0.0
        %4242 = vmatpush2.msra.mxu0 0.0
        %4243 = vmatprep.subr.mxu0 0.0
        %4244 = vmatpush2.msra.mxu0 0.0
        %4245 = vmatprep.subr.mxu0 0.0
        %4246 = vmatpush2.msra.mxu0 0.0
        %4247 = vmatprep.subr.mxu0 0.0
        %4248 = vmatpush2.msra.mxu0 0.0
        %4249 = vmatprep.subr.mxu0 0.0
        %4250 = vmatpush2.msra.mxu0 0.0
        %4251 = vmatprep.subr.mxu0 0.0
        %4252 = vmatpush2.msra.mxu0 0.0
        %4253 = vmatprep.subr.mxu0 0.0
        %4254 = vmatpush2.msra.mxu0 0.0
        %4255 = vmatprep.subr.mxu0 0.0
        %4256 = vmatpush2.msra.mxu0 0.0
        %4257 = vmatprep.subr.mxu0 0.0
        %4258 = vmatpush2.msra.mxu0 0.0
        %4259 = vmatprep.subr.mxu0 0.0
        %4260 = vmatpush2.msra.mxu0 0.0
        %4261 = vmatprep.subr.mxu0 0.0
        %4262 = vmatpush2.msra.mxu0 0.0
        %4263 = vmatprep.subr.mxu0 0.0
        %4264 = vmatpush2.msra.mxu0 0.0
        %4265 = vmatprep.mubr.f32.mxu0 0.0
        %4266 = vmatmul.mubr.f32.gmra.mxu0 %v4199
        %v4267 = vpop.f32.mrf.mxu0
        %v4268 = vadd.f32 0.0, %v4267
        %v4269 = vpop.f32.mrf.mxu0
        %4270 = vdwg.mxu0
        %v4271 = vadd.f32 %v4172, %v4268
        %s4272 = scalar_lea.vmem %s9, 32
        %v4273 = vld [vmem:[%s4272] sm:$0xff]
        %v4275 = vsel %vm640, %v4273, 0
        %4277 = vmatprep.subr.mxu0 0.0
        %4278 = vmatpush1.msra.mxu0 0.0
        %4279 = vmatprep.subr.mxu0 0.0
        %4280 = vmatpush1.msra.mxu0 0.0
        %4281 = vmatprep.subr.mxu0 0.0
        %4282 = vmatpush1.msra.mxu0 0.0
        %4283 = vmatprep.subr.mxu0 0.0
        %4284 = vmatpush1.msra.mxu0 0.0
        %4285 = vmatprep.subr.mxu0 0.0
        %4286 = vmatpush1.msra.mxu0 0.0
        %4287 = vmatprep.subr.mxu0 0.0
        %4288 = vmatpush1.msra.mxu0 0.0
        %4289 = vmatprep.subr.mxu0 0.0
        %4290 = vmatpush1.msra.mxu0 0.0
        %4291 = vmatprep.subr.mxu0 0.0
        %4292 = vmatpush1.msra.mxu0 0.0
        %4293 = vmatprep.subr.mxu0 0.0
        %4294 = vmatpush1.msra.mxu0 0.0
        %4295 = vmatprep.subr.mxu0 0.0
        %4296 = vmatpush1.msra.mxu0 0.0
        %4297 = vmatprep.subr.mxu0 0.0
        %4298 = vmatpush1.msra.mxu0 0.0
        %4299 = vmatprep.subr.mxu0 0.0
        %4300 = vmatpush1.msra.mxu0 0.0
        %4301 = vmatprep.subr.mxu0 0.0
        %4302 = vmatpush1.msra.mxu0 0.0
        %4303 = vmatprep.subr.mxu0 0.0
        %4304 = vmatpush1.msra.mxu0 0.0
        %4305 = vmatprep.subr.mxu0 0.0
        %4306 = vmatpush1.msra.mxu0 %v3873
        %4307 = vmatprep.subr.mxu0 0.0
        %4308 = vmatpush1.msra.mxu0 %v3871
        %4309 = vmatprep.subr.mxu0 0.0
        %4310 = vmatpush2.msra.mxu0 0.0
        %4311 = vmatprep.subr.mxu0 0.0
        %4312 = vmatpush2.msra.mxu0 0.0
        %4313 = vmatprep.subr.mxu0 0.0
        %4314 = vmatpush2.msra.mxu0 0.0
        %4315 = vmatprep.subr.mxu0 0.0
        %4316 = vmatpush2.msra.mxu0 0.0
        %4317 = vmatprep.subr.mxu0 0.0
        %4318 = vmatpush2.msra.mxu0 0.0
        %4319 = vmatprep.subr.mxu0 0.0
        %4320 = vmatpush2.msra.mxu0 0.0
        %4321 = vmatprep.subr.mxu0 0.0
        %4322 = vmatpush2.msra.mxu0 0.0
        %4323 = vmatprep.subr.mxu0 0.0
        %4324 = vmatpush2.msra.mxu0 0.0
        %4325 = vmatprep.subr.mxu0 0.0
        %4326 = vmatpush2.msra.mxu0 0.0
        %4327 = vmatprep.subr.mxu0 0.0
        %4328 = vmatpush2.msra.mxu0 0.0
        %4329 = vmatprep.subr.mxu0 0.0
        %4330 = vmatpush2.msra.mxu0 0.0
        %4331 = vmatprep.subr.mxu0 0.0
        %4332 = vmatpush2.msra.mxu0 0.0
        %4333 = vmatprep.subr.mxu0 0.0
        %4334 = vmatpush2.msra.mxu0 0.0
        %4335 = vmatprep.subr.mxu0 0.0
        %4336 = vmatpush2.msra.mxu0 0.0
        %4337 = vmatprep.subr.mxu0 0.0
        %4338 = vmatpush2.msra.mxu0 0.0
        %4339 = vmatprep.subr.mxu0 0.0
        %4340 = vmatpush2.msra.mxu0 0.0
        %4341 = vmatprep.mubr.f32.mxu0 0.0
        %4342 = vmatmul.mubr.f32.gmra.mxu0 %v4275
        %v4343 = vpop.f32.mrf.mxu0
        %v4344 = vadd.f32 0.0, %v4343
        %v4345 = vpop.f32.mrf.mxu0
        %4346 = vdwg.mxu0
        %v4347 = vadd.f32 %v4271, %v4344
        %s4348 = scalar_lea.vmem %s11, 5
        %v4349 = vld [vmem:[%s4348] sm:$0x1]
        %vm4350 = vcmp.gt.f32.partialorder %v4349, 0.5
        %v4351 = vsel %vm4350, 1, 0
        %v4352 = vlaneseq
        %v4353 = vshrl.u32 %v4352, 7
        %v4354 = vsub.s32 0, %v4353
        %v4355 = vrot.slane %v4351, %v4354
        %vm4356 = vcmp.eq.s32.totalorder %v4355, 1
        %4357 = vrot.lane.b32.xlu0 %v3871, 127
        %v4358 = vpop.permute.xlu0 %4357
        %4359 = vrot.lane.b32.xlu0 %v3873, 127
        %v4360 = vpop.permute.xlu0 %4359
        %v4363 = vsel %vm4356, %v4358, 0.0
        %v4364 = vsel %vm4356, %v4360, 0.0
        %s4365 = scalar_lea.vmem %s9, 40
        %v4366 = vld [vmem:[%s4365] sm:$0xff]
        %v4368 = vsel %vm640, %v4366, 0
        %4370 = vmatprep.subr.mxu0 0.0
        %4371 = vmatpush1.msra.mxu0 0.0
        %4372 = vmatprep.subr.mxu0 0.0
        %4373 = vmatpush1.msra.mxu0 0.0
        %4374 = vmatprep.subr.mxu0 0.0
        %4375 = vmatpush1.msra.mxu0 0.0
        %4376 = vmatprep.subr.mxu0 0.0
        %4377 = vmatpush1.msra.mxu0 0.0
        %4378 = vmatprep.subr.mxu0 0.0
        %4379 = vmatpush1.msra.mxu0 0.0
        %4380 = vmatprep.subr.mxu0 0.0
        %4381 = vmatpush1.msra.mxu0 0.0
        %4382 = vmatprep.subr.mxu0 0.0
        %4383 = vmatpush1.msra.mxu0 0.0
        %4384 = vmatprep.subr.mxu0 0.0
        %4385 = vmatpush1.msra.mxu0 0.0
        %4386 = vmatprep.subr.mxu0 0.0
        %4387 = vmatpush1.msra.mxu0 0.0
        %4388 = vmatprep.subr.mxu0 0.0
        %4389 = vmatpush1.msra.mxu0 0.0
        %4390 = vmatprep.subr.mxu0 0.0
        %4391 = vmatpush1.msra.mxu0 0.0
        %4392 = vmatprep.subr.mxu0 0.0
        %4393 = vmatpush1.msra.mxu0 0.0
        %4394 = vmatprep.subr.mxu0 0.0
        %4395 = vmatpush1.msra.mxu0 0.0
        %4396 = vmatprep.subr.mxu0 0.0
        %4397 = vmatpush1.msra.mxu0 0.0
        %4398 = vmatprep.subr.mxu0 0.0
        %4399 = vmatpush1.msra.mxu0 %v4364
        %4400 = vmatprep.subr.mxu0 0.0
        %4401 = vmatpush1.msra.mxu0 %v4363
        %4402 = vmatprep.subr.mxu0 0.0
        %4403 = vmatpush2.msra.mxu0 0.0
        %4404 = vmatprep.subr.mxu0 0.0
        %4405 = vmatpush2.msra.mxu0 0.0
        %4406 = vmatprep.subr.mxu0 0.0
        %4407 = vmatpush2.msra.mxu0 0.0
        %4408 = vmatprep.subr.mxu0 0.0
        %4409 = vmatpush2.msra.mxu0 0.0
        %4410 = vmatprep.subr.mxu0 0.0
        %4411 = vmatpush2.msra.mxu0 0.0
        %4412 = vmatprep.subr.mxu0 0.0
        %4413 = vmatpush2.msra.mxu0 0.0
        %4414 = vmatprep.subr.mxu0 0.0
        %4415 = vmatpush2.msra.mxu0 0.0
        %4416 = vmatprep.subr.mxu0 0.0
        %4417 = vmatpush2.msra.mxu0 0.0
        %4418 = vmatprep.subr.mxu0 0.0
        %4419 = vmatpush2.msra.mxu0 0.0
        %4420 = vmatprep.subr.mxu0 0.0
        %4421 = vmatpush2.msra.mxu0 0.0
        %4422 = vmatprep.subr.mxu0 0.0
        %4423 = vmatpush2.msra.mxu0 0.0
        %4424 = vmatprep.subr.mxu0 0.0
        %4425 = vmatpush2.msra.mxu0 0.0
        %4426 = vmatprep.subr.mxu0 0.0
        %4427 = vmatpush2.msra.mxu0 0.0
        %4428 = vmatprep.subr.mxu0 0.0
        %4429 = vmatpush2.msra.mxu0 0.0
        %4430 = vmatprep.subr.mxu0 0.0
        %4431 = vmatpush2.msra.mxu0 0.0
        %4432 = vmatprep.subr.mxu0 0.0
        %4433 = vmatpush2.msra.mxu0 0.0
        %4434 = vmatprep.mubr.f32.mxu0 0.0
        %4435 = vmatmul.mubr.f32.gmra.mxu0 %v4368
        %v4436 = vpop.f32.mrf.mxu0
        %v4437 = vadd.f32 0.0, %v4436
        %v4438 = vpop.f32.mrf.mxu0
        %4439 = vdwg.mxu0
        %v4440 = vadd.f32 %v4347, %v4437
        %s4441 = scalar_lea.vmem %s11, 6
        %v4442 = vld [vmem:[%s4441] sm:$0x1]
        %vm4443 = vcmp.gt.f32.partialorder %v4442, 0.5
        %v4444 = vsel %vm4443, 1, 0
        %v4445 = vlaneseq
        %v4446 = vshrl.u32 %v4445, 7
        %v4447 = vsub.s32 0, %v4446
        %v4448 = vrot.slane %v4444, %v4447
        %vm4449 = vcmp.eq.s32.totalorder %v4448, 1
        %4450 = vrot.lane.b32.xlu0 %v3871, 125
        %v4451 = vpop.permute.xlu0 %4450
        %4452 = vrot.lane.b32.xlu0 %v3873, 125
        %v4453 = vpop.permute.xlu0 %4452
        %v4456 = vsel %vm4449, %v4451, 0.0
        %v4457 = vsel %vm4449, %v4453, 0.0
        %s4458 = scalar_lea.vmem %s9, 48
        %v4459 = vld [vmem:[%s4458] sm:$0xff]
        %v4461 = vsel %vm640, %v4459, 0
        %4463 = vmatprep.subr.mxu0 0.0
        %4464 = vmatpush1.msra.mxu0 0.0
        %4465 = vmatprep.subr.mxu0 0.0
        %4466 = vmatpush1.msra.mxu0 0.0
        %4467 = vmatprep.subr.mxu0 0.0
        %4468 = vmatpush1.msra.mxu0 0.0
        %4469 = vmatprep.subr.mxu0 0.0
        %4470 = vmatpush1.msra.mxu0 0.0
        %4471 = vmatprep.subr.mxu0 0.0
        %4472 = vmatpush1.msra.mxu0 0.0
        %4473 = vmatprep.subr.mxu0 0.0
        %4474 = vmatpush1.msra.mxu0 0.0
        %4475 = vmatprep.subr.mxu0 0.0
        %4476 = vmatpush1.msra.mxu0 0.0
        %4477 = vmatprep.subr.mxu0 0.0
        %4478 = vmatpush1.msra.mxu0 0.0
        %4479 = vmatprep.subr.mxu0 0.0
        %4480 = vmatpush1.msra.mxu0 0.0
        %4481 = vmatprep.subr.mxu0 0.0
        %4482 = vmatpush1.msra.mxu0 0.0
        %4483 = vmatprep.subr.mxu0 0.0
        %4484 = vmatpush1.msra.mxu0 0.0
        %4485 = vmatprep.subr.mxu0 0.0
        %4486 = vmatpush1.msra.mxu0 0.0
        %4487 = vmatprep.subr.mxu0 0.0
        %4488 = vmatpush1.msra.mxu0 0.0
        %4489 = vmatprep.subr.mxu0 0.0
        %4490 = vmatpush1.msra.mxu0 0.0
        %4491 = vmatprep.subr.mxu0 0.0
        %4492 = vmatpush1.msra.mxu0 %v4457
        %4493 = vmatprep.subr.mxu0 0.0
        %4494 = vmatpush1.msra.mxu0 %v4456
        %4495 = vmatprep.subr.mxu0 0.0
        %4496 = vmatpush2.msra.mxu0 0.0
        %4497 = vmatprep.subr.mxu0 0.0
        %4498 = vmatpush2.msra.mxu0 0.0
        %4499 = vmatprep.subr.mxu0 0.0
        %4500 = vmatpush2.msra.mxu0 0.0
        %4501 = vmatprep.subr.mxu0 0.0
        %4502 = vmatpush2.msra.mxu0 0.0
        %4503 = vmatprep.subr.mxu0 0.0
        %4504 = vmatpush2.msra.mxu0 0.0
        %4505 = vmatprep.subr.mxu0 0.0
        %4506 = vmatpush2.msra.mxu0 0.0
        %4507 = vmatprep.subr.mxu0 0.0
        %4508 = vmatpush2.msra.mxu0 0.0
        %4509 = vmatprep.subr.mxu0 0.0
        %4510 = vmatpush2.msra.mxu0 0.0
        %4511 = vmatprep.subr.mxu0 0.0
        %4512 = vmatpush2.msra.mxu0 0.0
        %4513 = vmatprep.subr.mxu0 0.0
        %4514 = vmatpush2.msra.mxu0 0.0
        %4515 = vmatprep.subr.mxu0 0.0
        %4516 = vmatpush2.msra.mxu0 0.0
        %4517 = vmatprep.subr.mxu0 0.0
        %4518 = vmatpush2.msra.mxu0 0.0
        %4519 = vmatprep.subr.mxu0 0.0
        %4520 = vmatpush2.msra.mxu0 0.0
        %4521 = vmatprep.subr.mxu0 0.0
        %4522 = vmatpush2.msra.mxu0 0.0
        %4523 = vmatprep.subr.mxu0 0.0
        %4524 = vmatpush2.msra.mxu0 0.0
        %4525 = vmatprep.subr.mxu0 0.0
        %4526 = vmatpush2.msra.mxu0 0.0
        %4527 = vmatprep.mubr.f32.mxu0 0.0
        %4528 = vmatmul.mubr.f32.gmra.mxu0 %v4461
        %v4529 = vpop.f32.mrf.mxu0
        %v4530 = vadd.f32 0.0, %v4529
        %v4531 = vpop.f32.mrf.mxu0
        %4532 = vdwg.mxu0
        %v4533 = vadd.f32 %v4440, %v4530
        %s4534 = scalar_lea.vmem %s11, 7
        %v4535 = vld [vmem:[%s4534] sm:$0x1]
        %vm4536 = vcmp.gt.f32.partialorder %v4535, 0.5
        %v4537 = vsel %vm4536, 1, 0
        %v4538 = vlaneseq
        %v4539 = vshrl.u32 %v4538, 7
        %v4540 = vsub.s32 0, %v4539
        %v4541 = vrot.slane %v4537, %v4540
        %vm4542 = vcmp.eq.s32.totalorder %v4541, 1
        %4543 = vrot.lane.b32.xlu0 %v3871, 124
        %v4544 = vpop.permute.xlu0 %4543
        %4545 = vrot.lane.b32.xlu0 %v3873, 124
        %v4546 = vpop.permute.xlu0 %4545
        %v4549 = vsel %vm4542, %v4544, 0.0
        %v4550 = vsel %vm4542, %v4546, 0.0
        %s4551 = scalar_lea.vmem %s9, 56
        %v4552 = vld [vmem:[%s4551] sm:$0xff]
        %v4554 = vsel %vm640, %v4552, 0
        %4556 = vmatprep.subr.mxu0 0.0
        %4557 = vmatpush1.msra.mxu0 0.0
        %4558 = vmatprep.subr.mxu0 0.0
        %4559 = vmatpush1.msra.mxu0 0.0
        %4560 = vmatprep.subr.mxu0 0.0
        %4561 = vmatpush1.msra.mxu0 0.0
        %4562 = vmatprep.subr.mxu0 0.0
        %4563 = vmatpush1.msra.mxu0 0.0
        %4564 = vmatprep.subr.mxu0 0.0
        %4565 = vmatpush1.msra.mxu0 0.0
        %4566 = vmatprep.subr.mxu0 0.0
        %4567 = vmatpush1.msra.mxu0 0.0
        %4568 = vmatprep.subr.mxu0 0.0
        %4569 = vmatpush1.msra.mxu0 0.0
        %4570 = vmatprep.subr.mxu0 0.0
        %4571 = vmatpush1.msra.mxu0 0.0
        %4572 = vmatprep.subr.mxu0 0.0
        %4573 = vmatpush1.msra.mxu0 0.0
        %4574 = vmatprep.subr.mxu0 0.0
        %4575 = vmatpush1.msra.mxu0 0.0
        %4576 = vmatprep.subr.mxu0 0.0
        %4577 = vmatpush1.msra.mxu0 0.0
        %4578 = vmatprep.subr.mxu0 0.0
        %4579 = vmatpush1.msra.mxu0 0.0
        %4580 = vmatprep.subr.mxu0 0.0
        %4581 = vmatpush1.msra.mxu0 0.0
        %4582 = vmatprep.subr.mxu0 0.0
        %4583 = vmatpush1.msra.mxu0 0.0
        %4584 = vmatprep.subr.mxu0 0.0
        %4585 = vmatpush1.msra.mxu0 %v4550
        %4586 = vmatprep.subr.mxu0 0.0
        %4587 = vmatpush1.msra.mxu0 %v4549
        %4588 = vmatprep.subr.mxu0 0.0
        %4589 = vmatpush2.msra.mxu0 0.0
        %4590 = vmatprep.subr.mxu0 0.0
        %4591 = vmatpush2.msra.mxu0 0.0
        %4592 = vmatprep.subr.mxu0 0.0
        %4593 = vmatpush2.msra.mxu0 0.0
        %4594 = vmatprep.subr.mxu0 0.0
        %4595 = vmatpush2.msra.mxu0 0.0
        %4596 = vmatprep.subr.mxu0 0.0
        %4597 = vmatpush2.msra.mxu0 0.0
        %4598 = vmatprep.subr.mxu0 0.0
        %4599 = vmatpush2.msra.mxu0 0.0
        %4600 = vmatprep.subr.mxu0 0.0
        %4601 = vmatpush2.msra.mxu0 0.0
        %4602 = vmatprep.subr.mxu0 0.0
        %4603 = vmatpush2.msra.mxu0 0.0
        %4604 = vmatprep.subr.mxu0 0.0
        %4605 = vmatpush2.msra.mxu0 0.0
        %4606 = vmatprep.subr.mxu0 0.0
        %4607 = vmatpush2.msra.mxu0 0.0
        %4608 = vmatprep.subr.mxu0 0.0
        %4609 = vmatpush2.msra.mxu0 0.0
        %4610 = vmatprep.subr.mxu0 0.0
        %4611 = vmatpush2.msra.mxu0 0.0
        %4612 = vmatprep.subr.mxu0 0.0
        %4613 = vmatpush2.msra.mxu0 0.0
        %4614 = vmatprep.subr.mxu0 0.0
        %4615 = vmatpush2.msra.mxu0 0.0
        %4616 = vmatprep.subr.mxu0 0.0
        %4617 = vmatpush2.msra.mxu0 0.0
        %4618 = vmatprep.subr.mxu0 0.0
        %4619 = vmatpush2.msra.mxu0 0.0
        %4620 = vmatprep.mubr.f32.mxu0 0.0
        %4621 = vmatmul.mubr.f32.gmra.mxu0 %v4554
        %v4622 = vpop.f32.mrf.mxu0
        %v4623 = vadd.f32 0.0, %v4622
        %v4624 = vpop.f32.mrf.mxu0
        %4625 = vdwg.mxu0
        %v4626 = vadd.f32 %v4533, %v4623
        %s4627 = scalar_lea.vmem %s11, 8
        %v4628 = vld [vmem:[%s4627] sm:$0x1]
        %vm4629 = vcmp.gt.f32.partialorder %v4628, 0.5
        %v4630 = vsel %vm4629, 1, 0
        %v4631 = vlaneseq
        %v4632 = vshrl.u32 %v4631, 7
        %v4633 = vsub.s32 0, %v4632
        %v4634 = vrot.slane %v4630, %v4633
        %vm4635 = vcmp.eq.s32.totalorder %v4634, 1
        %4636 = vrot.lane.b32.xlu0 %v3871, 123
        %v4637 = vpop.permute.xlu0 %4636
        %4638 = vrot.lane.b32.xlu0 %v3873, 123
        %v4639 = vpop.permute.xlu0 %4638
        %v4642 = vsel %vm4635, %v4637, 0.0
        %v4643 = vsel %vm4635, %v4639, 0.0
        %s4644 = scalar_lea.vmem %s9, 64
        %v4645 = vld [vmem:[%s4644] sm:$0xff]
        %v4647 = vsel %vm640, %v4645, 0
        %4649 = vmatprep.subr.mxu0 0.0
        %4650 = vmatpush1.msra.mxu0 0.0
        %4651 = vmatprep.subr.mxu0 0.0
        %4652 = vmatpush1.msra.mxu0 0.0
        %4653 = vmatprep.subr.mxu0 0.0
        %4654 = vmatpush1.msra.mxu0 0.0
        %4655 = vmatprep.subr.mxu0 0.0
        %4656 = vmatpush1.msra.mxu0 0.0
        %4657 = vmatprep.subr.mxu0 0.0
        %4658 = vmatpush1.msra.mxu0 0.0
        %4659 = vmatprep.subr.mxu0 0.0
        %4660 = vmatpush1.msra.mxu0 0.0
        %4661 = vmatprep.subr.mxu0 0.0
        %4662 = vmatpush1.msra.mxu0 0.0
        %4663 = vmatprep.subr.mxu0 0.0
        %4664 = vmatpush1.msra.mxu0 0.0
        %4665 = vmatprep.subr.mxu0 0.0
        %4666 = vmatpush1.msra.mxu0 0.0
        %4667 = vmatprep.subr.mxu0 0.0
        %4668 = vmatpush1.msra.mxu0 0.0
        %4669 = vmatprep.subr.mxu0 0.0
        %4670 = vmatpush1.msra.mxu0 0.0
        %4671 = vmatprep.subr.mxu0 0.0
        %4672 = vmatpush1.msra.mxu0 0.0
        %4673 = vmatprep.subr.mxu0 0.0
        %4674 = vmatpush1.msra.mxu0 0.0
        %4675 = vmatprep.subr.mxu0 0.0
        %4676 = vmatpush1.msra.mxu0 0.0
        %4677 = vmatprep.subr.mxu0 0.0
        %4678 = vmatpush1.msra.mxu0 %v4643
        %4679 = vmatprep.subr.mxu0 0.0
        %4680 = vmatpush1.msra.mxu0 %v4642
        %4681 = vmatprep.subr.mxu0 0.0
        %4682 = vmatpush2.msra.mxu0 0.0
        %4683 = vmatprep.subr.mxu0 0.0
        %4684 = vmatpush2.msra.mxu0 0.0
        %4685 = vmatprep.subr.mxu0 0.0
        %4686 = vmatpush2.msra.mxu0 0.0
        %4687 = vmatprep.subr.mxu0 0.0
        %4688 = vmatpush2.msra.mxu0 0.0
        %4689 = vmatprep.subr.mxu0 0.0
        %4690 = vmatpush2.msra.mxu0 0.0
        %4691 = vmatprep.subr.mxu0 0.0
        %4692 = vmatpush2.msra.mxu0 0.0
        %4693 = vmatprep.subr.mxu0 0.0
        %4694 = vmatpush2.msra.mxu0 0.0
        %4695 = vmatprep.subr.mxu0 0.0
        %4696 = vmatpush2.msra.mxu0 0.0
        %4697 = vmatprep.subr.mxu0 0.0
        %4698 = vmatpush2.msra.mxu0 0.0
        %4699 = vmatprep.subr.mxu0 0.0
        %4700 = vmatpush2.msra.mxu0 0.0
        %4701 = vmatprep.subr.mxu0 0.0
        %4702 = vmatpush2.msra.mxu0 0.0
        %4703 = vmatprep.subr.mxu0 0.0
        %4704 = vmatpush2.msra.mxu0 0.0
        %4705 = vmatprep.subr.mxu0 0.0
        %4706 = vmatpush2.msra.mxu0 0.0
        %4707 = vmatprep.subr.mxu0 0.0
        %4708 = vmatpush2.msra.mxu0 0.0
        %4709 = vmatprep.subr.mxu0 0.0
        %4710 = vmatpush2.msra.mxu0 0.0
        %4711 = vmatprep.subr.mxu0 0.0
        %4712 = vmatpush2.msra.mxu0 0.0
        %4713 = vmatprep.mubr.f32.mxu0 0.0
        %4714 = vmatmul.mubr.f32.gmra.mxu0 %v4647
        %v4715 = vpop.f32.mrf.mxu0
        %v4716 = vadd.f32 0.0, %v4715
        %v4717 = vpop.f32.mrf.mxu0
        %4718 = vdwg.mxu0
        %v4719 = vadd.f32 %v4626, %v4716
        %v4720 = vld [vmem:[%s10] sm:$0xff]
        %4722 = vset.pattern.permute.xlu0 0
        %4723 = vperm.xlu0 %4722, %v4720
        %v4724 = vpop.permute.xlu0 %4723
        %v4726 = vadd.f32 %v4719, %v4724
        %vm4727 = vcmp.gt.f32.partialorder %v4726, 0.0
        %v4728 = vmul.f32 %v4726, 1.442695
        %v4729 = vpow.pop %v4728
        %v4730 = vsub.f32 %v4729, 1.0
        %v4731 = vsel %vm4727, %v4726, %v4730
        %v4732 = vld [vmem:[%s12] sm:$0xff]
        %v4733 = vld [vmem:[%s12 + $0x8] sm:$0xff]
        %v4735 = vsel %vm640, %v4731, 0
        %4737 = vmatprep.subr.mxu0 0.0
        %4738 = vmatpush1.msra.mxu0 0.0
        %4739 = vmatprep.subr.mxu0 0.0
        %4740 = vmatpush1.msra.mxu0 0.0
        %4741 = vmatprep.subr.mxu0 0.0
        %4742 = vmatpush1.msra.mxu0 0.0
        %4743 = vmatprep.subr.mxu0 0.0
        %4744 = vmatpush1.msra.mxu0 0.0
        %4745 = vmatprep.subr.mxu0 0.0
        %4746 = vmatpush1.msra.mxu0 0.0
        %4747 = vmatprep.subr.mxu0 0.0
        %4748 = vmatpush1.msra.mxu0 0.0
        %4749 = vmatprep.subr.mxu0 0.0
        %4750 = vmatpush1.msra.mxu0 0.0
        %4751 = vmatprep.subr.mxu0 0.0
        %4752 = vmatpush1.msra.mxu0 0.0
        %4753 = vmatprep.subr.mxu0 0.0
        %4754 = vmatpush1.msra.mxu0 0.0
        %4755 = vmatprep.subr.mxu0 0.0
        %4756 = vmatpush1.msra.mxu0 0.0
        %4757 = vmatprep.subr.mxu0 0.0
        %4758 = vmatpush1.msra.mxu0 0.0
        %4759 = vmatprep.subr.mxu0 0.0
        %4760 = vmatpush1.msra.mxu0 0.0
        %4761 = vmatprep.subr.mxu0 0.0
        %4762 = vmatpush1.msra.mxu0 0.0
        %4763 = vmatprep.subr.mxu0 0.0
        %4764 = vmatpush1.msra.mxu0 0.0
        %4765 = vmatprep.subr.mxu0 0.0
        %4766 = vmatpush1.msra.mxu0 %v4733
        %4767 = vmatprep.subr.mxu0 0.0
        %4768 = vmatpush1.msra.mxu0 %v4732
        %4769 = vmatprep.subr.mxu0 0.0
        %4770 = vmatpush2.msra.mxu0 0.0
        %4771 = vmatprep.subr.mxu0 0.0
        %4772 = vmatpush2.msra.mxu0 0.0
        %4773 = vmatprep.subr.mxu0 0.0
        %4774 = vmatpush2.msra.mxu0 0.0
        %4775 = vmatprep.subr.mxu0 0.0
        %4776 = vmatpush2.msra.mxu0 0.0
        %4777 = vmatprep.subr.mxu0 0.0
        %4778 = vmatpush2.msra.mxu0 0.0
        %4779 = vmatprep.subr.mxu0 0.0
        %4780 = vmatpush2.msra.mxu0 0.0
        %4781 = vmatprep.subr.mxu0 0.0
        %4782 = vmatpush2.msra.mxu0 0.0
        %4783 = vmatprep.subr.mxu0 0.0
        %4784 = vmatpush2.msra.mxu0 0.0
        %4785 = vmatprep.subr.mxu0 0.0
        %4786 = vmatpush2.msra.mxu0 0.0
        %4787 = vmatprep.subr.mxu0 0.0
        %4788 = vmatpush2.msra.mxu0 0.0
        %4789 = vmatprep.subr.mxu0 0.0
        %4790 = vmatpush2.msra.mxu0 0.0
        %4791 = vmatprep.subr.mxu0 0.0
        %4792 = vmatpush2.msra.mxu0 0.0
        %4793 = vmatprep.subr.mxu0 0.0
        %4794 = vmatpush2.msra.mxu0 0.0
        %4795 = vmatprep.subr.mxu0 0.0
        %4796 = vmatpush2.msra.mxu0 0.0
        %4797 = vmatprep.subr.mxu0 0.0
        %4798 = vmatpush2.msra.mxu0 0.0
        %4799 = vmatprep.subr.mxu0 0.0
        %4800 = vmatpush2.msra.mxu0 0.0
        %4801 = vmatprep.mubr.f32.mxu0 0.0
        %4802 = vmatmul.mubr.f32.gmra.mxu0 %v4735
        %v4803 = vpop.f32.mrf.mxu0
        %v4804 = vadd.f32 0.0, %v4803
        %v4805 = vpop.f32.mrf.mxu0
        %4806 = vdwg.mxu0
        %s4807 = scalar_lea.vmem %s12, 16
        %v4808 = vld [vmem:[%s4807] sm:$0xff]
        %v4809 = vld [vmem:[%s4807 + $0x8] sm:$0xff]
        %4810 = vmatprep.subr.mxu0 0.0
        %4811 = vmatpush1.msra.mxu0 0.0
        %4812 = vmatprep.subr.mxu0 0.0
        %4813 = vmatpush1.msra.mxu0 0.0
        %4814 = vmatprep.subr.mxu0 0.0
        %4815 = vmatpush1.msra.mxu0 0.0
        %4816 = vmatprep.subr.mxu0 0.0
        %4817 = vmatpush1.msra.mxu0 0.0
        %4818 = vmatprep.subr.mxu0 0.0
        %4819 = vmatpush1.msra.mxu0 0.0
        %4820 = vmatprep.subr.mxu0 0.0
        %4821 = vmatpush1.msra.mxu0 0.0
        %4822 = vmatprep.subr.mxu0 0.0
        %4823 = vmatpush1.msra.mxu0 0.0
        %4824 = vmatprep.subr.mxu0 0.0
        %4825 = vmatpush1.msra.mxu0 0.0
        %4826 = vmatprep.subr.mxu0 0.0
        %4827 = vmatpush1.msra.mxu0 0.0
        %4828 = vmatprep.subr.mxu0 0.0
        %4829 = vmatpush1.msra.mxu0 0.0
        %4830 = vmatprep.subr.mxu0 0.0
        %4831 = vmatpush1.msra.mxu0 0.0
        %4832 = vmatprep.subr.mxu0 0.0
        %4833 = vmatpush1.msra.mxu0 0.0
        %4834 = vmatprep.subr.mxu0 0.0
        %4835 = vmatpush1.msra.mxu0 0.0
        %4836 = vmatprep.subr.mxu0 0.0
        %4837 = vmatpush1.msra.mxu0 0.0
        %4838 = vmatprep.subr.mxu0 0.0
        %4839 = vmatpush1.msra.mxu0 %v4809
        %4840 = vmatprep.subr.mxu0 0.0
        %4841 = vmatpush1.msra.mxu0 %v4808
        %4842 = vmatprep.subr.mxu0 0.0
        %4843 = vmatpush2.msra.mxu0 0.0
        %4844 = vmatprep.subr.mxu0 0.0
        %4845 = vmatpush2.msra.mxu0 0.0
        %4846 = vmatprep.subr.mxu0 0.0
        %4847 = vmatpush2.msra.mxu0 0.0
        %4848 = vmatprep.subr.mxu0 0.0
        %4849 = vmatpush2.msra.mxu0 0.0
        %4850 = vmatprep.subr.mxu0 0.0
        %4851 = vmatpush2.msra.mxu0 0.0
        %4852 = vmatprep.subr.mxu0 0.0
        %4853 = vmatpush2.msra.mxu0 0.0
        %4854 = vmatprep.subr.mxu0 0.0
        %4855 = vmatpush2.msra.mxu0 0.0
        %4856 = vmatprep.subr.mxu0 0.0
        %4857 = vmatpush2.msra.mxu0 0.0
        %4858 = vmatprep.subr.mxu0 0.0
        %4859 = vmatpush2.msra.mxu0 0.0
        %4860 = vmatprep.subr.mxu0 0.0
        %4861 = vmatpush2.msra.mxu0 0.0
        %4862 = vmatprep.subr.mxu0 0.0
        %4863 = vmatpush2.msra.mxu0 0.0
        %4864 = vmatprep.subr.mxu0 0.0
        %4865 = vmatpush2.msra.mxu0 0.0
        %4866 = vmatprep.subr.mxu0 0.0
        %4867 = vmatpush2.msra.mxu0 0.0
        %4868 = vmatprep.subr.mxu0 0.0
        %4869 = vmatpush2.msra.mxu0 0.0
        %4870 = vmatprep.subr.mxu0 0.0
        %4871 = vmatpush2.msra.mxu0 0.0
        %4872 = vmatprep.subr.mxu0 0.0
        %4873 = vmatpush2.msra.mxu0 0.0
        %4874 = vmatprep.mubr.f32.mxu0 0.0
        %4875 = vmatmul.mubr.f32.gmra.mxu0 %v4735
        %v4876 = vpop.f32.mrf.mxu0
        %v4877 = vadd.f32 0.0, %v4876
        %v4878 = vpop.f32.mrf.mxu0
        %4879 = vdwg.mxu0
        %s4880 = scalar_lea.vmem %s12, 32
        %v4881 = vld [vmem:[%s4880] sm:$0xff]
        %v4882 = vld [vmem:[%s4880 + $0x8] sm:$0xff]
        %4883 = vmatprep.subr.mxu0 0.0
        %4884 = vmatpush1.msra.mxu0 0.0
        %4885 = vmatprep.subr.mxu0 0.0
        %4886 = vmatpush1.msra.mxu0 0.0
        %4887 = vmatprep.subr.mxu0 0.0
        %4888 = vmatpush1.msra.mxu0 0.0
        %4889 = vmatprep.subr.mxu0 0.0
        %4890 = vmatpush1.msra.mxu0 0.0
        %4891 = vmatprep.subr.mxu0 0.0
        %4892 = vmatpush1.msra.mxu0 0.0
        %4893 = vmatprep.subr.mxu0 0.0
        %4894 = vmatpush1.msra.mxu0 0.0
        %4895 = vmatprep.subr.mxu0 0.0
        %4896 = vmatpush1.msra.mxu0 0.0
        %4897 = vmatprep.subr.mxu0 0.0
        %4898 = vmatpush1.msra.mxu0 0.0
        %4899 = vmatprep.subr.mxu0 0.0
        %4900 = vmatpush1.msra.mxu0 0.0
        %4901 = vmatprep.subr.mxu0 0.0
        %4902 = vmatpush1.msra.mxu0 0.0
        %4903 = vmatprep.subr.mxu0 0.0
        %4904 = vmatpush1.msra.mxu0 0.0
        %4905 = vmatprep.subr.mxu0 0.0
        %4906 = vmatpush1.msra.mxu0 0.0
        %4907 = vmatprep.subr.mxu0 0.0
        %4908 = vmatpush1.msra.mxu0 0.0
        %4909 = vmatprep.subr.mxu0 0.0
        %4910 = vmatpush1.msra.mxu0 0.0
        %4911 = vmatprep.subr.mxu0 0.0
        %4912 = vmatpush1.msra.mxu0 %v4882
        %4913 = vmatprep.subr.mxu0 0.0
        %4914 = vmatpush1.msra.mxu0 %v4881
        %4915 = vmatprep.subr.mxu0 0.0
        %4916 = vmatpush2.msra.mxu0 0.0
        %4917 = vmatprep.subr.mxu0 0.0
        %4918 = vmatpush2.msra.mxu0 0.0
        %4919 = vmatprep.subr.mxu0 0.0
        %4920 = vmatpush2.msra.mxu0 0.0
        %4921 = vmatprep.subr.mxu0 0.0
        %4922 = vmatpush2.msra.mxu0 0.0
        %4923 = vmatprep.subr.mxu0 0.0
        %4924 = vmatpush2.msra.mxu0 0.0
        %4925 = vmatprep.subr.mxu0 0.0
        %4926 = vmatpush2.msra.mxu0 0.0
        %4927 = vmatprep.subr.mxu0 0.0
        %4928 = vmatpush2.msra.mxu0 0.0
        %4929 = vmatprep.subr.mxu0 0.0
        %4930 = vmatpush2.msra.mxu0 0.0
        %4931 = vmatprep.subr.mxu0 0.0
        %4932 = vmatpush2.msra.mxu0 0.0
        %4933 = vmatprep.subr.mxu0 0.0
        %4934 = vmatpush2.msra.mxu0 0.0
        %4935 = vmatprep.subr.mxu0 0.0
        %4936 = vmatpush2.msra.mxu0 0.0
        %4937 = vmatprep.subr.mxu0 0.0
        %4938 = vmatpush2.msra.mxu0 0.0
        %4939 = vmatprep.subr.mxu0 0.0
        %4940 = vmatpush2.msra.mxu0 0.0
        %4941 = vmatprep.subr.mxu0 0.0
        %4942 = vmatpush2.msra.mxu0 0.0
        %4943 = vmatprep.subr.mxu0 0.0
        %4944 = vmatpush2.msra.mxu0 0.0
        %4945 = vmatprep.subr.mxu0 0.0
        %4946 = vmatpush2.msra.mxu0 0.0
        %4947 = vmatprep.mubr.f32.mxu0 0.0
        %4948 = vmatmul.mubr.f32.gmra.mxu0 %v4735
        %v4949 = vpop.f32.mrf.mxu0
        %v4950 = vadd.f32 0.0, %v4949
        %v4951 = vpop.f32.mrf.mxu0
        %4952 = vdwg.mxu0
        %s4953 = scalar_lea.vmem %s12, 48
        %v4954 = vld [vmem:[%s4953] sm:$0xff]
        %v4955 = vld [vmem:[%s4953 + $0x8] sm:$0xff]
        %4956 = vmatprep.subr.mxu0 0.0
        %4957 = vmatpush1.msra.mxu0 0.0
        %4958 = vmatprep.subr.mxu0 0.0
        %4959 = vmatpush1.msra.mxu0 0.0
        %4960 = vmatprep.subr.mxu0 0.0
        %4961 = vmatpush1.msra.mxu0 0.0
        %4962 = vmatprep.subr.mxu0 0.0
        %4963 = vmatpush1.msra.mxu0 0.0
        %4964 = vmatprep.subr.mxu0 0.0
        %4965 = vmatpush1.msra.mxu0 0.0
        %4966 = vmatprep.subr.mxu0 0.0
        %4967 = vmatpush1.msra.mxu0 0.0
        %4968 = vmatprep.subr.mxu0 0.0
        %4969 = vmatpush1.msra.mxu0 0.0
        %4970 = vmatprep.subr.mxu0 0.0
        %4971 = vmatpush1.msra.mxu0 0.0
        %4972 = vmatprep.subr.mxu0 0.0
        %4973 = vmatpush1.msra.mxu0 0.0
        %4974 = vmatprep.subr.mxu0 0.0
        %4975 = vmatpush1.msra.mxu0 0.0
        %4976 = vmatprep.subr.mxu0 0.0
        %4977 = vmatpush1.msra.mxu0 0.0
        %4978 = vmatprep.subr.mxu0 0.0
        %4979 = vmatpush1.msra.mxu0 0.0
        %4980 = vmatprep.subr.mxu0 0.0
        %4981 = vmatpush1.msra.mxu0 0.0
        %4982 = vmatprep.subr.mxu0 0.0
        %4983 = vmatpush1.msra.mxu0 0.0
        %4984 = vmatprep.subr.mxu0 0.0
        %4985 = vmatpush1.msra.mxu0 %v4955
        %4986 = vmatprep.subr.mxu0 0.0
        %4987 = vmatpush1.msra.mxu0 %v4954
        %4988 = vmatprep.subr.mxu0 0.0
        %4989 = vmatpush2.msra.mxu0 0.0
        %4990 = vmatprep.subr.mxu0 0.0
        %4991 = vmatpush2.msra.mxu0 0.0
        %4992 = vmatprep.subr.mxu0 0.0
        %4993 = vmatpush2.msra.mxu0 0.0
        %4994 = vmatprep.subr.mxu0 0.0
        %4995 = vmatpush2.msra.mxu0 0.0
        %4996 = vmatprep.subr.mxu0 0.0
        %4997 = vmatpush2.msra.mxu0 0.0
        %4998 = vmatprep.subr.mxu0 0.0
        %4999 = vmatpush2.msra.mxu0 0.0
        %5000 = vmatprep.subr.mxu0 0.0
        %5001 = vmatpush2.msra.mxu0 0.0
        %5002 = vmatprep.subr.mxu0 0.0
        %5003 = vmatpush2.msra.mxu0 0.0
        %5004 = vmatprep.subr.mxu0 0.0
        %5005 = vmatpush2.msra.mxu0 0.0
        %5006 = vmatprep.subr.mxu0 0.0
        %5007 = vmatpush2.msra.mxu0 0.0
        %5008 = vmatprep.subr.mxu0 0.0
        %5009 = vmatpush2.msra.mxu0 0.0
        %5010 = vmatprep.subr.mxu0 0.0
        %5011 = vmatpush2.msra.mxu0 0.0
        %5012 = vmatprep.subr.mxu0 0.0
        %5013 = vmatpush2.msra.mxu0 0.0
        %5014 = vmatprep.subr.mxu0 0.0
        %5015 = vmatpush2.msra.mxu0 0.0
        %5016 = vmatprep.subr.mxu0 0.0
        %5017 = vmatpush2.msra.mxu0 0.0
        %5018 = vmatprep.subr.mxu0 0.0
        %5019 = vmatpush2.msra.mxu0 0.0
        %5020 = vmatprep.mubr.f32.mxu0 0.0
        %5021 = vmatmul.mubr.f32.gmra.mxu0 %v4735
        %v5022 = vpop.f32.mrf.mxu0
        %v5023 = vadd.f32 0.0, %v5022
        %v5024 = vpop.f32.mrf.mxu0
        %5025 = vdwg.mxu0
        %v5026 = vmax.f32 %v4804, %v4877
        %v5027 = vmax.f32 %v4950, %v5023
        %v5028 = vmax.f32 %v5026, %v5027
        %v5029 = vld [vmem:[%s13] sm:$0xff]
        %v5030 = vld [vmem:[%s13 + $0x8] sm:$0xff]
        %v5031 = vld [vmem:[%s13 + $0x10] sm:$0xff]
        %v5032 = vld [vmem:[%s13 + $0x18] sm:$0xff]
        %v5033 = vld [vmem:[%s14] sm:$0xff]
        %v5034 = vld [vmem:[%s14 + $0x8] sm:$0xff]
        %v5035 = vld [vmem:[%s14 + $0x10] sm:$0xff]
        %v5036 = vld [vmem:[%s14 + $0x18] sm:$0xff]
        %5038 = vset.pattern.permute.xlu0 0
        %5039 = vperm.xlu0 %5038, %v5033
        %v5040 = vpop.permute.xlu0 %5039
        %5043 = vset.pattern.permute.xlu0 0
        %5044 = vperm.xlu0 %5043, %v5034
        %v5045 = vpop.permute.xlu0 %5044
        %5048 = vset.pattern.permute.xlu0 0
        %5049 = vperm.xlu0 %5048, %v5035
        %v5050 = vpop.permute.xlu0 %5049
        %5053 = vset.pattern.permute.xlu0 0
        %5054 = vperm.xlu0 %5053, %v5036
        %v5055 = vpop.permute.xlu0 %5054
        %v5058 = vsel %vm2541, %v5029, 0
        %v5061 = vsel %vm2541, %v5030, 0
        %v5064 = vsel %vm2541, %v5031, 0
        %v5067 = vsel %vm2541, %v5032, 0
        %5069 = vmatprep.subr.mxu0 0.0
        %5070 = vmatpush1.msra.mxu0 0.0
        %5071 = vmatprep.subr.mxu0 0.0
        %5072 = vmatpush1.msra.mxu0 0.0
        %5073 = vmatprep.subr.mxu0 0.0
        %5074 = vmatpush1.msra.mxu0 0.0
        %5075 = vmatprep.subr.mxu0 0.0
        %5076 = vmatpush1.msra.mxu0 0.0
        %5077 = vmatprep.subr.mxu0 0.0
        %5078 = vmatpush1.msra.mxu0 0.0
        %5079 = vmatprep.subr.mxu0 0.0
        %5080 = vmatpush1.msra.mxu0 0.0
        %5081 = vmatprep.subr.mxu0 0.0
        %5082 = vmatpush1.msra.mxu0 0.0
        %5083 = vmatprep.subr.mxu0 0.0
        %5084 = vmatpush1.msra.mxu0 0.0
        %5085 = vmatprep.subr.mxu0 0.0
        %5086 = vmatpush1.msra.mxu0 0.0
        %5087 = vmatprep.subr.mxu0 0.0
        %5088 = vmatpush1.msra.mxu0 0.0
        %5089 = vmatprep.subr.mxu0 0.0
        %5090 = vmatpush1.msra.mxu0 0.0
        %5091 = vmatprep.subr.mxu0 0.0
        %5092 = vmatpush1.msra.mxu0 0.0
        %5093 = vmatprep.subr.mxu0 0.0
        %5094 = vmatpush1.msra.mxu0 0.0
        %5095 = vmatprep.subr.mxu0 0.0
        %5096 = vmatpush1.msra.mxu0 0.0
        %5097 = vmatprep.subr.mxu0 0.0
        %5098 = vmatpush1.msra.mxu0 0.0
        %5099 = vmatprep.subr.mxu0 0.0
        %5100 = vmatpush1.msra.mxu0 %v5028
        %5101 = vmatprep.subr.mxu0 0.0
        %5102 = vmatpush2.msra.mxu0 0.0
        %5103 = vmatprep.subr.mxu0 0.0
        %5104 = vmatpush2.msra.mxu0 0.0
        %5105 = vmatprep.subr.mxu0 0.0
        %5106 = vmatpush2.msra.mxu0 0.0
        %5107 = vmatprep.subr.mxu0 0.0
        %5108 = vmatpush2.msra.mxu0 0.0
        %5109 = vmatprep.subr.mxu0 0.0
        %5110 = vmatpush2.msra.mxu0 0.0
        %5111 = vmatprep.subr.mxu0 0.0
        %5112 = vmatpush2.msra.mxu0 0.0
        %5113 = vmatprep.subr.mxu0 0.0
        %5114 = vmatpush2.msra.mxu0 0.0
        %5115 = vmatprep.subr.mxu0 0.0
        %5116 = vmatpush2.msra.mxu0 0.0
        %5117 = vmatprep.subr.mxu0 0.0
        %5118 = vmatpush2.msra.mxu0 0.0
        %5119 = vmatprep.subr.mxu0 0.0
        %5120 = vmatpush2.msra.mxu0 0.0
        %5121 = vmatprep.subr.mxu0 0.0
        %5122 = vmatpush2.msra.mxu0 0.0
        %5123 = vmatprep.subr.mxu0 0.0
        %5124 = vmatpush2.msra.mxu0 0.0
        %5125 = vmatprep.subr.mxu0 0.0
        %5126 = vmatpush2.msra.mxu0 0.0
        %5127 = vmatprep.subr.mxu0 0.0
        %5128 = vmatpush2.msra.mxu0 0.0
        %5129 = vmatprep.subr.mxu0 0.0
        %5130 = vmatpush2.msra.mxu0 0.0
        %5131 = vmatprep.subr.mxu0 0.0
        %5132 = vmatpush2.msra.mxu0 0.0
        %5133 = vmatprep.mubr.f32.mxu0 0.0
        %5134 = vmatmul.mubr.f32.gmra.mxu0 %v5058
        %v5135 = vpop.f32.mrf.mxu0
        %v5136 = vadd.f32 %v5040, %v5135
        %v5137 = vpop.f32.mrf.mxu0
        %5138 = vmatprep.mubr.f32.mxu0 0.0
        %5139 = vmatmul.mubr.f32.gmra.mxu0 %v5061
        %v5140 = vpop.f32.mrf.mxu0
        %v5141 = vadd.f32 %v5045, %v5140
        %v5142 = vpop.f32.mrf.mxu0
        %5143 = vmatprep.mubr.f32.mxu0 0.0
        %5144 = vmatmul.mubr.f32.gmra.mxu0 %v5064
        %v5145 = vpop.f32.mrf.mxu0
        %v5146 = vadd.f32 %v5050, %v5145
        %v5147 = vpop.f32.mrf.mxu0
        %5148 = vmatprep.mubr.f32.mxu0 0.0
        %5149 = vmatmul.mubr.f32.gmra.mxu0 %v5067
        %v5150 = vpop.f32.mrf.mxu0
        %v5151 = vadd.f32 %v5055, %v5150
        %v5152 = vpop.f32.mrf.mxu0
        %5153 = vdwg.mxu0
        %v5154 = vsel %vm3919, %v5136, -inf
        %5155 = vmax.xlane.f32.xlu0 %v5154
        %v5156 = vpop.xlane.xlu0 %5155
        %v5157 = vsel %vm3919, %v5141, -inf
        %5158 = vmax.xlane.f32.xlu0 %v5157
        %v5159 = vpop.xlane.xlu0 %5158
        %v5160 = vsel %vm3919, %v5146, -inf
        %5161 = vmax.xlane.f32.xlu0 %v5160
        %v5162 = vpop.xlane.xlu0 %5161
        %v5163 = vsel %vm3919, %v5151, -inf
        %5164 = vmax.xlane.f32.xlu0 %v5163
        %v5165 = vpop.xlane.xlu0 %5164
        %v5166 = vsub.f32 %v5136, %v5156
        %v5167 = vsub.f32 %v5141, %v5159
        %v5168 = vsub.f32 %v5146, %v5162
        %v5169 = vsub.f32 %v5151, %v5165
        %v5170 = vmul.f32 %v5166, 1.442695
        %v5171 = vpow.pop %v5170
        %v5172 = vmul.f32 %v5167, 1.442695
        %v5173 = vpow.pop %v5172
        %v5174 = vmul.f32 %v5168, 1.442695
        %v5175 = vpow.pop %v5174
        %v5176 = vmul.f32 %v5169, 1.442695
        %v5177 = vpow.pop %v5176
        %v5178 = vsel %vm3919, %v5171, 0.0
        %5179 = vadd.xlane.f32.xlu0 %v5178
        %v5180 = vpop.xlane.xlu0 %5179
        %v5181 = vsel %vm3919, %v5173, 0.0
        %5182 = vadd.xlane.f32.xlu0 %v5181
        %v5183 = vpop.xlane.xlu0 %5182
        %v5184 = vsel %vm3919, %v5175, 0.0
        %5185 = vadd.xlane.f32.xlu0 %v5184
        %v5186 = vpop.xlane.xlu0 %5185
        %v5187 = vsel %vm3919, %v5177, 0.0
        %5188 = vadd.xlane.f32.xlu0 %v5187
        %v5189 = vpop.xlane.xlu0 %5188
        %v5190 = vrcp.pop %v5180
        %v5191 = vmul.f32 %v5171, %v5190
        %v5192 = vrcp.pop %v5183
        %v5193 = vmul.f32 %v5173, %v5192
        %v5194 = vrcp.pop %v5186
        %v5195 = vmul.f32 %v5175, %v5194
        %v5196 = vrcp.pop %v5189
        %v5197 = vmul.f32 %v5177, %v5196
        %v5198 = vld [vmem:[%s15] sm:$0x3]
        %v5199 = vld [vmem:[%s16] sm:$0x3]
        %5201 = vset.pattern.permute.xlu0 0
        %5202 = vperm.xlu0 %5201, %v5199
        %v5203 = vpop.permute.xlu0 %5202
        %v5206 = vsel %vm2557, %v5198, 0
        %5208 = vmatprep.subr.mxu0 0.0
        %5209 = vmatpush1.msra.mxu0 0.0
        %5210 = vmatprep.subr.mxu0 0.0
        %5211 = vmatpush1.msra.mxu0 0.0
        %5212 = vmatprep.subr.mxu0 0.0
        %5213 = vmatpush1.msra.mxu0 0.0
        %5214 = vmatprep.subr.mxu0 0.0
        %5215 = vmatpush1.msra.mxu0 0.0
        %5216 = vmatprep.subr.mxu0 0.0
        %5217 = vmatpush1.msra.mxu0 0.0
        %5218 = vmatprep.subr.mxu0 0.0
        %5219 = vmatpush1.msra.mxu0 0.0
        %5220 = vmatprep.subr.mxu0 0.0
        %5221 = vmatpush1.msra.mxu0 0.0
        %5222 = vmatprep.subr.mxu0 0.0
        %5223 = vmatpush1.msra.mxu0 0.0
        %5224 = vmatprep.subr.mxu0 0.0
        %5225 = vmatpush1.msra.mxu0 0.0
        %5226 = vmatprep.subr.mxu0 0.0
        %5227 = vmatpush1.msra.mxu0 0.0
        %5228 = vmatprep.subr.mxu0 0.0
        %5229 = vmatpush1.msra.mxu0 0.0
        %5230 = vmatprep.subr.mxu0 0.0
        %5231 = vmatpush1.msra.mxu0 0.0
        %5232 = vmatprep.subr.mxu0 0.0
        %5233 = vmatpush1.msra.mxu0 %v5197
        %5234 = vmatprep.subr.mxu0 0.0
        %5235 = vmatpush1.msra.mxu0 %v5195
        %5236 = vmatprep.subr.mxu0 0.0
        %5237 = vmatpush1.msra.mxu0 %v5193
        %5238 = vmatprep.subr.mxu0 0.0
        %5239 = vmatpush1.msra.mxu0 %v5191
        %5240 = vmatprep.subr.mxu0 0.0
        %5241 = vmatpush2.msra.mxu0 0.0
        %5242 = vmatprep.subr.mxu0 0.0
        %5243 = vmatpush2.msra.mxu0 0.0
        %5244 = vmatprep.subr.mxu0 0.0
        %5245 = vmatpush2.msra.mxu0 0.0
        %5246 = vmatprep.subr.mxu0 0.0
        %5247 = vmatpush2.msra.mxu0 0.0
        %5248 = vmatprep.subr.mxu0 0.0
        %5249 = vmatpush2.msra.mxu0 0.0
        %5250 = vmatprep.subr.mxu0 0.0
        %5251 = vmatpush2.msra.mxu0 0.0
        %5252 = vmatprep.subr.mxu0 0.0
        %5253 = vmatpush2.msra.mxu0 0.0
        %5254 = vmatprep.subr.mxu0 0.0
        %5255 = vmatpush2.msra.mxu0 0.0
        %5256 = vmatprep.subr.mxu0 0.0
        %5257 = vmatpush2.msra.mxu0 0.0
        %5258 = vmatprep.subr.mxu0 0.0
        %5259 = vmatpush2.msra.mxu0 0.0
        %5260 = vmatprep.subr.mxu0 0.0
        %5261 = vmatpush2.msra.mxu0 0.0
        %5262 = vmatprep.subr.mxu0 0.0
        %5263 = vmatpush2.msra.mxu0 0.0
        %5264 = vmatprep.subr.mxu0 0.0
        %5265 = vmatpush2.msra.mxu0 0.0
        %5266 = vmatprep.subr.mxu0 0.0
        %5267 = vmatpush2.msra.mxu0 0.0
        %5268 = vmatprep.subr.mxu0 0.0
        %5269 = vmatpush2.msra.mxu0 0.0
        %5270 = vmatprep.subr.mxu0 0.0
        %5271 = vmatpush2.msra.mxu0 0.0
        %5272 = vmatprep.mubr.f32.mxu0 0.0
        %5273 = vmatmul.mubr.f32.gmra.mxu0 %v5206
        %v5274 = vpop.f32.mrf.mxu0
        %v5275 = vadd.f32 %v5203, %v5274
        %v5276 = vpop.f32.mrf.mxu0
        %5277 = vdwg.mxu0
        %vm5278 = vcmask 25600
        %5279 = vst.msk [vmem:[%s569] sm:$0x3] %vm5278, %v5275
        %v5280 = vmul.f32 %v5275, %v5275
        %v5281 = vsel %vm5278, %v5280, 0.0
        %5282 = vadd.xlane.f32.xlu0 %v5281
        %v5283 = vpop.xlane.xlu0 %5282
        %vm5284 = vcmask 1041408
        %v5285 = vsel %vm5284, %v5283, 0.0
        %v5286 = vrot.slane %v5285, 4
        %v5287 = vadd.f32 %v5285, %v5286
        %v5288 = vrot.slane %v5287, 2
        %v5289 = vadd.f32 %v5287, %v5288
        %v5290 = vrot.slane %v5289, 1
        %v5291 = vadd.f32 %v5289, %v5290
        %vm5292 = vcmask 0
        %5293 = vst.msk [vmem:[%s582] sm:$0x1] %vm5292, %v5291
        %s5294 = sand.u32 %s403, 1
        %s5295 = scalar_lea.sflag [#allocation6], %s5294
        %s5296 = sand.u32 %s403, 1
        %s5297 = smul.addr %s5296, 2
        %s5298 = scalar_lea.vmem [#allocation5], %s5297
        %p5299 = scmp.lt.s32.totalorder %s33, 1
        %s5300 = scalar_select %p5299, %s33, 1
        %s5301 = scalar_lea.vmem %s18, %s5300
        // Predicated region
        $region89: #{encoder_pool_forward.2} parent=87 // pred_check
          %p5302 = pneg %p413
        $region90: #{encoder_pool_forward.2} parent=87 // pred_check_branch
          %5304 = sbr.rel (%p5302) target = $region92
        $region91: #{encoder_pool_forward.2} parent=87 // pred_region
          %s5306 = ssub.s32 32, 32
          %5307 = vsyncadd %s5295, %s5306
          %s5308 = smul.addr %s33, 32
          %s5309 = scalar_lea.hbm %s17, %s5308
          %s5311 = sshll.u32 %s5298, 4
          %s5312 = int_to_ptr.vmem [resolvable:$true] %s5311
          %5314 = dma.vmem_to_hbm [thread:$0]  %s5312, 32, %s5309, %s5295
        $region92: #{encoder_pool_forward.2} parent=87 // pred_fallthru
          _
        // Predicated region
        $region93: #{encoder_pool_forward.2} parent=87 // pred_check
          %p5315 = pneg %p439
        $region94: #{encoder_pool_forward.2} parent=87 // pred_check_branch
          %5317 = sbr.rel (%p5315) target = $region96
        $region95: #{encoder_pool_forward.2} parent=87 // pred_region
          _
        $region96: #{encoder_pool_forward.2} parent=87 // pred_fallthru
          _
      $region88: #{encoder_pool_forward.2} parent=5 // pred_fallthru
        _
      %p5318 = scmp.le.s32.totalorder 2, %s28
      // Predicated region
      $region97: #{encoder_pool_forward.2} parent=5 // pred_check
        %p5319 = pneg %p5318
      $region98: #{encoder_pool_forward.2} parent=5 // pred_check_branch
        %5321 = sbr.rel (%p5319) target = $region100
      $region99: #{encoder_pool_forward.2} parent=5 // pred_region
        %s5322 = ssub.s32 %s28, 2
        // Predicated region
        $region101: #{encoder_pool_forward.2} parent=99 // pred_check
          %p5323 = pneg %p419
        $region102: #{encoder_pool_forward.2} parent=99 // pred_check_branch
          %5325 = sbr.rel (%p5323) target = $region104
        $region103: #{encoder_pool_forward.2} parent=99 // pred_region
          %s5326 = sand.u32 %s404, 1
          %s5327 = scalar_lea.sflag [#allocation6], %s5326
          %s5328 = sand.u32 %s404, 1
          %s5329 = smul.addr %s5328, 2
          %s5330 = scalar_lea.vmem [#allocation5], %s5329
          %5331 = dma.done %s5327, 32
        $region104: #{encoder_pool_forward.2} parent=99 // pred_fallthru
          _
        // Predicated region
        $region105: #{encoder_pool_forward.2} parent=99 // pred_check
          %p5332 = pneg %p445
        $region106: #{encoder_pool_forward.2} parent=99 // pred_check_branch
          %5334 = sbr.rel (%p5332) target = $region108
        $region107: #{encoder_pool_forward.2} parent=99 // pred_region
          %p5335 = scmp.lt.s32.totalorder %s34, 1
          %s5336 = scalar_select %p5335, %s34, 1
          %s5337 = scalar_lea.vmem %s18, %s5336
        $region108: #{encoder_pool_forward.2} parent=99 // pred_fallthru
          _
      $region100: #{encoder_pool_forward.2} parent=5 // pred_fallthru
        _
    $region6: #{encoder_pool_forward.2} parent=1 // loop_footer
      %s32 = sadd.s32 1, %s28
    $region7: #{encoder_pool_forward.2} parent=1 // loop_footer_branch
      %27 = sbr.rel target = $region3
    $region8: #{encoder_pool_forward.2} parent=1 // loop_exit
      _
    %5338 = vsyncpa [#allocation6], 1
    %s5339 = scalar_lea.sflag [#allocation6], 1
    %5340 = vsyncpa %s5339, 1

</llo_original>
